<compile_context>
chip_gen: v7x
topology: tpu7x:2x2x1
jax: 0.10.0
libtpu: 0.0.40
codegen_flags: <defaults>
</compile_context>

<pallas_src>
import numpy as np
import jax
import jax.numpy as jnp
from jax.experimental import pallas as pl
from jax.experimental.pallas import tpu as pltpu

KS = 7        # SpatialAttention kernel_size
PAD = 3       # padding for kernel_size 7
BN_EPS = 1e-5


# ----------------------------- Kernel 1: SpatialAttention + global max pool -----------------------------
def sa_pool_kernel(x_ref, w_ref, o_ref, pad_ref):
    # x_ref:   (1, H, W, C)     VMEM  one batch element, bf16 (NHWC -> C on lanes)
    # w_ref:   (2, KS*KS)       SMEM  conv1 weights: row 0 -> avg channel, row 1 -> max channel
    # o_ref:   (1, 1, C)        VMEM  globally max-pooled attended features (f32)
    # pad_ref: (2, H+2P, W+2P)  VMEM  scratch for the zero-padded 2-channel stat map
    _, H, W, C = x_ref.shape
    # Upcast right after the load: all math in f32 (v5e VPU has no bf16; exact elsewhere too).
    x = x_ref[0].astype(jnp.float32)                # (H, W, C)

    # torch.mean / torch.max over the channel dim (dim=1 in NCHW == lane dim here)
    avg = jnp.mean(x, axis=-1)                      # (H, W)
    mx = jnp.max(x, axis=-1)                        # (H, W)

    # The scratch persists across grid steps: only the 3-wide border ever needs zeroing (once);
    # the interior is fully overwritten below every step.
    @pl.when(pl.program_id(0) == 0)
    def _():
        pad_ref[...] = jnp.zeros_like(pad_ref)

    pad_ref[0, PAD:PAD + H, PAD:PAD + W] = avg
    pad_ref[1, PAD:PAD + H, PAD:PAD + W] = mx
    p_avg = pad_ref[0]                              # (H+2P, W+2P) back in vregs
    p_max = pad_ref[1]

    # Conv2d(2, 1, 7, padding=3, bias=False) — fully unrolled taps, scalar weights from SMEM.
    # NOTE(perf, larger H*W): reformulate as pltpu.roll shifts or an im2col matmul if the
    # misaligned slices ever become the XLU bottleneck; at 8x8 this stage is input-DMA bound.
    acc = jnp.zeros((H, W), jnp.float32)
    for kh in range(KS):
        for kw in range(KS):
            w_avg = w_ref[0, kh * KS + kw]
            w_max = w_ref[1, kh * KS + kw]
            acc = acc + w_avg * p_avg[kh:kh + H, kw:kw + W] \
                      + w_max * p_max[kh:kh + H, kw:kw + W]

    att = jax.nn.sigmoid(acc)                       # (H, W)
    weighted = att[:, :, None] * x                  # (H, W, C)

    # AdaptiveMaxPool2d((1, 1)) == global spatial max
    pooled = jnp.max(weighted, axis=1)              # (H, C)
    o_ref[0] = jnp.max(pooled, axis=0, keepdims=True).astype(o_ref.dtype)   # (1, C)


def spatial_attention_maxpool(x_nhwc, conv_w):
    B, H, W, C = x_nhwc.shape
    conv_w_flat = conv_w.reshape(2, KS * KS).astype(jnp.float32)
    # bf16 activation block: the input DMA is essentially the entire cost of this kernel.
    x_bf16 = x_nhwc.astype(jnp.bfloat16)
    # NOTE(v7x scaling): at e.g. 56x56x2048 the bf16 block is ~12.8 MiB (25.7 MiB double-
    # buffered); tile H with a PAD-row halo and carry a running-max accumulator before going
    # to feature maps that large.
    out = pl.pallas_call(
        sa_pool_kernel,
        out_shape=jax.ShapeDtypeStruct((B, 1, C), jnp.float32),
        grid_spec=pltpu.PrefetchScalarGridSpec(
            num_scalar_prefetch=0,
            grid=(B,),
            in_specs=[
                pl.BlockSpec((1, H, W, C), lambda b: (b, 0, 0, 0)),
                pl.BlockSpec(memory_space=pltpu.MemorySpace.SMEM),
            ],
            out_specs=pl.BlockSpec((1, 1, C), lambda b: (b, 0, 0)),
            scratch_shapes=[pltpu.VMEM((2, H + 2 * PAD, W + 2 * PAD), jnp.float32)],
        ),
        compiler_params=pltpu.CompilerParams(dimension_semantics=("parallel",)),
    )(x_bf16, conv_w_flat)
    return out.reshape(B, C)


# ----------------------------- Kernel 2: Linear + BatchNorm1d (train mode) + ReLU -----------------------------
def fc_kernel(x_ref, wq_ref, s_ref, b_ref, g_ref, beta_ref, o_ref):
    # x_ref:  (B, K)   resident f32 activations (cast to bf16 for the MXU)
    # wq_ref: (tn, K)  int8 weight slab in native PyTorch (out_features, in_features) layout
    # s_ref:  (1, tn)  per-output-channel dequant scale;  b_ref: (1, tn) Linear bias
    xk = x_ref[...].astype(jnp.bfloat16)
    wk = wq_ref[...].astype(jnp.bfloat16)                            # int8 -> bf16 is exact
    z = jax.lax.dot_general(
        xk, wk,
        dimension_numbers=(((1,), (1,)), ((), ())),                  # x @ W^T, no transpose
        preferred_element_type=jnp.float32)                          # f32 MXU accumulation
    z = z * s_ref[...] + b_ref[...]                                  # dequant + Linear bias (fused FMA)
    mu = jnp.mean(z, axis=0, keepdims=True)                          # train-mode BN batch stats
    var = jnp.mean((z - mu) ** 2, axis=0, keepdims=True)             # biased variance
    y = g_ref[...] * (z - mu) * jax.lax.rsqrt(var + BN_EPS) + beta_ref[...]
    o_ref[...] = jnp.maximum(y, 0.0).astype(o_ref.dtype)             # ReLU


def fc_bn_relu(x, wq, w_scale, lin_b, bn_g, bn_b, *, tn=1024):
    # x: (B, K) f32 pooled features; wq: (N, K) int8 per-output-channel-quantized weight
    # (quantized ONCE outside the jitted hot path); w_scale: (N,) f32 dequant scales.
    B, K = x.shape
    N, K_w = wq.shape
    assert K_w == K
    tn = min(tn, N)
    assert N % tn == 0, "N must be divisible by the output tile"
    # BN batch statistics need the whole batch in one block: B is never tiled.
    # TODO(synk): if production B grows >=128, switch to a two-pass / Welford BN over B-tiles.
    assert B * K * 4 <= 4 * 1024 * 1024, "activation block must stay VMEM-resident"
    return pl.pallas_call(
        fc_kernel,
        out_shape=jax.ShapeDtypeStruct((B, N), x.dtype),
        grid_spec=pltpu.PrefetchScalarGridSpec(
            num_scalar_prefetch=0,
            grid=(N // tn,),                                   # 2 steps at N=2048, tn=1024
            in_specs=[
                pl.BlockSpec((B, K), lambda j: (0, 0)),        # activations fetched once, kept resident
                pl.BlockSpec((tn, K), lambda j: (j, 0)),       # int8 (tn, K) weight slab: 2 MiB/step
                pl.BlockSpec((1, tn), lambda j: (0, j)),       # dequant scale
                pl.BlockSpec((1, tn), lambda j: (0, j)),       # Linear bias
                pl.BlockSpec((1, tn), lambda j: (0, j)),       # BN gamma
                pl.BlockSpec((1, tn), lambda j: (0, j)),       # BN beta
            ],
            out_specs=pl.BlockSpec((B, tn), lambda j: (0, j)),
        ),
        # ~4 MiB double-buffered int8 weight residency fits every generation's scoped VMEM
        # default; 2 N-tiles keep megacore sharding on v7x.  (v7x profile-gated: tn=512 if the
        # per-core weight-DMA tail is exposed.)
        compiler_params=pltpu.CompilerParams(dimension_semantics=("parallel",)),
    )(x, wq, w_scale.reshape(1, N), lin_b.reshape(1, N),
      bn_g.reshape(1, N), bn_b.reshape(1, N))


def quantize_linear_weight(lin_w):
    """Per-output-channel symmetric int8 quantization of the (N, K) Linear weight.

    Done once, offline (outside jit): halves the FC's weight streaming on every TPU
    generation; the kernel casts int8 -> bf16 in-register, so no integer/fp8 MXU path is
    required and the same kernel runs on v5e/v6e/v7x.
    """
    s = jnp.maximum(jnp.max(jnp.abs(lin_w), axis=1), 1e-12) / 127.0    # (N,)
    wq = jnp.clip(jnp.round(lin_w / s[:, None]), -127, 127).astype(jnp.int8)
    return wq, s.astype(jnp.float32)


# ----------------------------- Full module forward -----------------------------
def _forward_nhwc(x_nhwc, conv_w, wq, w_scale, lin_b, bn_g, bn_b):
    pooled = spatial_attention_maxpool(x_nhwc, conv_w)                # (B, 2048) f32
    return fc_bn_relu(pooled, wq, w_scale, lin_b, bn_g, bn_b)         # (B, 2048)


# Preferred entry point: producer emits NHWC (ideally already bf16), no activation transpose.
spatial_max_forward_nhwc = jax.jit(_forward_nhwc)


@jax.jit
def spatial_max_forward(x_nchw, conv_w, wq, w_scale, lin_b, bn_g, bn_b):
    # PyTorch-convention NCHW entry point.  The transpose is fused with the bf16 downcast in
    # one XLA pass so its HBM writeback moves half the bytes; still prefer the NHWC entry.
    x_nhwc = jnp.transpose(x_nchw, (0, 2, 3, 1)).astype(jnp.bfloat16)
    return _forward_nhwc(x_nhwc, conv_w, wq, w_scale, lin_b, bn_g, bn_b)


# ----------------------------- Pure-JAX references -----------------------------
def reference_pooled(x_nchw, conv_w):
    avg = jnp.mean(x_nchw, axis=1, keepdims=True)
    mx = jnp.max(x_nchw, axis=1, keepdims=True)
    s = jnp.concatenate([avg, mx], axis=1)                            # (B, 2, H, W)
    conv = jax.lax.conv_general_dilated(
        s, conv_w[None], (1, 1), [(PAD, PAD), (PAD, PAD)],
        dimension_numbers=("NCHW", "OIHW", "NCHW"),
        precision=jax.lax.Precision.HIGHEST)
    att = jax.nn.sigmoid(conv)                                        # (B, 1, H, W)
    return jnp.max(att * x_nchw, axis=(2, 3))                         # (B, C)


def reference_fc(pooled, wq, w_scale, lin_b, bn_g, bn_b):
    # Mirrors the kernel's bf16-input / int8-weight / f32-accumulate matmul + dequant.
    w = wq.astype(jnp.float32)
    xk = pooled.astype(jnp.bfloat16).astype(jnp.float32)
    z = (xk @ w.T) * w_scale + lin_b
    mu = jnp.mean(z, axis=0, keepdims=True)
    var = jnp.mean((z - mu) ** 2, axis=0, keepdims=True)
    return jnp.maximum(bn_g * (z - mu) * jax.lax.rsqrt(var + BN_EPS) + bn_b, 0.0)


if __name__ == "__main__":
    B, C, H, W = 2, 2048, 8, 8        # C fixed at 2048 by fc_linear(2048, 2048)

    key = jax.random.PRNGKey(0)
    k_conv, k_lin, k_bn, k_x = jax.random.split(key, 4)

    # Deterministic, kaiming-style init matching weights_init_kaiming
    conv_w = jax.random.normal(k_conv, (2, KS, KS), jnp.float32) * np.sqrt(2.0 / (2 * KS * KS))  # fan_in
    lin_w = jax.random.normal(k_lin, (C, C), jnp.float32) * np.sqrt(2.0 / C)                      # fan_out
    lin_b = jnp.zeros((C,), jnp.float32)
    bn_g = 1.0 + 0.02 * jax.random.normal(k_bn, (C,), jnp.float32)                                # N(1, 0.02)
    bn_b = jnp.zeros((C,), jnp.float32)

    # One-time weight prep OUTSIDE the jitted hot path: per-output-channel int8 halves the FC's
    # HBM traffic on every generation; the kernel dequantizes on the matmul output.
    lin_wq, lin_ws = quantize_linear_weight(lin_w)

    x = jax.random.normal(k_x, (B, C, H, W), jnp.float32)             # PyTorch-convention NCHW input

    out = jax.block_until_ready(
        spatial_max_forward(x, conv_w, lin_wq, lin_ws, lin_b, bn_g, bn_b))
    assert out.shape == (B, C)
    assert np.all(np.isfinite(np.asarray(out)))

    # sanity 1: attention + global max-pool kernel vs pure-JAX reference (same bf16-rounded input)
    x_bf = x.astype(jnp.bfloat16).astype(jnp.float32)
    pooled = jax.block_until_ready(
        spatial_attention_maxpool(jnp.transpose(x, (0, 2, 3, 1)).astype(jnp.bfloat16), conv_w))
    ref_p = jax.block_until_ready(reference_pooled(x_bf, conv_w))
    assert np.allclose(np.asarray(pooled), np.asarray(ref_p), atol=1e-3, rtol=1e-3)

    # sanity 2: fused int8-weight Linear + BatchNorm1d + ReLU kernel vs pure-JAX reference
    fc_out = jax.block_until_ready(fc_bn_relu(pooled, lin_wq, lin_ws, lin_b, bn_g, bn_b))
    ref_fc = jax.block_until_ready(reference_fc(pooled, lin_wq, lin_ws, lin_b, bn_g, bn_b))
    assert np.allclose(np.asarray(fc_out), np.asarray(ref_fc), atol=1e-2, rtol=1e-2)

    print("KERNEL_OK")
</pallas_src>

<mosaic_0001>
module attributes {stable_mosaic.version = 11 : i64} {
  func.func @fc_kernel(%arg0: i32, %arg1: memref<2x2048xf32, #tpu.memory_space<vmem>>, %arg2: memref<1024x2048xi8, #tpu.memory_space<vmem>>, %arg3: memref<1x1024xf32, #tpu.memory_space<vmem>>, %arg4: memref<1x1024xf32, #tpu.memory_space<vmem>>, %arg5: memref<1x1024xf32, #tpu.memory_space<vmem>>, %arg6: memref<1x1024xf32, #tpu.memory_space<vmem>>, %arg7: memref<2x1024xf32, #tpu.memory_space<vmem>>) attributes {dimension_semantics = [#tpu.dimension_semantics<parallel>], iteration_bounds = array<i64: 2>, scalar_prefetch = 0 : i64, scratch_operands = 0 : i64, tpu.core_type = #tpu.core_type<tc>, window_params = [{pipeline_mode = #tpu.pipeline_mode<synchronous>, transform_indices = @transform_0, window_bounds = array<i64: 2, 2048>}, {transform_indices = @transform_1, window_bounds = array<i64: 1024, 2048>}, {transform_indices = @transform_2, window_bounds = array<i64: 1, 1024>}, {transform_indices = @transform_3, window_bounds = array<i64: 1, 1024>}, {transform_indices = @transform_4, window_bounds = array<i64: 1, 1024>}, {transform_indices = @transform_5, window_bounds = array<i64: 1, 1024>}, {transform_indices = @transform_6, window_bounds = array<i64: 2, 1024>}]} {
    %c0 = arith.constant 0 : index
    %c0_0 = arith.constant 0 : index
    %0 = vector.load %arg1[%c0, %c0_0] : memref<2x2048xf32, #tpu.memory_space<vmem>>, vector<2x2048xf32>
    %1 = arith.truncf %0 : vector<2x2048xf32> to vector<2x2048xbf16>
    %c0_1 = arith.constant 0 : index
    %c0_2 = arith.constant 0 : index
    %2 = vector.load %arg2[%c0_1, %c0_2] : memref<1024x2048xi8, #tpu.memory_space<vmem>>, vector<1024x2048xi8>
    %3 = arith.sitofp %2 : vector<1024x2048xi8> to vector<1024x2048xbf16>
    %cst = arith.constant dense<0.000000e+00> : vector<2x1024xf32>
    %4 = tpu.matmul %1, %3, %cst {dimension_numbers = #tpu.dot_dimension_numbers<[1], [1], [0], [0], [0, 0, 1, 0], [], []>} : vector<2x2048xbf16>, vector<1024x2048xbf16>, vector<2x1024xf32> -> vector<2x1024xf32>
    %c0_3 = arith.constant 0 : index
    %c0_4 = arith.constant 0 : index
    %5 = vector.load %arg3[%c0_3, %c0_4] : memref<1x1024xf32, #tpu.memory_space<vmem>>, vector<1x1024xf32>
    %6 = vector.broadcast %5 : vector<1x1024xf32> to vector<2x1024xf32>
    %7 = arith.mulf %4, %6 : vector<2x1024xf32>
    %c0_5 = arith.constant 0 : index
    %c0_6 = arith.constant 0 : index
    %8 = vector.load %arg4[%c0_5, %c0_6] : memref<1x1024xf32, #tpu.memory_space<vmem>>, vector<1x1024xf32>
    %9 = vector.broadcast %8 : vector<1x1024xf32> to vector<2x1024xf32>
    %10 = arith.addf %7, %9 : vector<2x1024xf32>
    %cst_7 = arith.constant dense<0.000000e+00> : vector<1024xf32>
    %11 = vector.multi_reduction <add>, %10, %cst_7 [0] : vector<2x1024xf32> to vector<1024xf32>
    %12 = vector.shape_cast %11 : vector<1024xf32> to vector<1x1024xf32>
    %cst_8 = arith.constant 2.000000e+00 : f32
    %13 = vector.broadcast %cst_8 : f32 to vector<1x1024xf32>
    %14 = arith.divf %12, %13 : vector<1x1024xf32>
    %15 = vector.broadcast %14 : vector<1x1024xf32> to vector<2x1024xf32>
    %16 = arith.subf %10, %15 : vector<2x1024xf32>
    %17 = arith.mulf %16, %16 : vector<2x1024xf32>
    %cst_9 = arith.constant dense<0.000000e+00> : vector<1024xf32>
    %18 = vector.multi_reduction <add>, %17, %cst_9 [0] : vector<2x1024xf32> to vector<1024xf32>
    %19 = vector.shape_cast %18 : vector<1024xf32> to vector<1x1024xf32>
    %cst_10 = arith.constant 2.000000e+00 : f32
    %20 = vector.broadcast %cst_10 : f32 to vector<1x1024xf32>
    %21 = arith.divf %19, %20 : vector<1x1024xf32>
    %c0_11 = arith.constant 0 : index
    %c0_12 = arith.constant 0 : index
    %22 = vector.load %arg5[%c0_11, %c0_12] : memref<1x1024xf32, #tpu.memory_space<vmem>>, vector<1x1024xf32>
    %23 = vector.broadcast %14 : vector<1x1024xf32> to vector<2x1024xf32>
    %24 = arith.subf %10, %23 : vector<2x1024xf32>
    %25 = vector.broadcast %22 : vector<1x1024xf32> to vector<2x1024xf32>
    %26 = arith.mulf %25, %24 : vector<2x1024xf32>
    %cst_13 = arith.constant 9.99999974E-6 : f32
    %27 = vector.broadcast %cst_13 : f32 to vector<1x1024xf32>
    %28 = arith.addf %21, %27 : vector<1x1024xf32>
    %29 = math.rsqrt %28 : vector<1x1024xf32>
    %30 = vector.broadcast %29 : vector<1x1024xf32> to vector<2x1024xf32>
    %31 = arith.mulf %26, %30 : vector<2x1024xf32>
    %c0_14 = arith.constant 0 : index
    %c0_15 = arith.constant 0 : index
    %32 = vector.load %arg6[%c0_14, %c0_15] : memref<1x1024xf32, #tpu.memory_space<vmem>>, vector<1x1024xf32>
    %33 = vector.broadcast %32 : vector<1x1024xf32> to vector<2x1024xf32>
    %34 = arith.addf %31, %33 : vector<2x1024xf32>
    %cst_16 = arith.constant 0.000000e+00 : f32
    %35 = vector.broadcast %cst_16 : f32 to vector<2x1024xf32>
    %36 = arith.maximumf %34, %35 : vector<2x1024xf32>
    %c0_17 = arith.constant 0 : index
    %c0_18 = arith.constant 0 : index
    %37 = vector.load %arg7[%c0_17, %c0_18] : memref<2x1024xf32, #tpu.memory_space<vmem>>, vector<2x1024xf32>
    tpu.vector_store %arg7[%c0_17, %c0_18], %36 {strides = array<i32>} : memref<2x1024xf32, #tpu.memory_space<vmem>>, vector<2x1024xf32>,
    return
  }
  func.func @transform_0(%arg0: i32) -> (i32, i32) {
    %c0_i32 = arith.constant 0 : i32
    %c0_i32_0 = arith.constant 0 : i32
    %c0_i32_1 = arith.constant 0 : i32
    return %c0_i32, %c0_i32_0 : i32, i32
  }
  func.func @transform_1(%arg0: i32) -> (i32, i32) {
    %c0_i32 = arith.constant 0 : i32
    %c0_i32_0 = arith.constant 0 : i32
    return %arg0, %c0_i32 : i32, i32
  }
  func.func @transform_2(%arg0: i32) -> (i32, i32) {
    %c0_i32 = arith.constant 0 : i32
    %c0_i32_0 = arith.constant 0 : i32
    return %c0_i32, %arg0 : i32, i32
  }
  func.func @transform_3(%arg0: i32) -> (i32, i32) {
    %c0_i32 = arith.constant 0 : i32
    %c0_i32_0 = arith.constant 0 : i32
    return %c0_i32, %arg0 : i32, i32
  }
  func.func @transform_4(%arg0: i32) -> (i32, i32) {
    %c0_i32 = arith.constant 0 : i32
    %c0_i32_0 = arith.constant 0 : i32
    return %c0_i32, %arg0 : i32, i32
  }
  func.func @transform_5(%arg0: i32) -> (i32, i32) {
    %c0_i32 = arith.constant 0 : i32
    %c0_i32_0 = arith.constant 0 : i32
    return %c0_i32, %arg0 : i32, i32
  }
  func.func @transform_6(%arg0: i32) -> (i32, i32) {
    %c0_i32 = arith.constant 0 : i32
    %c0_i32_0 = arith.constant 0 : i32
    return %c0_i32, %arg0 : i32, i32
  }
}

module attributes {stable_mosaic.version = 11 : i64} {
  func.func @sa_pool_kernel(%arg0: i32, %arg1: memref<1x8x8x2048xbf16, #tpu.memory_space<vmem>>, %arg2: memref<2x49xf32, #tpu.memory_space<smem>>, %arg3: memref<1x1x2048xf32, #tpu.memory_space<vmem>>, %arg4: memref<2x14x14xf32, #tpu.memory_space<vmem>>) attributes {dimension_semantics = [#tpu.dimension_semantics<parallel>], iteration_bounds = array<i64: 2>, scalar_prefetch = 0 : i64, scratch_operands = 1 : i64, tpu.core_type = #tpu.core_type<tc>, window_params = [{transform_indices = @transform_0, window_bounds = array<i64: 1, 8, 8, 2048>}, {transform_indices = @transform_1, window_bounds = array<i64: 2, 49>}, {transform_indices = @transform_2, window_bounds = array<i64: 1, 1, 2048>}]} {
    %c0 = arith.constant 0 : index
    %c0_0 = arith.constant 0 : index
    %c0_1 = arith.constant 0 : index
    %c0_2 = arith.constant 0 : index
    %0 = vector.load %arg1[%c0, %c0_0, %c0_1, %c0_2] : memref<1x8x8x2048xbf16, #tpu.memory_space<vmem>>, vector<1x8x8x2048xbf16>
    %1 = vector.shape_cast %0 : vector<1x8x8x2048xbf16> to vector<8x8x2048xbf16>
    %2 = arith.extf %1 : vector<8x8x2048xbf16> to vector<8x8x2048xf32>
    %cst = arith.constant dense<0.000000e+00> : vector<8x8xf32>
    %3 = vector.multi_reduction <add>, %2, %cst [2] : vector<8x8x2048xf32> to vector<8x8xf32>
    %cst_3 = arith.constant 2.048000e+03 : f32
    %4 = vector.broadcast %cst_3 : f32 to vector<8x8xf32>
    %5 = arith.divf %3, %4 : vector<8x8xf32>
    %cst_4 = arith.constant dense<0xFF800000> : vector<8x8xf32>
    %6 = vector.multi_reduction <maximumf>, %2, %cst_4 [2] : vector<8x8x2048xf32> to vector<8x8xf32>
    %c0_i32 = arith.constant 0 : i32
    %7 = arith.cmpi eq, %arg0, %c0_i32 : i32
    %8 = arith.extui %7 : i1 to i32
    %c0_i32_5 = arith.constant 0 : i32
    %9 = arith.cmpi ne, %8, %c0_i32_5 : i32
    scf.if %9 {
      %cst_173 = arith.constant 0.000000e+00 : f32
      %525 = vector.broadcast %cst_173 : f32 to vector<2x14x14xf32>
      %c0_174 = arith.constant 0 : index
      %c0_175 = arith.constant 0 : index
      %c0_176 = arith.constant 0 : index
      %526 = vector.load %arg4[%c0_174, %c0_175, %c0_176] : memref<2x14x14xf32, #tpu.memory_space<vmem>>, vector<2x14x14xf32>
      tpu.vector_store %arg4[%c0_174, %c0_175, %c0_176], %525 {strides = array<i32>} : memref<2x14x14xf32, #tpu.memory_space<vmem>>, vector<2x14x14xf32>,
    } else {
    }
    %c0_6 = arith.constant 0 : index
    %c3 = arith.constant 3 : index
    %c3_7 = arith.constant 3 : index
    %10 = vector.load %arg4[%c0_6, %c3, %c3_7] : memref<2x14x14xf32, #tpu.memory_space<vmem>>, vector<1x8x8xf32>
    %11 = vector.shape_cast %10 : vector<1x8x8xf32> to vector<8x8xf32>
    %12 = vector.shape_cast %5 : vector<8x8xf32> to vector<1x8x8xf32>
    tpu.vector_store %arg4[%c0_6, %c3, %c3_7], %12 {strides = array<i32>} : memref<2x14x14xf32, #tpu.memory_space<vmem>>, vector<1x8x8xf32>,
    %c1 = arith.constant 1 : index
    %c3_8 = arith.constant 3 : index
    %c3_9 = arith.constant 3 : index
    %13 = vector.load %arg4[%c1, %c3_8, %c3_9] : memref<2x14x14xf32, #tpu.memory_space<vmem>>, vector<1x8x8xf32>
    %14 = vector.shape_cast %13 : vector<1x8x8xf32> to vector<8x8xf32>
    %15 = vector.shape_cast %6 : vector<8x8xf32> to vector<1x8x8xf32>
    tpu.vector_store %arg4[%c1, %c3_8, %c3_9], %15 {strides = array<i32>} : memref<2x14x14xf32, #tpu.memory_space<vmem>>, vector<1x8x8xf32>,
    %c0_10 = arith.constant 0 : index
    %c0_11 = arith.constant 0 : index
    %c0_12 = arith.constant 0 : index
    %16 = vector.load %arg4[%c0_10, %c0_11, %c0_12] : memref<2x14x14xf32, #tpu.memory_space<vmem>>, vector<1x14x14xf32>
    %17 = vector.shape_cast %16 : vector<1x14x14xf32> to vector<14x14xf32>
    %c1_13 = arith.constant 1 : index
    %c0_14 = arith.constant 0 : index
    %c0_15 = arith.constant 0 : index
    %18 = vector.load %arg4[%c1_13, %c0_14, %c0_15] : memref<2x14x14xf32, #tpu.memory_space<vmem>>, vector<1x14x14xf32>
    %19 = vector.shape_cast %18 : vector<1x14x14xf32> to vector<14x14xf32>
    %cst_16 = arith.constant 0.000000e+00 : f32
    %20 = vector.broadcast %cst_16 : f32 to vector<8x8xf32>
    %c0_17 = arith.constant 0 : index
    %c0_18 = arith.constant 0 : index
    %21 = memref.load %arg2[%c0_17, %c0_18] : memref<2x49xf32, #tpu.memory_space<smem>>
    %c1_19 = arith.constant 1 : index
    %c0_20 = arith.constant 0 : index
    %22 = memref.load %arg2[%c1_19, %c0_20] : memref<2x49xf32, #tpu.memory_space<smem>>
    %23 = vector.extract_strided_slice %17 {offsets = [0, 0], sizes = [8, 8], strides = [1, 1]} : vector<14x14xf32> to vector<8x8xf32>
    %24 = vector.broadcast %21 : f32 to vector<8x8xf32>
    %25 = arith.mulf %24, %23 : vector<8x8xf32>
    %26 = arith.addf %20, %25 : vector<8x8xf32>
    %27 = vector.extract_strided_slice %19 {offsets = [0, 0], sizes = [8, 8], strides = [1, 1]} : vector<14x14xf32> to vector<8x8xf32>
    %28 = vector.broadcast %22 : f32 to vector<8x8xf32>
    %29 = arith.mulf %28, %27 : vector<8x8xf32>
    %30 = arith.addf %26, %29 : vector<8x8xf32>
    %c0_21 = arith.constant 0 : index
    %c1_22 = arith.constant 1 : index
    %31 = memref.load %arg2[%c0_21, %c1_22] : memref<2x49xf32, #tpu.memory_space<smem>>
    %c1_23 = arith.constant 1 : index
    %c1_24 = arith.constant 1 : index
    %32 = memref.load %arg2[%c1_23, %c1_24] : memref<2x49xf32, #tpu.memory_space<smem>>
    %33 = vector.extract_strided_slice %17 {offsets = [0, 1], sizes = [8, 8], strides = [1, 1]} : vector<14x14xf32> to vector<8x8xf32>
    %34 = vector.broadcast %31 : f32 to vector<8x8xf32>
    %35 = arith.mulf %34, %33 : vector<8x8xf32>
    %36 = arith.addf %30, %35 : vector<8x8xf32>
    %37 = vector.extract_strided_slice %19 {offsets = [0, 1], sizes = [8, 8], strides = [1, 1]} : vector<14x14xf32> to vector<8x8xf32>
    %38 = vector.broadcast %32 : f32 to vector<8x8xf32>
    %39 = arith.mulf %38, %37 : vector<8x8xf32>
    %40 = arith.addf %36, %39 : vector<8x8xf32>
    %c0_25 = arith.constant 0 : index
    %c2 = arith.constant 2 : index
    %41 = memref.load %arg2[%c0_25, %c2] : memref<2x49xf32, #tpu.memory_space<smem>>
    %c1_26 = arith.constant 1 : index
    %c2_27 = arith.constant 2 : index
    %42 = memref.load %arg2[%c1_26, %c2_27] : memref<2x49xf32, #tpu.memory_space<smem>>
    %43 = vector.extract_strided_slice %17 {offsets = [0, 2], sizes = [8, 8], strides = [1, 1]} : vector<14x14xf32> to vector<8x8xf32>
    %44 = vector.broadcast %41 : f32 to vector<8x8xf32>
    %45 = arith.mulf %44, %43 : vector<8x8xf32>
    %46 = arith.addf %40, %45 : vector<8x8xf32>
    %47 = vector.extract_strided_slice %19 {offsets = [0, 2], sizes = [8, 8], strides = [1, 1]} : vector<14x14xf32> to vector<8x8xf32>
    %48 = vector.broadcast %42 : f32 to vector<8x8xf32>
    %49 = arith.mulf %48, %47 : vector<8x8xf32>
    %50 = arith.addf %46, %49 : vector<8x8xf32>
    %c0_28 = arith.constant 0 : index
    %c3_29 = arith.constant 3 : index
    %51 = memref.load %arg2[%c0_28, %c3_29] : memref<2x49xf32, #tpu.memory_space<smem>>
    %c1_30 = arith.constant 1 : index
    %c3_31 = arith.constant 3 : index
    %52 = memref.load %arg2[%c1_30, %c3_31] : memref<2x49xf32, #tpu.memory_space<smem>>
    %53 = vector.extract_strided_slice %17 {offsets = [0, 3], sizes = [8, 8], strides = [1, 1]} : vector<14x14xf32> to vector<8x8xf32>
    %54 = vector.broadcast %51 : f32 to vector<8x8xf32>
    %55 = arith.mulf %54, %53 : vector<8x8xf32>
    %56 = arith.addf %50, %55 : vector<8x8xf32>
    %57 = vector.extract_strided_slice %19 {offsets = [0, 3], sizes = [8, 8], strides = [1, 1]} : vector<14x14xf32> to vector<8x8xf32>
    %58 = vector.broadcast %52 : f32 to vector<8x8xf32>
    %59 = arith.mulf %58, %57 : vector<8x8xf32>
    %60 = arith.addf %56, %59 : vector<8x8xf32>
    %c0_32 = arith.constant 0 : index
    %c4 = arith.constant 4 : index
    %61 = memref.load %arg2[%c0_32, %c4] : memref<2x49xf32, #tpu.memory_space<smem>>
    %c1_33 = arith.constant 1 : index
    %c4_34 = arith.constant 4 : index
    %62 = memref.load %arg2[%c1_33, %c4_34] : memref<2x49xf32, #tpu.memory_space<smem>>
    %63 = vector.extract_strided_slice %17 {offsets = [0, 4], sizes = [8, 8], strides = [1, 1]} : vector<14x14xf32> to vector<8x8xf32>
    %64 = vector.broadcast %61 : f32 to vector<8x8xf32>
    %65 = arith.mulf %64, %63 : vector<8x8xf32>
    %66 = arith.addf %60, %65 : vector<8x8xf32>
    %67 = vector.extract_strided_slice %19 {offsets = [0, 4], sizes = [8, 8], strides = [1, 1]} : vector<14x14xf32> to vector<8x8xf32>
    %68 = vector.broadcast %62 : f32 to vector<8x8xf32>
    %69 = arith.mulf %68, %67 : vector<8x8xf32>
    %70 = arith.addf %66, %69 : vector<8x8xf32>
    %c0_35 = arith.constant 0 : index
    %c5 = arith.constant 5 : index
    %71 = memref.load %arg2[%c0_35, %c5] : memref<2x49xf32, #tpu.memory_space<smem>>
    %c1_36 = arith.constant 1 : index
    %c5_37 = arith.constant 5 : index
    %72 = memref.load %arg2[%c1_36, %c5_37] : memref<2x49xf32, #tpu.memory_space<smem>>
    %73 = vector.extract_strided_slice %17 {offsets = [0, 5], sizes = [8, 8], strides = [1, 1]} : vector<14x14xf32> to vector<8x8xf32>
    %74 = vector.broadcast %71 : f32 to vector<8x8xf32>
    %75 = arith.mulf %74, %73 : vector<8x8xf32>
    %76 = arith.addf %70, %75 : vector<8x8xf32>
    %77 = vector.extract_strided_slice %19 {offsets = [0, 5], sizes = [8, 8], strides = [1, 1]} : vector<14x14xf32> to vector<8x8xf32>
    %78 = vector.broadcast %72 : f32 to vector<8x8xf32>
    %79 = arith.mulf %78, %77 : vector<8x8xf32>
    %80 = arith.addf %76, %79 : vector<8x8xf32>
    %c0_38 = arith.constant 0 : index
    %c6 = arith.constant 6 : index
    %81 = memref.load %arg2[%c0_38, %c6] : memref<2x49xf32, #tpu.memory_space<smem>>
    %c1_39 = arith.constant 1 : index
    %c6_40 = arith.constant 6 : index
    %82 = memref.load %arg2[%c1_39, %c6_40] : memref<2x49xf32, #tpu.memory_space<smem>>
    %83 = vector.extract_strided_slice %17 {offsets = [0, 6], sizes = [8, 8], strides = [1, 1]} : vector<14x14xf32> to vector<8x8xf32>
    %84 = vector.broadcast %81 : f32 to vector<8x8xf32>
    %85 = arith.mulf %84, %83 : vector<8x8xf32>
    %86 = arith.addf %80, %85 : vector<8x8xf32>
    %87 = vector.extract_strided_slice %19 {offsets = [0, 6], sizes = [8, 8], strides = [1, 1]} : vector<14x14xf32> to vector<8x8xf32>
    %88 = vector.broadcast %82 : f32 to vector<8x8xf32>
    %89 = arith.mulf %88, %87 : vector<8x8xf32>
    %90 = arith.addf %86, %89 : vector<8x8xf32>
    %c0_41 = arith.constant 0 : index
    %c7 = arith.constant 7 : index
    %91 = memref.load %arg2[%c0_41, %c7] : memref<2x49xf32, #tpu.memory_space<smem>>
    %c1_42 = arith.constant 1 : index
    %c7_43 = arith.constant 7 : index
    %92 = memref.load %arg2[%c1_42, %c7_43] : memref<2x49xf32, #tpu.memory_space<smem>>
    %93 = vector.extract_strided_slice %17 {offsets = [1, 0], sizes = [8, 8], strides = [1, 1]} : vector<14x14xf32> to vector<8x8xf32>
    %94 = vector.broadcast %91 : f32 to vector<8x8xf32>
    %95 = arith.mulf %94, %93 : vector<8x8xf32>
    %96 = arith.addf %90, %95 : vector<8x8xf32>
    %97 = vector.extract_strided_slice %19 {offsets = [1, 0], sizes = [8, 8], strides = [1, 1]} : vector<14x14xf32> to vector<8x8xf32>
    %98 = vector.broadcast %92 : f32 to vector<8x8xf32>
    %99 = arith.mulf %98, %97 : vector<8x8xf32>
    %100 = arith.addf %96, %99 : vector<8x8xf32>
    %c0_44 = arith.constant 0 : index
    %c8 = arith.constant 8 : index
    %101 = memref.load %arg2[%c0_44, %c8] : memref<2x49xf32, #tpu.memory_space<smem>>
    %c1_45 = arith.constant 1 : index
    %c8_46 = arith.constant 8 : index
    %102 = memref.load %arg2[%c1_45, %c8_46] : memref<2x49xf32, #tpu.memory_space<smem>>
    %103 = vector.extract_strided_slice %17 {offsets = [1, 1], sizes = [8, 8], strides = [1, 1]} : vector<14x14xf32> to vector<8x8xf32>
    %104 = vector.broadcast %101 : f32 to vector<8x8xf32>
    %105 = arith.mulf %104, %103 : vector<8x8xf32>
    %106 = arith.addf %100, %105 : vector<8x8xf32>
    %107 = vector.extract_strided_slice %19 {offsets = [1, 1], sizes = [8, 8], strides = [1, 1]} : vector<14x14xf32> to vector<8x8xf32>
    %108 = vector.broadcast %102 : f32 to vector<8x8xf32>
    %109 = arith.mulf %108, %107 : vector<8x8xf32>
    %110 = arith.addf %106, %109 : vector<8x8xf32>
    %c0_47 = arith.constant 0 : index
    %c9 = arith.constant 9 : index
    %111 = memref.load %arg2[%c0_47, %c9] : memref<2x49xf32, #tpu.memory_space<smem>>
    %c1_48 = arith.constant 1 : index
    %c9_49 = arith.constant 9 : index
    %112 = memref.load %arg2[%c1_48, %c9_49] : memref<2x49xf32, #tpu.memory_space<smem>>
    %113 = vector.extract_strided_slice %17 {offsets = [1, 2], sizes = [8, 8], strides = [1, 1]} : vector<14x14xf32> to vector<8x8xf32>
    %114 = vector.broadcast %111 : f32 to vector<8x8xf32>
    %115 = arith.mulf %114, %113 : vector<8x8xf32>
    %116 = arith.addf %110, %115 : vector<8x8xf32>
    %117 = vector.extract_strided_slice %19 {offsets = [1, 2], sizes = [8, 8], strides = [1, 1]} : vector<14x14xf32> to vector<8x8xf32>
    %118 = vector.broadcast %112 : f32 to vector<8x8xf32>
    %119 = arith.mulf %118, %117 : vector<8x8xf32>
    %120 = arith.addf %116, %119 : vector<8x8xf32>
    %c0_50 = arith.constant 0 : index
    %c10 = arith.constant 10 : index
    %121 = memref.load %arg2[%c0_50, %c10] : memref<2x49xf32, #tpu.memory_space<smem>>
    %c1_51 = arith.constant 1 : index
    %c10_52 = arith.constant 10 : index
    %122 = memref.load %arg2[%c1_51, %c10_52] : memref<2x49xf32, #tpu.memory_space<smem>>
    %123 = vector.extract_strided_slice %17 {offsets = [1, 3], sizes = [8, 8], strides = [1, 1]} : vector<14x14xf32> to vector<8x8xf32>
    %124 = vector.broadcast %121 : f32 to vector<8x8xf32>
    %125 = arith.mulf %124, %123 : vector<8x8xf32>
    %126 = arith.addf %120, %125 : vector<8x8xf32>
    %127 = vector.extract_strided_slice %19 {offsets = [1, 3], sizes = [8, 8], strides = [1, 1]} : vector<14x14xf32> to vector<8x8xf32>
    %128 = vector.broadcast %122 : f32 to vector<8x8xf32>
    %129 = arith.mulf %128, %127 : vector<8x8xf32>
    %130 = arith.addf %126, %129 : vector<8x8xf32>
    %c0_53 = arith.constant 0 : index
    %c11 = arith.constant 11 : index
    %131 = memref.load %arg2[%c0_53, %c11] : memref<2x49xf32, #tpu.memory_space<smem>>
    %c1_54 = arith.constant 1 : index
    %c11_55 = arith.constant 11 : index
    %132 = memref.load %arg2[%c1_54, %c11_55] : memref<2x49xf32, #tpu.memory_space<smem>>
    %133 = vector.extract_strided_slice %17 {offsets = [1, 4], sizes = [8, 8], strides = [1, 1]} : vector<14x14xf32> to vector<8x8xf32>
    %134 = vector.broadcast %131 : f32 to vector<8x8xf32>
    %135 = arith.mulf %134, %133 : vector<8x8xf32>
    %136 = arith.addf %130, %135 : vector<8x8xf32>
    %137 = vector.extract_strided_slice %19 {offsets = [1, 4], sizes = [8, 8], strides = [1, 1]} : vector<14x14xf32> to vector<8x8xf32>
    %138 = vector.broadcast %132 : f32 to vector<8x8xf32>
    %139 = arith.mulf %138, %137 : vector<8x8xf32>
    %140 = arith.addf %136, %139 : vector<8x8xf32>
    %c0_56 = arith.constant 0 : index
    %c12 = arith.constant 12 : index
    %141 = memref.load %arg2[%c0_56, %c12] : memref<2x49xf32, #tpu.memory_space<smem>>
    %c1_57 = arith.constant 1 : index
    %c12_58 = arith.constant 12 : index
    %142 = memref.load %arg2[%c1_57, %c12_58] : memref<2x49xf32, #tpu.memory_space<smem>>
    %143 = vector.extract_strided_slice %17 {offsets = [1, 5], sizes = [8, 8], strides = [1, 1]} : vector<14x14xf32> to vector<8x8xf32>
    %144 = vector.broadcast %141 : f32 to vector<8x8xf32>
    %145 = arith.mulf %144, %143 : vector<8x8xf32>
    %146 = arith.addf %140, %145 : vector<8x8xf32>
    %147 = vector.extract_strided_slice %19 {offsets = [1, 5], sizes = [8, 8], strides = [1, 1]} : vector<14x14xf32> to vector<8x8xf32>
    %148 = vector.broadcast %142 : f32 to vector<8x8xf32>
    %149 = arith.mulf %148, %147 : vector<8x8xf32>
    %150 = arith.addf %146, %149 : vector<8x8xf32>
    %c0_59 = arith.constant 0 : index
    %c13 = arith.constant 13 : index
    %151 = memref.load %arg2[%c0_59, %c13] : memref<2x49xf32, #tpu.memory_space<smem>>
    %c1_60 = arith.constant 1 : index
    %c13_61 = arith.constant 13 : index
    %152 = memref.load %arg2[%c1_60, %c13_61] : memref<2x49xf32, #tpu.memory_space<smem>>
    %153 = vector.extract_strided_slice %17 {offsets = [1, 6], sizes = [8, 8], strides = [1, 1]} : vector<14x14xf32> to vector<8x8xf32>
    %154 = vector.broadcast %151 : f32 to vector<8x8xf32>
    %155 = arith.mulf %154, %153 : vector<8x8xf32>
    %156 = arith.addf %150, %155 : vector<8x8xf32>
    %157 = vector.extract_strided_slice %19 {offsets = [1, 6], sizes = [8, 8], strides = [1, 1]} : vector<14x14xf32> to vector<8x8xf32>
    %158 = vector.broadcast %152 : f32 to vector<8x8xf32>
    %159 = arith.mulf %158, %157 : vector<8x8xf32>
    %160 = arith.addf %156, %159 : vector<8x8xf32>
    %c0_62 = arith.constant 0 : index
    %c14 = arith.constant 14 : index
    %161 = memref.load %arg2[%c0_62, %c14] : memref<2x49xf32, #tpu.memory_space<smem>>
    %c1_63 = arith.constant 1 : index
    %c14_64 = arith.constant 14 : index
    %162 = memref.load %arg2[%c1_63, %c14_64] : memref<2x49xf32, #tpu.memory_space<smem>>
    %163 = vector.extract_strided_slice %17 {offsets = [2, 0], sizes = [8, 8], strides = [1, 1]} : vector<14x14xf32> to vector<8x8xf32>
    %164 = vector.broadcast %161 : f32 to vector<8x8xf32>
    %165 = arith.mulf %164, %163 : vector<8x8xf32>
    %166 = arith.addf %160, %165 : vector<8x8xf32>
    %167 = vector.extract_strided_slice %19 {offsets = [2, 0], sizes = [8, 8], strides = [1, 1]} : vector<14x14xf32> to vector<8x8xf32>
    %168 = vector.broadcast %162 : f32 to vector<8x8xf32>
    %169 = arith.mulf %168, %167 : vector<8x8xf32>
    %170 = arith.addf %166, %169 : vector<8x8xf32>
    %c0_65 = arith.constant 0 : index
    %c15 = arith.constant 15 : index
    %171 = memref.load %arg2[%c0_65, %c15] : memref<2x49xf32, #tpu.memory_space<smem>>
    %c1_66 = arith.constant 1 : index
    %c15_67 = arith.constant 15 : index
    %172 = memref.load %arg2[%c1_66, %c15_67] : memref<2x49xf32, #tpu.memory_space<smem>>
    %173 = vector.extract_strided_slice %17 {offsets = [2, 1], sizes = [8, 8], strides = [1, 1]} : vector<14x14xf32> to vector<8x8xf32>
    %174 = vector.broadcast %171 : f32 to vector<8x8xf32>
    %175 = arith.mulf %174, %173 : vector<8x8xf32>
    %176 = arith.addf %170, %175 : vector<8x8xf32>
    %177 = vector.extract_strided_slice %19 {offsets = [2, 1], sizes = [8, 8], strides = [1, 1]} : vector<14x14xf32> to vector<8x8xf32>
    %178 = vector.broadcast %172 : f32 to vector<8x8xf32>
    %179 = arith.mulf %178, %177 : vector<8x8xf32>
    %180 = arith.addf %176, %179 : vector<8x8xf32>
    %c0_68 = arith.constant 0 : index
    %c16 = arith.constant 16 : index
    %181 = memref.load %arg2[%c0_68, %c16] : memref<2x49xf32, #tpu.memory_space<smem>>
    %c1_69 = arith.constant 1 : index
    %c16_70 = arith.constant 16 : index
    %182 = memref.load %arg2[%c1_69, %c16_70] : memref<2x49xf32, #tpu.memory_space<smem>>
    %183 = vector.extract_strided_slice %17 {offsets = [2, 2], sizes = [8, 8], strides = [1, 1]} : vector<14x14xf32> to vector<8x8xf32>
    %184 = vector.broadcast %181 : f32 to vector<8x8xf32>
    %185 = arith.mulf %184, %183 : vector<8x8xf32>
    %186 = arith.addf %180, %185 : vector<8x8xf32>
    %187 = vector.extract_strided_slice %19 {offsets = [2, 2], sizes = [8, 8], strides = [1, 1]} : vector<14x14xf32> to vector<8x8xf32>
    %188 = vector.broadcast %182 : f32 to vector<8x8xf32>
    %189 = arith.mulf %188, %187 : vector<8x8xf32>
    %190 = arith.addf %186, %189 : vector<8x8xf32>
    %c0_71 = arith.constant 0 : index
    %c17 = arith.constant 17 : index
    %191 = memref.load %arg2[%c0_71, %c17] : memref<2x49xf32, #tpu.memory_space<smem>>
    %c1_72 = arith.constant 1 : index
    %c17_73 = arith.constant 17 : index
    %192 = memref.load %arg2[%c1_72, %c17_73] : memref<2x49xf32, #tpu.memory_space<smem>>
    %193 = vector.extract_strided_slice %17 {offsets = [2, 3], sizes = [8, 8], strides = [1, 1]} : vector<14x14xf32> to vector<8x8xf32>
    %194 = vector.broadcast %191 : f32 to vector<8x8xf32>
    %195 = arith.mulf %194, %193 : vector<8x8xf32>
    %196 = arith.addf %190, %195 : vector<8x8xf32>
    %197 = vector.extract_strided_slice %19 {offsets = [2, 3], sizes = [8, 8], strides = [1, 1]} : vector<14x14xf32> to vector<8x8xf32>
    %198 = vector.broadcast %192 : f32 to vector<8x8xf32>
    %199 = arith.mulf %198, %197 : vector<8x8xf32>
    %200 = arith.addf %196, %199 : vector<8x8xf32>
    %c0_74 = arith.constant 0 : index
    %c18 = arith.constant 18 : index
    %201 = memref.load %arg2[%c0_74, %c18] : memref<2x49xf32, #tpu.memory_space<smem>>
    %c1_75 = arith.constant 1 : index
    %c18_76 = arith.constant 18 : index
    %202 = memref.load %arg2[%c1_75, %c18_76] : memref<2x49xf32, #tpu.memory_space<smem>>
    %203 = vector.extract_strided_slice %17 {offsets = [2, 4], sizes = [8, 8], strides = [1, 1]} : vector<14x14xf32> to vector<8x8xf32>
    %204 = vector.broadcast %201 : f32 to vector<8x8xf32>
    %205 = arith.mulf %204, %203 : vector<8x8xf32>
    %206 = arith.addf %200, %205 : vector<8x8xf32>
    %207 = vector.extract_strided_slice %19 {offsets = [2, 4], sizes = [8, 8], strides = [1, 1]} : vector<14x14xf32> to vector<8x8xf32>
    %208 = vector.broadcast %202 : f32 to vector<8x8xf32>
    %209 = arith.mulf %208, %207 : vector<8x8xf32>
    %210 = arith.addf %206, %209 : vector<8x8xf32>
    %c0_77 = arith.constant 0 : index
    %c19 = arith.constant 19 : index
    %211 = memref.load %arg2[%c0_77, %c19] : memref<2x49xf32, #tpu.memory_space<smem>>
    %c1_78 = arith.constant 1 : index
    %c19_79 = arith.constant 19 : index
    %212 = memref.load %arg2[%c1_78, %c19_79] : memref<2x49xf32, #tpu.memory_space<smem>>
    %213 = vector.extract_strided_slice %17 {offsets = [2, 5], sizes = [8, 8], strides = [1, 1]} : vector<14x14xf32> to vector<8x8xf32>
    %214 = vector.broadcast %211 : f32 to vector<8x8xf32>
    %215 = arith.mulf %214, %213 : vector<8x8xf32>
    %216 = arith.addf %210, %215 : vector<8x8xf32>
    %217 = vector.extract_strided_slice %19 {offsets = [2, 5], sizes = [8, 8], strides = [1, 1]} : vector<14x14xf32> to vector<8x8xf32>
    %218 = vector.broadcast %212 : f32 to vector<8x8xf32>
    %219 = arith.mulf %218, %217 : vector<8x8xf32>
    %220 = arith.addf %216, %219 : vector<8x8xf32>
    %c0_80 = arith.constant 0 : index
    %c20 = arith.constant 20 : index
    %221 = memref.load %arg2[%c0_80, %c20] : memref<2x49xf32, #tpu.memory_space<smem>>
    %c1_81 = arith.constant 1 : index
    %c20_82 = arith.constant 20 : index
    %222 = memref.load %arg2[%c1_81, %c20_82] : memref<2x49xf32, #tpu.memory_space<smem>>
    %223 = vector.extract_strided_slice %17 {offsets = [2, 6], sizes = [8, 8], strides = [1, 1]} : vector<14x14xf32> to vector<8x8xf32>
    %224 = vector.broadcast %221 : f32 to vector<8x8xf32>
    %225 = arith.mulf %224, %223 : vector<8x8xf32>
    %226 = arith.addf %220, %225 : vector<8x8xf32>
    %227 = vector.extract_strided_slice %19 {offsets = [2, 6], sizes = [8, 8], strides = [1, 1]} : vector<14x14xf32> to vector<8x8xf32>
    %228 = vector.broadcast %222 : f32 to vector<8x8xf32>
    %229 = arith.mulf %228, %227 : vector<8x8xf32>
    %230 = arith.addf %226, %229 : vector<8x8xf32>
    %c0_83 = arith.constant 0 : index
    %c21 = arith.constant 21 : index
    %231 = memref.load %arg2[%c0_83, %c21] : memref<2x49xf32, #tpu.memory_space<smem>>
    %c1_84 = arith.constant 1 : index
    %c21_85 = arith.constant 21 : index
    %232 = memref.load %arg2[%c1_84, %c21_85] : memref<2x49xf32, #tpu.memory_space<smem>>
    %233 = vector.extract_strided_slice %17 {offsets = [3, 0], sizes = [8, 8], strides = [1, 1]} : vector<14x14xf32> to vector<8x8xf32>
    %234 = vector.broadcast %231 : f32 to vector<8x8xf32>
    %235 = arith.mulf %234, %233 : vector<8x8xf32>
    %236 = arith.addf %230, %235 : vector<8x8xf32>
    %237 = vector.extract_strided_slice %19 {offsets = [3, 0], sizes = [8, 8], strides = [1, 1]} : vector<14x14xf32> to vector<8x8xf32>
    %238 = vector.broadcast %232 : f32 to vector<8x8xf32>
    %239 = arith.mulf %238, %237 : vector<8x8xf32>
    %240 = arith.addf %236, %239 : vector<8x8xf32>
    %c0_86 = arith.constant 0 : index
    %c22 = arith.constant 22 : index
    %241 = memref.load %arg2[%c0_86, %c22] : memref<2x49xf32, #tpu.memory_space<smem>>
    %c1_87 = arith.constant 1 : index
    %c22_88 = arith.constant 22 : index
    %242 = memref.load %arg2[%c1_87, %c22_88] : memref<2x49xf32, #tpu.memory_space<smem>>
    %243 = vector.extract_strided_slice %17 {offsets = [3, 1], sizes = [8, 8], strides = [1, 1]} : vector<14x14xf32> to vector<8x8xf32>
    %244 = vector.broadcast %241 : f32 to vector<8x8xf32>
    %245 = arith.mulf %244, %243 : vector<8x8xf32>
    %246 = arith.addf %240, %245 : vector<8x8xf32>
    %247 = vector.extract_strided_slice %19 {offsets = [3, 1], sizes = [8, 8], strides = [1, 1]} : vector<14x14xf32> to vector<8x8xf32>
    %248 = vector.broadcast %242 : f32 to vector<8x8xf32>
    %249 = arith.mulf %248, %247 : vector<8x8xf32>
    %250 = arith.addf %246, %249 : vector<8x8xf32>
    %c0_89 = arith.constant 0 : index
    %c23 = arith.constant 23 : index
    %251 = memref.load %arg2[%c0_89, %c23] : memref<2x49xf32, #tpu.memory_space<smem>>
    %c1_90 = arith.constant 1 : index
    %c23_91 = arith.constant 23 : index
    %252 = memref.load %arg2[%c1_90, %c23_91] : memref<2x49xf32, #tpu.memory_space<smem>>
    %253 = vector.extract_strided_slice %17 {offsets = [3, 2], sizes = [8, 8], strides = [1, 1]} : vector<14x14xf32> to vector<8x8xf32>
    %254 = vector.broadcast %251 : f32 to vector<8x8xf32>
    %255 = arith.mulf %254, %253 : vector<8x8xf32>
    %256 = arith.addf %250, %255 : vector<8x8xf32>
    %257 = vector.extract_strided_slice %19 {offsets = [3, 2], sizes = [8, 8], strides = [1, 1]} : vector<14x14xf32> to vector<8x8xf32>
    %258 = vector.broadcast %252 : f32 to vector<8x8xf32>
    %259 = arith.mulf %258, %257 : vector<8x8xf32>
    %260 = arith.addf %256, %259 : vector<8x8xf32>
    %c0_92 = arith.constant 0 : index
    %c24 = arith.constant 24 : index
    %261 = memref.load %arg2[%c0_92, %c24] : memref<2x49xf32, #tpu.memory_space<smem>>
    %c1_93 = arith.constant 1 : index
    %c24_94 = arith.constant 24 : index
    %262 = memref.load %arg2[%c1_93, %c24_94] : memref<2x49xf32, #tpu.memory_space<smem>>
    %263 = vector.extract_strided_slice %17 {offsets = [3, 3], sizes = [8, 8], strides = [1, 1]} : vector<14x14xf32> to vector<8x8xf32>
    %264 = vector.broadcast %261 : f32 to vector<8x8xf32>
    %265 = arith.mulf %264, %263 : vector<8x8xf32>
    %266 = arith.addf %260, %265 : vector<8x8xf32>
    %267 = vector.extract_strided_slice %19 {offsets = [3, 3], sizes = [8, 8], strides = [1, 1]} : vector<14x14xf32> to vector<8x8xf32>
    %268 = vector.broadcast %262 : f32 to vector<8x8xf32>
    %269 = arith.mulf %268, %267 : vector<8x8xf32>
    %270 = arith.addf %266, %269 : vector<8x8xf32>
    %c0_95 = arith.constant 0 : index
    %c25 = arith.constant 25 : index
    %271 = memref.load %arg2[%c0_95, %c25] : memref<2x49xf32, #tpu.memory_space<smem>>
    %c1_96 = arith.constant 1 : index
    %c25_97 = arith.constant 25 : index
    %272 = memref.load %arg2[%c1_96, %c25_97] : memref<2x49xf32, #tpu.memory_space<smem>>
    %273 = vector.extract_strided_slice %17 {offsets = [3, 4], sizes = [8, 8], strides = [1, 1]} : vector<14x14xf32> to vector<8x8xf32>
    %274 = vector.broadcast %271 : f32 to vector<8x8xf32>
    %275 = arith.mulf %274, %273 : vector<8x8xf32>
    %276 = arith.addf %270, %275 : vector<8x8xf32>
    %277 = vector.extract_strided_slice %19 {offsets = [3, 4], sizes = [8, 8], strides = [1, 1]} : vector<14x14xf32> to vector<8x8xf32>
    %278 = vector.broadcast %272 : f32 to vector<8x8xf32>
    %279 = arith.mulf %278, %277 : vector<8x8xf32>
    %280 = arith.addf %276, %279 : vector<8x8xf32>
    %c0_98 = arith.constant 0 : index
    %c26 = arith.constant 26 : index
    %281 = memref.load %arg2[%c0_98, %c26] : memref<2x49xf32, #tpu.memory_space<smem>>
    %c1_99 = arith.constant 1 : index
    %c26_100 = arith.constant 26 : index
    %282 = memref.load %arg2[%c1_99, %c26_100] : memref<2x49xf32, #tpu.memory_space<smem>>
    %283 = vector.extract_strided_slice %17 {offsets = [3, 5], sizes = [8, 8], strides = [1, 1]} : vector<14x14xf32> to vector<8x8xf32>
    %284 = vector.broadcast %281 : f32 to vector<8x8xf32>
    %285 = arith.mulf %284, %283 : vector<8x8xf32>
    %286 = arith.addf %280, %285 : vector<8x8xf32>
    %287 = vector.extract_strided_slice %19 {offsets = [3, 5], sizes = [8, 8], strides = [1, 1]} : vector<14x14xf32> to vector<8x8xf32>
    %288 = vector.broadcast %282 : f32 to vector<8x8xf32>
    %289 = arith.mulf %288, %287 : vector<8x8xf32>
    %290 = arith.addf %286, %289 : vector<8x8xf32>
    %c0_101 = arith.constant 0 : index
    %c27 = arith.constant 27 : index
    %291 = memref.load %arg2[%c0_101, %c27] : memref<2x49xf32, #tpu.memory_space<smem>>
    %c1_102 = arith.constant 1 : index
    %c27_103 = arith.constant 27 : index
    %292 = memref.load %arg2[%c1_102, %c27_103] : memref<2x49xf32, #tpu.memory_space<smem>>
    %293 = vector.extract_strided_slice %17 {offsets = [3, 6], sizes = [8, 8], strides = [1, 1]} : vector<14x14xf32> to vector<8x8xf32>
    %294 = vector.broadcast %291 : f32 to vector<8x8xf32>
    %295 = arith.mulf %294, %293 : vector<8x8xf32>
    %296 = arith.addf %290, %295 : vector<8x8xf32>
    %297 = vector.extract_strided_slice %19 {offsets = [3, 6], sizes = [8, 8], strides = [1, 1]} : vector<14x14xf32> to vector<8x8xf32>
    %298 = vector.broadcast %292 : f32 to vector<8x8xf32>
    %299 = arith.mulf %298, %297 : vector<8x8xf32>
    %300 = arith.addf %296, %299 : vector<8x8xf32>
    %c0_104 = arith.constant 0 : index
    %c28 = arith.constant 28 : index
    %301 = memref.load %arg2[%c0_104, %c28] : memref<2x49xf32, #tpu.memory_space<smem>>
    %c1_105 = arith.constant 1 : index
    %c28_106 = arith.constant 28 : index
    %302 = memref.load %arg2[%c1_105, %c28_106] : memref<2x49xf32, #tpu.memory_space<smem>>
    %303 = vector.extract_strided_slice %17 {offsets = [4, 0], sizes = [8, 8], strides = [1, 1]} : vector<14x14xf32> to vector<8x8xf32>
    %304 = vector.broadcast %301 : f32 to vector<8x8xf32>
    %305 = arith.mulf %304, %303 : vector<8x8xf32>
    %306 = arith.addf %300, %305 : vector<8x8xf32>
    %307 = vector.extract_strided_slice %19 {offsets = [4, 0], sizes = [8, 8], strides = [1, 1]} : vector<14x14xf32> to vector<8x8xf32>
    %308 = vector.broadcast %302 : f32 to vector<8x8xf32>
    %309 = arith.mulf %308, %307 : vector<8x8xf32>
    %310 = arith.addf %306, %309 : vector<8x8xf32>
    %c0_107 = arith.constant 0 : index
    %c29 = arith.constant 29 : index
    %311 = memref.load %arg2[%c0_107, %c29] : memref<2x49xf32, #tpu.memory_space<smem>>
    %c1_108 = arith.constant 1 : index
    %c29_109 = arith.constant 29 : index
    %312 = memref.load %arg2[%c1_108, %c29_109] : memref<2x49xf32, #tpu.memory_space<smem>>
    %313 = vector.extract_strided_slice %17 {offsets = [4, 1], sizes = [8, 8], strides = [1, 1]} : vector<14x14xf32> to vector<8x8xf32>
    %314 = vector.broadcast %311 : f32 to vector<8x8xf32>
    %315 = arith.mulf %314, %313 : vector<8x8xf32>
    %316 = arith.addf %310, %315 : vector<8x8xf32>
    %317 = vector.extract_strided_slice %19 {offsets = [4, 1], sizes = [8, 8], strides = [1, 1]} : vector<14x14xf32> to vector<8x8xf32>
    %318 = vector.broadcast %312 : f32 to vector<8x8xf32>
    %319 = arith.mulf %318, %317 : vector<8x8xf32>
    %320 = arith.addf %316, %319 : vector<8x8xf32>
    %c0_110 = arith.constant 0 : index
    %c30 = arith.constant 30 : index
    %321 = memref.load %arg2[%c0_110, %c30] : memref<2x49xf32, #tpu.memory_space<smem>>
    %c1_111 = arith.constant 1 : index
    %c30_112 = arith.constant 30 : index
    %322 = memref.load %arg2[%c1_111, %c30_112] : memref<2x49xf32, #tpu.memory_space<smem>>
    %323 = vector.extract_strided_slice %17 {offsets = [4, 2], sizes = [8, 8], strides = [1, 1]} : vector<14x14xf32> to vector<8x8xf32>
    %324 = vector.broadcast %321 : f32 to vector<8x8xf32>
    %325 = arith.mulf %324, %323 : vector<8x8xf32>
    %326 = arith.addf %320, %325 : vector<8x8xf32>
    %327 = vector.extract_strided_slice %19 {offsets = [4, 2], sizes = [8, 8], strides = [1, 1]} : vector<14x14xf32> to vector<8x8xf32>
    %328 = vector.broadcast %322 : f32 to vector<8x8xf32>
    %329 = arith.mulf %328, %327 : vector<8x8xf32>
    %330 = arith.addf %326, %329 : vector<8x8xf32>
    %c0_113 = arith.constant 0 : index
    %c31 = arith.constant 31 : index
    %331 = memref.load %arg2[%c0_113, %c31] : memref<2x49xf32, #tpu.memory_space<smem>>
    %c1_114 = arith.constant 1 : index
    %c31_115 = arith.constant 31 : index
    %332 = memref.load %arg2[%c1_114, %c31_115] : memref<2x49xf32, #tpu.memory_space<smem>>
    %333 = vector.extract_strided_slice %17 {offsets = [4, 3], sizes = [8, 8], strides = [1, 1]} : vector<14x14xf32> to vector<8x8xf32>
    %334 = vector.broadcast %331 : f32 to vector<8x8xf32>
    %335 = arith.mulf %334, %333 : vector<8x8xf32>
    %336 = arith.addf %330, %335 : vector<8x8xf32>
    %337 = vector.extract_strided_slice %19 {offsets = [4, 3], sizes = [8, 8], strides = [1, 1]} : vector<14x14xf32> to vector<8x8xf32>
    %338 = vector.broadcast %332 : f32 to vector<8x8xf32>
    %339 = arith.mulf %338, %337 : vector<8x8xf32>
    %340 = arith.addf %336, %339 : vector<8x8xf32>
    %c0_116 = arith.constant 0 : index
    %c32 = arith.constant 32 : index
    %341 = memref.load %arg2[%c0_116, %c32] : memref<2x49xf32, #tpu.memory_space<smem>>
    %c1_117 = arith.constant 1 : index
    %c32_118 = arith.constant 32 : index
    %342 = memref.load %arg2[%c1_117, %c32_118] : memref<2x49xf32, #tpu.memory_space<smem>>
    %343 = vector.extract_strided_slice %17 {offsets = [4, 4], sizes = [8, 8], strides = [1, 1]} : vector<14x14xf32> to vector<8x8xf32>
    %344 = vector.broadcast %341 : f32 to vector<8x8xf32>
    %345 = arith.mulf %344, %343 : vector<8x8xf32>
    %346 = arith.addf %340, %345 : vector<8x8xf32>
    %347 = vector.extract_strided_slice %19 {offsets = [4, 4], sizes = [8, 8], strides = [1, 1]} : vector<14x14xf32> to vector<8x8xf32>
    %348 = vector.broadcast %342 : f32 to vector<8x8xf32>
    %349 = arith.mulf %348, %347 : vector<8x8xf32>
    %350 = arith.addf %346, %349 : vector<8x8xf32>
    %c0_119 = arith.constant 0 : index
    %c33 = arith.constant 33 : index
    %351 = memref.load %arg2[%c0_119, %c33] : memref<2x49xf32, #tpu.memory_space<smem>>
    %c1_120 = arith.constant 1 : index
    %c33_121 = arith.constant 33 : index
    %352 = memref.load %arg2[%c1_120, %c33_121] : memref<2x49xf32, #tpu.memory_space<smem>>
    %353 = vector.extract_strided_slice %17 {offsets = [4, 5], sizes = [8, 8], strides = [1, 1]} : vector<14x14xf32> to vector<8x8xf32>
    %354 = vector.broadcast %351 : f32 to vector<8x8xf32>
    %355 = arith.mulf %354, %353 : vector<8x8xf32>
    %356 = arith.addf %350, %355 : vector<8x8xf32>
    %357 = vector.extract_strided_slice %19 {offsets = [4, 5], sizes = [8, 8], strides = [1, 1]} : vector<14x14xf32> to vector<8x8xf32>
    %358 = vector.broadcast %352 : f32 to vector<8x8xf32>
    %359 = arith.mulf %358, %357 : vector<8x8xf32>
    %360 = arith.addf %356, %359 : vector<8x8xf32>
    %c0_122 = arith.constant 0 : index
    %c34 = arith.constant 34 : index
    %361 = memref.load %arg2[%c0_122, %c34] : memref<2x49xf32, #tpu.memory_space<smem>>
    %c1_123 = arith.constant 1 : index
    %c34_124 = arith.constant 34 : index
    %362 = memref.load %arg2[%c1_123, %c34_124] : memref<2x49xf32, #tpu.memory_space<smem>>
    %363 = vector.extract_strided_slice %17 {offsets = [4, 6], sizes = [8, 8], strides = [1, 1]} : vector<14x14xf32> to vector<8x8xf32>
    %364 = vector.broadcast %361 : f32 to vector<8x8xf32>
    %365 = arith.mulf %364, %363 : vector<8x8xf32>
    %366 = arith.addf %360, %365 : vector<8x8xf32>
    %367 = vector.extract_strided_slice %19 {offsets = [4, 6], sizes = [8, 8], strides = [1, 1]} : vector<14x14xf32> to vector<8x8xf32>
    %368 = vector.broadcast %362 : f32 to vector<8x8xf32>
    %369 = arith.mulf %368, %367 : vector<8x8xf32>
    %370 = arith.addf %366, %369 : vector<8x8xf32>
    %c0_125 = arith.constant 0 : index
    %c35 = arith.constant 35 : index
    %371 = memref.load %arg2[%c0_125, %c35] : memref<2x49xf32, #tpu.memory_space<smem>>
    %c1_126 = arith.constant 1 : index
    %c35_127 = arith.constant 35 : index
    %372 = memref.load %arg2[%c1_126, %c35_127] : memref<2x49xf32, #tpu.memory_space<smem>>
    %373 = vector.extract_strided_slice %17 {offsets = [5, 0], sizes = [8, 8], strides = [1, 1]} : vector<14x14xf32> to vector<8x8xf32>
    %374 = vector.broadcast %371 : f32 to vector<8x8xf32>
    %375 = arith.mulf %374, %373 : vector<8x8xf32>
    %376 = arith.addf %370, %375 : vector<8x8xf32>
    %377 = vector.extract_strided_slice %19 {offsets = [5, 0], sizes = [8, 8], strides = [1, 1]} : vector<14x14xf32> to vector<8x8xf32>
    %378 = vector.broadcast %372 : f32 to vector<8x8xf32>
    %379 = arith.mulf %378, %377 : vector<8x8xf32>
    %380 = arith.addf %376, %379 : vector<8x8xf32>
    %c0_128 = arith.constant 0 : index
    %c36 = arith.constant 36 : index
    %381 = memref.load %arg2[%c0_128, %c36] : memref<2x49xf32, #tpu.memory_space<smem>>
    %c1_129 = arith.constant 1 : index
    %c36_130 = arith.constant 36 : index
    %382 = memref.load %arg2[%c1_129, %c36_130] : memref<2x49xf32, #tpu.memory_space<smem>>
    %383 = vector.extract_strided_slice %17 {offsets = [5, 1], sizes = [8, 8], strides = [1, 1]} : vector<14x14xf32> to vector<8x8xf32>
    %384 = vector.broadcast %381 : f32 to vector<8x8xf32>
    %385 = arith.mulf %384, %383 : vector<8x8xf32>
    %386 = arith.addf %380, %385 : vector<8x8xf32>
    %387 = vector.extract_strided_slice %19 {offsets = [5, 1], sizes = [8, 8], strides = [1, 1]} : vector<14x14xf32> to vector<8x8xf32>
    %388 = vector.broadcast %382 : f32 to vector<8x8xf32>
    %389 = arith.mulf %388, %387 : vector<8x8xf32>
    %390 = arith.addf %386, %389 : vector<8x8xf32>
    %c0_131 = arith.constant 0 : index
    %c37 = arith.constant 37 : index
    %391 = memref.load %arg2[%c0_131, %c37] : memref<2x49xf32, #tpu.memory_space<smem>>
    %c1_132 = arith.constant 1 : index
    %c37_133 = arith.constant 37 : index
    %392 = memref.load %arg2[%c1_132, %c37_133] : memref<2x49xf32, #tpu.memory_space<smem>>
    %393 = vector.extract_strided_slice %17 {offsets = [5, 2], sizes = [8, 8], strides = [1, 1]} : vector<14x14xf32> to vector<8x8xf32>
    %394 = vector.broadcast %391 : f32 to vector<8x8xf32>
    %395 = arith.mulf %394, %393 : vector<8x8xf32>
    %396 = arith.addf %390, %395 : vector<8x8xf32>
    %397 = vector.extract_strided_slice %19 {offsets = [5, 2], sizes = [8, 8], strides = [1, 1]} : vector<14x14xf32> to vector<8x8xf32>
    %398 = vector.broadcast %392 : f32 to vector<8x8xf32>
    %399 = arith.mulf %398, %397 : vector<8x8xf32>
    %400 = arith.addf %396, %399 : vector<8x8xf32>
    %c0_134 = arith.constant 0 : index
    %c38 = arith.constant 38 : index
    %401 = memref.load %arg2[%c0_134, %c38] : memref<2x49xf32, #tpu.memory_space<smem>>
    %c1_135 = arith.constant 1 : index
    %c38_136 = arith.constant 38 : index
    %402 = memref.load %arg2[%c1_135, %c38_136] : memref<2x49xf32, #tpu.memory_space<smem>>
    %403 = vector.extract_strided_slice %17 {offsets = [5, 3], sizes = [8, 8], strides = [1, 1]} : vector<14x14xf32> to vector<8x8xf32>
    %404 = vector.broadcast %401 : f32 to vector<8x8xf32>
    %405 = arith.mulf %404, %403 : vector<8x8xf32>
    %406 = arith.addf %400, %405 : vector<8x8xf32>
    %407 = vector.extract_strided_slice %19 {offsets = [5, 3], sizes = [8, 8], strides = [1, 1]} : vector<14x14xf32> to vector<8x8xf32>
    %408 = vector.broadcast %402 : f32 to vector<8x8xf32>
    %409 = arith.mulf %408, %407 : vector<8x8xf32>
    %410 = arith.addf %406, %409 : vector<8x8xf32>
    %c0_137 = arith.constant 0 : index
    %c39 = arith.constant 39 : index
    %411 = memref.load %arg2[%c0_137, %c39] : memref<2x49xf32, #tpu.memory_space<smem>>
    %c1_138 = arith.constant 1 : index
    %c39_139 = arith.constant 39 : index
    %412 = memref.load %arg2[%c1_138, %c39_139] : memref<2x49xf32, #tpu.memory_space<smem>>
    %413 = vector.extract_strided_slice %17 {offsets = [5, 4], sizes = [8, 8], strides = [1, 1]} : vector<14x14xf32> to vector<8x8xf32>
    %414 = vector.broadcast %411 : f32 to vector<8x8xf32>
    %415 = arith.mulf %414, %413 : vector<8x8xf32>
    %416 = arith.addf %410, %415 : vector<8x8xf32>
    %417 = vector.extract_strided_slice %19 {offsets = [5, 4], sizes = [8, 8], strides = [1, 1]} : vector<14x14xf32> to vector<8x8xf32>
    %418 = vector.broadcast %412 : f32 to vector<8x8xf32>
    %419 = arith.mulf %418, %417 : vector<8x8xf32>
    %420 = arith.addf %416, %419 : vector<8x8xf32>
    %c0_140 = arith.constant 0 : index
    %c40 = arith.constant 40 : index
    %421 = memref.load %arg2[%c0_140, %c40] : memref<2x49xf32, #tpu.memory_space<smem>>
    %c1_141 = arith.constant 1 : index
    %c40_142 = arith.constant 40 : index
    %422 = memref.load %arg2[%c1_141, %c40_142] : memref<2x49xf32, #tpu.memory_space<smem>>
    %423 = vector.extract_strided_slice %17 {offsets = [5, 5], sizes = [8, 8], strides = [1, 1]} : vector<14x14xf32> to vector<8x8xf32>
    %424 = vector.broadcast %421 : f32 to vector<8x8xf32>
    %425 = arith.mulf %424, %423 : vector<8x8xf32>
    %426 = arith.addf %420, %425 : vector<8x8xf32>
    %427 = vector.extract_strided_slice %19 {offsets = [5, 5], sizes = [8, 8], strides = [1, 1]} : vector<14x14xf32> to vector<8x8xf32>
    %428 = vector.broadcast %422 : f32 to vector<8x8xf32>
    %429 = arith.mulf %428, %427 : vector<8x8xf32>
    %430 = arith.addf %426, %429 : vector<8x8xf32>
    %c0_143 = arith.constant 0 : index
    %c41 = arith.constant 41 : index
    %431 = memref.load %arg2[%c0_143, %c41] : memref<2x49xf32, #tpu.memory_space<smem>>
    %c1_144 = arith.constant 1 : index
    %c41_145 = arith.constant 41 : index
    %432 = memref.load %arg2[%c1_144, %c41_145] : memref<2x49xf32, #tpu.memory_space<smem>>
    %433 = vector.extract_strided_slice %17 {offsets = [5, 6], sizes = [8, 8], strides = [1, 1]} : vector<14x14xf32> to vector<8x8xf32>
    %434 = vector.broadcast %431 : f32 to vector<8x8xf32>
    %435 = arith.mulf %434, %433 : vector<8x8xf32>
    %436 = arith.addf %430, %435 : vector<8x8xf32>
    %437 = vector.extract_strided_slice %19 {offsets = [5, 6], sizes = [8, 8], strides = [1, 1]} : vector<14x14xf32> to vector<8x8xf32>
    %438 = vector.broadcast %432 : f32 to vector<8x8xf32>
    %439 = arith.mulf %438, %437 : vector<8x8xf32>
    %440 = arith.addf %436, %439 : vector<8x8xf32>
    %c0_146 = arith.constant 0 : index
    %c42 = arith.constant 42 : index
    %441 = memref.load %arg2[%c0_146, %c42] : memref<2x49xf32, #tpu.memory_space<smem>>
    %c1_147 = arith.constant 1 : index
    %c42_148 = arith.constant 42 : index
    %442 = memref.load %arg2[%c1_147, %c42_148] : memref<2x49xf32, #tpu.memory_space<smem>>
    %443 = vector.extract_strided_slice %17 {offsets = [6, 0], sizes = [8, 8], strides = [1, 1]} : vector<14x14xf32> to vector<8x8xf32>
    %444 = vector.broadcast %441 : f32 to vector<8x8xf32>
    %445 = arith.mulf %444, %443 : vector<8x8xf32>
    %446 = arith.addf %440, %445 : vector<8x8xf32>
    %447 = vector.extract_strided_slice %19 {offsets = [6, 0], sizes = [8, 8], strides = [1, 1]} : vector<14x14xf32> to vector<8x8xf32>
    %448 = vector.broadcast %442 : f32 to vector<8x8xf32>
    %449 = arith.mulf %448, %447 : vector<8x8xf32>
    %450 = arith.addf %446, %449 : vector<8x8xf32>
    %c0_149 = arith.constant 0 : index
    %c43 = arith.constant 43 : index
    %451 = memref.load %arg2[%c0_149, %c43] : memref<2x49xf32, #tpu.memory_space<smem>>
    %c1_150 = arith.constant 1 : index
    %c43_151 = arith.constant 43 : index
    %452 = memref.load %arg2[%c1_150, %c43_151] : memref<2x49xf32, #tpu.memory_space<smem>>
    %453 = vector.extract_strided_slice %17 {offsets = [6, 1], sizes = [8, 8], strides = [1, 1]} : vector<14x14xf32> to vector<8x8xf32>
    %454 = vector.broadcast %451 : f32 to vector<8x8xf32>
    %455 = arith.mulf %454, %453 : vector<8x8xf32>
    %456 = arith.addf %450, %455 : vector<8x8xf32>
    %457 = vector.extract_strided_slice %19 {offsets = [6, 1], sizes = [8, 8], strides = [1, 1]} : vector<14x14xf32> to vector<8x8xf32>
    %458 = vector.broadcast %452 : f32 to vector<8x8xf32>
    %459 = arith.mulf %458, %457 : vector<8x8xf32>
    %460 = arith.addf %456, %459 : vector<8x8xf32>
    %c0_152 = arith.constant 0 : index
    %c44 = arith.constant 44 : index
    %461 = memref.load %arg2[%c0_152, %c44] : memref<2x49xf32, #tpu.memory_space<smem>>
    %c1_153 = arith.constant 1 : index
    %c44_154 = arith.constant 44 : index
    %462 = memref.load %arg2[%c1_153, %c44_154] : memref<2x49xf32, #tpu.memory_space<smem>>
    %463 = vector.extract_strided_slice %17 {offsets = [6, 2], sizes = [8, 8], strides = [1, 1]} : vector<14x14xf32> to vector<8x8xf32>
    %464 = vector.broadcast %461 : f32 to vector<8x8xf32>
    %465 = arith.mulf %464, %463 : vector<8x8xf32>
    %466 = arith.addf %460, %465 : vector<8x8xf32>
    %467 = vector.extract_strided_slice %19 {offsets = [6, 2], sizes = [8, 8], strides = [1, 1]} : vector<14x14xf32> to vector<8x8xf32>
    %468 = vector.broadcast %462 : f32 to vector<8x8xf32>
    %469 = arith.mulf %468, %467 : vector<8x8xf32>
    %470 = arith.addf %466, %469 : vector<8x8xf32>
    %c0_155 = arith.constant 0 : index
    %c45 = arith.constant 45 : index
    %471 = memref.load %arg2[%c0_155, %c45] : memref<2x49xf32, #tpu.memory_space<smem>>
    %c1_156 = arith.constant 1 : index
    %c45_157 = arith.constant 45 : index
    %472 = memref.load %arg2[%c1_156, %c45_157] : memref<2x49xf32, #tpu.memory_space<smem>>
    %473 = vector.extract_strided_slice %17 {offsets = [6, 3], sizes = [8, 8], strides = [1, 1]} : vector<14x14xf32> to vector<8x8xf32>
    %474 = vector.broadcast %471 : f32 to vector<8x8xf32>
    %475 = arith.mulf %474, %473 : vector<8x8xf32>
    %476 = arith.addf %470, %475 : vector<8x8xf32>
    %477 = vector.extract_strided_slice %19 {offsets = [6, 3], sizes = [8, 8], strides = [1, 1]} : vector<14x14xf32> to vector<8x8xf32>
    %478 = vector.broadcast %472 : f32 to vector<8x8xf32>
    %479 = arith.mulf %478, %477 : vector<8x8xf32>
    %480 = arith.addf %476, %479 : vector<8x8xf32>
    %c0_158 = arith.constant 0 : index
    %c46 = arith.constant 46 : index
    %481 = memref.load %arg2[%c0_158, %c46] : memref<2x49xf32, #tpu.memory_space<smem>>
    %c1_159 = arith.constant 1 : index
    %c46_160 = arith.constant 46 : index
    %482 = memref.load %arg2[%c1_159, %c46_160] : memref<2x49xf32, #tpu.memory_space<smem>>
    %483 = vector.extract_strided_slice %17 {offsets = [6, 4], sizes = [8, 8], strides = [1, 1]} : vector<14x14xf32> to vector<8x8xf32>
    %484 = vector.broadcast %481 : f32 to vector<8x8xf32>
    %485 = arith.mulf %484, %483 : vector<8x8xf32>
    %486 = arith.addf %480, %485 : vector<8x8xf32>
    %487 = vector.extract_strided_slice %19 {offsets = [6, 4], sizes = [8, 8], strides = [1, 1]} : vector<14x14xf32> to vector<8x8xf32>
    %488 = vector.broadcast %482 : f32 to vector<8x8xf32>
    %489 = arith.mulf %488, %487 : vector<8x8xf32>
    %490 = arith.addf %486, %489 : vector<8x8xf32>
    %c0_161 = arith.constant 0 : index
    %c47 = arith.constant 47 : index
    %491 = memref.load %arg2[%c0_161, %c47] : memref<2x49xf32, #tpu.memory_space<smem>>
    %c1_162 = arith.constant 1 : index
    %c47_163 = arith.constant 47 : index
    %492 = memref.load %arg2[%c1_162, %c47_163] : memref<2x49xf32, #tpu.memory_space<smem>>
    %493 = vector.extract_strided_slice %17 {offsets = [6, 5], sizes = [8, 8], strides = [1, 1]} : vector<14x14xf32> to vector<8x8xf32>
    %494 = vector.broadcast %491 : f32 to vector<8x8xf32>
    %495 = arith.mulf %494, %493 : vector<8x8xf32>
    %496 = arith.addf %490, %495 : vector<8x8xf32>
    %497 = vector.extract_strided_slice %19 {offsets = [6, 5], sizes = [8, 8], strides = [1, 1]} : vector<14x14xf32> to vector<8x8xf32>
    %498 = vector.broadcast %492 : f32 to vector<8x8xf32>
    %499 = arith.mulf %498, %497 : vector<8x8xf32>
    %500 = arith.addf %496, %499 : vector<8x8xf32>
    %c0_164 = arith.constant 0 : index
    %c48 = arith.constant 48 : index
    %501 = memref.load %arg2[%c0_164, %c48] : memref<2x49xf32, #tpu.memory_space<smem>>
    %c1_165 = arith.constant 1 : index
    %c48_166 = arith.constant 48 : index
    %502 = memref.load %arg2[%c1_165, %c48_166] : memref<2x49xf32, #tpu.memory_space<smem>>
    %503 = vector.extract_strided_slice %17 {offsets = [6, 6], sizes = [8, 8], strides = [1, 1]} : vector<14x14xf32> to vector<8x8xf32>
    %504 = vector.broadcast %501 : f32 to vector<8x8xf32>
    %505 = arith.mulf %504, %503 : vector<8x8xf32>
    %506 = arith.addf %500, %505 : vector<8x8xf32>
    %507 = vector.extract_strided_slice %19 {offsets = [6, 6], sizes = [8, 8], strides = [1, 1]} : vector<14x14xf32> to vector<8x8xf32>
    %508 = vector.broadcast %502 : f32 to vector<8x8xf32>
    %509 = arith.mulf %508, %507 : vector<8x8xf32>
    %510 = arith.addf %506, %509 : vector<8x8xf32>
    %511 = arith.negf %510 : vector<8x8xf32>
    %512 = math.exp %511 : vector<8x8xf32>
    %cst_167 = arith.constant 1.000000e+00 : f32
    %513 = vector.broadcast %cst_167 : f32 to vector<8x8xf32>
    %514 = arith.addf %513, %512 : vector<8x8xf32>
    %515 = arith.divf %513, %514 : vector<8x8xf32>
    %516 = vector.shape_cast %515 : vector<8x8xf32> to vector<8x8x1xf32>
    %517 = vector.broadcast %516 : vector<8x8x1xf32> to vector<8x8x2048xf32>
    %518 = arith.mulf %517, %2 : vector<8x8x2048xf32>
    %cst_168 = arith.constant dense<0xFF800000> : vector<8x2048xf32>
    %519 = vector.multi_reduction <maximumf>, %518, %cst_168 [1] : vector<8x8x2048xf32> to vector<8x2048xf32>
    %cst_169 = arith.constant dense<0xFF800000> : vector<2048xf32>
    %520 = vector.multi_reduction <maximumf>, %519, %cst_169 [0] : vector<8x2048xf32> to vector<2048xf32>
    %521 = vector.shape_cast %520 : vector<2048xf32> to vector<1x2048xf32>
    %c0_170 = arith.constant 0 : index
    %c0_171 = arith.constant 0 : index
    %c0_172 = arith.constant 0 : index
    %522 = vector.load %arg3[%c0_170, %c0_171, %c0_172] : memref<1x1x2048xf32, #tpu.memory_space<vmem>>, vector<1x1x2048xf32>
    %523 = vector.shape_cast %522 : vector<1x1x2048xf32> to vector<1x2048xf32>
    %524 = vector.shape_cast %521 : vector<1x2048xf32> to vector<1x1x2048xf32>
    tpu.vector_store %arg3[%c0_170, %c0_171, %c0_172], %524 {strides = array<i32>} : memref<1x1x2048xf32, #tpu.memory_space<vmem>>, vector<1x1x2048xf32>,
    return
  }
  func.func @transform_0(%arg0: i32) -> (i32, i32, i32, i32) {
    %c0_i32 = arith.constant 0 : i32
    %c0_i32_0 = arith.constant 0 : i32
    %c0_i32_1 = arith.constant 0 : i32
    %c0_i32_2 = arith.constant 0 : i32
    return %arg0, %c0_i32, %c0_i32_0, %c0_i32_1 : i32, i32, i32, i32
  }
  func.func @transform_1(%arg0: i32) -> (i32, i32) {
    %c0_i32 = arith.constant 0 : i32
    %c0_i32_0 = arith.constant 0 : i32
    %c0_i32_1 = arith.constant 0 : i32
    return %c0_i32, %c0_i32_0 : i32, i32
  }
  func.func @transform_2(%arg0: i32) -> (i32, i32, i32) {
    %c0_i32 = arith.constant 0 : i32
    %c0_i32_0 = arith.constant 0 : i32
    %c0_i32_1 = arith.constant 0 : i32
    return %arg0, %c0_i32, %c0_i32_0 : i32, i32, i32
  }
}

</mosaic_0001>

<llo_original>
// kernel: spatial_max_forward.3
$region0: #{spatial_max_forward.3}
  #allocation0 [shape = 'u32[]', space=smem, size = 0x4, offset = 0x4, fixed_abs, tag = 'smem constant byte address 0x4 - core index']
  #allocation1 [shape = 'u32[144,128]{1,0:T(1,128)}', space=vmem, size = 0x12000, scoped, tag = 'internal scratch']
  %s0 = inlined_call_operand.vmem [shape: f32[2,2048], index: 0, kind: input, shape index: {}]
  %s1 = inlined_call_operand.hbm [shape: s8[2048,2048], index: 1, kind: input, shape index: {}]
  %s2 = inlined_call_operand.hbm [shape: f32[1,2048], index: 2, kind: input, shape index: {}]
  %s3 = inlined_call_operand.hbm [shape: f32[1,2048], index: 3, kind: input, shape index: {}]
  %s4 = inlined_call_operand.hbm [shape: f32[1,2048], index: 4, kind: input, shape index: {}]
  %s5 = inlined_call_operand.hbm [shape: f32[1,2048], index: 5, kind: input, shape index: {}]
  %s6 = inlined_call_operand.hbm [shape: f32[2,2048], index: 6, kind: output, shape index: {}]
  %s7 = sld [smem:[#allocation0]]
  $region77: #{spatial_max_forward.3} parent=0
    _
  %s9 = ssub.s32 1, %s7
  %s10 = scalar_select 0, %s9, %s7
  $region1: #{spatial_max_forward.3} parent=0
    #allocation2 [shape = 'u8[4194304]{0}', space=vmem, size = 0x400000, scoped, tag = 'input window, operand 1']
    #allocation3 [shape = 's32[2]{0}', space=sflag, size = 0x8, scoped, tag = 'scoped memory for spatial_max_forward.3']
    #allocation4 [shape = 's32[2]{0}', space=sflag, size = 0x8, scoped, tag = 'scoped memory for spatial_max_forward.3']
    #allocation5 [shape = 'u8[8192]{0}', space=vmem, size = 0x2000, scoped, tag = 'input window, operand 2']
    #allocation6 [shape = 's32[2]{0}', space=sflag, size = 0x8, scoped, tag = 'scoped memory for spatial_max_forward.3']
    #allocation7 [shape = 'u8[8192]{0}', space=vmem, size = 0x2000, scoped, tag = 'input window, operand 3']
    #allocation8 [shape = 'u8[8192]{0}', space=vmem, size = 0x2000, scoped, tag = 'input window, operand 4']
    #allocation9 [shape = 's32[2]{0}', space=sflag, size = 0x8, scoped, tag = 'scoped memory for spatial_max_forward.3']
    #allocation10 [shape = 'u8[8192]{0}', space=vmem, size = 0x2000, scoped, tag = 'input window, operand 5']
    #allocation11 [shape = 'u8[16384]{0}', space=vmem, size = 0x4000, scoped, tag = 'output window, operand 0']
    %11 = vsyncpa [#allocation3], 0
    %s12 = scalar_lea.sflag [#allocation3], 1
    %13 = vsyncpa %s12, 0
    %14 = vsyncpa [#allocation6], 0
    %s15 = scalar_lea.sflag [#allocation6], 1
    %16 = vsyncpa %s15, 0
    %17 = vsyncpa [#allocation9], 0
    %s18 = scalar_lea.sflag [#allocation9], 1
    %19 = vsyncpa %s18, 0
    %20 = vsyncpa [#allocation4], 0
    %s21 = scalar_lea.sflag [#allocation4], 1
    %22 = vsyncpa %s21, 0
    loop: start=0, step=1, limit=4
    $region2: #{spatial_max_forward.3} parent=1 // loop_pre_header
      _
    $region3: #{spatial_max_forward.3} parent=1 // loop_header
      %s24 = sphi 0, %s28
      %p25 = scmp.ge.s32.totalorder %s24, 4
      %s32 = sphi 0, %s32
      %s34 = sphi 0, %s32
      %s35 = sphi 0, %s34
      %s49 = sphi 0, %s35
      %s55 = sphi 0, %s57
      %s58 = sphi 0, %s55
      %s59 = sphi 0, %s58
      %s75 = sphi 0, %s59
      %s81 = sphi 0, %s83
      %s84 = sphi 0, %s81
      %s85 = sphi 0, %s84
      %s101 = sphi 0, %s85
      %s107 = sphi 0, %s109
      %s110 = sphi 0, %s107
      %s111 = sphi 0, %s110
      %s127 = sphi 0, %s111
      %s133 = sphi 0, %s135
      %s136 = sphi 0, %s133
      %s137 = sphi 0, %s136
      %s153 = sphi 0, %s137
      %s159 = sphi 0, %s161
      %s162 = sphi 0, %s159
      %s163 = sphi 0, %s162
      %s179 = sphi 0, %s163
      %s185 = sphi 0, %s187
      %s188 = sphi 0, %s185
      %s189 = sphi 0, %s188
      %s205 = sphi 0, %s189
    $region4: #{spatial_max_forward.3} parent=1 // loop_header_branch
      %27 = sbr.rel (%p25) target = $region8
    $region5: #{spatial_max_forward.3} parent=1 // loop_body
      %s29 = ssub.s32 %s24, 1
      %s30 = ssub.s32 %s24, 2
      %s31 = sadd.s32 %s24, 1
      %s33 = sadd.s32 %s32, 1
      %p36 = scmp.eq.s32.totalorder %s24, 1
      %p37 = scmp.ne.s32.totalorder %s32, %s34
      %p38 = scmp.eq.s32.totalorder %s24, 0
      %p39 = por %p37, %p38
      %p40 = scmp.ne.s32.totalorder %s32, %s34
      %p41 = scmp.eq.s32.totalorder %s29, 1
      %p42 = por %p40, %p41
      %p43 = scmp.ne.s32.totalorder %s34, %s35
      %p44 = scmp.eq.s32.totalorder %s29, 0
      %p45 = por %p43, %p44
      %p46 = scmp.ne.s32.totalorder %s34, %s35
      %p47 = scmp.eq.s32.totalorder %s30, 1
      %p48 = por %p46, %p47
      %p50 = scmp.ne.s32.totalorder %s35, %s49
      %p51 = scmp.eq.s32.totalorder %s30, 0
      %p52 = por %p50, %p51
      %s53 = ssub.s32 %s24, %s31
      %p54 = scmp.eq.s32.totalorder %s53, 0
      %s56 = sadd.s32 %s55, 1
      %s57 = scalar_select %p54, %s55, %s56
      %p60 = pneg %p54
      %p61 = scmp.eq.s32.totalorder %s24, 1
      %p62 = por %p60, %p61
      %p63 = scmp.ne.s32.totalorder %s55, %s58
      %p64 = scmp.eq.s32.totalorder %s24, 0
      %p65 = por %p63, %p64
      %p66 = scmp.ne.s32.totalorder %s55, %s58
      %p67 = scmp.eq.s32.totalorder %s29, 1
      %p68 = por %p66, %p67
      %p69 = scmp.ne.s32.totalorder %s58, %s59
      %p70 = scmp.eq.s32.totalorder %s29, 0
      %p71 = por %p69, %p70
      %p72 = scmp.ne.s32.totalorder %s58, %s59
      %p73 = scmp.eq.s32.totalorder %s30, 1
      %p74 = por %p72, %p73
      %p76 = scmp.ne.s32.totalorder %s59, %s75
      %p77 = scmp.eq.s32.totalorder %s30, 0
      %p78 = por %p76, %p77
      %s79 = ssub.s32 %s24, %s31
      %p80 = scmp.eq.s32.totalorder %s79, 0
      %s82 = sadd.s32 %s81, 1
      %s83 = scalar_select %p80, %s81, %s82
      %p86 = pneg %p80
      %p87 = scmp.eq.s32.totalorder %s24, 1
      %p88 = por %p86, %p87
      %p89 = scmp.ne.s32.totalorder %s81, %s84
      %p90 = scmp.eq.s32.totalorder %s24, 0
      %p91 = por %p89, %p90
      %p92 = scmp.ne.s32.totalorder %s81, %s84
      %p93 = scmp.eq.s32.totalorder %s29, 1
      %p94 = por %p92, %p93
      %p95 = scmp.ne.s32.totalorder %s84, %s85
      %p96 = scmp.eq.s32.totalorder %s29, 0
      %p97 = por %p95, %p96
      %p98 = scmp.ne.s32.totalorder %s84, %s85
      %p99 = scmp.eq.s32.totalorder %s30, 1
      %p100 = por %p98, %p99
      %p102 = scmp.ne.s32.totalorder %s85, %s101
      %p103 = scmp.eq.s32.totalorder %s30, 0
      %p104 = por %p102, %p103
      %s105 = ssub.s32 %s24, %s31
      %p106 = scmp.eq.s32.totalorder %s105, 0
      %s108 = sadd.s32 %s107, 1
      %s109 = scalar_select %p106, %s107, %s108
      %p112 = pneg %p106
      %p113 = scmp.eq.s32.totalorder %s24, 1
      %p114 = por %p112, %p113
      %p115 = scmp.ne.s32.totalorder %s107, %s110
      %p116 = scmp.eq.s32.totalorder %s24, 0
      %p117 = por %p115, %p116
      %p118 = scmp.ne.s32.totalorder %s107, %s110
      %p119 = scmp.eq.s32.totalorder %s29, 1
      %p120 = por %p118, %p119
      %p121 = scmp.ne.s32.totalorder %s110, %s111
      %p122 = scmp.eq.s32.totalorder %s29, 0
      %p123 = por %p121, %p122
      %p124 = scmp.ne.s32.totalorder %s110, %s111
      %p125 = scmp.eq.s32.totalorder %s30, 1
      %p126 = por %p124, %p125
      %p128 = scmp.ne.s32.totalorder %s111, %s127
      %p129 = scmp.eq.s32.totalorder %s30, 0
      %p130 = por %p128, %p129
      %s131 = ssub.s32 %s24, %s31
      %p132 = scmp.eq.s32.totalorder %s131, 0
      %s134 = sadd.s32 %s133, 1
      %s135 = scalar_select %p132, %s133, %s134
      %p138 = pneg %p132
      %p139 = scmp.eq.s32.totalorder %s24, 1
      %p140 = por %p138, %p139
      %p141 = scmp.ne.s32.totalorder %s133, %s136
      %p142 = scmp.eq.s32.totalorder %s24, 0
      %p143 = por %p141, %p142
      %p144 = scmp.ne.s32.totalorder %s133, %s136
      %p145 = scmp.eq.s32.totalorder %s29, 1
      %p146 = por %p144, %p145
      %p147 = scmp.ne.s32.totalorder %s136, %s137
      %p148 = scmp.eq.s32.totalorder %s29, 0
      %p149 = por %p147, %p148
      %p150 = scmp.ne.s32.totalorder %s136, %s137
      %p151 = scmp.eq.s32.totalorder %s30, 1
      %p152 = por %p150, %p151
      %p154 = scmp.ne.s32.totalorder %s137, %s153
      %p155 = scmp.eq.s32.totalorder %s30, 0
      %p156 = por %p154, %p155
      %s157 = ssub.s32 %s24, %s31
      %p158 = scmp.eq.s32.totalorder %s157, 0
      %s160 = sadd.s32 %s159, 1
      %s161 = scalar_select %p158, %s159, %s160
      %p164 = pneg %p158
      %p165 = scmp.eq.s32.totalorder %s24, 1
      %p166 = por %p164, %p165
      %p167 = scmp.ne.s32.totalorder %s159, %s162
      %p168 = scmp.eq.s32.totalorder %s24, 0
      %p169 = por %p167, %p168
      %p170 = scmp.ne.s32.totalorder %s159, %s162
      %p171 = scmp.eq.s32.totalorder %s29, 1
      %p172 = por %p170, %p171
      %p173 = scmp.ne.s32.totalorder %s162, %s163
      %p174 = scmp.eq.s32.totalorder %s29, 0
      %p175 = por %p173, %p174
      %p176 = scmp.ne.s32.totalorder %s162, %s163
      %p177 = scmp.eq.s32.totalorder %s30, 1
      %p178 = por %p176, %p177
      %p180 = scmp.ne.s32.totalorder %s163, %s179
      %p181 = scmp.eq.s32.totalorder %s30, 0
      %p182 = por %p180, %p181
      %s183 = ssub.s32 %s24, %s31
      %p184 = scmp.eq.s32.totalorder %s183, 0
      %s186 = sadd.s32 %s185, 1
      %s187 = scalar_select %p184, %s185, %s186
      %p190 = pneg %p184
      %p191 = scmp.eq.s32.totalorder %s24, 1
      %p192 = por %p190, %p191
      %p193 = scmp.ne.s32.totalorder %s185, %s188
      %p194 = scmp.eq.s32.totalorder %s24, 0
      %p195 = por %p193, %p194
      %p196 = scmp.ne.s32.totalorder %s185, %s188
      %p197 = scmp.eq.s32.totalorder %s29, 1
      %p198 = por %p196, %p197
      %p199 = scmp.ne.s32.totalorder %s188, %s189
      %p200 = scmp.eq.s32.totalorder %s29, 0
      %p201 = por %p199, %p200
      %p202 = scmp.ne.s32.totalorder %s188, %s189
      %p203 = scmp.eq.s32.totalorder %s30, 1
      %p204 = por %p202, %p203
      %p206 = scmp.ne.s32.totalorder %s189, %s205
      %p207 = scmp.eq.s32.totalorder %s30, 0
      %p208 = por %p206, %p207
      %p209 = scmp.le.s32.totalorder 1, %s24
      %p210 = scmp.lt.s32.totalorder %s24, 3
      %p211 = pnand %p209, %p210
      %p212 = pneg %p211
      // Predicated region
      $region9: #{spatial_max_forward.3} parent=5 // pred_check
        _
      $region10: #{spatial_max_forward.3} parent=5 // pred_check_branch
        %214 = sbr.rel (%p211) target = $region12
      $region11: #{spatial_max_forward.3} parent=5 // pred_region
        %s215 = ssub.s32 %s24, 1
        // Predicated region
        $region13: #{spatial_max_forward.3} parent=11 // pred_check
          %p216 = pneg %p45
        $region14: #{spatial_max_forward.3} parent=11 // pred_check_branch
          %218 = sbr.rel (%p216) target = $region16
        $region15: #{spatial_max_forward.3} parent=11 // pred_region
          _
        $region16: #{spatial_max_forward.3} parent=11 // pred_fallthru
          _
      $region12: #{spatial_max_forward.3} parent=5 // pred_fallthru
        _
      %p219 = scmp.lt.s32.totalorder %s24, 2
      // Predicated region
      $region17: #{spatial_max_forward.3} parent=5 // pred_check
        %p220 = pneg %p219
      $region18: #{spatial_max_forward.3} parent=5 // pred_check_branch
        %222 = sbr.rel (%p220) target = $region20
      $region19: #{spatial_max_forward.3} parent=5 // pred_region
        // Predicated region
        $region21: #{spatial_max_forward.3} parent=19 // pred_check
          %p223 = pneg %p65
        $region22: #{spatial_max_forward.3} parent=19 // pred_check_branch
          %225 = sbr.rel (%p223) target = $region24
        $region23: #{spatial_max_forward.3} parent=19 // pred_region
          %s226 = sand.u32 %s55, 1
          %s227 = scalar_lea.sflag [#allocation3], %s226
          %s228 = sand.u32 %s55, 1
          %s229 = smul.addr %s228, 4096
          %s230 = scalar_lea.vmem [#allocation2], %s229
          %s231 = smul.u32 32, %s24
          %s233 = ssub.s32 65536, 65536
          %234 = vsyncadd %s227, %s233
          %s235 = smul.addr %s231, 16
          %s236 = smul.addr %s235, 128
          %s237 = scalar_lea.hbm %s1, %s236
          %s238 = sshll.u32 %s230, 4
          %s239 = int_to_ptr.vmem [resolvable:$true] %s238
          %244 = dma.hbm_to_vmem [thread:$0]  %s237, 65536, %s239, %s227, 2048, 2048, 128
        $region24: #{spatial_max_forward.3} parent=19 // pred_fallthru
          _
        // Predicated region
        $region25: #{spatial_max_forward.3} parent=19 // pred_check
          %p245 = pneg %p91
        $region26: #{spatial_max_forward.3} parent=19 // pred_check_branch
          %247 = sbr.rel (%p245) target = $region28
        $region27: #{spatial_max_forward.3} parent=19 // pred_region
          %s248 = sand.u32 %s24, 1
          %s249 = scalar_lea.sflag [#allocation6], %s248
          %s250 = sand.u32 %s81, 1
          %s251 = smul.addr %s250, 8
          %s252 = scalar_lea.vmem [#allocation5], %s251
          %s253 = smul.u32 8, %s24
          %s255 = ssub.s32 128, 128
          %256 = vsyncadd %s249, %s255
          %s257 = smul.addr %s253, 16
          %s258 = scalar_lea.hbm %s2, %s257
          %s260 = sshll.u32 %s252, 4
          %s261 = int_to_ptr.vmem [resolvable:$true] %s260
          %263 = dma.hbm_to_vmem [thread:$0]  %s258, 128, %s261, %s249
        $region28: #{spatial_max_forward.3} parent=19 // pred_fallthru
          _
        // Predicated region
        $region29: #{spatial_max_forward.3} parent=19 // pred_check
          %p264 = pneg %p117
        $region30: #{spatial_max_forward.3} parent=19 // pred_check_branch
          %266 = sbr.rel (%p264) target = $region32
        $region31: #{spatial_max_forward.3} parent=19 // pred_region
          %s267 = sand.u32 %s24, 1
          %s268 = scalar_lea.sflag [#allocation6], %s267
          %s269 = sand.u32 %s107, 1
          %s270 = smul.addr %s269, 8
          %s271 = scalar_lea.vmem [#allocation7], %s270
          %s272 = smul.u32 8, %s24
          %s274 = ssub.s32 128, 128
          %275 = vsyncadd %s268, %s274
          %s276 = smul.addr %s272, 16
          %s277 = scalar_lea.hbm %s3, %s276
          %s279 = sshll.u32 %s271, 4
          %s280 = int_to_ptr.vmem [resolvable:$true] %s279
          %282 = dma.hbm_to_vmem [thread:$0]  %s277, 128, %s280, %s268
        $region32: #{spatial_max_forward.3} parent=19 // pred_fallthru
          _
        // Predicated region
        $region33: #{spatial_max_forward.3} parent=19 // pred_check
          %p283 = pneg %p143
        $region34: #{spatial_max_forward.3} parent=19 // pred_check_branch
          %285 = sbr.rel (%p283) target = $region36
        $region35: #{spatial_max_forward.3} parent=19 // pred_region
          %s286 = sand.u32 %s24, 1
          %s287 = scalar_lea.sflag [#allocation9], %s286
          %s288 = sand.u32 %s133, 1
          %s289 = smul.addr %s288, 8
          %s290 = scalar_lea.vmem [#allocation8], %s289
          %s291 = smul.u32 8, %s24
          %s293 = ssub.s32 128, 128
          %294 = vsyncadd %s287, %s293
          %s295 = smul.addr %s291, 16
          %s296 = scalar_lea.hbm %s4, %s295
          %s298 = sshll.u32 %s290, 4
          %s299 = int_to_ptr.vmem [resolvable:$true] %s298
          %301 = dma.hbm_to_vmem [thread:$0]  %s296, 128, %s299, %s287
        $region36: #{spatial_max_forward.3} parent=19 // pred_fallthru
          _
        // Predicated region
        $region37: #{spatial_max_forward.3} parent=19 // pred_check
          %p302 = pneg %p169
        $region38: #{spatial_max_forward.3} parent=19 // pred_check_branch
          %304 = sbr.rel (%p302) target = $region40
        $region39: #{spatial_max_forward.3} parent=19 // pred_region
          %s305 = sand.u32 %s24, 1
          %s306 = scalar_lea.sflag [#allocation9], %s305
          %s307 = sand.u32 %s159, 1
          %s308 = smul.addr %s307, 8
          %s309 = scalar_lea.vmem [#allocation10], %s308
          %s310 = smul.u32 8, %s24
          %s312 = ssub.s32 128, 128
          %313 = vsyncadd %s306, %s312
          %s314 = smul.addr %s310, 16
          %s315 = scalar_lea.hbm %s5, %s314
          %s317 = sshll.u32 %s309, 4
          %s318 = int_to_ptr.vmem [resolvable:$true] %s317
          %320 = dma.hbm_to_vmem [thread:$0]  %s315, 128, %s318, %s306
        $region40: #{spatial_max_forward.3} parent=19 // pred_fallthru
          _
      $region20: #{spatial_max_forward.3} parent=5 // pred_fallthru
        _
      %p321 = scmp.le.s32.totalorder 1, %s24
      %p322 = scmp.lt.s32.totalorder %s24, 3
      %p323 = pnand %p321, %p322
      %p324 = pneg %p323
      // Predicated region
      $region41: #{spatial_max_forward.3} parent=5 // pred_check
        _
      $region42: #{spatial_max_forward.3} parent=5 // pred_check_branch
        %326 = sbr.rel (%p323) target = $region44
      $region43: #{spatial_max_forward.3} parent=5 // pred_region
        %s327 = ssub.s32 %s24, 1
        %s328 = sand.u32 %s58, 1
        %s329 = scalar_lea.sflag [#allocation3], %s328
        %s330 = sand.u32 %s58, 1
        %s331 = smul.addr %s330, 4096
        %s332 = scalar_lea.vmem [#allocation2], %s331
        // Predicated region
        $region45: #{spatial_max_forward.3} parent=43 // pred_check
          %p333 = pneg %p71
        $region46: #{spatial_max_forward.3} parent=43 // pred_check_branch
          %335 = sbr.rel (%p333) target = $region48
        $region47: #{spatial_max_forward.3} parent=43 // pred_region
          %336 = dma.done %s329, 65536
        $region48: #{spatial_max_forward.3} parent=43 // pred_fallthru
          _
        %s337 = sand.u32 %s29, 1
        %s338 = scalar_lea.sflag [#allocation6], %s337
        %s339 = sand.u32 %s84, 1
        %s340 = smul.addr %s339, 8
        %s341 = scalar_lea.vmem [#allocation5], %s340
        // Predicated region
        $region49: #{spatial_max_forward.3} parent=43 // pred_check
          %p342 = pneg %p97
        $region50: #{spatial_max_forward.3} parent=43 // pred_check_branch
          %344 = sbr.rel (%p342) target = $region52
        $region51: #{spatial_max_forward.3} parent=43 // pred_region
          %345 = dma.done %s338, 128
        $region52: #{spatial_max_forward.3} parent=43 // pred_fallthru
          _
        %s346 = sand.u32 %s29, 1
        %s347 = scalar_lea.sflag [#allocation6], %s346
        %s348 = sand.u32 %s110, 1
        %s349 = smul.addr %s348, 8
        %s350 = scalar_lea.vmem [#allocation7], %s349
        // Predicated region
        $region53: #{spatial_max_forward.3} parent=43 // pred_check
          %p351 = pneg %p123
        $region54: #{spatial_max_forward.3} parent=43 // pred_check_branch
          %353 = sbr.rel (%p351) target = $region56
        $region55: #{spatial_max_forward.3} parent=43 // pred_region
          %354 = dma.done %s347, 128
        $region56: #{spatial_max_forward.3} parent=43 // pred_fallthru
          _
        %s355 = sand.u32 %s29, 1
        %s356 = scalar_lea.sflag [#allocation9], %s355
        %s357 = sand.u32 %s136, 1
        %s358 = smul.addr %s357, 8
        %s359 = scalar_lea.vmem [#allocation8], %s358
        // Predicated region
        $region57: #{spatial_max_forward.3} parent=43 // pred_check
          %p360 = pneg %p149
        $region58: #{spatial_max_forward.3} parent=43 // pred_check_branch
          %362 = sbr.rel (%p360) target = $region60
        $region59: #{spatial_max_forward.3} parent=43 // pred_region
          %363 = dma.done %s356, 128
        $region60: #{spatial_max_forward.3} parent=43 // pred_fallthru
          _
        %s364 = sand.u32 %s29, 1
        %s365 = scalar_lea.sflag [#allocation9], %s364
        %s366 = sand.u32 %s162, 1
        %s367 = smul.addr %s366, 8
        %s368 = scalar_lea.vmem [#allocation10], %s367
        // Predicated region
        $region61: #{spatial_max_forward.3} parent=43 // pred_check
          %p369 = pneg %p175
        $region62: #{spatial_max_forward.3} parent=43 // pred_check_branch
          %371 = sbr.rel (%p369) target = $region64
        $region63: #{spatial_max_forward.3} parent=43 // pred_region
          %372 = dma.done %s365, 128
        $region64: #{spatial_max_forward.3} parent=43 // pred_fallthru
          _
        %p373 = pneg %p45
        %p374 = pneg %p42
        %s375 = sand.u32 %s58, 1
        %s376 = scalar_lea.sflag [#allocation3], %s375
        %s377 = sand.u32 %s58, 1
        %s378 = smul.addr %s377, 4096
        %s379 = scalar_lea.vmem [#allocation2], %s378
        %p380 = pneg %p71
        %p381 = pneg %p68
        %s382 = sand.u32 %s29, 1
        %s383 = scalar_lea.sflag [#allocation6], %s382
        %s384 = sand.u32 %s84, 1
        %s385 = smul.addr %s384, 8
        %s386 = scalar_lea.vmem [#allocation5], %s385
        %p387 = pneg %p97
        %p388 = pneg %p94
        %s389 = sand.u32 %s29, 1
        %s390 = scalar_lea.sflag [#allocation6], %s389
        %s391 = sand.u32 %s110, 1
        %s392 = smul.addr %s391, 8
        %s393 = scalar_lea.vmem [#allocation7], %s392
        %p394 = pneg %p123
        %p395 = pneg %p120
        %s396 = sand.u32 %s29, 1
        %s397 = scalar_lea.sflag [#allocation9], %s396
        %s398 = sand.u32 %s136, 1
        %s399 = smul.addr %s398, 8
        %s400 = scalar_lea.vmem [#allocation8], %s399
        %p401 = pneg %p149
        %p402 = pneg %p146
        %s403 = sand.u32 %s29, 1
        %s404 = scalar_lea.sflag [#allocation9], %s403
        %s405 = sand.u32 %s162, 1
        %s406 = smul.addr %s405, 8
        %s407 = scalar_lea.vmem [#allocation10], %s406
        %p408 = pneg %p175
        %p409 = pneg %p172
        %p410 = pneg %p201
        %p411 = pneg %p198
        %s412 = sand.u32 %s188, 1
        %s413 = scalar_lea.sflag [#allocation4], %s412
        %s414 = sand.u32 %s188, 1
        %s415 = smul.addr %s414, 16
        %s416 = scalar_lea.vmem [#allocation11], %s415
        %s417 = smul.u32 32, %s29
        %s418 = smul.u32 8, %s29
        %s419 = smul.u32 8, %s29
        %s420 = smul.u32 8, %s29
        %s421 = smul.u32 8, %s29
        %s422 = smul.u32 8, %s29
        %v423 = vld [vmem:[%s0] sm:$0xff]
        %v424 = vld [vmem:[%s0 + $0x8] sm:$0xff]
        %v425 = vld [vmem:[%s0 + $0x10] sm:$0xff]
        %v426 = vld [vmem:[%s0 + $0x18] sm:$0xff]
        %v431 = vcombine.high %v423, %v423
        %v433 = vunpack.c.l.s4 1983009808
        %v434 = vunpack.c.0.s8 %v433
        %v435 = vlaneseq
        %v436 = vshrl.u32 %v435, 7
        %v437 = vsub.s32 %v434, %v436
        %v438 = vrot.slane %v423, %v437
        %v440 = vunpack.c.l.s4 1983009808
        %v441 = vunpack.c.0.s8 %v440
        %v442 = vlaneseq
        %v443 = vshrl.u32 %v442, 7
        %v444 = vsub.s32 %v441, %v443
        %v445 = vrot.slane %v431, %v444
        %v446 = vcombine.high %v438, %v438
        %v447 = vcombine.high %v445, %v445
        %v448 = vcombine.high %v424, %v424
        %v450 = vunpack.c.l.s4 1983009808
        %v451 = vunpack.c.0.s8 %v450
        %v452 = vlaneseq
        %v453 = vshrl.u32 %v452, 7
        %v454 = vsub.s32 %v451, %v453
        %v455 = vrot.slane %v424, %v454
        %v457 = vunpack.c.l.s4 1983009808
        %v458 = vunpack.c.0.s8 %v457
        %v459 = vlaneseq
        %v460 = vshrl.u32 %v459, 7
        %v461 = vsub.s32 %v458, %v460
        %v462 = vrot.slane %v448, %v461
        %v463 = vcombine.high %v455, %v455
        %v464 = vcombine.high %v462, %v462
        %v465 = vcombine.high %v425, %v425
        %v467 = vunpack.c.l.s4 1983009808
        %v468 = vunpack.c.0.s8 %v467
        %v469 = vlaneseq
        %v470 = vshrl.u32 %v469, 7
        %v471 = vsub.s32 %v468, %v470
        %v472 = vrot.slane %v425, %v471
        %v474 = vunpack.c.l.s4 1983009808
        %v475 = vunpack.c.0.s8 %v474
        %v476 = vlaneseq
        %v477 = vshrl.u32 %v476, 7
        %v478 = vsub.s32 %v475, %v477
        %v479 = vrot.slane %v465, %v478
        %v480 = vcombine.high %v472, %v472
        %v481 = vcombine.high %v479, %v479
        %v482 = vcombine.high %v426, %v426
        %v484 = vunpack.c.l.s4 1983009808
        %v485 = vunpack.c.0.s8 %v484
        %v486 = vlaneseq
        %v487 = vshrl.u32 %v486, 7
        %v488 = vsub.s32 %v485, %v487
        %v489 = vrot.slane %v426, %v488
        %v491 = vunpack.c.l.s4 1983009808
        %v492 = vunpack.c.0.s8 %v491
        %v493 = vlaneseq
        %v494 = vshrl.u32 %v493, 7
        %v495 = vsub.s32 %v492, %v494
        %v496 = vrot.slane %v482, %v495
        %v497 = vcombine.high %v489, %v489
        %v498 = vcombine.high %v496, %v496
        %v515 = vpack.c.bf16 %v438, %v438
        %v516 = vpack.c.bf16 %v446, %v446
        %v517 = vpack.c.bf16 %v445, %v445
        %v518 = vpack.c.bf16 %v447, %v447
        %v519 = vpack.c.bf16 %v455, %v455
        %v520 = vpack.c.bf16 %v463, %v463
        %v521 = vpack.c.bf16 %v462, %v462
        %v522 = vpack.c.bf16 %v464, %v464
        %v523 = vpack.c.bf16 %v472, %v472
        %v524 = vpack.c.bf16 %v480, %v480
        %v525 = vpack.c.bf16 %v479, %v479
        %v526 = vpack.c.bf16 %v481, %v481
        %v527 = vpack.c.bf16 %v489, %v489
        %v528 = vpack.c.bf16 %v497, %v497
        %v529 = vpack.c.bf16 %v496, %v496
        %v530 = vpack.c.bf16 %v498, %v498
        %v531 = vld [vmem:[%s332] sm:$0xff]
        %v532 = vld [vmem:[%s332 + $0x8] sm:$0xff]
        %v533 = vld [vmem:[%s332 + $0x10] sm:$0xff]
        %v534 = vld [vmem:[%s332 + $0x18] sm:$0xff]
        %v535 = vld [vmem:[%s332 + $0x20] sm:$0xff]
        %v536 = vld [vmem:[%s332 + $0x28] sm:$0xff]
        %v537 = vld [vmem:[%s332 + $0x30] sm:$0xff]
        %v538 = vld [vmem:[%s332 + $0x38] sm:$0xff]
        %v539 = vld [vmem:[%s332 + $0x40] sm:$0xff]
        %v540 = vld [vmem:[%s332 + $0x48] sm:$0xff]
        %v541 = vld [vmem:[%s332 + $0x50] sm:$0xff]
        %v542 = vld [vmem:[%s332 + $0x58] sm:$0xff]
        %v543 = vld [vmem:[%s332 + $0x60] sm:$0xff]
        %v544 = vld [vmem:[%s332 + $0x68] sm:$0xff]
        %v545 = vld [vmem:[%s332 + $0x70] sm:$0xff]
        %v546 = vld [vmem:[%s332 + $0x78] sm:$0xff]
        %v547 = vld [vmem:[%s332 + $0x80] sm:$0xff]
        %v548 = vld [vmem:[%s332 + $0x88] sm:$0xff]
        %v549 = vld [vmem:[%s332 + $0x90] sm:$0xff]
        %v550 = vld [vmem:[%s332 + $0x98] sm:$0xff]
        %v551 = vld [vmem:[%s332 + $0xa0] sm:$0xff]
        %v552 = vld [vmem:[%s332 + $0xa8] sm:$0xff]
        %v553 = vld [vmem:[%s332 + $0xb0] sm:$0xff]
        %v554 = vld [vmem:[%s332 + $0xb8] sm:$0xff]
        %v555 = vld [vmem:[%s332 + $0xc0] sm:$0xff]
        %v556 = vld [vmem:[%s332 + $0xc8] sm:$0xff]
        %v557 = vld [vmem:[%s332 + $0xd0] sm:$0xff]
        %v558 = vld [vmem:[%s332 + $0xd8] sm:$0xff]
        %v559 = vld [vmem:[%s332 + $0xe0] sm:$0xff]
        %v560 = vld [vmem:[%s332 + $0xe8] sm:$0xff]
        %v561 = vld [vmem:[%s332 + $0xf0] sm:$0xff]
        %v562 = vld [vmem:[%s332 + $0xf8] sm:$0xff]
        %v563 = vld [vmem:[%s332 + $0x100] sm:$0xff]
        %v564 = vld [vmem:[%s332 + $0x108] sm:$0xff]
        %v565 = vld [vmem:[%s332 + $0x110] sm:$0xff]
        %v566 = vld [vmem:[%s332 + $0x118] sm:$0xff]
        %v567 = vld [vmem:[%s332 + $0x120] sm:$0xff]
        %v568 = vld [vmem:[%s332 + $0x128] sm:$0xff]
        %v569 = vld [vmem:[%s332 + $0x130] sm:$0xff]
        %v570 = vld [vmem:[%s332 + $0x138] sm:$0xff]
        %v571 = vld [vmem:[%s332 + $0x140] sm:$0xff]
        %v572 = vld [vmem:[%s332 + $0x148] sm:$0xff]
        %v573 = vld [vmem:[%s332 + $0x150] sm:$0xff]
        %v574 = vld [vmem:[%s332 + $0x158] sm:$0xff]
        %v575 = vld [vmem:[%s332 + $0x160] sm:$0xff]
        %v576 = vld [vmem:[%s332 + $0x168] sm:$0xff]
        %v577 = vld [vmem:[%s332 + $0x170] sm:$0xff]
        %v578 = vld [vmem:[%s332 + $0x178] sm:$0xff]
        %v579 = vld [vmem:[%s332 + $0x180] sm:$0xff]
        %v580 = vld [vmem:[%s332 + $0x188] sm:$0xff]
        %v581 = vld [vmem:[%s332 + $0x190] sm:$0xff]
        %v582 = vld [vmem:[%s332 + $0x198] sm:$0xff]
        %v583 = vld [vmem:[%s332 + $0x1a0] sm:$0xff]
        %v584 = vld [vmem:[%s332 + $0x1a8] sm:$0xff]
        %v585 = vld [vmem:[%s332 + $0x1b0] sm:$0xff]
        %v586 = vld [vmem:[%s332 + $0x1b8] sm:$0xff]
        %v587 = vld [vmem:[%s332 + $0x1c0] sm:$0xff]
        %v588 = vld [vmem:[%s332 + $0x1c8] sm:$0xff]
        %v589 = vld [vmem:[%s332 + $0x1d0] sm:$0xff]
        %v590 = vld [vmem:[%s332 + $0x1d8] sm:$0xff]
        %v591 = vld [vmem:[%s332 + $0x1e0] sm:$0xff]
        %v592 = vld [vmem:[%s332 + $0x1e8] sm:$0xff]
        %v593 = vld [vmem:[%s332 + $0x1f0] sm:$0xff]
        %v594 = vld [vmem:[%s332 + $0x1f8] sm:$0xff]
        %v595 = vld [vmem:[%s332 + $0x200] sm:$0xff]
        %v596 = vld [vmem:[%s332 + $0x208] sm:$0xff]
        %v597 = vld [vmem:[%s332 + $0x210] sm:$0xff]
        %v598 = vld [vmem:[%s332 + $0x218] sm:$0xff]
        %v599 = vld [vmem:[%s332 + $0x220] sm:$0xff]
        %v600 = vld [vmem:[%s332 + $0x228] sm:$0xff]
        %v601 = vld [vmem:[%s332 + $0x230] sm:$0xff]
        %v602 = vld [vmem:[%s332 + $0x238] sm:$0xff]
        %v603 = vld [vmem:[%s332 + $0x240] sm:$0xff]
        %v604 = vld [vmem:[%s332 + $0x248] sm:$0xff]
        %v605 = vld [vmem:[%s332 + $0x250] sm:$0xff]
        %v606 = vld [vmem:[%s332 + $0x258] sm:$0xff]
        %v607 = vld [vmem:[%s332 + $0x260] sm:$0xff]
        %v608 = vld [vmem:[%s332 + $0x268] sm:$0xff]
        %v609 = vld [vmem:[%s332 + $0x270] sm:$0xff]
        %v610 = vld [vmem:[%s332 + $0x278] sm:$0xff]
        %v611 = vld [vmem:[%s332 + $0x280] sm:$0xff]
        %v612 = vld [vmem:[%s332 + $0x288] sm:$0xff]
        %v613 = vld [vmem:[%s332 + $0x290] sm:$0xff]
        %v614 = vld [vmem:[%s332 + $0x298] sm:$0xff]
        %v615 = vld [vmem:[%s332 + $0x2a0] sm:$0xff]
        %v616 = vld [vmem:[%s332 + $0x2a8] sm:$0xff]
        %v617 = vld [vmem:[%s332 + $0x2b0] sm:$0xff]
        %v618 = vld [vmem:[%s332 + $0x2b8] sm:$0xff]
        %v619 = vld [vmem:[%s332 + $0x2c0] sm:$0xff]
        %v620 = vld [vmem:[%s332 + $0x2c8] sm:$0xff]
        %v621 = vld [vmem:[%s332 + $0x2d0] sm:$0xff]
        %v622 = vld [vmem:[%s332 + $0x2d8] sm:$0xff]
        %v623 = vld [vmem:[%s332 + $0x2e0] sm:$0xff]
        %v624 = vld [vmem:[%s332 + $0x2e8] sm:$0xff]
        %v625 = vld [vmem:[%s332 + $0x2f0] sm:$0xff]
        %v626 = vld [vmem:[%s332 + $0x2f8] sm:$0xff]
        %v627 = vld [vmem:[%s332 + $0x300] sm:$0xff]
        %v628 = vld [vmem:[%s332 + $0x308] sm:$0xff]
        %v629 = vld [vmem:[%s332 + $0x310] sm:$0xff]
        %v630 = vld [vmem:[%s332 + $0x318] sm:$0xff]
        %v631 = vld [vmem:[%s332 + $0x320] sm:$0xff]
        %v632 = vld [vmem:[%s332 + $0x328] sm:$0xff]
        %v633 = vld [vmem:[%s332 + $0x330] sm:$0xff]
        %v634 = vld [vmem:[%s332 + $0x338] sm:$0xff]
        %v635 = vld [vmem:[%s332 + $0x340] sm:$0xff]
        %v636 = vld [vmem:[%s332 + $0x348] sm:$0xff]
        %v637 = vld [vmem:[%s332 + $0x350] sm:$0xff]
        %v638 = vld [vmem:[%s332 + $0x358] sm:$0xff]
        %v639 = vld [vmem:[%s332 + $0x360] sm:$0xff]
        %v640 = vld [vmem:[%s332 + $0x368] sm:$0xff]
        %v641 = vld [vmem:[%s332 + $0x370] sm:$0xff]
        %v642 = vld [vmem:[%s332 + $0x378] sm:$0xff]
        %v643 = vld [vmem:[%s332 + $0x380] sm:$0xff]
        %v644 = vld [vmem:[%s332 + $0x388] sm:$0xff]
        %v645 = vld [vmem:[%s332 + $0x390] sm:$0xff]
        %v646 = vld [vmem:[%s332 + $0x398] sm:$0xff]
        %v647 = vld [vmem:[%s332 + $0x3a0] sm:$0xff]
        %v648 = vld [vmem:[%s332 + $0x3a8] sm:$0xff]
        %v649 = vld [vmem:[%s332 + $0x3b0] sm:$0xff]
        %v650 = vld [vmem:[%s332 + $0x3b8] sm:$0xff]
        %v651 = vld [vmem:[%s332 + $0x3c0] sm:$0xff]
        %v652 = vld [vmem:[%s332 + $0x3c8] sm:$0xff]
        %v653 = vld [vmem:[%s332 + $0x3d0] sm:$0xff]
        %v654 = vld [vmem:[%s332 + $0x3d8] sm:$0xff]
        %v655 = vld [vmem:[%s332 + $0x3e0] sm:$0xff]
        %v656 = vld [vmem:[%s332 + $0x3e8] sm:$0xff]
        %v657 = vld [vmem:[%s332 + $0x3f0] sm:$0xff]
        %v658 = vld [vmem:[%s332 + $0x3f8] sm:$0xff]
        %v659 = vld [vmem:[%s332 + $0x400] sm:$0xff]
        %v660 = vld [vmem:[%s332 + $0x408] sm:$0xff]
        %v661 = vld [vmem:[%s332 + $0x410] sm:$0xff]
        %v662 = vld [vmem:[%s332 + $0x418] sm:$0xff]
        %v663 = vld [vmem:[%s332 + $0x420] sm:$0xff]
        %v664 = vld [vmem:[%s332 + $0x428] sm:$0xff]
        %v665 = vld [vmem:[%s332 + $0x430] sm:$0xff]
        %v666 = vld [vmem:[%s332 + $0x438] sm:$0xff]
        %v667 = vld [vmem:[%s332 + $0x440] sm:$0xff]
        %v668 = vld [vmem:[%s332 + $0x448] sm:$0xff]
        %v669 = vld [vmem:[%s332 + $0x450] sm:$0xff]
        %v670 = vld [vmem:[%s332 + $0x458] sm:$0xff]
        %v671 = vld [vmem:[%s332 + $0x460] sm:$0xff]
        %v672 = vld [vmem:[%s332 + $0x468] sm:$0xff]
        %v673 = vld [vmem:[%s332 + $0x470] sm:$0xff]
        %v674 = vld [vmem:[%s332 + $0x478] sm:$0xff]
        %v675 = vld [vmem:[%s332 + $0x480] sm:$0xff]
        %v676 = vld [vmem:[%s332 + $0x488] sm:$0xff]
        %v677 = vld [vmem:[%s332 + $0x490] sm:$0xff]
        %v678 = vld [vmem:[%s332 + $0x498] sm:$0xff]
        %v679 = vld [vmem:[%s332 + $0x4a0] sm:$0xff]
        %v680 = vld [vmem:[%s332 + $0x4a8] sm:$0xff]
        %v681 = vld [vmem:[%s332 + $0x4b0] sm:$0xff]
        %v682 = vld [vmem:[%s332 + $0x4b8] sm:$0xff]
        %v683 = vld [vmem:[%s332 + $0x4c0] sm:$0xff]
        %v684 = vld [vmem:[%s332 + $0x4c8] sm:$0xff]
        %v685 = vld [vmem:[%s332 + $0x4d0] sm:$0xff]
        %v686 = vld [vmem:[%s332 + $0x4d8] sm:$0xff]
        %v687 = vld [vmem:[%s332 + $0x4e0] sm:$0xff]
        %v688 = vld [vmem:[%s332 + $0x4e8] sm:$0xff]
        %v689 = vld [vmem:[%s332 + $0x4f0] sm:$0xff]
        %v690 = vld [vmem:[%s332 + $0x4f8] sm:$0xff]
        %v691 = vld [vmem:[%s332 + $0x500] sm:$0xff]
        %v692 = vld [vmem:[%s332 + $0x508] sm:$0xff]
        %v693 = vld [vmem:[%s332 + $0x510] sm:$0xff]
        %v694 = vld [vmem:[%s332 + $0x518] sm:$0xff]
        %v695 = vld [vmem:[%s332 + $0x520] sm:$0xff]
        %v696 = vld [vmem:[%s332 + $0x528] sm:$0xff]
        %v697 = vld [vmem:[%s332 + $0x530] sm:$0xff]
        %v698 = vld [vmem:[%s332 + $0x538] sm:$0xff]
        %v699 = vld [vmem:[%s332 + $0x540] sm:$0xff]
        %v700 = vld [vmem:[%s332 + $0x548] sm:$0xff]
        %v701 = vld [vmem:[%s332 + $0x550] sm:$0xff]
        %v702 = vld [vmem:[%s332 + $0x558] sm:$0xff]
        %v703 = vld [vmem:[%s332 + $0x560] sm:$0xff]
        %v704 = vld [vmem:[%s332 + $0x568] sm:$0xff]
        %v705 = vld [vmem:[%s332 + $0x570] sm:$0xff]
        %v706 = vld [vmem:[%s332 + $0x578] sm:$0xff]
        %v707 = vld [vmem:[%s332 + $0x580] sm:$0xff]
        %v708 = vld [vmem:[%s332 + $0x588] sm:$0xff]
        %v709 = vld [vmem:[%s332 + $0x590] sm:$0xff]
        %v710 = vld [vmem:[%s332 + $0x598] sm:$0xff]
        %v711 = vld [vmem:[%s332 + $0x5a0] sm:$0xff]
        %v712 = vld [vmem:[%s332 + $0x5a8] sm:$0xff]
        %v713 = vld [vmem:[%s332 + $0x5b0] sm:$0xff]
        %v714 = vld [vmem:[%s332 + $0x5b8] sm:$0xff]
        %v715 = vld [vmem:[%s332 + $0x5c0] sm:$0xff]
        %v716 = vld [vmem:[%s332 + $0x5c8] sm:$0xff]
        %v717 = vld [vmem:[%s332 + $0x5d0] sm:$0xff]
        %v718 = vld [vmem:[%s332 + $0x5d8] sm:$0xff]
        %v719 = vld [vmem:[%s332 + $0x5e0] sm:$0xff]
        %v720 = vld [vmem:[%s332 + $0x5e8] sm:$0xff]
        %v721 = vld [vmem:[%s332 + $0x5f0] sm:$0xff]
        %v722 = vld [vmem:[%s332 + $0x5f8] sm:$0xff]
        %v723 = vld [vmem:[%s332 + $0x600] sm:$0xff]
        %v724 = vld [vmem:[%s332 + $0x608] sm:$0xff]
        %v725 = vld [vmem:[%s332 + $0x610] sm:$0xff]
        %v726 = vld [vmem:[%s332 + $0x618] sm:$0xff]
        %v727 = vld [vmem:[%s332 + $0x620] sm:$0xff]
        %v728 = vld [vmem:[%s332 + $0x628] sm:$0xff]
        %v729 = vld [vmem:[%s332 + $0x630] sm:$0xff]
        %v730 = vld [vmem:[%s332 + $0x638] sm:$0xff]
        %v731 = vld [vmem:[%s332 + $0x640] sm:$0xff]
        %v732 = vld [vmem:[%s332 + $0x648] sm:$0xff]
        %v733 = vld [vmem:[%s332 + $0x650] sm:$0xff]
        %v734 = vld [vmem:[%s332 + $0x658] sm:$0xff]
        %v735 = vld [vmem:[%s332 + $0x660] sm:$0xff]
        %v736 = vld [vmem:[%s332 + $0x668] sm:$0xff]
        %v737 = vld [vmem:[%s332 + $0x670] sm:$0xff]
        %v738 = vld [vmem:[%s332 + $0x678] sm:$0xff]
        %v739 = vld [vmem:[%s332 + $0x680] sm:$0xff]
        %v740 = vld [vmem:[%s332 + $0x688] sm:$0xff]
        %v741 = vld [vmem:[%s332 + $0x690] sm:$0xff]
        %v742 = vld [vmem:[%s332 + $0x698] sm:$0xff]
        %v743 = vld [vmem:[%s332 + $0x6a0] sm:$0xff]
        %v744 = vld [vmem:[%s332 + $0x6a8] sm:$0xff]
        %v745 = vld [vmem:[%s332 + $0x6b0] sm:$0xff]
        %v746 = vld [vmem:[%s332 + $0x6b8] sm:$0xff]
        %v747 = vld [vmem:[%s332 + $0x6c0] sm:$0xff]
        %v748 = vld [vmem:[%s332 + $0x6c8] sm:$0xff]
        %v749 = vld [vmem:[%s332 + $0x6d0] sm:$0xff]
        %v750 = vld [vmem:[%s332 + $0x6d8] sm:$0xff]
        %v751 = vld [vmem:[%s332 + $0x6e0] sm:$0xff]
        %v752 = vld [vmem:[%s332 + $0x6e8] sm:$0xff]
        %v753 = vld [vmem:[%s332 + $0x6f0] sm:$0xff]
        %v754 = vld [vmem:[%s332 + $0x6f8] sm:$0xff]
        %v755 = vld [vmem:[%s332 + $0x700] sm:$0xff]
        %v756 = vld [vmem:[%s332 + $0x708] sm:$0xff]
        %v757 = vld [vmem:[%s332 + $0x710] sm:$0xff]
        %v758 = vld [vmem:[%s332 + $0x718] sm:$0xff]
        %v759 = vld [vmem:[%s332 + $0x720] sm:$0xff]
        %v760 = vld [vmem:[%s332 + $0x728] sm:$0xff]
        %v761 = vld [vmem:[%s332 + $0x730] sm:$0xff]
        %v762 = vld [vmem:[%s332 + $0x738] sm:$0xff]
        %v763 = vld [vmem:[%s332 + $0x740] sm:$0xff]
        %v764 = vld [vmem:[%s332 + $0x748] sm:$0xff]
        %v765 = vld [vmem:[%s332 + $0x750] sm:$0xff]
        %v766 = vld [vmem:[%s332 + $0x758] sm:$0xff]
        %v767 = vld [vmem:[%s332 + $0x760] sm:$0xff]
        %v768 = vld [vmem:[%s332 + $0x768] sm:$0xff]
        %v769 = vld [vmem:[%s332 + $0x770] sm:$0xff]
        %v770 = vld [vmem:[%s332 + $0x778] sm:$0xff]
        %v771 = vld [vmem:[%s332 + $0x780] sm:$0xff]
        %v772 = vld [vmem:[%s332 + $0x788] sm:$0xff]
        %v773 = vld [vmem:[%s332 + $0x790] sm:$0xff]
        %v774 = vld [vmem:[%s332 + $0x798] sm:$0xff]
        %v775 = vld [vmem:[%s332 + $0x7a0] sm:$0xff]
        %v776 = vld [vmem:[%s332 + $0x7a8] sm:$0xff]
        %v777 = vld [vmem:[%s332 + $0x7b0] sm:$0xff]
        %v778 = vld [vmem:[%s332 + $0x7b8] sm:$0xff]
        %v779 = vld [vmem:[%s332 + $0x7c0] sm:$0xff]
        %v780 = vld [vmem:[%s332 + $0x7c8] sm:$0xff]
        %v781 = vld [vmem:[%s332 + $0x7d0] sm:$0xff]
        %v782 = vld [vmem:[%s332 + $0x7d8] sm:$0xff]
        %v783 = vld [vmem:[%s332 + $0x7e0] sm:$0xff]
        %v784 = vld [vmem:[%s332 + $0x7e8] sm:$0xff]
        %v785 = vld [vmem:[%s332 + $0x7f0] sm:$0xff]
        %v786 = vld [vmem:[%s332 + $0x7f8] sm:$0xff]
        %v787 = vld [vmem:[%s332 + $0x800] sm:$0xff]
        %v788 = vld [vmem:[%s332 + $0x808] sm:$0xff]
        %v789 = vld [vmem:[%s332 + $0x810] sm:$0xff]
        %v790 = vld [vmem:[%s332 + $0x818] sm:$0xff]
        %v791 = vld [vmem:[%s332 + $0x820] sm:$0xff]
        %v792 = vld [vmem:[%s332 + $0x828] sm:$0xff]
        %v793 = vld [vmem:[%s332 + $0x830] sm:$0xff]
        %v794 = vld [vmem:[%s332 + $0x838] sm:$0xff]
        %v795 = vld [vmem:[%s332 + $0x840] sm:$0xff]
        %v796 = vld [vmem:[%s332 + $0x848] sm:$0xff]
        %v797 = vld [vmem:[%s332 + $0x850] sm:$0xff]
        %v798 = vld [vmem:[%s332 + $0x858] sm:$0xff]
        %v799 = vld [vmem:[%s332 + $0x860] sm:$0xff]
        %v800 = vld [vmem:[%s332 + $0x868] sm:$0xff]
        %v801 = vld [vmem:[%s332 + $0x870] sm:$0xff]
        %v802 = vld [vmem:[%s332 + $0x878] sm:$0xff]
        %v803 = vld [vmem:[%s332 + $0x880] sm:$0xff]
        %v804 = vld [vmem:[%s332 + $0x888] sm:$0xff]
        %v805 = vld [vmem:[%s332 + $0x890] sm:$0xff]
        %v806 = vld [vmem:[%s332 + $0x898] sm:$0xff]
        %v807 = vld [vmem:[%s332 + $0x8a0] sm:$0xff]
        %v808 = vld [vmem:[%s332 + $0x8a8] sm:$0xff]
        %v809 = vld [vmem:[%s332 + $0x8b0] sm:$0xff]
        %v810 = vld [vmem:[%s332 + $0x8b8] sm:$0xff]
        %v811 = vld [vmem:[%s332 + $0x8c0] sm:$0xff]
        %v812 = vld [vmem:[%s332 + $0x8c8] sm:$0xff]
        %v813 = vld [vmem:[%s332 + $0x8d0] sm:$0xff]
        %v814 = vld [vmem:[%s332 + $0x8d8] sm:$0xff]
        %v815 = vld [vmem:[%s332 + $0x8e0] sm:$0xff]
        %v816 = vld [vmem:[%s332 + $0x8e8] sm:$0xff]
        %v817 = vld [vmem:[%s332 + $0x8f0] sm:$0xff]
        %v818 = vld [vmem:[%s332 + $0x8f8] sm:$0xff]
        %v819 = vld [vmem:[%s332 + $0x900] sm:$0xff]
        %v820 = vld [vmem:[%s332 + $0x908] sm:$0xff]
        %v821 = vld [vmem:[%s332 + $0x910] sm:$0xff]
        %v822 = vld [vmem:[%s332 + $0x918] sm:$0xff]
        %v823 = vld [vmem:[%s332 + $0x920] sm:$0xff]
        %v824 = vld [vmem:[%s332 + $0x928] sm:$0xff]
        %v825 = vld [vmem:[%s332 + $0x930] sm:$0xff]
        %v826 = vld [vmem:[%s332 + $0x938] sm:$0xff]
        %v827 = vld [vmem:[%s332 + $0x940] sm:$0xff]
        %v828 = vld [vmem:[%s332 + $0x948] sm:$0xff]
        %v829 = vld [vmem:[%s332 + $0x950] sm:$0xff]
        %v830 = vld [vmem:[%s332 + $0x958] sm:$0xff]
        %v831 = vld [vmem:[%s332 + $0x960] sm:$0xff]
        %v832 = vld [vmem:[%s332 + $0x968] sm:$0xff]
        %v833 = vld [vmem:[%s332 + $0x970] sm:$0xff]
        %v834 = vld [vmem:[%s332 + $0x978] sm:$0xff]
        %v835 = vld [vmem:[%s332 + $0x980] sm:$0xff]
        %v836 = vld [vmem:[%s332 + $0x988] sm:$0xff]
        %v837 = vld [vmem:[%s332 + $0x990] sm:$0xff]
        %v838 = vld [vmem:[%s332 + $0x998] sm:$0xff]
        %v839 = vld [vmem:[%s332 + $0x9a0] sm:$0xff]
        %v840 = vld [vmem:[%s332 + $0x9a8] sm:$0xff]
        %v841 = vld [vmem:[%s332 + $0x9b0] sm:$0xff]
        %v842 = vld [vmem:[%s332 + $0x9b8] sm:$0xff]
        %v843 = vld [vmem:[%s332 + $0x9c0] sm:$0xff]
        %v844 = vld [vmem:[%s332 + $0x9c8] sm:$0xff]
        %v845 = vld [vmem:[%s332 + $0x9d0] sm:$0xff]
        %v846 = vld [vmem:[%s332 + $0x9d8] sm:$0xff]
        %v847 = vld [vmem:[%s332 + $0x9e0] sm:$0xff]
        %v848 = vld [vmem:[%s332 + $0x9e8] sm:$0xff]
        %v849 = vld [vmem:[%s332 + $0x9f0] sm:$0xff]
        %v850 = vld [vmem:[%s332 + $0x9f8] sm:$0xff]
        %v851 = vld [vmem:[%s332 + $0xa00] sm:$0xff]
        %v852 = vld [vmem:[%s332 + $0xa08] sm:$0xff]
        %v853 = vld [vmem:[%s332 + $0xa10] sm:$0xff]
        %v854 = vld [vmem:[%s332 + $0xa18] sm:$0xff]
        %v855 = vld [vmem:[%s332 + $0xa20] sm:$0xff]
        %v856 = vld [vmem:[%s332 + $0xa28] sm:$0xff]
        %v857 = vld [vmem:[%s332 + $0xa30] sm:$0xff]
        %v858 = vld [vmem:[%s332 + $0xa38] sm:$0xff]
        %v859 = vld [vmem:[%s332 + $0xa40] sm:$0xff]
        %v860 = vld [vmem:[%s332 + $0xa48] sm:$0xff]
        %v861 = vld [vmem:[%s332 + $0xa50] sm:$0xff]
        %v862 = vld [vmem:[%s332 + $0xa58] sm:$0xff]
        %v863 = vld [vmem:[%s332 + $0xa60] sm:$0xff]
        %v864 = vld [vmem:[%s332 + $0xa68] sm:$0xff]
        %v865 = vld [vmem:[%s332 + $0xa70] sm:$0xff]
        %v866 = vld [vmem:[%s332 + $0xa78] sm:$0xff]
        %v867 = vld [vmem:[%s332 + $0xa80] sm:$0xff]
        %v868 = vld [vmem:[%s332 + $0xa88] sm:$0xff]
        %v869 = vld [vmem:[%s332 + $0xa90] sm:$0xff]
        %v870 = vld [vmem:[%s332 + $0xa98] sm:$0xff]
        %v871 = vld [vmem:[%s332 + $0xaa0] sm:$0xff]
        %v872 = vld [vmem:[%s332 + $0xaa8] sm:$0xff]
        %v873 = vld [vmem:[%s332 + $0xab0] sm:$0xff]
        %v874 = vld [vmem:[%s332 + $0xab8] sm:$0xff]
        %v875 = vld [vmem:[%s332 + $0xac0] sm:$0xff]
        %v876 = vld [vmem:[%s332 + $0xac8] sm:$0xff]
        %v877 = vld [vmem:[%s332 + $0xad0] sm:$0xff]
        %v878 = vld [vmem:[%s332 + $0xad8] sm:$0xff]
        %v879 = vld [vmem:[%s332 + $0xae0] sm:$0xff]
        %v880 = vld [vmem:[%s332 + $0xae8] sm:$0xff]
        %v881 = vld [vmem:[%s332 + $0xaf0] sm:$0xff]
        %v882 = vld [vmem:[%s332 + $0xaf8] sm:$0xff]
        %v883 = vld [vmem:[%s332 + $0xb00] sm:$0xff]
        %v884 = vld [vmem:[%s332 + $0xb08] sm:$0xff]
        %v885 = vld [vmem:[%s332 + $0xb10] sm:$0xff]
        %v886 = vld [vmem:[%s332 + $0xb18] sm:$0xff]
        %v887 = vld [vmem:[%s332 + $0xb20] sm:$0xff]
        %v888 = vld [vmem:[%s332 + $0xb28] sm:$0xff]
        %v889 = vld [vmem:[%s332 + $0xb30] sm:$0xff]
        %v890 = vld [vmem:[%s332 + $0xb38] sm:$0xff]
        %v891 = vld [vmem:[%s332 + $0xb40] sm:$0xff]
        %v892 = vld [vmem:[%s332 + $0xb48] sm:$0xff]
        %v893 = vld [vmem:[%s332 + $0xb50] sm:$0xff]
        %v894 = vld [vmem:[%s332 + $0xb58] sm:$0xff]
        %v895 = vld [vmem:[%s332 + $0xb60] sm:$0xff]
        %v896 = vld [vmem:[%s332 + $0xb68] sm:$0xff]
        %v897 = vld [vmem:[%s332 + $0xb70] sm:$0xff]
        %v898 = vld [vmem:[%s332 + $0xb78] sm:$0xff]
        %v899 = vld [vmem:[%s332 + $0xb80] sm:$0xff]
        %v900 = vld [vmem:[%s332 + $0xb88] sm:$0xff]
        %v901 = vld [vmem:[%s332 + $0xb90] sm:$0xff]
        %v902 = vld [vmem:[%s332 + $0xb98] sm:$0xff]
        %v903 = vld [vmem:[%s332 + $0xba0] sm:$0xff]
        %v904 = vld [vmem:[%s332 + $0xba8] sm:$0xff]
        %v905 = vld [vmem:[%s332 + $0xbb0] sm:$0xff]
        %v906 = vld [vmem:[%s332 + $0xbb8] sm:$0xff]
        %v907 = vld [vmem:[%s332 + $0xbc0] sm:$0xff]
        %v908 = vld [vmem:[%s332 + $0xbc8] sm:$0xff]
        %v909 = vld [vmem:[%s332 + $0xbd0] sm:$0xff]
        %v910 = vld [vmem:[%s332 + $0xbd8] sm:$0xff]
        %v911 = vld [vmem:[%s332 + $0xbe0] sm:$0xff]
        %v912 = vld [vmem:[%s332 + $0xbe8] sm:$0xff]
        %v913 = vld [vmem:[%s332 + $0xbf0] sm:$0xff]
        %v914 = vld [vmem:[%s332 + $0xbf8] sm:$0xff]
        %v915 = vld [vmem:[%s332 + $0xc00] sm:$0xff]
        %v916 = vld [vmem:[%s332 + $0xc08] sm:$0xff]
        %v917 = vld [vmem:[%s332 + $0xc10] sm:$0xff]
        %v918 = vld [vmem:[%s332 + $0xc18] sm:$0xff]
        %v919 = vld [vmem:[%s332 + $0xc20] sm:$0xff]
        %v920 = vld [vmem:[%s332 + $0xc28] sm:$0xff]
        %v921 = vld [vmem:[%s332 + $0xc30] sm:$0xff]
        %v922 = vld [vmem:[%s332 + $0xc38] sm:$0xff]
        %v923 = vld [vmem:[%s332 + $0xc40] sm:$0xff]
        %v924 = vld [vmem:[%s332 + $0xc48] sm:$0xff]
        %v925 = vld [vmem:[%s332 + $0xc50] sm:$0xff]
        %v926 = vld [vmem:[%s332 + $0xc58] sm:$0xff]
        %v927 = vld [vmem:[%s332 + $0xc60] sm:$0xff]
        %v928 = vld [vmem:[%s332 + $0xc68] sm:$0xff]
        %v929 = vld [vmem:[%s332 + $0xc70] sm:$0xff]
        %v930 = vld [vmem:[%s332 + $0xc78] sm:$0xff]
        %v931 = vld [vmem:[%s332 + $0xc80] sm:$0xff]
        %v932 = vld [vmem:[%s332 + $0xc88] sm:$0xff]
        %v933 = vld [vmem:[%s332 + $0xc90] sm:$0xff]
        %v934 = vld [vmem:[%s332 + $0xc98] sm:$0xff]
        %v935 = vld [vmem:[%s332 + $0xca0] sm:$0xff]
        %v936 = vld [vmem:[%s332 + $0xca8] sm:$0xff]
        %v937 = vld [vmem:[%s332 + $0xcb0] sm:$0xff]
        %v938 = vld [vmem:[%s332 + $0xcb8] sm:$0xff]
        %v939 = vld [vmem:[%s332 + $0xcc0] sm:$0xff]
        %v940 = vld [vmem:[%s332 + $0xcc8] sm:$0xff]
        %v941 = vld [vmem:[%s332 + $0xcd0] sm:$0xff]
        %v942 = vld [vmem:[%s332 + $0xcd8] sm:$0xff]
        %v943 = vld [vmem:[%s332 + $0xce0] sm:$0xff]
        %v944 = vld [vmem:[%s332 + $0xce8] sm:$0xff]
        %v945 = vld [vmem:[%s332 + $0xcf0] sm:$0xff]
        %v946 = vld [vmem:[%s332 + $0xcf8] sm:$0xff]
        %v947 = vld [vmem:[%s332 + $0xd00] sm:$0xff]
        %v948 = vld [vmem:[%s332 + $0xd08] sm:$0xff]
        %v949 = vld [vmem:[%s332 + $0xd10] sm:$0xff]
        %v950 = vld [vmem:[%s332 + $0xd18] sm:$0xff]
        %v951 = vld [vmem:[%s332 + $0xd20] sm:$0xff]
        %v952 = vld [vmem:[%s332 + $0xd28] sm:$0xff]
        %v953 = vld [vmem:[%s332 + $0xd30] sm:$0xff]
        %v954 = vld [vmem:[%s332 + $0xd38] sm:$0xff]
        %v955 = vld [vmem:[%s332 + $0xd40] sm:$0xff]
        %v956 = vld [vmem:[%s332 + $0xd48] sm:$0xff]
        %v957 = vld [vmem:[%s332 + $0xd50] sm:$0xff]
        %v958 = vld [vmem:[%s332 + $0xd58] sm:$0xff]
        %v959 = vld [vmem:[%s332 + $0xd60] sm:$0xff]
        %v960 = vld [vmem:[%s332 + $0xd68] sm:$0xff]
        %v961 = vld [vmem:[%s332 + $0xd70] sm:$0xff]
        %v962 = vld [vmem:[%s332 + $0xd78] sm:$0xff]
        %v963 = vld [vmem:[%s332 + $0xd80] sm:$0xff]
        %v964 = vld [vmem:[%s332 + $0xd88] sm:$0xff]
        %v965 = vld [vmem:[%s332 + $0xd90] sm:$0xff]
        %v966 = vld [vmem:[%s332 + $0xd98] sm:$0xff]
        %v967 = vld [vmem:[%s332 + $0xda0] sm:$0xff]
        %v968 = vld [vmem:[%s332 + $0xda8] sm:$0xff]
        %v969 = vld [vmem:[%s332 + $0xdb0] sm:$0xff]
        %v970 = vld [vmem:[%s332 + $0xdb8] sm:$0xff]
        %v971 = vld [vmem:[%s332 + $0xdc0] sm:$0xff]
        %v972 = vld [vmem:[%s332 + $0xdc8] sm:$0xff]
        %v973 = vld [vmem:[%s332 + $0xdd0] sm:$0xff]
        %v974 = vld [vmem:[%s332 + $0xdd8] sm:$0xff]
        %v975 = vld [vmem:[%s332 + $0xde0] sm:$0xff]
        %v976 = vld [vmem:[%s332 + $0xde8] sm:$0xff]
        %v977 = vld [vmem:[%s332 + $0xdf0] sm:$0xff]
        %v978 = vld [vmem:[%s332 + $0xdf8] sm:$0xff]
        %v979 = vld [vmem:[%s332 + $0xe00] sm:$0xff]
        %v980 = vld [vmem:[%s332 + $0xe08] sm:$0xff]
        %v981 = vld [vmem:[%s332 + $0xe10] sm:$0xff]
        %v982 = vld [vmem:[%s332 + $0xe18] sm:$0xff]
        %v983 = vld [vmem:[%s332 + $0xe20] sm:$0xff]
        %v984 = vld [vmem:[%s332 + $0xe28] sm:$0xff]
        %v985 = vld [vmem:[%s332 + $0xe30] sm:$0xff]
        %v986 = vld [vmem:[%s332 + $0xe38] sm:$0xff]
        %v987 = vld [vmem:[%s332 + $0xe40] sm:$0xff]
        %v988 = vld [vmem:[%s332 + $0xe48] sm:$0xff]
        %v989 = vld [vmem:[%s332 + $0xe50] sm:$0xff]
        %v990 = vld [vmem:[%s332 + $0xe58] sm:$0xff]
        %v991 = vld [vmem:[%s332 + $0xe60] sm:$0xff]
        %v992 = vld [vmem:[%s332 + $0xe68] sm:$0xff]
        %v993 = vld [vmem:[%s332 + $0xe70] sm:$0xff]
        %v994 = vld [vmem:[%s332 + $0xe78] sm:$0xff]
        %v995 = vld [vmem:[%s332 + $0xe80] sm:$0xff]
        %v996 = vld [vmem:[%s332 + $0xe88] sm:$0xff]
        %v997 = vld [vmem:[%s332 + $0xe90] sm:$0xff]
        %v998 = vld [vmem:[%s332 + $0xe98] sm:$0xff]
        %v999 = vld [vmem:[%s332 + $0xea0] sm:$0xff]
        %v1000 = vld [vmem:[%s332 + $0xea8] sm:$0xff]
        %v1001 = vld [vmem:[%s332 + $0xeb0] sm:$0xff]
        %v1002 = vld [vmem:[%s332 + $0xeb8] sm:$0xff]
        %v1003 = vld [vmem:[%s332 + $0xec0] sm:$0xff]
        %v1004 = vld [vmem:[%s332 + $0xec8] sm:$0xff]
        %v1005 = vld [vmem:[%s332 + $0xed0] sm:$0xff]
        %v1006 = vld [vmem:[%s332 + $0xed8] sm:$0xff]
        %v1007 = vld [vmem:[%s332 + $0xee0] sm:$0xff]
        %v1008 = vld [vmem:[%s332 + $0xee8] sm:$0xff]
        %v1009 = vld [vmem:[%s332 + $0xef0] sm:$0xff]
        %v1010 = vld [vmem:[%s332 + $0xef8] sm:$0xff]
        %v1011 = vld [vmem:[%s332 + $0xf00] sm:$0xff]
        %v1012 = vld [vmem:[%s332 + $0xf08] sm:$0xff]
        %v1013 = vld [vmem:[%s332 + $0xf10] sm:$0xff]
        %v1014 = vld [vmem:[%s332 + $0xf18] sm:$0xff]
        %v1015 = vld [vmem:[%s332 + $0xf20] sm:$0xff]
        %v1016 = vld [vmem:[%s332 + $0xf28] sm:$0xff]
        %v1017 = vld [vmem:[%s332 + $0xf30] sm:$0xff]
        %v1018 = vld [vmem:[%s332 + $0xf38] sm:$0xff]
        %v1019 = vld [vmem:[%s332 + $0xf40] sm:$0xff]
        %v1020 = vld [vmem:[%s332 + $0xf48] sm:$0xff]
        %v1021 = vld [vmem:[%s332 + $0xf50] sm:$0xff]
        %v1022 = vld [vmem:[%s332 + $0xf58] sm:$0xff]
        %v1023 = vld [vmem:[%s332 + $0xf60] sm:$0xff]
        %v1024 = vld [vmem:[%s332 + $0xf68] sm:$0xff]
        %v1025 = vld [vmem:[%s332 + $0xf70] sm:$0xff]
        %v1026 = vld [vmem:[%s332 + $0xf78] sm:$0xff]
        %v1027 = vld [vmem:[%s332 + $0xf80] sm:$0xff]
        %v1028 = vld [vmem:[%s332 + $0xf88] sm:$0xff]
        %v1029 = vld [vmem:[%s332 + $0xf90] sm:$0xff]
        %v1030 = vld [vmem:[%s332 + $0xf98] sm:$0xff]
        %v1031 = vld [vmem:[%s332 + $0xfa0] sm:$0xff]
        %v1032 = vld [vmem:[%s332 + $0xfa8] sm:$0xff]
        %v1033 = vld [vmem:[%s332 + $0xfb0] sm:$0xff]
        %v1034 = vld [vmem:[%s332 + $0xfb8] sm:$0xff]
        %v1035 = vld [vmem:[%s332 + $0xfc0] sm:$0xff]
        %v1036 = vld [vmem:[%s332 + $0xfc8] sm:$0xff]
        %v1037 = vld [vmem:[%s332 + $0xfd0] sm:$0xff]
        %v1038 = vld [vmem:[%s332 + $0xfd8] sm:$0xff]
        %v1039 = vld [vmem:[%s332 + $0xfe0] sm:$0xff]
        %v1040 = vld [vmem:[%s332 + $0xfe8] sm:$0xff]
        %v1041 = vld [vmem:[%s332 + $0xff0] sm:$0xff]
        %v1042 = vld [vmem:[%s332 + $0xff8] sm:$0xff]
        %v1043 = vunpack.c.l.s8.bf16 %v531
        %v1044 = vunpack.c.l.s8.bf16 %v532
        %v1045 = vunpack.c.l.s8.bf16 %v533
        %v1046 = vunpack.c.l.s8.bf16 %v534
        %v1047 = vunpack.c.l.s8.bf16 %v535
        %v1048 = vunpack.c.l.s8.bf16 %v536
        %v1049 = vunpack.c.l.s8.bf16 %v537
        %v1050 = vunpack.c.l.s8.bf16 %v538
        %v1051 = vunpack.c.l.s8.bf16 %v539
        %v1052 = vunpack.c.l.s8.bf16 %v540
        %v1053 = vunpack.c.l.s8.bf16 %v541
        %v1054 = vunpack.c.l.s8.bf16 %v542
        %v1055 = vunpack.c.l.s8.bf16 %v543
        %v1056 = vunpack.c.l.s8.bf16 %v544
        %v1057 = vunpack.c.l.s8.bf16 %v545
        %v1058 = vunpack.c.l.s8.bf16 %v546
        %v1059 = vunpack.c.h.s8.bf16 %v531
        %v1060 = vunpack.c.h.s8.bf16 %v532
        %v1061 = vunpack.c.h.s8.bf16 %v533
        %v1062 = vunpack.c.h.s8.bf16 %v534
        %v1063 = vunpack.c.h.s8.bf16 %v535
        %v1064 = vunpack.c.h.s8.bf16 %v536
        %v1065 = vunpack.c.h.s8.bf16 %v537
        %v1066 = vunpack.c.h.s8.bf16 %v538
        %v1067 = vunpack.c.h.s8.bf16 %v539
        %v1068 = vunpack.c.h.s8.bf16 %v540
        %v1069 = vunpack.c.h.s8.bf16 %v541
        %v1070 = vunpack.c.h.s8.bf16 %v542
        %v1071 = vunpack.c.h.s8.bf16 %v543
        %v1072 = vunpack.c.h.s8.bf16 %v544
        %v1073 = vunpack.c.h.s8.bf16 %v545
        %v1074 = vunpack.c.h.s8.bf16 %v546
        %v1075 = vunpack.c.l.s8.bf16 %v547
        %v1076 = vunpack.c.l.s8.bf16 %v548
        %v1077 = vunpack.c.l.s8.bf16 %v549
        %v1078 = vunpack.c.l.s8.bf16 %v550
        %v1079 = vunpack.c.l.s8.bf16 %v551
        %v1080 = vunpack.c.l.s8.bf16 %v552
        %v1081 = vunpack.c.l.s8.bf16 %v553
        %v1082 = vunpack.c.l.s8.bf16 %v554
        %v1083 = vunpack.c.l.s8.bf16 %v555
        %v1084 = vunpack.c.l.s8.bf16 %v556
        %v1085 = vunpack.c.l.s8.bf16 %v557
        %v1086 = vunpack.c.l.s8.bf16 %v558
        %v1087 = vunpack.c.l.s8.bf16 %v559
        %v1088 = vunpack.c.l.s8.bf16 %v560
        %v1089 = vunpack.c.l.s8.bf16 %v561
        %v1090 = vunpack.c.l.s8.bf16 %v562
        %v1091 = vunpack.c.h.s8.bf16 %v547
        %v1092 = vunpack.c.h.s8.bf16 %v548
        %v1093 = vunpack.c.h.s8.bf16 %v549
        %v1094 = vunpack.c.h.s8.bf16 %v550
        %v1095 = vunpack.c.h.s8.bf16 %v551
        %v1096 = vunpack.c.h.s8.bf16 %v552
        %v1097 = vunpack.c.h.s8.bf16 %v553
        %v1098 = vunpack.c.h.s8.bf16 %v554
        %v1099 = vunpack.c.h.s8.bf16 %v555
        %v1100 = vunpack.c.h.s8.bf16 %v556
        %v1101 = vunpack.c.h.s8.bf16 %v557
        %v1102 = vunpack.c.h.s8.bf16 %v558
        %v1103 = vunpack.c.h.s8.bf16 %v559
        %v1104 = vunpack.c.h.s8.bf16 %v560
        %v1105 = vunpack.c.h.s8.bf16 %v561
        %v1106 = vunpack.c.h.s8.bf16 %v562
        %v1107 = vunpack.c.l.s8.bf16 %v563
        %v1108 = vunpack.c.l.s8.bf16 %v564
        %v1109 = vunpack.c.l.s8.bf16 %v565
        %v1110 = vunpack.c.l.s8.bf16 %v566
        %v1111 = vunpack.c.l.s8.bf16 %v567
        %v1112 = vunpack.c.l.s8.bf16 %v568
        %v1113 = vunpack.c.l.s8.bf16 %v569
        %v1114 = vunpack.c.l.s8.bf16 %v570
        %v1115 = vunpack.c.l.s8.bf16 %v571
        %v1116 = vunpack.c.l.s8.bf16 %v572
        %v1117 = vunpack.c.l.s8.bf16 %v573
        %v1118 = vunpack.c.l.s8.bf16 %v574
        %v1119 = vunpack.c.l.s8.bf16 %v575
        %v1120 = vunpack.c.l.s8.bf16 %v576
        %v1121 = vunpack.c.l.s8.bf16 %v577
        %v1122 = vunpack.c.l.s8.bf16 %v578
        %v1123 = vunpack.c.h.s8.bf16 %v563
        %v1124 = vunpack.c.h.s8.bf16 %v564
        %v1125 = vunpack.c.h.s8.bf16 %v565
        %v1126 = vunpack.c.h.s8.bf16 %v566
        %v1127 = vunpack.c.h.s8.bf16 %v567
        %v1128 = vunpack.c.h.s8.bf16 %v568
        %v1129 = vunpack.c.h.s8.bf16 %v569
        %v1130 = vunpack.c.h.s8.bf16 %v570
        %v1131 = vunpack.c.h.s8.bf16 %v571
        %v1132 = vunpack.c.h.s8.bf16 %v572
        %v1133 = vunpack.c.h.s8.bf16 %v573
        %v1134 = vunpack.c.h.s8.bf16 %v574
        %v1135 = vunpack.c.h.s8.bf16 %v575
        %v1136 = vunpack.c.h.s8.bf16 %v576
        %v1137 = vunpack.c.h.s8.bf16 %v577
        %v1138 = vunpack.c.h.s8.bf16 %v578
        %v1139 = vunpack.c.l.s8.bf16 %v579
        %v1140 = vunpack.c.l.s8.bf16 %v580
        %v1141 = vunpack.c.l.s8.bf16 %v581
        %v1142 = vunpack.c.l.s8.bf16 %v582
        %v1143 = vunpack.c.l.s8.bf16 %v583
        %v1144 = vunpack.c.l.s8.bf16 %v584
        %v1145 = vunpack.c.l.s8.bf16 %v585
        %v1146 = vunpack.c.l.s8.bf16 %v586
        %v1147 = vunpack.c.l.s8.bf16 %v587
        %v1148 = vunpack.c.l.s8.bf16 %v588
        %v1149 = vunpack.c.l.s8.bf16 %v589
        %v1150 = vunpack.c.l.s8.bf16 %v590
        %v1151 = vunpack.c.l.s8.bf16 %v591
        %v1152 = vunpack.c.l.s8.bf16 %v592
        %v1153 = vunpack.c.l.s8.bf16 %v593
        %v1154 = vunpack.c.l.s8.bf16 %v594
        %v1155 = vunpack.c.h.s8.bf16 %v579
        %v1156 = vunpack.c.h.s8.bf16 %v580
        %v1157 = vunpack.c.h.s8.bf16 %v581
        %v1158 = vunpack.c.h.s8.bf16 %v582
        %v1159 = vunpack.c.h.s8.bf16 %v583
        %v1160 = vunpack.c.h.s8.bf16 %v584
        %v1161 = vunpack.c.h.s8.bf16 %v585
        %v1162 = vunpack.c.h.s8.bf16 %v586
        %v1163 = vunpack.c.h.s8.bf16 %v587
        %v1164 = vunpack.c.h.s8.bf16 %v588
        %v1165 = vunpack.c.h.s8.bf16 %v589
        %v1166 = vunpack.c.h.s8.bf16 %v590
        %v1167 = vunpack.c.h.s8.bf16 %v591
        %v1168 = vunpack.c.h.s8.bf16 %v592
        %v1169 = vunpack.c.h.s8.bf16 %v593
        %v1170 = vunpack.c.h.s8.bf16 %v594
        %v1171 = vunpack.c.l.s8.bf16 %v595
        %v1172 = vunpack.c.l.s8.bf16 %v596
        %v1173 = vunpack.c.l.s8.bf16 %v597
        %v1174 = vunpack.c.l.s8.bf16 %v598
        %v1175 = vunpack.c.l.s8.bf16 %v599
        %v1176 = vunpack.c.l.s8.bf16 %v600
        %v1177 = vunpack.c.l.s8.bf16 %v601
        %v1178 = vunpack.c.l.s8.bf16 %v602
        %v1179 = vunpack.c.l.s8.bf16 %v603
        %v1180 = vunpack.c.l.s8.bf16 %v604
        %v1181 = vunpack.c.l.s8.bf16 %v605
        %v1182 = vunpack.c.l.s8.bf16 %v606
        %v1183 = vunpack.c.l.s8.bf16 %v607
        %v1184 = vunpack.c.l.s8.bf16 %v608
        %v1185 = vunpack.c.l.s8.bf16 %v609
        %v1186 = vunpack.c.l.s8.bf16 %v610
        %v1187 = vunpack.c.h.s8.bf16 %v595
        %v1188 = vunpack.c.h.s8.bf16 %v596
        %v1189 = vunpack.c.h.s8.bf16 %v597
        %v1190 = vunpack.c.h.s8.bf16 %v598
        %v1191 = vunpack.c.h.s8.bf16 %v599
        %v1192 = vunpack.c.h.s8.bf16 %v600
        %v1193 = vunpack.c.h.s8.bf16 %v601
        %v1194 = vunpack.c.h.s8.bf16 %v602
        %v1195 = vunpack.c.h.s8.bf16 %v603
        %v1196 = vunpack.c.h.s8.bf16 %v604
        %v1197 = vunpack.c.h.s8.bf16 %v605
        %v1198 = vunpack.c.h.s8.bf16 %v606
        %v1199 = vunpack.c.h.s8.bf16 %v607
        %v1200 = vunpack.c.h.s8.bf16 %v608
        %v1201 = vunpack.c.h.s8.bf16 %v609
        %v1202 = vunpack.c.h.s8.bf16 %v610
        %v1203 = vunpack.c.l.s8.bf16 %v611
        %v1204 = vunpack.c.l.s8.bf16 %v612
        %v1205 = vunpack.c.l.s8.bf16 %v613
        %v1206 = vunpack.c.l.s8.bf16 %v614
        %v1207 = vunpack.c.l.s8.bf16 %v615
        %v1208 = vunpack.c.l.s8.bf16 %v616
        %v1209 = vunpack.c.l.s8.bf16 %v617
        %v1210 = vunpack.c.l.s8.bf16 %v618
        %v1211 = vunpack.c.l.s8.bf16 %v619
        %v1212 = vunpack.c.l.s8.bf16 %v620
        %v1213 = vunpack.c.l.s8.bf16 %v621
        %v1214 = vunpack.c.l.s8.bf16 %v622
        %v1215 = vunpack.c.l.s8.bf16 %v623
        %v1216 = vunpack.c.l.s8.bf16 %v624
        %v1217 = vunpack.c.l.s8.bf16 %v625
        %v1218 = vunpack.c.l.s8.bf16 %v626
        %v1219 = vunpack.c.h.s8.bf16 %v611
        %v1220 = vunpack.c.h.s8.bf16 %v612
        %v1221 = vunpack.c.h.s8.bf16 %v613
        %v1222 = vunpack.c.h.s8.bf16 %v614
        %v1223 = vunpack.c.h.s8.bf16 %v615
        %v1224 = vunpack.c.h.s8.bf16 %v616
        %v1225 = vunpack.c.h.s8.bf16 %v617
        %v1226 = vunpack.c.h.s8.bf16 %v618
        %v1227 = vunpack.c.h.s8.bf16 %v619
        %v1228 = vunpack.c.h.s8.bf16 %v620
        %v1229 = vunpack.c.h.s8.bf16 %v621
        %v1230 = vunpack.c.h.s8.bf16 %v622
        %v1231 = vunpack.c.h.s8.bf16 %v623
        %v1232 = vunpack.c.h.s8.bf16 %v624
        %v1233 = vunpack.c.h.s8.bf16 %v625
        %v1234 = vunpack.c.h.s8.bf16 %v626
        %v1235 = vunpack.c.l.s8.bf16 %v627
        %v1236 = vunpack.c.l.s8.bf16 %v628
        %v1237 = vunpack.c.l.s8.bf16 %v629
        %v1238 = vunpack.c.l.s8.bf16 %v630
        %v1239 = vunpack.c.l.s8.bf16 %v631
        %v1240 = vunpack.c.l.s8.bf16 %v632
        %v1241 = vunpack.c.l.s8.bf16 %v633
        %v1242 = vunpack.c.l.s8.bf16 %v634
        %v1243 = vunpack.c.l.s8.bf16 %v635
        %v1244 = vunpack.c.l.s8.bf16 %v636
        %v1245 = vunpack.c.l.s8.bf16 %v637
        %v1246 = vunpack.c.l.s8.bf16 %v638
        %v1247 = vunpack.c.l.s8.bf16 %v639
        %v1248 = vunpack.c.l.s8.bf16 %v640
        %v1249 = vunpack.c.l.s8.bf16 %v641
        %v1250 = vunpack.c.l.s8.bf16 %v642
        %v1251 = vunpack.c.h.s8.bf16 %v627
        %v1252 = vunpack.c.h.s8.bf16 %v628
        %v1253 = vunpack.c.h.s8.bf16 %v629
        %v1254 = vunpack.c.h.s8.bf16 %v630
        %v1255 = vunpack.c.h.s8.bf16 %v631
        %v1256 = vunpack.c.h.s8.bf16 %v632
        %v1257 = vunpack.c.h.s8.bf16 %v633
        %v1258 = vunpack.c.h.s8.bf16 %v634
        %v1259 = vunpack.c.h.s8.bf16 %v635
        %v1260 = vunpack.c.h.s8.bf16 %v636
        %v1261 = vunpack.c.h.s8.bf16 %v637
        %v1262 = vunpack.c.h.s8.bf16 %v638
        %v1263 = vunpack.c.h.s8.bf16 %v639
        %v1264 = vunpack.c.h.s8.bf16 %v640
        %v1265 = vunpack.c.h.s8.bf16 %v641
        %v1266 = vunpack.c.h.s8.bf16 %v642
        %v1267 = vunpack.c.l.s8.bf16 %v643
        %v1268 = vunpack.c.l.s8.bf16 %v644
        %v1269 = vunpack.c.l.s8.bf16 %v645
        %v1270 = vunpack.c.l.s8.bf16 %v646
        %v1271 = vunpack.c.l.s8.bf16 %v647
        %v1272 = vunpack.c.l.s8.bf16 %v648
        %v1273 = vunpack.c.l.s8.bf16 %v649
        %v1274 = vunpack.c.l.s8.bf16 %v650
        %v1275 = vunpack.c.l.s8.bf16 %v651
        %v1276 = vunpack.c.l.s8.bf16 %v652
        %v1277 = vunpack.c.l.s8.bf16 %v653
        %v1278 = vunpack.c.l.s8.bf16 %v654
        %v1279 = vunpack.c.l.s8.bf16 %v655
        %v1280 = vunpack.c.l.s8.bf16 %v656
        %v1281 = vunpack.c.l.s8.bf16 %v657
        %v1282 = vunpack.c.l.s8.bf16 %v658
        %v1283 = vunpack.c.h.s8.bf16 %v643
        %v1284 = vunpack.c.h.s8.bf16 %v644
        %v1285 = vunpack.c.h.s8.bf16 %v645
        %v1286 = vunpack.c.h.s8.bf16 %v646
        %v1287 = vunpack.c.h.s8.bf16 %v647
        %v1288 = vunpack.c.h.s8.bf16 %v648
        %v1289 = vunpack.c.h.s8.bf16 %v649
        %v1290 = vunpack.c.h.s8.bf16 %v650
        %v1291 = vunpack.c.h.s8.bf16 %v651
        %v1292 = vunpack.c.h.s8.bf16 %v652
        %v1293 = vunpack.c.h.s8.bf16 %v653
        %v1294 = vunpack.c.h.s8.bf16 %v654
        %v1295 = vunpack.c.h.s8.bf16 %v655
        %v1296 = vunpack.c.h.s8.bf16 %v656
        %v1297 = vunpack.c.h.s8.bf16 %v657
        %v1298 = vunpack.c.h.s8.bf16 %v658
        %v1299 = vunpack.c.l.s8.bf16 %v659
        %v1300 = vunpack.c.l.s8.bf16 %v660
        %v1301 = vunpack.c.l.s8.bf16 %v661
        %v1302 = vunpack.c.l.s8.bf16 %v662
        %v1303 = vunpack.c.l.s8.bf16 %v663
        %v1304 = vunpack.c.l.s8.bf16 %v664
        %v1305 = vunpack.c.l.s8.bf16 %v665
        %v1306 = vunpack.c.l.s8.bf16 %v666
        %v1307 = vunpack.c.l.s8.bf16 %v667
        %v1308 = vunpack.c.l.s8.bf16 %v668
        %v1309 = vunpack.c.l.s8.bf16 %v669
        %v1310 = vunpack.c.l.s8.bf16 %v670
        %v1311 = vunpack.c.l.s8.bf16 %v671
        %v1312 = vunpack.c.l.s8.bf16 %v672
        %v1313 = vunpack.c.l.s8.bf16 %v673
        %v1314 = vunpack.c.l.s8.bf16 %v674
        %v1315 = vunpack.c.h.s8.bf16 %v659
        %v1316 = vunpack.c.h.s8.bf16 %v660
        %v1317 = vunpack.c.h.s8.bf16 %v661
        %v1318 = vunpack.c.h.s8.bf16 %v662
        %v1319 = vunpack.c.h.s8.bf16 %v663
        %v1320 = vunpack.c.h.s8.bf16 %v664
        %v1321 = vunpack.c.h.s8.bf16 %v665
        %v1322 = vunpack.c.h.s8.bf16 %v666
        %v1323 = vunpack.c.h.s8.bf16 %v667
        %v1324 = vunpack.c.h.s8.bf16 %v668
        %v1325 = vunpack.c.h.s8.bf16 %v669
        %v1326 = vunpack.c.h.s8.bf16 %v670
        %v1327 = vunpack.c.h.s8.bf16 %v671
        %v1328 = vunpack.c.h.s8.bf16 %v672
        %v1329 = vunpack.c.h.s8.bf16 %v673
        %v1330 = vunpack.c.h.s8.bf16 %v674
        %v1331 = vunpack.c.l.s8.bf16 %v675
        %v1332 = vunpack.c.l.s8.bf16 %v676
        %v1333 = vunpack.c.l.s8.bf16 %v677
        %v1334 = vunpack.c.l.s8.bf16 %v678
        %v1335 = vunpack.c.l.s8.bf16 %v679
        %v1336 = vunpack.c.l.s8.bf16 %v680
        %v1337 = vunpack.c.l.s8.bf16 %v681
        %v1338 = vunpack.c.l.s8.bf16 %v682
        %v1339 = vunpack.c.l.s8.bf16 %v683
        %v1340 = vunpack.c.l.s8.bf16 %v684
        %v1341 = vunpack.c.l.s8.bf16 %v685
        %v1342 = vunpack.c.l.s8.bf16 %v686
        %v1343 = vunpack.c.l.s8.bf16 %v687
        %v1344 = vunpack.c.l.s8.bf16 %v688
        %v1345 = vunpack.c.l.s8.bf16 %v689
        %v1346 = vunpack.c.l.s8.bf16 %v690
        %v1347 = vunpack.c.h.s8.bf16 %v675
        %v1348 = vunpack.c.h.s8.bf16 %v676
        %v1349 = vunpack.c.h.s8.bf16 %v677
        %v1350 = vunpack.c.h.s8.bf16 %v678
        %v1351 = vunpack.c.h.s8.bf16 %v679
        %v1352 = vunpack.c.h.s8.bf16 %v680
        %v1353 = vunpack.c.h.s8.bf16 %v681
        %v1354 = vunpack.c.h.s8.bf16 %v682
        %v1355 = vunpack.c.h.s8.bf16 %v683
        %v1356 = vunpack.c.h.s8.bf16 %v684
        %v1357 = vunpack.c.h.s8.bf16 %v685
        %v1358 = vunpack.c.h.s8.bf16 %v686
        %v1359 = vunpack.c.h.s8.bf16 %v687
        %v1360 = vunpack.c.h.s8.bf16 %v688
        %v1361 = vunpack.c.h.s8.bf16 %v689
        %v1362 = vunpack.c.h.s8.bf16 %v690
        %v1363 = vunpack.c.l.s8.bf16 %v691
        %v1364 = vunpack.c.l.s8.bf16 %v692
        %v1365 = vunpack.c.l.s8.bf16 %v693
        %v1366 = vunpack.c.l.s8.bf16 %v694
        %v1367 = vunpack.c.l.s8.bf16 %v695
        %v1368 = vunpack.c.l.s8.bf16 %v696
        %v1369 = vunpack.c.l.s8.bf16 %v697
        %v1370 = vunpack.c.l.s8.bf16 %v698
        %v1371 = vunpack.c.l.s8.bf16 %v699
        %v1372 = vunpack.c.l.s8.bf16 %v700
        %v1373 = vunpack.c.l.s8.bf16 %v701
        %v1374 = vunpack.c.l.s8.bf16 %v702
        %v1375 = vunpack.c.l.s8.bf16 %v703
        %v1376 = vunpack.c.l.s8.bf16 %v704
        %v1377 = vunpack.c.l.s8.bf16 %v705
        %v1378 = vunpack.c.l.s8.bf16 %v706
        %v1379 = vunpack.c.h.s8.bf16 %v691
        %v1380 = vunpack.c.h.s8.bf16 %v692
        %v1381 = vunpack.c.h.s8.bf16 %v693
        %v1382 = vunpack.c.h.s8.bf16 %v694
        %v1383 = vunpack.c.h.s8.bf16 %v695
        %v1384 = vunpack.c.h.s8.bf16 %v696
        %v1385 = vunpack.c.h.s8.bf16 %v697
        %v1386 = vunpack.c.h.s8.bf16 %v698
        %v1387 = vunpack.c.h.s8.bf16 %v699
        %v1388 = vunpack.c.h.s8.bf16 %v700
        %v1389 = vunpack.c.h.s8.bf16 %v701
        %v1390 = vunpack.c.h.s8.bf16 %v702
        %v1391 = vunpack.c.h.s8.bf16 %v703
        %v1392 = vunpack.c.h.s8.bf16 %v704
        %v1393 = vunpack.c.h.s8.bf16 %v705
        %v1394 = vunpack.c.h.s8.bf16 %v706
        %v1395 = vunpack.c.l.s8.bf16 %v707
        %v1396 = vunpack.c.l.s8.bf16 %v708
        %v1397 = vunpack.c.l.s8.bf16 %v709
        %v1398 = vunpack.c.l.s8.bf16 %v710
        %v1399 = vunpack.c.l.s8.bf16 %v711
        %v1400 = vunpack.c.l.s8.bf16 %v712
        %v1401 = vunpack.c.l.s8.bf16 %v713
        %v1402 = vunpack.c.l.s8.bf16 %v714
        %v1403 = vunpack.c.l.s8.bf16 %v715
        %v1404 = vunpack.c.l.s8.bf16 %v716
        %v1405 = vunpack.c.l.s8.bf16 %v717
        %v1406 = vunpack.c.l.s8.bf16 %v718
        %v1407 = vunpack.c.l.s8.bf16 %v719
        %v1408 = vunpack.c.l.s8.bf16 %v720
        %v1409 = vunpack.c.l.s8.bf16 %v721
        %v1410 = vunpack.c.l.s8.bf16 %v722
        %v1411 = vunpack.c.h.s8.bf16 %v707
        %v1412 = vunpack.c.h.s8.bf16 %v708
        %v1413 = vunpack.c.h.s8.bf16 %v709
        %v1414 = vunpack.c.h.s8.bf16 %v710
        %v1415 = vunpack.c.h.s8.bf16 %v711
        %v1416 = vunpack.c.h.s8.bf16 %v712
        %v1417 = vunpack.c.h.s8.bf16 %v713
        %v1418 = vunpack.c.h.s8.bf16 %v714
        %v1419 = vunpack.c.h.s8.bf16 %v715
        %v1420 = vunpack.c.h.s8.bf16 %v716
        %v1421 = vunpack.c.h.s8.bf16 %v717
        %v1422 = vunpack.c.h.s8.bf16 %v718
        %v1423 = vunpack.c.h.s8.bf16 %v719
        %v1424 = vunpack.c.h.s8.bf16 %v720
        %v1425 = vunpack.c.h.s8.bf16 %v721
        %v1426 = vunpack.c.h.s8.bf16 %v722
        %v1427 = vunpack.c.l.s8.bf16 %v723
        %v1428 = vunpack.c.l.s8.bf16 %v724
        %v1429 = vunpack.c.l.s8.bf16 %v725
        %v1430 = vunpack.c.l.s8.bf16 %v726
        %v1431 = vunpack.c.l.s8.bf16 %v727
        %v1432 = vunpack.c.l.s8.bf16 %v728
        %v1433 = vunpack.c.l.s8.bf16 %v729
        %v1434 = vunpack.c.l.s8.bf16 %v730
        %v1435 = vunpack.c.l.s8.bf16 %v731
        %v1436 = vunpack.c.l.s8.bf16 %v732
        %v1437 = vunpack.c.l.s8.bf16 %v733
        %v1438 = vunpack.c.l.s8.bf16 %v734
        %v1439 = vunpack.c.l.s8.bf16 %v735
        %v1440 = vunpack.c.l.s8.bf16 %v736
        %v1441 = vunpack.c.l.s8.bf16 %v737
        %v1442 = vunpack.c.l.s8.bf16 %v738
        %v1443 = vunpack.c.h.s8.bf16 %v723
        %v1444 = vunpack.c.h.s8.bf16 %v724
        %v1445 = vunpack.c.h.s8.bf16 %v725
        %v1446 = vunpack.c.h.s8.bf16 %v726
        %v1447 = vunpack.c.h.s8.bf16 %v727
        %v1448 = vunpack.c.h.s8.bf16 %v728
        %v1449 = vunpack.c.h.s8.bf16 %v729
        %v1450 = vunpack.c.h.s8.bf16 %v730
        %v1451 = vunpack.c.h.s8.bf16 %v731
        %v1452 = vunpack.c.h.s8.bf16 %v732
        %v1453 = vunpack.c.h.s8.bf16 %v733
        %v1454 = vunpack.c.h.s8.bf16 %v734
        %v1455 = vunpack.c.h.s8.bf16 %v735
        %v1456 = vunpack.c.h.s8.bf16 %v736
        %v1457 = vunpack.c.h.s8.bf16 %v737
        %v1458 = vunpack.c.h.s8.bf16 %v738
        %v1459 = vunpack.c.l.s8.bf16 %v739
        %v1460 = vunpack.c.l.s8.bf16 %v740
        %v1461 = vunpack.c.l.s8.bf16 %v741
        %v1462 = vunpack.c.l.s8.bf16 %v742
        %v1463 = vunpack.c.l.s8.bf16 %v743
        %v1464 = vunpack.c.l.s8.bf16 %v744
        %v1465 = vunpack.c.l.s8.bf16 %v745
        %v1466 = vunpack.c.l.s8.bf16 %v746
        %v1467 = vunpack.c.l.s8.bf16 %v747
        %v1468 = vunpack.c.l.s8.bf16 %v748
        %v1469 = vunpack.c.l.s8.bf16 %v749
        %v1470 = vunpack.c.l.s8.bf16 %v750
        %v1471 = vunpack.c.l.s8.bf16 %v751
        %v1472 = vunpack.c.l.s8.bf16 %v752
        %v1473 = vunpack.c.l.s8.bf16 %v753
        %v1474 = vunpack.c.l.s8.bf16 %v754
        %v1475 = vunpack.c.h.s8.bf16 %v739
        %v1476 = vunpack.c.h.s8.bf16 %v740
        %v1477 = vunpack.c.h.s8.bf16 %v741
        %v1478 = vunpack.c.h.s8.bf16 %v742
        %v1479 = vunpack.c.h.s8.bf16 %v743
        %v1480 = vunpack.c.h.s8.bf16 %v744
        %v1481 = vunpack.c.h.s8.bf16 %v745
        %v1482 = vunpack.c.h.s8.bf16 %v746
        %v1483 = vunpack.c.h.s8.bf16 %v747
        %v1484 = vunpack.c.h.s8.bf16 %v748
        %v1485 = vunpack.c.h.s8.bf16 %v749
        %v1486 = vunpack.c.h.s8.bf16 %v750
        %v1487 = vunpack.c.h.s8.bf16 %v751
        %v1488 = vunpack.c.h.s8.bf16 %v752
        %v1489 = vunpack.c.h.s8.bf16 %v753
        %v1490 = vunpack.c.h.s8.bf16 %v754
        %v1491 = vunpack.c.l.s8.bf16 %v755
        %v1492 = vunpack.c.l.s8.bf16 %v756
        %v1493 = vunpack.c.l.s8.bf16 %v757
        %v1494 = vunpack.c.l.s8.bf16 %v758
        %v1495 = vunpack.c.l.s8.bf16 %v759
        %v1496 = vunpack.c.l.s8.bf16 %v760
        %v1497 = vunpack.c.l.s8.bf16 %v761
        %v1498 = vunpack.c.l.s8.bf16 %v762
        %v1499 = vunpack.c.l.s8.bf16 %v763
        %v1500 = vunpack.c.l.s8.bf16 %v764
        %v1501 = vunpack.c.l.s8.bf16 %v765
        %v1502 = vunpack.c.l.s8.bf16 %v766
        %v1503 = vunpack.c.l.s8.bf16 %v767
        %v1504 = vunpack.c.l.s8.bf16 %v768
        %v1505 = vunpack.c.l.s8.bf16 %v769
        %v1506 = vunpack.c.l.s8.bf16 %v770
        %v1507 = vunpack.c.h.s8.bf16 %v755
        %v1508 = vunpack.c.h.s8.bf16 %v756
        %v1509 = vunpack.c.h.s8.bf16 %v757
        %v1510 = vunpack.c.h.s8.bf16 %v758
        %v1511 = vunpack.c.h.s8.bf16 %v759
        %v1512 = vunpack.c.h.s8.bf16 %v760
        %v1513 = vunpack.c.h.s8.bf16 %v761
        %v1514 = vunpack.c.h.s8.bf16 %v762
        %v1515 = vunpack.c.h.s8.bf16 %v763
        %v1516 = vunpack.c.h.s8.bf16 %v764
        %v1517 = vunpack.c.h.s8.bf16 %v765
        %v1518 = vunpack.c.h.s8.bf16 %v766
        %v1519 = vunpack.c.h.s8.bf16 %v767
        %v1520 = vunpack.c.h.s8.bf16 %v768
        %v1521 = vunpack.c.h.s8.bf16 %v769
        %v1522 = vunpack.c.h.s8.bf16 %v770
        %v1523 = vunpack.c.l.s8.bf16 %v771
        %v1524 = vunpack.c.l.s8.bf16 %v772
        %v1525 = vunpack.c.l.s8.bf16 %v773
        %v1526 = vunpack.c.l.s8.bf16 %v774
        %v1527 = vunpack.c.l.s8.bf16 %v775
        %v1528 = vunpack.c.l.s8.bf16 %v776
        %v1529 = vunpack.c.l.s8.bf16 %v777
        %v1530 = vunpack.c.l.s8.bf16 %v778
        %v1531 = vunpack.c.l.s8.bf16 %v779
        %v1532 = vunpack.c.l.s8.bf16 %v780
        %v1533 = vunpack.c.l.s8.bf16 %v781
        %v1534 = vunpack.c.l.s8.bf16 %v782
        %v1535 = vunpack.c.l.s8.bf16 %v783
        %v1536 = vunpack.c.l.s8.bf16 %v784
        %v1537 = vunpack.c.l.s8.bf16 %v785
        %v1538 = vunpack.c.l.s8.bf16 %v786
        %v1539 = vunpack.c.h.s8.bf16 %v771
        %v1540 = vunpack.c.h.s8.bf16 %v772
        %v1541 = vunpack.c.h.s8.bf16 %v773
        %v1542 = vunpack.c.h.s8.bf16 %v774
        %v1543 = vunpack.c.h.s8.bf16 %v775
        %v1544 = vunpack.c.h.s8.bf16 %v776
        %v1545 = vunpack.c.h.s8.bf16 %v777
        %v1546 = vunpack.c.h.s8.bf16 %v778
        %v1547 = vunpack.c.h.s8.bf16 %v779
        %v1548 = vunpack.c.h.s8.bf16 %v780
        %v1549 = vunpack.c.h.s8.bf16 %v781
        %v1550 = vunpack.c.h.s8.bf16 %v782
        %v1551 = vunpack.c.h.s8.bf16 %v783
        %v1552 = vunpack.c.h.s8.bf16 %v784
        %v1553 = vunpack.c.h.s8.bf16 %v785
        %v1554 = vunpack.c.h.s8.bf16 %v786
        %v1555 = vunpack.c.l.s8.bf16 %v787
        %v1556 = vunpack.c.l.s8.bf16 %v788
        %v1557 = vunpack.c.l.s8.bf16 %v789
        %v1558 = vunpack.c.l.s8.bf16 %v790
        %v1559 = vunpack.c.l.s8.bf16 %v791
        %v1560 = vunpack.c.l.s8.bf16 %v792
        %v1561 = vunpack.c.l.s8.bf16 %v793
        %v1562 = vunpack.c.l.s8.bf16 %v794
        %v1563 = vunpack.c.l.s8.bf16 %v795
        %v1564 = vunpack.c.l.s8.bf16 %v796
        %v1565 = vunpack.c.l.s8.bf16 %v797
        %v1566 = vunpack.c.l.s8.bf16 %v798
        %v1567 = vunpack.c.l.s8.bf16 %v799
        %v1568 = vunpack.c.l.s8.bf16 %v800
        %v1569 = vunpack.c.l.s8.bf16 %v801
        %v1570 = vunpack.c.l.s8.bf16 %v802
        %v1571 = vunpack.c.h.s8.bf16 %v787
        %v1572 = vunpack.c.h.s8.bf16 %v788
        %v1573 = vunpack.c.h.s8.bf16 %v789
        %v1574 = vunpack.c.h.s8.bf16 %v790
        %v1575 = vunpack.c.h.s8.bf16 %v791
        %v1576 = vunpack.c.h.s8.bf16 %v792
        %v1577 = vunpack.c.h.s8.bf16 %v793
        %v1578 = vunpack.c.h.s8.bf16 %v794
        %v1579 = vunpack.c.h.s8.bf16 %v795
        %v1580 = vunpack.c.h.s8.bf16 %v796
        %v1581 = vunpack.c.h.s8.bf16 %v797
        %v1582 = vunpack.c.h.s8.bf16 %v798
        %v1583 = vunpack.c.h.s8.bf16 %v799
        %v1584 = vunpack.c.h.s8.bf16 %v800
        %v1585 = vunpack.c.h.s8.bf16 %v801
        %v1586 = vunpack.c.h.s8.bf16 %v802
        %v1587 = vunpack.c.l.s8.bf16 %v803
        %v1588 = vunpack.c.l.s8.bf16 %v804
        %v1589 = vunpack.c.l.s8.bf16 %v805
        %v1590 = vunpack.c.l.s8.bf16 %v806
        %v1591 = vunpack.c.l.s8.bf16 %v807
        %v1592 = vunpack.c.l.s8.bf16 %v808
        %v1593 = vunpack.c.l.s8.bf16 %v809
        %v1594 = vunpack.c.l.s8.bf16 %v810
        %v1595 = vunpack.c.l.s8.bf16 %v811
        %v1596 = vunpack.c.l.s8.bf16 %v812
        %v1597 = vunpack.c.l.s8.bf16 %v813
        %v1598 = vunpack.c.l.s8.bf16 %v814
        %v1599 = vunpack.c.l.s8.bf16 %v815
        %v1600 = vunpack.c.l.s8.bf16 %v816
        %v1601 = vunpack.c.l.s8.bf16 %v817
        %v1602 = vunpack.c.l.s8.bf16 %v818
        %v1603 = vunpack.c.h.s8.bf16 %v803
        %v1604 = vunpack.c.h.s8.bf16 %v804
        %v1605 = vunpack.c.h.s8.bf16 %v805
        %v1606 = vunpack.c.h.s8.bf16 %v806
        %v1607 = vunpack.c.h.s8.bf16 %v807
        %v1608 = vunpack.c.h.s8.bf16 %v808
        %v1609 = vunpack.c.h.s8.bf16 %v809
        %v1610 = vunpack.c.h.s8.bf16 %v810
        %v1611 = vunpack.c.h.s8.bf16 %v811
        %v1612 = vunpack.c.h.s8.bf16 %v812
        %v1613 = vunpack.c.h.s8.bf16 %v813
        %v1614 = vunpack.c.h.s8.bf16 %v814
        %v1615 = vunpack.c.h.s8.bf16 %v815
        %v1616 = vunpack.c.h.s8.bf16 %v816
        %v1617 = vunpack.c.h.s8.bf16 %v817
        %v1618 = vunpack.c.h.s8.bf16 %v818
        %v1619 = vunpack.c.l.s8.bf16 %v819
        %v1620 = vunpack.c.l.s8.bf16 %v820
        %v1621 = vunpack.c.l.s8.bf16 %v821
        %v1622 = vunpack.c.l.s8.bf16 %v822
        %v1623 = vunpack.c.l.s8.bf16 %v823
        %v1624 = vunpack.c.l.s8.bf16 %v824
        %v1625 = vunpack.c.l.s8.bf16 %v825
        %v1626 = vunpack.c.l.s8.bf16 %v826
        %v1627 = vunpack.c.l.s8.bf16 %v827
        %v1628 = vunpack.c.l.s8.bf16 %v828
        %v1629 = vunpack.c.l.s8.bf16 %v829
        %v1630 = vunpack.c.l.s8.bf16 %v830
        %v1631 = vunpack.c.l.s8.bf16 %v831
        %v1632 = vunpack.c.l.s8.bf16 %v832
        %v1633 = vunpack.c.l.s8.bf16 %v833
        %v1634 = vunpack.c.l.s8.bf16 %v834
        %v1635 = vunpack.c.h.s8.bf16 %v819
        %v1636 = vunpack.c.h.s8.bf16 %v820
        %v1637 = vunpack.c.h.s8.bf16 %v821
        %v1638 = vunpack.c.h.s8.bf16 %v822
        %v1639 = vunpack.c.h.s8.bf16 %v823
        %v1640 = vunpack.c.h.s8.bf16 %v824
        %v1641 = vunpack.c.h.s8.bf16 %v825
        %v1642 = vunpack.c.h.s8.bf16 %v826
        %v1643 = vunpack.c.h.s8.bf16 %v827
        %v1644 = vunpack.c.h.s8.bf16 %v828
        %v1645 = vunpack.c.h.s8.bf16 %v829
        %v1646 = vunpack.c.h.s8.bf16 %v830
        %v1647 = vunpack.c.h.s8.bf16 %v831
        %v1648 = vunpack.c.h.s8.bf16 %v832
        %v1649 = vunpack.c.h.s8.bf16 %v833
        %v1650 = vunpack.c.h.s8.bf16 %v834
        %v1651 = vunpack.c.l.s8.bf16 %v835
        %v1652 = vunpack.c.l.s8.bf16 %v836
        %v1653 = vunpack.c.l.s8.bf16 %v837
        %v1654 = vunpack.c.l.s8.bf16 %v838
        %v1655 = vunpack.c.l.s8.bf16 %v839
        %v1656 = vunpack.c.l.s8.bf16 %v840
        %v1657 = vunpack.c.l.s8.bf16 %v841
        %v1658 = vunpack.c.l.s8.bf16 %v842
        %v1659 = vunpack.c.l.s8.bf16 %v843
        %v1660 = vunpack.c.l.s8.bf16 %v844
        %v1661 = vunpack.c.l.s8.bf16 %v845
        %v1662 = vunpack.c.l.s8.bf16 %v846
        %v1663 = vunpack.c.l.s8.bf16 %v847
        %v1664 = vunpack.c.l.s8.bf16 %v848
        %v1665 = vunpack.c.l.s8.bf16 %v849
        %v1666 = vunpack.c.l.s8.bf16 %v850
        %v1667 = vunpack.c.h.s8.bf16 %v835
        %v1668 = vunpack.c.h.s8.bf16 %v836
        %v1669 = vunpack.c.h.s8.bf16 %v837
        %v1670 = vunpack.c.h.s8.bf16 %v838
        %v1671 = vunpack.c.h.s8.bf16 %v839
        %v1672 = vunpack.c.h.s8.bf16 %v840
        %v1673 = vunpack.c.h.s8.bf16 %v841
        %v1674 = vunpack.c.h.s8.bf16 %v842
        %v1675 = vunpack.c.h.s8.bf16 %v843
        %v1676 = vunpack.c.h.s8.bf16 %v844
        %v1677 = vunpack.c.h.s8.bf16 %v845
        %v1678 = vunpack.c.h.s8.bf16 %v846
        %v1679 = vunpack.c.h.s8.bf16 %v847
        %v1680 = vunpack.c.h.s8.bf16 %v848
        %v1681 = vunpack.c.h.s8.bf16 %v849
        %v1682 = vunpack.c.h.s8.bf16 %v850
        %v1683 = vunpack.c.l.s8.bf16 %v851
        %v1684 = vunpack.c.l.s8.bf16 %v852
        %v1685 = vunpack.c.l.s8.bf16 %v853
        %v1686 = vunpack.c.l.s8.bf16 %v854
        %v1687 = vunpack.c.l.s8.bf16 %v855
        %v1688 = vunpack.c.l.s8.bf16 %v856
        %v1689 = vunpack.c.l.s8.bf16 %v857
        %v1690 = vunpack.c.l.s8.bf16 %v858
        %v1691 = vunpack.c.l.s8.bf16 %v859
        %v1692 = vunpack.c.l.s8.bf16 %v860
        %v1693 = vunpack.c.l.s8.bf16 %v861
        %v1694 = vunpack.c.l.s8.bf16 %v862
        %v1695 = vunpack.c.l.s8.bf16 %v863
        %v1696 = vunpack.c.l.s8.bf16 %v864
        %v1697 = vunpack.c.l.s8.bf16 %v865
        %v1698 = vunpack.c.l.s8.bf16 %v866
        %v1699 = vunpack.c.h.s8.bf16 %v851
        %v1700 = vunpack.c.h.s8.bf16 %v852
        %v1701 = vunpack.c.h.s8.bf16 %v853
        %v1702 = vunpack.c.h.s8.bf16 %v854
        %v1703 = vunpack.c.h.s8.bf16 %v855
        %v1704 = vunpack.c.h.s8.bf16 %v856
        %v1705 = vunpack.c.h.s8.bf16 %v857
        %v1706 = vunpack.c.h.s8.bf16 %v858
        %v1707 = vunpack.c.h.s8.bf16 %v859
        %v1708 = vunpack.c.h.s8.bf16 %v860
        %v1709 = vunpack.c.h.s8.bf16 %v861
        %v1710 = vunpack.c.h.s8.bf16 %v862
        %v1711 = vunpack.c.h.s8.bf16 %v863
        %v1712 = vunpack.c.h.s8.bf16 %v864
        %v1713 = vunpack.c.h.s8.bf16 %v865
        %v1714 = vunpack.c.h.s8.bf16 %v866
        %v1715 = vunpack.c.l.s8.bf16 %v867
        %v1716 = vunpack.c.l.s8.bf16 %v868
        %v1717 = vunpack.c.l.s8.bf16 %v869
        %v1718 = vunpack.c.l.s8.bf16 %v870
        %v1719 = vunpack.c.l.s8.bf16 %v871
        %v1720 = vunpack.c.l.s8.bf16 %v872
        %v1721 = vunpack.c.l.s8.bf16 %v873
        %v1722 = vunpack.c.l.s8.bf16 %v874
        %v1723 = vunpack.c.l.s8.bf16 %v875
        %v1724 = vunpack.c.l.s8.bf16 %v876
        %v1725 = vunpack.c.l.s8.bf16 %v877
        %v1726 = vunpack.c.l.s8.bf16 %v878
        %v1727 = vunpack.c.l.s8.bf16 %v879
        %v1728 = vunpack.c.l.s8.bf16 %v880
        %v1729 = vunpack.c.l.s8.bf16 %v881
        %v1730 = vunpack.c.l.s8.bf16 %v882
        %v1731 = vunpack.c.h.s8.bf16 %v867
        %v1732 = vunpack.c.h.s8.bf16 %v868
        %v1733 = vunpack.c.h.s8.bf16 %v869
        %v1734 = vunpack.c.h.s8.bf16 %v870
        %v1735 = vunpack.c.h.s8.bf16 %v871
        %v1736 = vunpack.c.h.s8.bf16 %v872
        %v1737 = vunpack.c.h.s8.bf16 %v873
        %v1738 = vunpack.c.h.s8.bf16 %v874
        %v1739 = vunpack.c.h.s8.bf16 %v875
        %v1740 = vunpack.c.h.s8.bf16 %v876
        %v1741 = vunpack.c.h.s8.bf16 %v877
        %v1742 = vunpack.c.h.s8.bf16 %v878
        %v1743 = vunpack.c.h.s8.bf16 %v879
        %v1744 = vunpack.c.h.s8.bf16 %v880
        %v1745 = vunpack.c.h.s8.bf16 %v881
        %v1746 = vunpack.c.h.s8.bf16 %v882
        %v1747 = vunpack.c.l.s8.bf16 %v883
        %v1748 = vunpack.c.l.s8.bf16 %v884
        %v1749 = vunpack.c.l.s8.bf16 %v885
        %v1750 = vunpack.c.l.s8.bf16 %v886
        %v1751 = vunpack.c.l.s8.bf16 %v887
        %v1752 = vunpack.c.l.s8.bf16 %v888
        %v1753 = vunpack.c.l.s8.bf16 %v889
        %v1754 = vunpack.c.l.s8.bf16 %v890
        %v1755 = vunpack.c.l.s8.bf16 %v891
        %v1756 = vunpack.c.l.s8.bf16 %v892
        %v1757 = vunpack.c.l.s8.bf16 %v893
        %v1758 = vunpack.c.l.s8.bf16 %v894
        %v1759 = vunpack.c.l.s8.bf16 %v895
        %v1760 = vunpack.c.l.s8.bf16 %v896
        %v1761 = vunpack.c.l.s8.bf16 %v897
        %v1762 = vunpack.c.l.s8.bf16 %v898
        %v1763 = vunpack.c.h.s8.bf16 %v883
        %v1764 = vunpack.c.h.s8.bf16 %v884
        %v1765 = vunpack.c.h.s8.bf16 %v885
        %v1766 = vunpack.c.h.s8.bf16 %v886
        %v1767 = vunpack.c.h.s8.bf16 %v887
        %v1768 = vunpack.c.h.s8.bf16 %v888
        %v1769 = vunpack.c.h.s8.bf16 %v889
        %v1770 = vunpack.c.h.s8.bf16 %v890
        %v1771 = vunpack.c.h.s8.bf16 %v891
        %v1772 = vunpack.c.h.s8.bf16 %v892
        %v1773 = vunpack.c.h.s8.bf16 %v893
        %v1774 = vunpack.c.h.s8.bf16 %v894
        %v1775 = vunpack.c.h.s8.bf16 %v895
        %v1776 = vunpack.c.h.s8.bf16 %v896
        %v1777 = vunpack.c.h.s8.bf16 %v897
        %v1778 = vunpack.c.h.s8.bf16 %v898
        %v1779 = vunpack.c.l.s8.bf16 %v899
        %v1780 = vunpack.c.l.s8.bf16 %v900
        %v1781 = vunpack.c.l.s8.bf16 %v901
        %v1782 = vunpack.c.l.s8.bf16 %v902
        %v1783 = vunpack.c.l.s8.bf16 %v903
        %v1784 = vunpack.c.l.s8.bf16 %v904
        %v1785 = vunpack.c.l.s8.bf16 %v905
        %v1786 = vunpack.c.l.s8.bf16 %v906
        %v1787 = vunpack.c.l.s8.bf16 %v907
        %v1788 = vunpack.c.l.s8.bf16 %v908
        %v1789 = vunpack.c.l.s8.bf16 %v909
        %v1790 = vunpack.c.l.s8.bf16 %v910
        %v1791 = vunpack.c.l.s8.bf16 %v911
        %v1792 = vunpack.c.l.s8.bf16 %v912
        %v1793 = vunpack.c.l.s8.bf16 %v913
        %v1794 = vunpack.c.l.s8.bf16 %v914
        %v1795 = vunpack.c.h.s8.bf16 %v899
        %v1796 = vunpack.c.h.s8.bf16 %v900
        %v1797 = vunpack.c.h.s8.bf16 %v901
        %v1798 = vunpack.c.h.s8.bf16 %v902
        %v1799 = vunpack.c.h.s8.bf16 %v903
        %v1800 = vunpack.c.h.s8.bf16 %v904
        %v1801 = vunpack.c.h.s8.bf16 %v905
        %v1802 = vunpack.c.h.s8.bf16 %v906
        %v1803 = vunpack.c.h.s8.bf16 %v907
        %v1804 = vunpack.c.h.s8.bf16 %v908
        %v1805 = vunpack.c.h.s8.bf16 %v909
        %v1806 = vunpack.c.h.s8.bf16 %v910
        %v1807 = vunpack.c.h.s8.bf16 %v911
        %v1808 = vunpack.c.h.s8.bf16 %v912
        %v1809 = vunpack.c.h.s8.bf16 %v913
        %v1810 = vunpack.c.h.s8.bf16 %v914
        %v1811 = vunpack.c.l.s8.bf16 %v915
        %v1812 = vunpack.c.l.s8.bf16 %v916
        %v1813 = vunpack.c.l.s8.bf16 %v917
        %v1814 = vunpack.c.l.s8.bf16 %v918
        %v1815 = vunpack.c.l.s8.bf16 %v919
        %v1816 = vunpack.c.l.s8.bf16 %v920
        %v1817 = vunpack.c.l.s8.bf16 %v921
        %v1818 = vunpack.c.l.s8.bf16 %v922
        %v1819 = vunpack.c.l.s8.bf16 %v923
        %v1820 = vunpack.c.l.s8.bf16 %v924
        %v1821 = vunpack.c.l.s8.bf16 %v925
        %v1822 = vunpack.c.l.s8.bf16 %v926
        %v1823 = vunpack.c.l.s8.bf16 %v927
        %v1824 = vunpack.c.l.s8.bf16 %v928
        %v1825 = vunpack.c.l.s8.bf16 %v929
        %v1826 = vunpack.c.l.s8.bf16 %v930
        %v1827 = vunpack.c.h.s8.bf16 %v915
        %v1828 = vunpack.c.h.s8.bf16 %v916
        %v1829 = vunpack.c.h.s8.bf16 %v917
        %v1830 = vunpack.c.h.s8.bf16 %v918
        %v1831 = vunpack.c.h.s8.bf16 %v919
        %v1832 = vunpack.c.h.s8.bf16 %v920
        %v1833 = vunpack.c.h.s8.bf16 %v921
        %v1834 = vunpack.c.h.s8.bf16 %v922
        %v1835 = vunpack.c.h.s8.bf16 %v923
        %v1836 = vunpack.c.h.s8.bf16 %v924
        %v1837 = vunpack.c.h.s8.bf16 %v925
        %v1838 = vunpack.c.h.s8.bf16 %v926
        %v1839 = vunpack.c.h.s8.bf16 %v927
        %v1840 = vunpack.c.h.s8.bf16 %v928
        %v1841 = vunpack.c.h.s8.bf16 %v929
        %v1842 = vunpack.c.h.s8.bf16 %v930
        %v1843 = vunpack.c.l.s8.bf16 %v931
        %v1844 = vunpack.c.l.s8.bf16 %v932
        %v1845 = vunpack.c.l.s8.bf16 %v933
        %v1846 = vunpack.c.l.s8.bf16 %v934
        %v1847 = vunpack.c.l.s8.bf16 %v935
        %v1848 = vunpack.c.l.s8.bf16 %v936
        %v1849 = vunpack.c.l.s8.bf16 %v937
        %v1850 = vunpack.c.l.s8.bf16 %v938
        %v1851 = vunpack.c.l.s8.bf16 %v939
        %v1852 = vunpack.c.l.s8.bf16 %v940
        %v1853 = vunpack.c.l.s8.bf16 %v941
        %v1854 = vunpack.c.l.s8.bf16 %v942
        %v1855 = vunpack.c.l.s8.bf16 %v943
        %v1856 = vunpack.c.l.s8.bf16 %v944
        %v1857 = vunpack.c.l.s8.bf16 %v945
        %v1858 = vunpack.c.l.s8.bf16 %v946
        %v1859 = vunpack.c.h.s8.bf16 %v931
        %v1860 = vunpack.c.h.s8.bf16 %v932
        %v1861 = vunpack.c.h.s8.bf16 %v933
        %v1862 = vunpack.c.h.s8.bf16 %v934
        %v1863 = vunpack.c.h.s8.bf16 %v935
        %v1864 = vunpack.c.h.s8.bf16 %v936
        %v1865 = vunpack.c.h.s8.bf16 %v937
        %v1866 = vunpack.c.h.s8.bf16 %v938
        %v1867 = vunpack.c.h.s8.bf16 %v939
        %v1868 = vunpack.c.h.s8.bf16 %v940
        %v1869 = vunpack.c.h.s8.bf16 %v941
        %v1870 = vunpack.c.h.s8.bf16 %v942
        %v1871 = vunpack.c.h.s8.bf16 %v943
        %v1872 = vunpack.c.h.s8.bf16 %v944
        %v1873 = vunpack.c.h.s8.bf16 %v945
        %v1874 = vunpack.c.h.s8.bf16 %v946
        %v1875 = vunpack.c.l.s8.bf16 %v947
        %v1876 = vunpack.c.l.s8.bf16 %v948
        %v1877 = vunpack.c.l.s8.bf16 %v949
        %v1878 = vunpack.c.l.s8.bf16 %v950
        %v1879 = vunpack.c.l.s8.bf16 %v951
        %v1880 = vunpack.c.l.s8.bf16 %v952
        %v1881 = vunpack.c.l.s8.bf16 %v953
        %v1882 = vunpack.c.l.s8.bf16 %v954
        %v1883 = vunpack.c.l.s8.bf16 %v955
        %v1884 = vunpack.c.l.s8.bf16 %v956
        %v1885 = vunpack.c.l.s8.bf16 %v957
        %v1886 = vunpack.c.l.s8.bf16 %v958
        %v1887 = vunpack.c.l.s8.bf16 %v959
        %v1888 = vunpack.c.l.s8.bf16 %v960
        %v1889 = vunpack.c.l.s8.bf16 %v961
        %v1890 = vunpack.c.l.s8.bf16 %v962
        %v1891 = vunpack.c.h.s8.bf16 %v947
        %v1892 = vunpack.c.h.s8.bf16 %v948
        %v1893 = vunpack.c.h.s8.bf16 %v949
        %v1894 = vunpack.c.h.s8.bf16 %v950
        %v1895 = vunpack.c.h.s8.bf16 %v951
        %v1896 = vunpack.c.h.s8.bf16 %v952
        %v1897 = vunpack.c.h.s8.bf16 %v953
        %v1898 = vunpack.c.h.s8.bf16 %v954
        %v1899 = vunpack.c.h.s8.bf16 %v955
        %v1900 = vunpack.c.h.s8.bf16 %v956
        %v1901 = vunpack.c.h.s8.bf16 %v957
        %v1902 = vunpack.c.h.s8.bf16 %v958
        %v1903 = vunpack.c.h.s8.bf16 %v959
        %v1904 = vunpack.c.h.s8.bf16 %v960
        %v1905 = vunpack.c.h.s8.bf16 %v961
        %v1906 = vunpack.c.h.s8.bf16 %v962
        %v1907 = vunpack.c.l.s8.bf16 %v963
        %v1908 = vunpack.c.l.s8.bf16 %v964
        %v1909 = vunpack.c.l.s8.bf16 %v965
        %v1910 = vunpack.c.l.s8.bf16 %v966
        %v1911 = vunpack.c.l.s8.bf16 %v967
        %v1912 = vunpack.c.l.s8.bf16 %v968
        %v1913 = vunpack.c.l.s8.bf16 %v969
        %v1914 = vunpack.c.l.s8.bf16 %v970
        %v1915 = vunpack.c.l.s8.bf16 %v971
        %v1916 = vunpack.c.l.s8.bf16 %v972
        %v1917 = vunpack.c.l.s8.bf16 %v973
        %v1918 = vunpack.c.l.s8.bf16 %v974
        %v1919 = vunpack.c.l.s8.bf16 %v975
        %v1920 = vunpack.c.l.s8.bf16 %v976
        %v1921 = vunpack.c.l.s8.bf16 %v977
        %v1922 = vunpack.c.l.s8.bf16 %v978
        %v1923 = vunpack.c.h.s8.bf16 %v963
        %v1924 = vunpack.c.h.s8.bf16 %v964
        %v1925 = vunpack.c.h.s8.bf16 %v965
        %v1926 = vunpack.c.h.s8.bf16 %v966
        %v1927 = vunpack.c.h.s8.bf16 %v967
        %v1928 = vunpack.c.h.s8.bf16 %v968
        %v1929 = vunpack.c.h.s8.bf16 %v969
        %v1930 = vunpack.c.h.s8.bf16 %v970
        %v1931 = vunpack.c.h.s8.bf16 %v971
        %v1932 = vunpack.c.h.s8.bf16 %v972
        %v1933 = vunpack.c.h.s8.bf16 %v973
        %v1934 = vunpack.c.h.s8.bf16 %v974
        %v1935 = vunpack.c.h.s8.bf16 %v975
        %v1936 = vunpack.c.h.s8.bf16 %v976
        %v1937 = vunpack.c.h.s8.bf16 %v977
        %v1938 = vunpack.c.h.s8.bf16 %v978
        %v1939 = vunpack.c.l.s8.bf16 %v979
        %v1940 = vunpack.c.l.s8.bf16 %v980
        %v1941 = vunpack.c.l.s8.bf16 %v981
        %v1942 = vunpack.c.l.s8.bf16 %v982
        %v1943 = vunpack.c.l.s8.bf16 %v983
        %v1944 = vunpack.c.l.s8.bf16 %v984
        %v1945 = vunpack.c.l.s8.bf16 %v985
        %v1946 = vunpack.c.l.s8.bf16 %v986
        %v1947 = vunpack.c.l.s8.bf16 %v987
        %v1948 = vunpack.c.l.s8.bf16 %v988
        %v1949 = vunpack.c.l.s8.bf16 %v989
        %v1950 = vunpack.c.l.s8.bf16 %v990
        %v1951 = vunpack.c.l.s8.bf16 %v991
        %v1952 = vunpack.c.l.s8.bf16 %v992
        %v1953 = vunpack.c.l.s8.bf16 %v993
        %v1954 = vunpack.c.l.s8.bf16 %v994
        %v1955 = vunpack.c.h.s8.bf16 %v979
        %v1956 = vunpack.c.h.s8.bf16 %v980
        %v1957 = vunpack.c.h.s8.bf16 %v981
        %v1958 = vunpack.c.h.s8.bf16 %v982
        %v1959 = vunpack.c.h.s8.bf16 %v983
        %v1960 = vunpack.c.h.s8.bf16 %v984
        %v1961 = vunpack.c.h.s8.bf16 %v985
        %v1962 = vunpack.c.h.s8.bf16 %v986
        %v1963 = vunpack.c.h.s8.bf16 %v987
        %v1964 = vunpack.c.h.s8.bf16 %v988
        %v1965 = vunpack.c.h.s8.bf16 %v989
        %v1966 = vunpack.c.h.s8.bf16 %v990
        %v1967 = vunpack.c.h.s8.bf16 %v991
        %v1968 = vunpack.c.h.s8.bf16 %v992
        %v1969 = vunpack.c.h.s8.bf16 %v993
        %v1970 = vunpack.c.h.s8.bf16 %v994
        %v1971 = vunpack.c.l.s8.bf16 %v995
        %v1972 = vunpack.c.l.s8.bf16 %v996
        %v1973 = vunpack.c.l.s8.bf16 %v997
        %v1974 = vunpack.c.l.s8.bf16 %v998
        %v1975 = vunpack.c.l.s8.bf16 %v999
        %v1976 = vunpack.c.l.s8.bf16 %v1000
        %v1977 = vunpack.c.l.s8.bf16 %v1001
        %v1978 = vunpack.c.l.s8.bf16 %v1002
        %v1979 = vunpack.c.l.s8.bf16 %v1003
        %v1980 = vunpack.c.l.s8.bf16 %v1004
        %v1981 = vunpack.c.l.s8.bf16 %v1005
        %v1982 = vunpack.c.l.s8.bf16 %v1006
        %v1983 = vunpack.c.l.s8.bf16 %v1007
        %v1984 = vunpack.c.l.s8.bf16 %v1008
        %v1985 = vunpack.c.l.s8.bf16 %v1009
        %v1986 = vunpack.c.l.s8.bf16 %v1010
        %v1987 = vunpack.c.h.s8.bf16 %v995
        %v1988 = vunpack.c.h.s8.bf16 %v996
        %v1989 = vunpack.c.h.s8.bf16 %v997
        %v1990 = vunpack.c.h.s8.bf16 %v998
        %v1991 = vunpack.c.h.s8.bf16 %v999
        %v1992 = vunpack.c.h.s8.bf16 %v1000
        %v1993 = vunpack.c.h.s8.bf16 %v1001
        %v1994 = vunpack.c.h.s8.bf16 %v1002
        %v1995 = vunpack.c.h.s8.bf16 %v1003
        %v1996 = vunpack.c.h.s8.bf16 %v1004
        %v1997 = vunpack.c.h.s8.bf16 %v1005
        %v1998 = vunpack.c.h.s8.bf16 %v1006
        %v1999 = vunpack.c.h.s8.bf16 %v1007
        %v2000 = vunpack.c.h.s8.bf16 %v1008
        %v2001 = vunpack.c.h.s8.bf16 %v1009
        %v2002 = vunpack.c.h.s8.bf16 %v1010
        %v2003 = vunpack.c.l.s8.bf16 %v1011
        %v2004 = vunpack.c.l.s8.bf16 %v1012
        %v2005 = vunpack.c.l.s8.bf16 %v1013
        %v2006 = vunpack.c.l.s8.bf16 %v1014
        %v2007 = vunpack.c.l.s8.bf16 %v1015
        %v2008 = vunpack.c.l.s8.bf16 %v1016
        %v2009 = vunpack.c.l.s8.bf16 %v1017
        %v2010 = vunpack.c.l.s8.bf16 %v1018
        %v2011 = vunpack.c.l.s8.bf16 %v1019
        %v2012 = vunpack.c.l.s8.bf16 %v1020
        %v2013 = vunpack.c.l.s8.bf16 %v1021
        %v2014 = vunpack.c.l.s8.bf16 %v1022
        %v2015 = vunpack.c.l.s8.bf16 %v1023
        %v2016 = vunpack.c.l.s8.bf16 %v1024
        %v2017 = vunpack.c.l.s8.bf16 %v1025
        %v2018 = vunpack.c.l.s8.bf16 %v1026
        %v2019 = vunpack.c.h.s8.bf16 %v1011
        %v2020 = vunpack.c.h.s8.bf16 %v1012
        %v2021 = vunpack.c.h.s8.bf16 %v1013
        %v2022 = vunpack.c.h.s8.bf16 %v1014
        %v2023 = vunpack.c.h.s8.bf16 %v1015
        %v2024 = vunpack.c.h.s8.bf16 %v1016
        %v2025 = vunpack.c.h.s8.bf16 %v1017
        %v2026 = vunpack.c.h.s8.bf16 %v1018
        %v2027 = vunpack.c.h.s8.bf16 %v1019
        %v2028 = vunpack.c.h.s8.bf16 %v1020
        %v2029 = vunpack.c.h.s8.bf16 %v1021
        %v2030 = vunpack.c.h.s8.bf16 %v1022
        %v2031 = vunpack.c.h.s8.bf16 %v1023
        %v2032 = vunpack.c.h.s8.bf16 %v1024
        %v2033 = vunpack.c.h.s8.bf16 %v1025
        %v2034 = vunpack.c.h.s8.bf16 %v1026
        %v2035 = vunpack.c.l.s8.bf16 %v1027
        %v2036 = vunpack.c.l.s8.bf16 %v1028
        %v2037 = vunpack.c.l.s8.bf16 %v1029
        %v2038 = vunpack.c.l.s8.bf16 %v1030
        %v2039 = vunpack.c.l.s8.bf16 %v1031
        %v2040 = vunpack.c.l.s8.bf16 %v1032
        %v2041 = vunpack.c.l.s8.bf16 %v1033
        %v2042 = vunpack.c.l.s8.bf16 %v1034
        %v2043 = vunpack.c.l.s8.bf16 %v1035
        %v2044 = vunpack.c.l.s8.bf16 %v1036
        %v2045 = vunpack.c.l.s8.bf16 %v1037
        %v2046 = vunpack.c.l.s8.bf16 %v1038
        %v2047 = vunpack.c.l.s8.bf16 %v1039
        %v2048 = vunpack.c.l.s8.bf16 %v1040
        %v2049 = vunpack.c.l.s8.bf16 %v1041
        %v2050 = vunpack.c.l.s8.bf16 %v1042
        %v2051 = vunpack.c.h.s8.bf16 %v1027
        %v2052 = vunpack.c.h.s8.bf16 %v1028
        %v2053 = vunpack.c.h.s8.bf16 %v1029
        %v2054 = vunpack.c.h.s8.bf16 %v1030
        %v2055 = vunpack.c.h.s8.bf16 %v1031
        %v2056 = vunpack.c.h.s8.bf16 %v1032
        %v2057 = vunpack.c.h.s8.bf16 %v1033
        %v2058 = vunpack.c.h.s8.bf16 %v1034
        %v2059 = vunpack.c.h.s8.bf16 %v1035
        %v2060 = vunpack.c.h.s8.bf16 %v1036
        %v2061 = vunpack.c.h.s8.bf16 %v1037
        %v2062 = vunpack.c.h.s8.bf16 %v1038
        %v2063 = vunpack.c.h.s8.bf16 %v1039
        %v2064 = vunpack.c.h.s8.bf16 %v1040
        %v2065 = vunpack.c.h.s8.bf16 %v1041
        %v2066 = vunpack.c.h.s8.bf16 %v1042
        %2067 = vmatprep.subr.bf16.mxu0 %v1044
        %2068 = vmatpush1.bf16.xpose.msra.mxu0 %v1043
        %2069 = vmatprep.subr.bf16.mxu0 %v1060
        %2070 = vmatpush1.bf16.xpose.msra.mxu0 %v1059
        %2071 = vmatprep.subr.bf16.mxu0 %v1076
        %2072 = vmatpush1.bf16.xpose.msra.mxu0 %v1075
        %2073 = vmatprep.subr.bf16.mxu0 %v1092
        %2074 = vmatpush1.bf16.xpose.msra.mxu0 %v1091
        %2075 = vmatprep.subr.bf16.mxu0 %v1108
        %2076 = vmatpush1.bf16.xpose.msra.mxu0 %v1107
        %2077 = vmatprep.subr.bf16.mxu0 %v1124
        %2078 = vmatpush1.bf16.xpose.msra.mxu0 %v1123
        %2079 = vmatprep.subr.bf16.mxu0 %v1140
        %2080 = vmatpush1.bf16.xpose.msra.mxu0 %v1139
        %2081 = vmatprep.subr.bf16.mxu0 %v1156
        %2082 = vmatpush1.bf16.xpose.msra.mxu0 %v1155
        %2083 = vmatprep.subr.bf16.mxu0 %v1172
        %2084 = vmatpush1.bf16.xpose.msra.mxu0 %v1171
        %2085 = vmatprep.subr.bf16.mxu0 %v1188
        %2086 = vmatpush1.bf16.xpose.msra.mxu0 %v1187
        %2087 = vmatprep.subr.bf16.mxu0 %v1204
        %2088 = vmatpush1.bf16.xpose.msra.mxu0 %v1203
        %2089 = vmatprep.subr.bf16.mxu0 %v1220
        %2090 = vmatpush1.bf16.xpose.msra.mxu0 %v1219
        %2091 = vmatprep.subr.bf16.mxu0 %v1236
        %2092 = vmatpush1.bf16.xpose.msra.mxu0 %v1235
        %2093 = vmatprep.subr.bf16.mxu0 %v1252
        %2094 = vmatpush1.bf16.xpose.msra.mxu0 %v1251
        %2095 = vmatprep.subr.bf16.mxu0 %v1268
        %2096 = vmatpush1.bf16.xpose.msra.mxu0 %v1267
        %2097 = vmatprep.subr.bf16.mxu0 %v1284
        %2098 = vmatpush1.bf16.xpose.msra.mxu0 %v1283
        %2099 = vmatprep.mubr.bf16.mxu0 %v516
        %2100 = vmatmul.mubr.bf16.gmra.mrb[0].mxu0 %v515
        %v2101 = vpop.f32.mrb[0].mxu0
        %v2102 = vadd.f32 0.0, %v2101
        %v2103 = vpop.f32.mrb[0].mxu0
        %v2104 = vadd.f32 0.0, %v2103
        %v2105 = vpop.f32.mrb[0].mxu0
        %v2106 = vpop.f32.mrb[0].mxu0
        %2107 = vdwg.mxu0
        %2108 = vmatprep.subr.bf16.mxu0 %v1046
        %2109 = vmatpush1.bf16.xpose.msra.mxu0 %v1045
        %2110 = vmatprep.subr.bf16.mxu0 %v1062
        %2111 = vmatpush1.bf16.xpose.msra.mxu0 %v1061
        %2112 = vmatprep.subr.bf16.mxu0 %v1078
        %2113 = vmatpush1.bf16.xpose.msra.mxu0 %v1077
        %2114 = vmatprep.subr.bf16.mxu0 %v1094
        %2115 = vmatpush1.bf16.xpose.msra.mxu0 %v1093
        %2116 = vmatprep.subr.bf16.mxu0 %v1110
        %2117 = vmatpush1.bf16.xpose.msra.mxu0 %v1109
        %2118 = vmatprep.subr.bf16.mxu0 %v1126
        %2119 = vmatpush1.bf16.xpose.msra.mxu0 %v1125
        %2120 = vmatprep.subr.bf16.mxu0 %v1142
        %2121 = vmatpush1.bf16.xpose.msra.mxu0 %v1141
        %2122 = vmatprep.subr.bf16.mxu0 %v1158
        %2123 = vmatpush1.bf16.xpose.msra.mxu0 %v1157
        %2124 = vmatprep.subr.bf16.mxu0 %v1174
        %2125 = vmatpush1.bf16.xpose.msra.mxu0 %v1173
        %2126 = vmatprep.subr.bf16.mxu0 %v1190
        %2127 = vmatpush1.bf16.xpose.msra.mxu0 %v1189
        %2128 = vmatprep.subr.bf16.mxu0 %v1206
        %2129 = vmatpush1.bf16.xpose.msra.mxu0 %v1205
        %2130 = vmatprep.subr.bf16.mxu0 %v1222
        %2131 = vmatpush1.bf16.xpose.msra.mxu0 %v1221
        %2132 = vmatprep.subr.bf16.mxu0 %v1238
        %2133 = vmatpush1.bf16.xpose.msra.mxu0 %v1237
        %2134 = vmatprep.subr.bf16.mxu0 %v1254
        %2135 = vmatpush1.bf16.xpose.msra.mxu0 %v1253
        %2136 = vmatprep.subr.bf16.mxu0 %v1270
        %2137 = vmatpush1.bf16.xpose.msra.mxu0 %v1269
        %2138 = vmatprep.subr.bf16.mxu0 %v1286
        %2139 = vmatpush1.bf16.xpose.msra.mxu0 %v1285
        %2140 = vmatprep.mubr.bf16.mxu0 %v518
        %2141 = vmatmul.mubr.bf16.gmra.mrb[0].mxu0 %v517
        %v2142 = vpop.f32.mrb[0].mxu0
        %v2143 = vadd.f32 %v2102, %v2142
        %v2144 = vpop.f32.mrb[0].mxu0
        %v2145 = vadd.f32 %v2104, %v2144
        %v2146 = vpop.f32.mrb[0].mxu0
        %v2147 = vpop.f32.mrb[0].mxu0
        %2148 = vdwg.mxu0
        %2149 = vmatprep.subr.bf16.mxu0 %v1048
        %2150 = vmatpush1.bf16.xpose.msra.mxu0 %v1047
        %2151 = vmatprep.subr.bf16.mxu0 %v1064
        %2152 = vmatpush1.bf16.xpose.msra.mxu0 %v1063
        %2153 = vmatprep.subr.bf16.mxu0 %v1080
        %2154 = vmatpush1.bf16.xpose.msra.mxu0 %v1079
        %2155 = vmatprep.subr.bf16.mxu0 %v1096
        %2156 = vmatpush1.bf16.xpose.msra.mxu0 %v1095
        %2157 = vmatprep.subr.bf16.mxu0 %v1112
        %2158 = vmatpush1.bf16.xpose.msra.mxu0 %v1111
        %2159 = vmatprep.subr.bf16.mxu0 %v1128
        %2160 = vmatpush1.bf16.xpose.msra.mxu0 %v1127
        %2161 = vmatprep.subr.bf16.mxu0 %v1144
        %2162 = vmatpush1.bf16.xpose.msra.mxu0 %v1143
        %2163 = vmatprep.subr.bf16.mxu0 %v1160
        %2164 = vmatpush1.bf16.xpose.msra.mxu0 %v1159
        %2165 = vmatprep.subr.bf16.mxu0 %v1176
        %2166 = vmatpush1.bf16.xpose.msra.mxu0 %v1175
        %2167 = vmatprep.subr.bf16.mxu0 %v1192
        %2168 = vmatpush1.bf16.xpose.msra.mxu0 %v1191
        %2169 = vmatprep.subr.bf16.mxu0 %v1208
        %2170 = vmatpush1.bf16.xpose.msra.mxu0 %v1207
        %2171 = vmatprep.subr.bf16.mxu0 %v1224
        %2172 = vmatpush1.bf16.xpose.msra.mxu0 %v1223
        %2173 = vmatprep.subr.bf16.mxu0 %v1240
        %2174 = vmatpush1.bf16.xpose.msra.mxu0 %v1239
        %2175 = vmatprep.subr.bf16.mxu0 %v1256
        %2176 = vmatpush1.bf16.xpose.msra.mxu0 %v1255
        %2177 = vmatprep.subr.bf16.mxu0 %v1272
        %2178 = vmatpush1.bf16.xpose.msra.mxu0 %v1271
        %2179 = vmatprep.subr.bf16.mxu0 %v1288
        %2180 = vmatpush1.bf16.xpose.msra.mxu0 %v1287
        %2181 = vmatprep.mubr.bf16.mxu0 %v520
        %2182 = vmatmul.mubr.bf16.gmra.mrb[0].mxu0 %v519
        %v2183 = vpop.f32.mrb[0].mxu0
        %v2184 = vadd.f32 %v2143, %v2183
        %v2185 = vpop.f32.mrb[0].mxu0
        %v2186 = vadd.f32 %v2145, %v2185
        %v2187 = vpop.f32.mrb[0].mxu0
        %v2188 = vpop.f32.mrb[0].mxu0
        %2189 = vdwg.mxu0
        %2190 = vmatprep.subr.bf16.mxu0 %v1050
        %2191 = vmatpush1.bf16.xpose.msra.mxu0 %v1049
        %2192 = vmatprep.subr.bf16.mxu0 %v1066
        %2193 = vmatpush1.bf16.xpose.msra.mxu0 %v1065
        %2194 = vmatprep.subr.bf16.mxu0 %v1082
        %2195 = vmatpush1.bf16.xpose.msra.mxu0 %v1081
        %2196 = vmatprep.subr.bf16.mxu0 %v1098
        %2197 = vmatpush1.bf16.xpose.msra.mxu0 %v1097
        %2198 = vmatprep.subr.bf16.mxu0 %v1114
        %2199 = vmatpush1.bf16.xpose.msra.mxu0 %v1113
        %2200 = vmatprep.subr.bf16.mxu0 %v1130
        %2201 = vmatpush1.bf16.xpose.msra.mxu0 %v1129
        %2202 = vmatprep.subr.bf16.mxu0 %v1146
        %2203 = vmatpush1.bf16.xpose.msra.mxu0 %v1145
        %2204 = vmatprep.subr.bf16.mxu0 %v1162
        %2205 = vmatpush1.bf16.xpose.msra.mxu0 %v1161
        %2206 = vmatprep.subr.bf16.mxu0 %v1178
        %2207 = vmatpush1.bf16.xpose.msra.mxu0 %v1177
        %2208 = vmatprep.subr.bf16.mxu0 %v1194
        %2209 = vmatpush1.bf16.xpose.msra.mxu0 %v1193
        %2210 = vmatprep.subr.bf16.mxu0 %v1210
        %2211 = vmatpush1.bf16.xpose.msra.mxu0 %v1209
        %2212 = vmatprep.subr.bf16.mxu0 %v1226
        %2213 = vmatpush1.bf16.xpose.msra.mxu0 %v1225
        %2214 = vmatprep.subr.bf16.mxu0 %v1242
        %2215 = vmatpush1.bf16.xpose.msra.mxu0 %v1241
        %2216 = vmatprep.subr.bf16.mxu0 %v1258
        %2217 = vmatpush1.bf16.xpose.msra.mxu0 %v1257
        %2218 = vmatprep.subr.bf16.mxu0 %v1274
        %2219 = vmatpush1.bf16.xpose.msra.mxu0 %v1273
        %2220 = vmatprep.subr.bf16.mxu0 %v1290
        %2221 = vmatpush1.bf16.xpose.msra.mxu0 %v1289
        %2222 = vmatprep.mubr.bf16.mxu0 %v522
        %2223 = vmatmul.mubr.bf16.gmra.mrb[0].mxu0 %v521
        %v2224 = vpop.f32.mrb[0].mxu0
        %v2225 = vadd.f32 %v2184, %v2224
        %v2226 = vpop.f32.mrb[0].mxu0
        %v2227 = vadd.f32 %v2186, %v2226
        %v2228 = vpop.f32.mrb[0].mxu0
        %v2229 = vpop.f32.mrb[0].mxu0
        %2230 = vdwg.mxu0
        %2231 = vmatprep.subr.bf16.mxu0 %v1052
        %2232 = vmatpush1.bf16.xpose.msra.mxu0 %v1051
        %2233 = vmatprep.subr.bf16.mxu0 %v1068
        %2234 = vmatpush1.bf16.xpose.msra.mxu0 %v1067
        %2235 = vmatprep.subr.bf16.mxu0 %v1084
        %2236 = vmatpush1.bf16.xpose.msra.mxu0 %v1083
        %2237 = vmatprep.subr.bf16.mxu0 %v1100
        %2238 = vmatpush1.bf16.xpose.msra.mxu0 %v1099
        %2239 = vmatprep.subr.bf16.mxu0 %v1116
        %2240 = vmatpush1.bf16.xpose.msra.mxu0 %v1115
        %2241 = vmatprep.subr.bf16.mxu0 %v1132
        %2242 = vmatpush1.bf16.xpose.msra.mxu0 %v1131
        %2243 = vmatprep.subr.bf16.mxu0 %v1148
        %2244 = vmatpush1.bf16.xpose.msra.mxu0 %v1147
        %2245 = vmatprep.subr.bf16.mxu0 %v1164
        %2246 = vmatpush1.bf16.xpose.msra.mxu0 %v1163
        %2247 = vmatprep.subr.bf16.mxu0 %v1180
        %2248 = vmatpush1.bf16.xpose.msra.mxu0 %v1179
        %2249 = vmatprep.subr.bf16.mxu0 %v1196
        %2250 = vmatpush1.bf16.xpose.msra.mxu0 %v1195
        %2251 = vmatprep.subr.bf16.mxu0 %v1212
        %2252 = vmatpush1.bf16.xpose.msra.mxu0 %v1211
        %2253 = vmatprep.subr.bf16.mxu0 %v1228
        %2254 = vmatpush1.bf16.xpose.msra.mxu0 %v1227
        %2255 = vmatprep.subr.bf16.mxu0 %v1244
        %2256 = vmatpush1.bf16.xpose.msra.mxu0 %v1243
        %2257 = vmatprep.subr.bf16.mxu0 %v1260
        %2258 = vmatpush1.bf16.xpose.msra.mxu0 %v1259
        %2259 = vmatprep.subr.bf16.mxu0 %v1276
        %2260 = vmatpush1.bf16.xpose.msra.mxu0 %v1275
        %2261 = vmatprep.subr.bf16.mxu0 %v1292
        %2262 = vmatpush1.bf16.xpose.msra.mxu0 %v1291
        %2263 = vmatprep.mubr.bf16.mxu0 %v524
        %2264 = vmatmul.mubr.bf16.gmra.mrb[0].mxu0 %v523
        %v2265 = vpop.f32.mrb[0].mxu0
        %v2266 = vadd.f32 %v2225, %v2265
        %v2267 = vpop.f32.mrb[0].mxu0
        %v2268 = vadd.f32 %v2227, %v2267
        %v2269 = vpop.f32.mrb[0].mxu0
        %v2270 = vpop.f32.mrb[0].mxu0
        %2271 = vdwg.mxu0
        %2272 = vmatprep.subr.bf16.mxu0 %v1054
        %2273 = vmatpush1.bf16.xpose.msra.mxu0 %v1053
        %2274 = vmatprep.subr.bf16.mxu0 %v1070
        %2275 = vmatpush1.bf16.xpose.msra.mxu0 %v1069
        %2276 = vmatprep.subr.bf16.mxu0 %v1086
        %2277 = vmatpush1.bf16.xpose.msra.mxu0 %v1085
        %2278 = vmatprep.subr.bf16.mxu0 %v1102
        %2279 = vmatpush1.bf16.xpose.msra.mxu0 %v1101
        %2280 = vmatprep.subr.bf16.mxu0 %v1118
        %2281 = vmatpush1.bf16.xpose.msra.mxu0 %v1117
        %2282 = vmatprep.subr.bf16.mxu0 %v1134
        %2283 = vmatpush1.bf16.xpose.msra.mxu0 %v1133
        %2284 = vmatprep.subr.bf16.mxu0 %v1150
        %2285 = vmatpush1.bf16.xpose.msra.mxu0 %v1149
        %2286 = vmatprep.subr.bf16.mxu0 %v1166
        %2287 = vmatpush1.bf16.xpose.msra.mxu0 %v1165
        %2288 = vmatprep.subr.bf16.mxu0 %v1182
        %2289 = vmatpush1.bf16.xpose.msra.mxu0 %v1181
        %2290 = vmatprep.subr.bf16.mxu0 %v1198
        %2291 = vmatpush1.bf16.xpose.msra.mxu0 %v1197
        %2292 = vmatprep.subr.bf16.mxu0 %v1214
        %2293 = vmatpush1.bf16.xpose.msra.mxu0 %v1213
        %2294 = vmatprep.subr.bf16.mxu0 %v1230
        %2295 = vmatpush1.bf16.xpose.msra.mxu0 %v1229
        %2296 = vmatprep.subr.bf16.mxu0 %v1246
        %2297 = vmatpush1.bf16.xpose.msra.mxu0 %v1245
        %2298 = vmatprep.subr.bf16.mxu0 %v1262
        %2299 = vmatpush1.bf16.xpose.msra.mxu0 %v1261
        %2300 = vmatprep.subr.bf16.mxu0 %v1278
        %2301 = vmatpush1.bf16.xpose.msra.mxu0 %v1277
        %2302 = vmatprep.subr.bf16.mxu0 %v1294
        %2303 = vmatpush1.bf16.xpose.msra.mxu0 %v1293
        %2304 = vmatprep.mubr.bf16.mxu0 %v526
        %2305 = vmatmul.mubr.bf16.gmra.mrb[0].mxu0 %v525
        %v2306 = vpop.f32.mrb[0].mxu0
        %v2307 = vadd.f32 %v2266, %v2306
        %v2308 = vpop.f32.mrb[0].mxu0
        %v2309 = vadd.f32 %v2268, %v2308
        %v2310 = vpop.f32.mrb[0].mxu0
        %v2311 = vpop.f32.mrb[0].mxu0
        %2312 = vdwg.mxu0
        %2313 = vmatprep.subr.bf16.mxu0 %v1056
        %2314 = vmatpush1.bf16.xpose.msra.mxu0 %v1055
        %2315 = vmatprep.subr.bf16.mxu0 %v1072
        %2316 = vmatpush1.bf16.xpose.msra.mxu0 %v1071
        %2317 = vmatprep.subr.bf16.mxu0 %v1088
        %2318 = vmatpush1.bf16.xpose.msra.mxu0 %v1087
        %2319 = vmatprep.subr.bf16.mxu0 %v1104
        %2320 = vmatpush1.bf16.xpose.msra.mxu0 %v1103
        %2321 = vmatprep.subr.bf16.mxu0 %v1120
        %2322 = vmatpush1.bf16.xpose.msra.mxu0 %v1119
        %2323 = vmatprep.subr.bf16.mxu0 %v1136
        %2324 = vmatpush1.bf16.xpose.msra.mxu0 %v1135
        %2325 = vmatprep.subr.bf16.mxu0 %v1152
        %2326 = vmatpush1.bf16.xpose.msra.mxu0 %v1151
        %2327 = vmatprep.subr.bf16.mxu0 %v1168
        %2328 = vmatpush1.bf16.xpose.msra.mxu0 %v1167
        %2329 = vmatprep.subr.bf16.mxu0 %v1184
        %2330 = vmatpush1.bf16.xpose.msra.mxu0 %v1183
        %2331 = vmatprep.subr.bf16.mxu0 %v1200
        %2332 = vmatpush1.bf16.xpose.msra.mxu0 %v1199
        %2333 = vmatprep.subr.bf16.mxu0 %v1216
        %2334 = vmatpush1.bf16.xpose.msra.mxu0 %v1215
        %2335 = vmatprep.subr.bf16.mxu0 %v1232
        %2336 = vmatpush1.bf16.xpose.msra.mxu0 %v1231
        %2337 = vmatprep.subr.bf16.mxu0 %v1248
        %2338 = vmatpush1.bf16.xpose.msra.mxu0 %v1247
        %2339 = vmatprep.subr.bf16.mxu0 %v1264
        %2340 = vmatpush1.bf16.xpose.msra.mxu0 %v1263
        %2341 = vmatprep.subr.bf16.mxu0 %v1280
        %2342 = vmatpush1.bf16.xpose.msra.mxu0 %v1279
        %2343 = vmatprep.subr.bf16.mxu0 %v1296
        %2344 = vmatpush1.bf16.xpose.msra.mxu0 %v1295
        %2345 = vmatprep.mubr.bf16.mxu0 %v528
        %2346 = vmatmul.mubr.bf16.gmra.mrb[0].mxu0 %v527
        %v2347 = vpop.f32.mrb[0].mxu0
        %v2348 = vadd.f32 %v2307, %v2347
        %v2349 = vpop.f32.mrb[0].mxu0
        %v2350 = vadd.f32 %v2309, %v2349
        %v2351 = vpop.f32.mrb[0].mxu0
        %v2352 = vpop.f32.mrb[0].mxu0
        %2353 = vdwg.mxu0
        %2354 = vmatprep.subr.bf16.mxu0 %v1058
        %2355 = vmatpush1.bf16.xpose.msra.mxu0 %v1057
        %2356 = vmatprep.subr.bf16.mxu0 %v1074
        %2357 = vmatpush1.bf16.xpose.msra.mxu0 %v1073
        %2358 = vmatprep.subr.bf16.mxu0 %v1090
        %2359 = vmatpush1.bf16.xpose.msra.mxu0 %v1089
        %2360 = vmatprep.subr.bf16.mxu0 %v1106
        %2361 = vmatpush1.bf16.xpose.msra.mxu0 %v1105
        %2362 = vmatprep.subr.bf16.mxu0 %v1122
        %2363 = vmatpush1.bf16.xpose.msra.mxu0 %v1121
        %2364 = vmatprep.subr.bf16.mxu0 %v1138
        %2365 = vmatpush1.bf16.xpose.msra.mxu0 %v1137
        %2366 = vmatprep.subr.bf16.mxu0 %v1154
        %2367 = vmatpush1.bf16.xpose.msra.mxu0 %v1153
        %2368 = vmatprep.subr.bf16.mxu0 %v1170
        %2369 = vmatpush1.bf16.xpose.msra.mxu0 %v1169
        %2370 = vmatprep.subr.bf16.mxu0 %v1186
        %2371 = vmatpush1.bf16.xpose.msra.mxu0 %v1185
        %2372 = vmatprep.subr.bf16.mxu0 %v1202
        %2373 = vmatpush1.bf16.xpose.msra.mxu0 %v1201
        %2374 = vmatprep.subr.bf16.mxu0 %v1218
        %2375 = vmatpush1.bf16.xpose.msra.mxu0 %v1217
        %2376 = vmatprep.subr.bf16.mxu0 %v1234
        %2377 = vmatpush1.bf16.xpose.msra.mxu0 %v1233
        %2378 = vmatprep.subr.bf16.mxu0 %v1250
        %2379 = vmatpush1.bf16.xpose.msra.mxu0 %v1249
        %2380 = vmatprep.subr.bf16.mxu0 %v1266
        %2381 = vmatpush1.bf16.xpose.msra.mxu0 %v1265
        %2382 = vmatprep.subr.bf16.mxu0 %v1282
        %2383 = vmatpush1.bf16.xpose.msra.mxu0 %v1281
        %2384 = vmatprep.subr.bf16.mxu0 %v1298
        %2385 = vmatpush1.bf16.xpose.msra.mxu0 %v1297
        %2386 = vmatprep.mubr.bf16.mxu0 %v530
        %2387 = vmatmul.mubr.bf16.gmra.mrb[0].mxu0 %v529
        %v2388 = vpop.f32.mrb[0].mxu0
        %v2389 = vadd.f32 %v2348, %v2388
        %v2390 = vpop.f32.mrb[0].mxu0
        %v2391 = vadd.f32 %v2350, %v2390
        %v2392 = vpop.f32.mrb[0].mxu0
        %v2393 = vpop.f32.mrb[0].mxu0
        %2394 = vdwg.mxu0
        %2395 = vmatprep.subr.bf16.mxu0 %v1300
        %2396 = vmatpush1.bf16.xpose.msra.mxu0 %v1299
        %2397 = vmatprep.subr.bf16.mxu0 %v1316
        %2398 = vmatpush1.bf16.xpose.msra.mxu0 %v1315
        %2399 = vmatprep.subr.bf16.mxu0 %v1332
        %2400 = vmatpush1.bf16.xpose.msra.mxu0 %v1331
        %2401 = vmatprep.subr.bf16.mxu0 %v1348
        %2402 = vmatpush1.bf16.xpose.msra.mxu0 %v1347
        %2403 = vmatprep.subr.bf16.mxu0 %v1364
        %2404 = vmatpush1.bf16.xpose.msra.mxu0 %v1363
        %2405 = vmatprep.subr.bf16.mxu0 %v1380
        %2406 = vmatpush1.bf16.xpose.msra.mxu0 %v1379
        %2407 = vmatprep.subr.bf16.mxu0 %v1396
        %2408 = vmatpush1.bf16.xpose.msra.mxu0 %v1395
        %2409 = vmatprep.subr.bf16.mxu0 %v1412
        %2410 = vmatpush1.bf16.xpose.msra.mxu0 %v1411
        %2411 = vmatprep.subr.bf16.mxu0 %v1428
        %2412 = vmatpush1.bf16.xpose.msra.mxu0 %v1427
        %2413 = vmatprep.subr.bf16.mxu0 %v1444
        %2414 = vmatpush1.bf16.xpose.msra.mxu0 %v1443
        %2415 = vmatprep.subr.bf16.mxu0 %v1460
        %2416 = vmatpush1.bf16.xpose.msra.mxu0 %v1459
        %2417 = vmatprep.subr.bf16.mxu0 %v1476
        %2418 = vmatpush1.bf16.xpose.msra.mxu0 %v1475
        %2419 = vmatprep.subr.bf16.mxu0 %v1492
        %2420 = vmatpush1.bf16.xpose.msra.mxu0 %v1491
        %2421 = vmatprep.subr.bf16.mxu0 %v1508
        %2422 = vmatpush1.bf16.xpose.msra.mxu0 %v1507
        %2423 = vmatprep.subr.bf16.mxu0 %v1524
        %2424 = vmatpush1.bf16.xpose.msra.mxu0 %v1523
        %2425 = vmatprep.subr.bf16.mxu0 %v1540
        %2426 = vmatpush1.bf16.xpose.msra.mxu0 %v1539
        %2427 = vmatprep.mubr.bf16.mxu0 %v516
        %2428 = vmatmul.mubr.bf16.gmra.mrb[0].mxu0 %v515
        %v2429 = vpop.f32.mrb[0].mxu0
        %v2430 = vadd.f32 0.0, %v2429
        %v2431 = vpop.f32.mrb[0].mxu0
        %v2432 = vadd.f32 0.0, %v2431
        %v2433 = vpop.f32.mrb[0].mxu0
        %v2434 = vpop.f32.mrb[0].mxu0
        %2435 = vdwg.mxu0
        %2436 = vmatprep.subr.bf16.mxu0 %v1302
        %2437 = vmatpush1.bf16.xpose.msra.mxu0 %v1301
        %2438 = vmatprep.subr.bf16.mxu0 %v1318
        %2439 = vmatpush1.bf16.xpose.msra.mxu0 %v1317
        %2440 = vmatprep.subr.bf16.mxu0 %v1334
        %2441 = vmatpush1.bf16.xpose.msra.mxu0 %v1333
        %2442 = vmatprep.subr.bf16.mxu0 %v1350
        %2443 = vmatpush1.bf16.xpose.msra.mxu0 %v1349
        %2444 = vmatprep.subr.bf16.mxu0 %v1366
        %2445 = vmatpush1.bf16.xpose.msra.mxu0 %v1365
        %2446 = vmatprep.subr.bf16.mxu0 %v1382
        %2447 = vmatpush1.bf16.xpose.msra.mxu0 %v1381
        %2448 = vmatprep.subr.bf16.mxu0 %v1398
        %2449 = vmatpush1.bf16.xpose.msra.mxu0 %v1397
        %2450 = vmatprep.subr.bf16.mxu0 %v1414
        %2451 = vmatpush1.bf16.xpose.msra.mxu0 %v1413
        %2452 = vmatprep.subr.bf16.mxu0 %v1430
        %2453 = vmatpush1.bf16.xpose.msra.mxu0 %v1429
        %2454 = vmatprep.subr.bf16.mxu0 %v1446
        %2455 = vmatpush1.bf16.xpose.msra.mxu0 %v1445
        %2456 = vmatprep.subr.bf16.mxu0 %v1462
        %2457 = vmatpush1.bf16.xpose.msra.mxu0 %v1461
        %2458 = vmatprep.subr.bf16.mxu0 %v1478
        %2459 = vmatpush1.bf16.xpose.msra.mxu0 %v1477
        %2460 = vmatprep.subr.bf16.mxu0 %v1494
        %2461 = vmatpush1.bf16.xpose.msra.mxu0 %v1493
        %2462 = vmatprep.subr.bf16.mxu0 %v1510
        %2463 = vmatpush1.bf16.xpose.msra.mxu0 %v1509
        %2464 = vmatprep.subr.bf16.mxu0 %v1526
        %2465 = vmatpush1.bf16.xpose.msra.mxu0 %v1525
        %2466 = vmatprep.subr.bf16.mxu0 %v1542
        %2467 = vmatpush1.bf16.xpose.msra.mxu0 %v1541
        %2468 = vmatprep.mubr.bf16.mxu0 %v518
        %2469 = vmatmul.mubr.bf16.gmra.mrb[0].mxu0 %v517
        %v2470 = vpop.f32.mrb[0].mxu0
        %v2471 = vadd.f32 %v2430, %v2470
        %v2472 = vpop.f32.mrb[0].mxu0
        %v2473 = vadd.f32 %v2432, %v2472
        %v2474 = vpop.f32.mrb[0].mxu0
        %v2475 = vpop.f32.mrb[0].mxu0
        %2476 = vdwg.mxu0
        %2477 = vmatprep.subr.bf16.mxu0 %v1304
        %2478 = vmatpush1.bf16.xpose.msra.mxu0 %v1303
        %2479 = vmatprep.subr.bf16.mxu0 %v1320
        %2480 = vmatpush1.bf16.xpose.msra.mxu0 %v1319
        %2481 = vmatprep.subr.bf16.mxu0 %v1336
        %2482 = vmatpush1.bf16.xpose.msra.mxu0 %v1335
        %2483 = vmatprep.subr.bf16.mxu0 %v1352
        %2484 = vmatpush1.bf16.xpose.msra.mxu0 %v1351
        %2485 = vmatprep.subr.bf16.mxu0 %v1368
        %2486 = vmatpush1.bf16.xpose.msra.mxu0 %v1367
        %2487 = vmatprep.subr.bf16.mxu0 %v1384
        %2488 = vmatpush1.bf16.xpose.msra.mxu0 %v1383
        %2489 = vmatprep.subr.bf16.mxu0 %v1400
        %2490 = vmatpush1.bf16.xpose.msra.mxu0 %v1399
        %2491 = vmatprep.subr.bf16.mxu0 %v1416
        %2492 = vmatpush1.bf16.xpose.msra.mxu0 %v1415
        %2493 = vmatprep.subr.bf16.mxu0 %v1432
        %2494 = vmatpush1.bf16.xpose.msra.mxu0 %v1431
        %2495 = vmatprep.subr.bf16.mxu0 %v1448
        %2496 = vmatpush1.bf16.xpose.msra.mxu0 %v1447
        %2497 = vmatprep.subr.bf16.mxu0 %v1464
        %2498 = vmatpush1.bf16.xpose.msra.mxu0 %v1463
        %2499 = vmatprep.subr.bf16.mxu0 %v1480
        %2500 = vmatpush1.bf16.xpose.msra.mxu0 %v1479
        %2501 = vmatprep.subr.bf16.mxu0 %v1496
        %2502 = vmatpush1.bf16.xpose.msra.mxu0 %v1495
        %2503 = vmatprep.subr.bf16.mxu0 %v1512
        %2504 = vmatpush1.bf16.xpose.msra.mxu0 %v1511
        %2505 = vmatprep.subr.bf16.mxu0 %v1528
        %2506 = vmatpush1.bf16.xpose.msra.mxu0 %v1527
        %2507 = vmatprep.subr.bf16.mxu0 %v1544
        %2508 = vmatpush1.bf16.xpose.msra.mxu0 %v1543
        %2509 = vmatprep.mubr.bf16.mxu0 %v520
        %2510 = vmatmul.mubr.bf16.gmra.mrb[0].mxu0 %v519
        %v2511 = vpop.f32.mrb[0].mxu0
        %v2512 = vadd.f32 %v2471, %v2511
        %v2513 = vpop.f32.mrb[0].mxu0
        %v2514 = vadd.f32 %v2473, %v2513
        %v2515 = vpop.f32.mrb[0].mxu0
        %v2516 = vpop.f32.mrb[0].mxu0
        %2517 = vdwg.mxu0
        %2518 = vmatprep.subr.bf16.mxu0 %v1306
        %2519 = vmatpush1.bf16.xpose.msra.mxu0 %v1305
        %2520 = vmatprep.subr.bf16.mxu0 %v1322
        %2521 = vmatpush1.bf16.xpose.msra.mxu0 %v1321
        %2522 = vmatprep.subr.bf16.mxu0 %v1338
        %2523 = vmatpush1.bf16.xpose.msra.mxu0 %v1337
        %2524 = vmatprep.subr.bf16.mxu0 %v1354
        %2525 = vmatpush1.bf16.xpose.msra.mxu0 %v1353
        %2526 = vmatprep.subr.bf16.mxu0 %v1370
        %2527 = vmatpush1.bf16.xpose.msra.mxu0 %v1369
        %2528 = vmatprep.subr.bf16.mxu0 %v1386
        %2529 = vmatpush1.bf16.xpose.msra.mxu0 %v1385
        %2530 = vmatprep.subr.bf16.mxu0 %v1402
        %2531 = vmatpush1.bf16.xpose.msra.mxu0 %v1401
        %2532 = vmatprep.subr.bf16.mxu0 %v1418
        %2533 = vmatpush1.bf16.xpose.msra.mxu0 %v1417
        %2534 = vmatprep.subr.bf16.mxu0 %v1434
        %2535 = vmatpush1.bf16.xpose.msra.mxu0 %v1433
        %2536 = vmatprep.subr.bf16.mxu0 %v1450
        %2537 = vmatpush1.bf16.xpose.msra.mxu0 %v1449
        %2538 = vmatprep.subr.bf16.mxu0 %v1466
        %2539 = vmatpush1.bf16.xpose.msra.mxu0 %v1465
        %2540 = vmatprep.subr.bf16.mxu0 %v1482
        %2541 = vmatpush1.bf16.xpose.msra.mxu0 %v1481
        %2542 = vmatprep.subr.bf16.mxu0 %v1498
        %2543 = vmatpush1.bf16.xpose.msra.mxu0 %v1497
        %2544 = vmatprep.subr.bf16.mxu0 %v1514
        %2545 = vmatpush1.bf16.xpose.msra.mxu0 %v1513
        %2546 = vmatprep.subr.bf16.mxu0 %v1530
        %2547 = vmatpush1.bf16.xpose.msra.mxu0 %v1529
        %2548 = vmatprep.subr.bf16.mxu0 %v1546
        %2549 = vmatpush1.bf16.xpose.msra.mxu0 %v1545
        %2550 = vmatprep.mubr.bf16.mxu0 %v522
        %2551 = vmatmul.mubr.bf16.gmra.mrb[0].mxu0 %v521
        %v2552 = vpop.f32.mrb[0].mxu0
        %v2553 = vadd.f32 %v2512, %v2552
        %v2554 = vpop.f32.mrb[0].mxu0
        %v2555 = vadd.f32 %v2514, %v2554
        %v2556 = vpop.f32.mrb[0].mxu0
        %v2557 = vpop.f32.mrb[0].mxu0
        %2558 = vdwg.mxu0
        %2559 = vmatprep.subr.bf16.mxu0 %v1308
        %2560 = vmatpush1.bf16.xpose.msra.mxu0 %v1307
        %2561 = vmatprep.subr.bf16.mxu0 %v1324
        %2562 = vmatpush1.bf16.xpose.msra.mxu0 %v1323
        %2563 = vmatprep.subr.bf16.mxu0 %v1340
        %2564 = vmatpush1.bf16.xpose.msra.mxu0 %v1339
        %2565 = vmatprep.subr.bf16.mxu0 %v1356
        %2566 = vmatpush1.bf16.xpose.msra.mxu0 %v1355
        %2567 = vmatprep.subr.bf16.mxu0 %v1372
        %2568 = vmatpush1.bf16.xpose.msra.mxu0 %v1371
        %2569 = vmatprep.subr.bf16.mxu0 %v1388
        %2570 = vmatpush1.bf16.xpose.msra.mxu0 %v1387
        %2571 = vmatprep.subr.bf16.mxu0 %v1404
        %2572 = vmatpush1.bf16.xpose.msra.mxu0 %v1403
        %2573 = vmatprep.subr.bf16.mxu0 %v1420
        %2574 = vmatpush1.bf16.xpose.msra.mxu0 %v1419
        %2575 = vmatprep.subr.bf16.mxu0 %v1436
        %2576 = vmatpush1.bf16.xpose.msra.mxu0 %v1435
        %2577 = vmatprep.subr.bf16.mxu0 %v1452
        %2578 = vmatpush1.bf16.xpose.msra.mxu0 %v1451
        %2579 = vmatprep.subr.bf16.mxu0 %v1468
        %2580 = vmatpush1.bf16.xpose.msra.mxu0 %v1467
        %2581 = vmatprep.subr.bf16.mxu0 %v1484
        %2582 = vmatpush1.bf16.xpose.msra.mxu0 %v1483
        %2583 = vmatprep.subr.bf16.mxu0 %v1500
        %2584 = vmatpush1.bf16.xpose.msra.mxu0 %v1499
        %2585 = vmatprep.subr.bf16.mxu0 %v1516
        %2586 = vmatpush1.bf16.xpose.msra.mxu0 %v1515
        %2587 = vmatprep.subr.bf16.mxu0 %v1532
        %2588 = vmatpush1.bf16.xpose.msra.mxu0 %v1531
        %2589 = vmatprep.subr.bf16.mxu0 %v1548
        %2590 = vmatpush1.bf16.xpose.msra.mxu0 %v1547
        %2591 = vmatprep.mubr.bf16.mxu0 %v524
        %2592 = vmatmul.mubr.bf16.gmra.mrb[0].mxu0 %v523
        %v2593 = vpop.f32.mrb[0].mxu0
        %v2594 = vadd.f32 %v2553, %v2593
        %v2595 = vpop.f32.mrb[0].mxu0
        %v2596 = vadd.f32 %v2555, %v2595
        %v2597 = vpop.f32.mrb[0].mxu0
        %v2598 = vpop.f32.mrb[0].mxu0
        %2599 = vdwg.mxu0
        %2600 = vmatprep.subr.bf16.mxu0 %v1310
        %2601 = vmatpush1.bf16.xpose.msra.mxu0 %v1309
        %2602 = vmatprep.subr.bf16.mxu0 %v1326
        %2603 = vmatpush1.bf16.xpose.msra.mxu0 %v1325
        %2604 = vmatprep.subr.bf16.mxu0 %v1342
        %2605 = vmatpush1.bf16.xpose.msra.mxu0 %v1341
        %2606 = vmatprep.subr.bf16.mxu0 %v1358
        %2607 = vmatpush1.bf16.xpose.msra.mxu0 %v1357
        %2608 = vmatprep.subr.bf16.mxu0 %v1374
        %2609 = vmatpush1.bf16.xpose.msra.mxu0 %v1373
        %2610 = vmatprep.subr.bf16.mxu0 %v1390
        %2611 = vmatpush1.bf16.xpose.msra.mxu0 %v1389
        %2612 = vmatprep.subr.bf16.mxu0 %v1406
        %2613 = vmatpush1.bf16.xpose.msra.mxu0 %v1405
        %2614 = vmatprep.subr.bf16.mxu0 %v1422
        %2615 = vmatpush1.bf16.xpose.msra.mxu0 %v1421
        %2616 = vmatprep.subr.bf16.mxu0 %v1438
        %2617 = vmatpush1.bf16.xpose.msra.mxu0 %v1437
        %2618 = vmatprep.subr.bf16.mxu0 %v1454
        %2619 = vmatpush1.bf16.xpose.msra.mxu0 %v1453
        %2620 = vmatprep.subr.bf16.mxu0 %v1470
        %2621 = vmatpush1.bf16.xpose.msra.mxu0 %v1469
        %2622 = vmatprep.subr.bf16.mxu0 %v1486
        %2623 = vmatpush1.bf16.xpose.msra.mxu0 %v1485
        %2624 = vmatprep.subr.bf16.mxu0 %v1502
        %2625 = vmatpush1.bf16.xpose.msra.mxu0 %v1501
        %2626 = vmatprep.subr.bf16.mxu0 %v1518
        %2627 = vmatpush1.bf16.xpose.msra.mxu0 %v1517
        %2628 = vmatprep.subr.bf16.mxu0 %v1534
        %2629 = vmatpush1.bf16.xpose.msra.mxu0 %v1533
        %2630 = vmatprep.subr.bf16.mxu0 %v1550
        %2631 = vmatpush1.bf16.xpose.msra.mxu0 %v1549
        %2632 = vmatprep.mubr.bf16.mxu0 %v526
        %2633 = vmatmul.mubr.bf16.gmra.mrb[0].mxu0 %v525
        %v2634 = vpop.f32.mrb[0].mxu0
        %v2635 = vadd.f32 %v2594, %v2634
        %v2636 = vpop.f32.mrb[0].mxu0
        %v2637 = vadd.f32 %v2596, %v2636
        %v2638 = vpop.f32.mrb[0].mxu0
        %v2639 = vpop.f32.mrb[0].mxu0
        %2640 = vdwg.mxu0
        %2641 = vmatprep.subr.bf16.mxu0 %v1312
        %2642 = vmatpush1.bf16.xpose.msra.mxu0 %v1311
        %2643 = vmatprep.subr.bf16.mxu0 %v1328
        %2644 = vmatpush1.bf16.xpose.msra.mxu0 %v1327
        %2645 = vmatprep.subr.bf16.mxu0 %v1344
        %2646 = vmatpush1.bf16.xpose.msra.mxu0 %v1343
        %2647 = vmatprep.subr.bf16.mxu0 %v1360
        %2648 = vmatpush1.bf16.xpose.msra.mxu0 %v1359
        %2649 = vmatprep.subr.bf16.mxu0 %v1376
        %2650 = vmatpush1.bf16.xpose.msra.mxu0 %v1375
        %2651 = vmatprep.subr.bf16.mxu0 %v1392
        %2652 = vmatpush1.bf16.xpose.msra.mxu0 %v1391
        %2653 = vmatprep.subr.bf16.mxu0 %v1408
        %2654 = vmatpush1.bf16.xpose.msra.mxu0 %v1407
        %2655 = vmatprep.subr.bf16.mxu0 %v1424
        %2656 = vmatpush1.bf16.xpose.msra.mxu0 %v1423
        %2657 = vmatprep.subr.bf16.mxu0 %v1440
        %2658 = vmatpush1.bf16.xpose.msra.mxu0 %v1439
        %2659 = vmatprep.subr.bf16.mxu0 %v1456
        %2660 = vmatpush1.bf16.xpose.msra.mxu0 %v1455
        %2661 = vmatprep.subr.bf16.mxu0 %v1472
        %2662 = vmatpush1.bf16.xpose.msra.mxu0 %v1471
        %2663 = vmatprep.subr.bf16.mxu0 %v1488
        %2664 = vmatpush1.bf16.xpose.msra.mxu0 %v1487
        %2665 = vmatprep.subr.bf16.mxu0 %v1504
        %2666 = vmatpush1.bf16.xpose.msra.mxu0 %v1503
        %2667 = vmatprep.subr.bf16.mxu0 %v1520
        %2668 = vmatpush1.bf16.xpose.msra.mxu0 %v1519
        %2669 = vmatprep.subr.bf16.mxu0 %v1536
        %2670 = vmatpush1.bf16.xpose.msra.mxu0 %v1535
        %2671 = vmatprep.subr.bf16.mxu0 %v1552
        %2672 = vmatpush1.bf16.xpose.msra.mxu0 %v1551
        %2673 = vmatprep.mubr.bf16.mxu0 %v528
        %2674 = vmatmul.mubr.bf16.gmra.mrb[0].mxu0 %v527
        %v2675 = vpop.f32.mrb[0].mxu0
        %v2676 = vadd.f32 %v2635, %v2675
        %v2677 = vpop.f32.mrb[0].mxu0
        %v2678 = vadd.f32 %v2637, %v2677
        %v2679 = vpop.f32.mrb[0].mxu0
        %v2680 = vpop.f32.mrb[0].mxu0
        %2681 = vdwg.mxu0
        %2682 = vmatprep.subr.bf16.mxu0 %v1314
        %2683 = vmatpush1.bf16.xpose.msra.mxu0 %v1313
        %2684 = vmatprep.subr.bf16.mxu0 %v1330
        %2685 = vmatpush1.bf16.xpose.msra.mxu0 %v1329
        %2686 = vmatprep.subr.bf16.mxu0 %v1346
        %2687 = vmatpush1.bf16.xpose.msra.mxu0 %v1345
        %2688 = vmatprep.subr.bf16.mxu0 %v1362
        %2689 = vmatpush1.bf16.xpose.msra.mxu0 %v1361
        %2690 = vmatprep.subr.bf16.mxu0 %v1378
        %2691 = vmatpush1.bf16.xpose.msra.mxu0 %v1377
        %2692 = vmatprep.subr.bf16.mxu0 %v1394
        %2693 = vmatpush1.bf16.xpose.msra.mxu0 %v1393
        %2694 = vmatprep.subr.bf16.mxu0 %v1410
        %2695 = vmatpush1.bf16.xpose.msra.mxu0 %v1409
        %2696 = vmatprep.subr.bf16.mxu0 %v1426
        %2697 = vmatpush1.bf16.xpose.msra.mxu0 %v1425
        %2698 = vmatprep.subr.bf16.mxu0 %v1442
        %2699 = vmatpush1.bf16.xpose.msra.mxu0 %v1441
        %2700 = vmatprep.subr.bf16.mxu0 %v1458
        %2701 = vmatpush1.bf16.xpose.msra.mxu0 %v1457
        %2702 = vmatprep.subr.bf16.mxu0 %v1474
        %2703 = vmatpush1.bf16.xpose.msra.mxu0 %v1473
        %2704 = vmatprep.subr.bf16.mxu0 %v1490
        %2705 = vmatpush1.bf16.xpose.msra.mxu0 %v1489
        %2706 = vmatprep.subr.bf16.mxu0 %v1506
        %2707 = vmatpush1.bf16.xpose.msra.mxu0 %v1505
        %2708 = vmatprep.subr.bf16.mxu0 %v1522
        %2709 = vmatpush1.bf16.xpose.msra.mxu0 %v1521
        %2710 = vmatprep.subr.bf16.mxu0 %v1538
        %2711 = vmatpush1.bf16.xpose.msra.mxu0 %v1537
        %2712 = vmatprep.subr.bf16.mxu0 %v1554
        %2713 = vmatpush1.bf16.xpose.msra.mxu0 %v1553
        %2714 = vmatprep.mubr.bf16.mxu0 %v530
        %2715 = vmatmul.mubr.bf16.gmra.mrb[0].mxu0 %v529
        %v2716 = vpop.f32.mrb[0].mxu0
        %v2717 = vadd.f32 %v2676, %v2716
        %v2718 = vpop.f32.mrb[0].mxu0
        %v2719 = vadd.f32 %v2678, %v2718
        %v2720 = vpop.f32.mrb[0].mxu0
        %v2721 = vpop.f32.mrb[0].mxu0
        %2722 = vdwg.mxu0
        %2723 = vmatprep.subr.bf16.mxu0 %v1556
        %2724 = vmatpush1.bf16.xpose.msra.mxu0 %v1555
        %2725 = vmatprep.subr.bf16.mxu0 %v1572
        %2726 = vmatpush1.bf16.xpose.msra.mxu0 %v1571
        %2727 = vmatprep.subr.bf16.mxu0 %v1588
        %2728 = vmatpush1.bf16.xpose.msra.mxu0 %v1587
        %2729 = vmatprep.subr.bf16.mxu0 %v1604
        %2730 = vmatpush1.bf16.xpose.msra.mxu0 %v1603
        %2731 = vmatprep.subr.bf16.mxu0 %v1620
        %2732 = vmatpush1.bf16.xpose.msra.mxu0 %v1619
        %2733 = vmatprep.subr.bf16.mxu0 %v1636
        %2734 = vmatpush1.bf16.xpose.msra.mxu0 %v1635
        %2735 = vmatprep.subr.bf16.mxu0 %v1652
        %2736 = vmatpush1.bf16.xpose.msra.mxu0 %v1651
        %2737 = vmatprep.subr.bf16.mxu0 %v1668
        %2738 = vmatpush1.bf16.xpose.msra.mxu0 %v1667
        %2739 = vmatprep.subr.bf16.mxu0 %v1684
        %2740 = vmatpush1.bf16.xpose.msra.mxu0 %v1683
        %2741 = vmatprep.subr.bf16.mxu0 %v1700
        %2742 = vmatpush1.bf16.xpose.msra.mxu0 %v1699
        %2743 = vmatprep.subr.bf16.mxu0 %v1716
        %2744 = vmatpush1.bf16.xpose.msra.mxu0 %v1715
        %2745 = vmatprep.subr.bf16.mxu0 %v1732
        %2746 = vmatpush1.bf16.xpose.msra.mxu0 %v1731
        %2747 = vmatprep.subr.bf16.mxu0 %v1748
        %2748 = vmatpush1.bf16.xpose.msra.mxu0 %v1747
        %2749 = vmatprep.subr.bf16.mxu0 %v1764
        %2750 = vmatpush1.bf16.xpose.msra.mxu0 %v1763
        %2751 = vmatprep.subr.bf16.mxu0 %v1780
        %2752 = vmatpush1.bf16.xpose.msra.mxu0 %v1779
        %2753 = vmatprep.subr.bf16.mxu0 %v1796
        %2754 = vmatpush1.bf16.xpose.msra.mxu0 %v1795
        %2755 = vmatprep.mubr.bf16.mxu0 %v516
        %2756 = vmatmul.mubr.bf16.gmra.mrb[0].mxu0 %v515
        %v2757 = vpop.f32.mrb[0].mxu0
        %v2758 = vadd.f32 0.0, %v2757
        %v2759 = vpop.f32.mrb[0].mxu0
        %v2760 = vadd.f32 0.0, %v2759
        %v2761 = vpop.f32.mrb[0].mxu0
        %v2762 = vpop.f32.mrb[0].mxu0
        %2763 = vdwg.mxu0
        %2764 = vmatprep.subr.bf16.mxu0 %v1558
        %2765 = vmatpush1.bf16.xpose.msra.mxu0 %v1557
        %2766 = vmatprep.subr.bf16.mxu0 %v1574
        %2767 = vmatpush1.bf16.xpose.msra.mxu0 %v1573
        %2768 = vmatprep.subr.bf16.mxu0 %v1590
        %2769 = vmatpush1.bf16.xpose.msra.mxu0 %v1589
        %2770 = vmatprep.subr.bf16.mxu0 %v1606
        %2771 = vmatpush1.bf16.xpose.msra.mxu0 %v1605
        %2772 = vmatprep.subr.bf16.mxu0 %v1622
        %2773 = vmatpush1.bf16.xpose.msra.mxu0 %v1621
        %2774 = vmatprep.subr.bf16.mxu0 %v1638
        %2775 = vmatpush1.bf16.xpose.msra.mxu0 %v1637
        %2776 = vmatprep.subr.bf16.mxu0 %v1654
        %2777 = vmatpush1.bf16.xpose.msra.mxu0 %v1653
        %2778 = vmatprep.subr.bf16.mxu0 %v1670
        %2779 = vmatpush1.bf16.xpose.msra.mxu0 %v1669
        %2780 = vmatprep.subr.bf16.mxu0 %v1686
        %2781 = vmatpush1.bf16.xpose.msra.mxu0 %v1685
        %2782 = vmatprep.subr.bf16.mxu0 %v1702
        %2783 = vmatpush1.bf16.xpose.msra.mxu0 %v1701
        %2784 = vmatprep.subr.bf16.mxu0 %v1718
        %2785 = vmatpush1.bf16.xpose.msra.mxu0 %v1717
        %2786 = vmatprep.subr.bf16.mxu0 %v1734
        %2787 = vmatpush1.bf16.xpose.msra.mxu0 %v1733
        %2788 = vmatprep.subr.bf16.mxu0 %v1750
        %2789 = vmatpush1.bf16.xpose.msra.mxu0 %v1749
        %2790 = vmatprep.subr.bf16.mxu0 %v1766
        %2791 = vmatpush1.bf16.xpose.msra.mxu0 %v1765
        %2792 = vmatprep.subr.bf16.mxu0 %v1782
        %2793 = vmatpush1.bf16.xpose.msra.mxu0 %v1781
        %2794 = vmatprep.subr.bf16.mxu0 %v1798
        %2795 = vmatpush1.bf16.xpose.msra.mxu0 %v1797
        %2796 = vmatprep.mubr.bf16.mxu0 %v518
        %2797 = vmatmul.mubr.bf16.gmra.mrb[0].mxu0 %v517
        %v2798 = vpop.f32.mrb[0].mxu0
        %v2799 = vadd.f32 %v2758, %v2798
        %v2800 = vpop.f32.mrb[0].mxu0
        %v2801 = vadd.f32 %v2760, %v2800
        %v2802 = vpop.f32.mrb[0].mxu0
        %v2803 = vpop.f32.mrb[0].mxu0
        %2804 = vdwg.mxu0
        %2805 = vmatprep.subr.bf16.mxu0 %v1560
        %2806 = vmatpush1.bf16.xpose.msra.mxu0 %v1559
        %2807 = vmatprep.subr.bf16.mxu0 %v1576
        %2808 = vmatpush1.bf16.xpose.msra.mxu0 %v1575
        %2809 = vmatprep.subr.bf16.mxu0 %v1592
        %2810 = vmatpush1.bf16.xpose.msra.mxu0 %v1591
        %2811 = vmatprep.subr.bf16.mxu0 %v1608
        %2812 = vmatpush1.bf16.xpose.msra.mxu0 %v1607
        %2813 = vmatprep.subr.bf16.mxu0 %v1624
        %2814 = vmatpush1.bf16.xpose.msra.mxu0 %v1623
        %2815 = vmatprep.subr.bf16.mxu0 %v1640
        %2816 = vmatpush1.bf16.xpose.msra.mxu0 %v1639
        %2817 = vmatprep.subr.bf16.mxu0 %v1656
        %2818 = vmatpush1.bf16.xpose.msra.mxu0 %v1655
        %2819 = vmatprep.subr.bf16.mxu0 %v1672
        %2820 = vmatpush1.bf16.xpose.msra.mxu0 %v1671
        %2821 = vmatprep.subr.bf16.mxu0 %v1688
        %2822 = vmatpush1.bf16.xpose.msra.mxu0 %v1687
        %2823 = vmatprep.subr.bf16.mxu0 %v1704
        %2824 = vmatpush1.bf16.xpose.msra.mxu0 %v1703
        %2825 = vmatprep.subr.bf16.mxu0 %v1720
        %2826 = vmatpush1.bf16.xpose.msra.mxu0 %v1719
        %2827 = vmatprep.subr.bf16.mxu0 %v1736
        %2828 = vmatpush1.bf16.xpose.msra.mxu0 %v1735
        %2829 = vmatprep.subr.bf16.mxu0 %v1752
        %2830 = vmatpush1.bf16.xpose.msra.mxu0 %v1751
        %2831 = vmatprep.subr.bf16.mxu0 %v1768
        %2832 = vmatpush1.bf16.xpose.msra.mxu0 %v1767
        %2833 = vmatprep.subr.bf16.mxu0 %v1784
        %2834 = vmatpush1.bf16.xpose.msra.mxu0 %v1783
        %2835 = vmatprep.subr.bf16.mxu0 %v1800
        %2836 = vmatpush1.bf16.xpose.msra.mxu0 %v1799
        %2837 = vmatprep.mubr.bf16.mxu0 %v520
        %2838 = vmatmul.mubr.bf16.gmra.mrb[0].mxu0 %v519
        %v2839 = vpop.f32.mrb[0].mxu0
        %v2840 = vadd.f32 %v2799, %v2839
        %v2841 = vpop.f32.mrb[0].mxu0
        %v2842 = vadd.f32 %v2801, %v2841
        %v2843 = vpop.f32.mrb[0].mxu0
        %v2844 = vpop.f32.mrb[0].mxu0
        %2845 = vdwg.mxu0
        %2846 = vmatprep.subr.bf16.mxu0 %v1562
        %2847 = vmatpush1.bf16.xpose.msra.mxu0 %v1561
        %2848 = vmatprep.subr.bf16.mxu0 %v1578
        %2849 = vmatpush1.bf16.xpose.msra.mxu0 %v1577
        %2850 = vmatprep.subr.bf16.mxu0 %v1594
        %2851 = vmatpush1.bf16.xpose.msra.mxu0 %v1593
        %2852 = vmatprep.subr.bf16.mxu0 %v1610
        %2853 = vmatpush1.bf16.xpose.msra.mxu0 %v1609
        %2854 = vmatprep.subr.bf16.mxu0 %v1626
        %2855 = vmatpush1.bf16.xpose.msra.mxu0 %v1625
        %2856 = vmatprep.subr.bf16.mxu0 %v1642
        %2857 = vmatpush1.bf16.xpose.msra.mxu0 %v1641
        %2858 = vmatprep.subr.bf16.mxu0 %v1658
        %2859 = vmatpush1.bf16.xpose.msra.mxu0 %v1657
        %2860 = vmatprep.subr.bf16.mxu0 %v1674
        %2861 = vmatpush1.bf16.xpose.msra.mxu0 %v1673
        %2862 = vmatprep.subr.bf16.mxu0 %v1690
        %2863 = vmatpush1.bf16.xpose.msra.mxu0 %v1689
        %2864 = vmatprep.subr.bf16.mxu0 %v1706
        %2865 = vmatpush1.bf16.xpose.msra.mxu0 %v1705
        %2866 = vmatprep.subr.bf16.mxu0 %v1722
        %2867 = vmatpush1.bf16.xpose.msra.mxu0 %v1721
        %2868 = vmatprep.subr.bf16.mxu0 %v1738
        %2869 = vmatpush1.bf16.xpose.msra.mxu0 %v1737
        %2870 = vmatprep.subr.bf16.mxu0 %v1754
        %2871 = vmatpush1.bf16.xpose.msra.mxu0 %v1753
        %2872 = vmatprep.subr.bf16.mxu0 %v1770
        %2873 = vmatpush1.bf16.xpose.msra.mxu0 %v1769
        %2874 = vmatprep.subr.bf16.mxu0 %v1786
        %2875 = vmatpush1.bf16.xpose.msra.mxu0 %v1785
        %2876 = vmatprep.subr.bf16.mxu0 %v1802
        %2877 = vmatpush1.bf16.xpose.msra.mxu0 %v1801
        %2878 = vmatprep.mubr.bf16.mxu0 %v522
        %2879 = vmatmul.mubr.bf16.gmra.mrb[0].mxu0 %v521
        %v2880 = vpop.f32.mrb[0].mxu0
        %v2881 = vadd.f32 %v2840, %v2880
        %v2882 = vpop.f32.mrb[0].mxu0
        %v2883 = vadd.f32 %v2842, %v2882
        %v2884 = vpop.f32.mrb[0].mxu0
        %v2885 = vpop.f32.mrb[0].mxu0
        %2886 = vdwg.mxu0
        %2887 = vmatprep.subr.bf16.mxu0 %v1564
        %2888 = vmatpush1.bf16.xpose.msra.mxu0 %v1563
        %2889 = vmatprep.subr.bf16.mxu0 %v1580
        %2890 = vmatpush1.bf16.xpose.msra.mxu0 %v1579
        %2891 = vmatprep.subr.bf16.mxu0 %v1596
        %2892 = vmatpush1.bf16.xpose.msra.mxu0 %v1595
        %2893 = vmatprep.subr.bf16.mxu0 %v1612
        %2894 = vmatpush1.bf16.xpose.msra.mxu0 %v1611
        %2895 = vmatprep.subr.bf16.mxu0 %v1628
        %2896 = vmatpush1.bf16.xpose.msra.mxu0 %v1627
        %2897 = vmatprep.subr.bf16.mxu0 %v1644
        %2898 = vmatpush1.bf16.xpose.msra.mxu0 %v1643
        %2899 = vmatprep.subr.bf16.mxu0 %v1660
        %2900 = vmatpush1.bf16.xpose.msra.mxu0 %v1659
        %2901 = vmatprep.subr.bf16.mxu0 %v1676
        %2902 = vmatpush1.bf16.xpose.msra.mxu0 %v1675
        %2903 = vmatprep.subr.bf16.mxu0 %v1692
        %2904 = vmatpush1.bf16.xpose.msra.mxu0 %v1691
        %2905 = vmatprep.subr.bf16.mxu0 %v1708
        %2906 = vmatpush1.bf16.xpose.msra.mxu0 %v1707
        %2907 = vmatprep.subr.bf16.mxu0 %v1724
        %2908 = vmatpush1.bf16.xpose.msra.mxu0 %v1723
        %2909 = vmatprep.subr.bf16.mxu0 %v1740
        %2910 = vmatpush1.bf16.xpose.msra.mxu0 %v1739
        %2911 = vmatprep.subr.bf16.mxu0 %v1756
        %2912 = vmatpush1.bf16.xpose.msra.mxu0 %v1755
        %2913 = vmatprep.subr.bf16.mxu0 %v1772
        %2914 = vmatpush1.bf16.xpose.msra.mxu0 %v1771
        %2915 = vmatprep.subr.bf16.mxu0 %v1788
        %2916 = vmatpush1.bf16.xpose.msra.mxu0 %v1787
        %2917 = vmatprep.subr.bf16.mxu0 %v1804
        %2918 = vmatpush1.bf16.xpose.msra.mxu0 %v1803
        %2919 = vmatprep.mubr.bf16.mxu0 %v524
        %2920 = vmatmul.mubr.bf16.gmra.mrb[0].mxu0 %v523
        %v2921 = vpop.f32.mrb[0].mxu0
        %v2922 = vadd.f32 %v2881, %v2921
        %v2923 = vpop.f32.mrb[0].mxu0
        %v2924 = vadd.f32 %v2883, %v2923
        %v2925 = vpop.f32.mrb[0].mxu0
        %v2926 = vpop.f32.mrb[0].mxu0
        %2927 = vdwg.mxu0
        %2928 = vmatprep.subr.bf16.mxu0 %v1566
        %2929 = vmatpush1.bf16.xpose.msra.mxu0 %v1565
        %2930 = vmatprep.subr.bf16.mxu0 %v1582
        %2931 = vmatpush1.bf16.xpose.msra.mxu0 %v1581
        %2932 = vmatprep.subr.bf16.mxu0 %v1598
        %2933 = vmatpush1.bf16.xpose.msra.mxu0 %v1597
        %2934 = vmatprep.subr.bf16.mxu0 %v1614
        %2935 = vmatpush1.bf16.xpose.msra.mxu0 %v1613
        %2936 = vmatprep.subr.bf16.mxu0 %v1630
        %2937 = vmatpush1.bf16.xpose.msra.mxu0 %v1629
        %2938 = vmatprep.subr.bf16.mxu0 %v1646
        %2939 = vmatpush1.bf16.xpose.msra.mxu0 %v1645
        %2940 = vmatprep.subr.bf16.mxu0 %v1662
        %2941 = vmatpush1.bf16.xpose.msra.mxu0 %v1661
        %2942 = vmatprep.subr.bf16.mxu0 %v1678
        %2943 = vmatpush1.bf16.xpose.msra.mxu0 %v1677
        %2944 = vmatprep.subr.bf16.mxu0 %v1694
        %2945 = vmatpush1.bf16.xpose.msra.mxu0 %v1693
        %2946 = vmatprep.subr.bf16.mxu0 %v1710
        %2947 = vmatpush1.bf16.xpose.msra.mxu0 %v1709
        %2948 = vmatprep.subr.bf16.mxu0 %v1726
        %2949 = vmatpush1.bf16.xpose.msra.mxu0 %v1725
        %2950 = vmatprep.subr.bf16.mxu0 %v1742
        %2951 = vmatpush1.bf16.xpose.msra.mxu0 %v1741
        %2952 = vmatprep.subr.bf16.mxu0 %v1758
        %2953 = vmatpush1.bf16.xpose.msra.mxu0 %v1757
        %2954 = vmatprep.subr.bf16.mxu0 %v1774
        %2955 = vmatpush1.bf16.xpose.msra.mxu0 %v1773
        %2956 = vmatprep.subr.bf16.mxu0 %v1790
        %2957 = vmatpush1.bf16.xpose.msra.mxu0 %v1789
        %2958 = vmatprep.subr.bf16.mxu0 %v1806
        %2959 = vmatpush1.bf16.xpose.msra.mxu0 %v1805
        %2960 = vmatprep.mubr.bf16.mxu0 %v526
        %2961 = vmatmul.mubr.bf16.gmra.mrb[0].mxu0 %v525
        %v2962 = vpop.f32.mrb[0].mxu0
        %v2963 = vadd.f32 %v2922, %v2962
        %v2964 = vpop.f32.mrb[0].mxu0
        %v2965 = vadd.f32 %v2924, %v2964
        %v2966 = vpop.f32.mrb[0].mxu0
        %v2967 = vpop.f32.mrb[0].mxu0
        %2968 = vdwg.mxu0
        %2969 = vmatprep.subr.bf16.mxu0 %v1568
        %2970 = vmatpush1.bf16.xpose.msra.mxu0 %v1567
        %2971 = vmatprep.subr.bf16.mxu0 %v1584
        %2972 = vmatpush1.bf16.xpose.msra.mxu0 %v1583
        %2973 = vmatprep.subr.bf16.mxu0 %v1600
        %2974 = vmatpush1.bf16.xpose.msra.mxu0 %v1599
        %2975 = vmatprep.subr.bf16.mxu0 %v1616
        %2976 = vmatpush1.bf16.xpose.msra.mxu0 %v1615
        %2977 = vmatprep.subr.bf16.mxu0 %v1632
        %2978 = vmatpush1.bf16.xpose.msra.mxu0 %v1631
        %2979 = vmatprep.subr.bf16.mxu0 %v1648
        %2980 = vmatpush1.bf16.xpose.msra.mxu0 %v1647
        %2981 = vmatprep.subr.bf16.mxu0 %v1664
        %2982 = vmatpush1.bf16.xpose.msra.mxu0 %v1663
        %2983 = vmatprep.subr.bf16.mxu0 %v1680
        %2984 = vmatpush1.bf16.xpose.msra.mxu0 %v1679
        %2985 = vmatprep.subr.bf16.mxu0 %v1696
        %2986 = vmatpush1.bf16.xpose.msra.mxu0 %v1695
        %2987 = vmatprep.subr.bf16.mxu0 %v1712
        %2988 = vmatpush1.bf16.xpose.msra.mxu0 %v1711
        %2989 = vmatprep.subr.bf16.mxu0 %v1728
        %2990 = vmatpush1.bf16.xpose.msra.mxu0 %v1727
        %2991 = vmatprep.subr.bf16.mxu0 %v1744
        %2992 = vmatpush1.bf16.xpose.msra.mxu0 %v1743
        %2993 = vmatprep.subr.bf16.mxu0 %v1760
        %2994 = vmatpush1.bf16.xpose.msra.mxu0 %v1759
        %2995 = vmatprep.subr.bf16.mxu0 %v1776
        %2996 = vmatpush1.bf16.xpose.msra.mxu0 %v1775
        %2997 = vmatprep.subr.bf16.mxu0 %v1792
        %2998 = vmatpush1.bf16.xpose.msra.mxu0 %v1791
        %2999 = vmatprep.subr.bf16.mxu0 %v1808
        %3000 = vmatpush1.bf16.xpose.msra.mxu0 %v1807
        %3001 = vmatprep.mubr.bf16.mxu0 %v528
        %3002 = vmatmul.mubr.bf16.gmra.mrb[0].mxu0 %v527
        %v3003 = vpop.f32.mrb[0].mxu0
        %v3004 = vadd.f32 %v2963, %v3003
        %v3005 = vpop.f32.mrb[0].mxu0
        %v3006 = vadd.f32 %v2965, %v3005
        %v3007 = vpop.f32.mrb[0].mxu0
        %v3008 = vpop.f32.mrb[0].mxu0
        %3009 = vdwg.mxu0
        %3010 = vmatprep.subr.bf16.mxu0 %v1570
        %3011 = vmatpush1.bf16.xpose.msra.mxu0 %v1569
        %3012 = vmatprep.subr.bf16.mxu0 %v1586
        %3013 = vmatpush1.bf16.xpose.msra.mxu0 %v1585
        %3014 = vmatprep.subr.bf16.mxu0 %v1602
        %3015 = vmatpush1.bf16.xpose.msra.mxu0 %v1601
        %3016 = vmatprep.subr.bf16.mxu0 %v1618
        %3017 = vmatpush1.bf16.xpose.msra.mxu0 %v1617
        %3018 = vmatprep.subr.bf16.mxu0 %v1634
        %3019 = vmatpush1.bf16.xpose.msra.mxu0 %v1633
        %3020 = vmatprep.subr.bf16.mxu0 %v1650
        %3021 = vmatpush1.bf16.xpose.msra.mxu0 %v1649
        %3022 = vmatprep.subr.bf16.mxu0 %v1666
        %3023 = vmatpush1.bf16.xpose.msra.mxu0 %v1665
        %3024 = vmatprep.subr.bf16.mxu0 %v1682
        %3025 = vmatpush1.bf16.xpose.msra.mxu0 %v1681
        %3026 = vmatprep.subr.bf16.mxu0 %v1698
        %3027 = vmatpush1.bf16.xpose.msra.mxu0 %v1697
        %3028 = vmatprep.subr.bf16.mxu0 %v1714
        %3029 = vmatpush1.bf16.xpose.msra.mxu0 %v1713
        %3030 = vmatprep.subr.bf16.mxu0 %v1730
        %3031 = vmatpush1.bf16.xpose.msra.mxu0 %v1729
        %3032 = vmatprep.subr.bf16.mxu0 %v1746
        %3033 = vmatpush1.bf16.xpose.msra.mxu0 %v1745
        %3034 = vmatprep.subr.bf16.mxu0 %v1762
        %3035 = vmatpush1.bf16.xpose.msra.mxu0 %v1761
        %3036 = vmatprep.subr.bf16.mxu0 %v1778
        %3037 = vmatpush1.bf16.xpose.msra.mxu0 %v1777
        %3038 = vmatprep.subr.bf16.mxu0 %v1794
        %3039 = vmatpush1.bf16.xpose.msra.mxu0 %v1793
        %3040 = vmatprep.subr.bf16.mxu0 %v1810
        %3041 = vmatpush1.bf16.xpose.msra.mxu0 %v1809
        %3042 = vmatprep.mubr.bf16.mxu0 %v530
        %3043 = vmatmul.mubr.bf16.gmra.mrb[0].mxu0 %v529
        %v3044 = vpop.f32.mrb[0].mxu0
        %v3045 = vadd.f32 %v3004, %v3044
        %v3046 = vpop.f32.mrb[0].mxu0
        %v3047 = vadd.f32 %v3006, %v3046
        %v3048 = vpop.f32.mrb[0].mxu0
        %v3049 = vpop.f32.mrb[0].mxu0
        %3050 = vdwg.mxu0
        %3051 = vmatprep.subr.bf16.mxu0 %v1812
        %3052 = vmatpush1.bf16.xpose.msra.mxu0 %v1811
        %3053 = vmatprep.subr.bf16.mxu0 %v1828
        %3054 = vmatpush1.bf16.xpose.msra.mxu0 %v1827
        %3055 = vmatprep.subr.bf16.mxu0 %v1844
        %3056 = vmatpush1.bf16.xpose.msra.mxu0 %v1843
        %3057 = vmatprep.subr.bf16.mxu0 %v1860
        %3058 = vmatpush1.bf16.xpose.msra.mxu0 %v1859
        %3059 = vmatprep.subr.bf16.mxu0 %v1876
        %3060 = vmatpush1.bf16.xpose.msra.mxu0 %v1875
        %3061 = vmatprep.subr.bf16.mxu0 %v1892
        %3062 = vmatpush1.bf16.xpose.msra.mxu0 %v1891
        %3063 = vmatprep.subr.bf16.mxu0 %v1908
        %3064 = vmatpush1.bf16.xpose.msra.mxu0 %v1907
        %3065 = vmatprep.subr.bf16.mxu0 %v1924
        %3066 = vmatpush1.bf16.xpose.msra.mxu0 %v1923
        %3067 = vmatprep.subr.bf16.mxu0 %v1940
        %3068 = vmatpush1.bf16.xpose.msra.mxu0 %v1939
        %3069 = vmatprep.subr.bf16.mxu0 %v1956
        %3070 = vmatpush1.bf16.xpose.msra.mxu0 %v1955
        %3071 = vmatprep.subr.bf16.mxu0 %v1972
        %3072 = vmatpush1.bf16.xpose.msra.mxu0 %v1971
        %3073 = vmatprep.subr.bf16.mxu0 %v1988
        %3074 = vmatpush1.bf16.xpose.msra.mxu0 %v1987
        %3075 = vmatprep.subr.bf16.mxu0 %v2004
        %3076 = vmatpush1.bf16.xpose.msra.mxu0 %v2003
        %3077 = vmatprep.subr.bf16.mxu0 %v2020
        %3078 = vmatpush1.bf16.xpose.msra.mxu0 %v2019
        %3079 = vmatprep.subr.bf16.mxu0 %v2036
        %3080 = vmatpush1.bf16.xpose.msra.mxu0 %v2035
        %3081 = vmatprep.subr.bf16.mxu0 %v2052
        %3082 = vmatpush1.bf16.xpose.msra.mxu0 %v2051
        %3083 = vmatprep.mubr.bf16.mxu0 %v516
        %3084 = vmatmul.mubr.bf16.gmra.mrb[0].mxu0 %v515
        %v3085 = vpop.f32.mrb[0].mxu0
        %v3086 = vadd.f32 0.0, %v3085
        %v3087 = vpop.f32.mrb[0].mxu0
        %v3088 = vadd.f32 0.0, %v3087
        %v3089 = vpop.f32.mrb[0].mxu0
        %v3090 = vpop.f32.mrb[0].mxu0
        %3091 = vdwg.mxu0
        %3092 = vmatprep.subr.bf16.mxu0 %v1814
        %3093 = vmatpush1.bf16.xpose.msra.mxu0 %v1813
        %3094 = vmatprep.subr.bf16.mxu0 %v1830
        %3095 = vmatpush1.bf16.xpose.msra.mxu0 %v1829
        %3096 = vmatprep.subr.bf16.mxu0 %v1846
        %3097 = vmatpush1.bf16.xpose.msra.mxu0 %v1845
        %3098 = vmatprep.subr.bf16.mxu0 %v1862
        %3099 = vmatpush1.bf16.xpose.msra.mxu0 %v1861
        %3100 = vmatprep.subr.bf16.mxu0 %v1878
        %3101 = vmatpush1.bf16.xpose.msra.mxu0 %v1877
        %3102 = vmatprep.subr.bf16.mxu0 %v1894
        %3103 = vmatpush1.bf16.xpose.msra.mxu0 %v1893
        %3104 = vmatprep.subr.bf16.mxu0 %v1910
        %3105 = vmatpush1.bf16.xpose.msra.mxu0 %v1909
        %3106 = vmatprep.subr.bf16.mxu0 %v1926
        %3107 = vmatpush1.bf16.xpose.msra.mxu0 %v1925
        %3108 = vmatprep.subr.bf16.mxu0 %v1942
        %3109 = vmatpush1.bf16.xpose.msra.mxu0 %v1941
        %3110 = vmatprep.subr.bf16.mxu0 %v1958
        %3111 = vmatpush1.bf16.xpose.msra.mxu0 %v1957
        %3112 = vmatprep.subr.bf16.mxu0 %v1974
        %3113 = vmatpush1.bf16.xpose.msra.mxu0 %v1973
        %3114 = vmatprep.subr.bf16.mxu0 %v1990
        %3115 = vmatpush1.bf16.xpose.msra.mxu0 %v1989
        %3116 = vmatprep.subr.bf16.mxu0 %v2006
        %3117 = vmatpush1.bf16.xpose.msra.mxu0 %v2005
        %3118 = vmatprep.subr.bf16.mxu0 %v2022
        %3119 = vmatpush1.bf16.xpose.msra.mxu0 %v2021
        %3120 = vmatprep.subr.bf16.mxu0 %v2038
        %3121 = vmatpush1.bf16.xpose.msra.mxu0 %v2037
        %3122 = vmatprep.subr.bf16.mxu0 %v2054
        %3123 = vmatpush1.bf16.xpose.msra.mxu0 %v2053
        %3124 = vmatprep.mubr.bf16.mxu0 %v518
        %3125 = vmatmul.mubr.bf16.gmra.mrb[0].mxu0 %v517
        %v3126 = vpop.f32.mrb[0].mxu0
        %v3127 = vadd.f32 %v3086, %v3126
        %v3128 = vpop.f32.mrb[0].mxu0
        %v3129 = vadd.f32 %v3088, %v3128
        %v3130 = vpop.f32.mrb[0].mxu0
        %v3131 = vpop.f32.mrb[0].mxu0
        %3132 = vdwg.mxu0
        %3133 = vmatprep.subr.bf16.mxu0 %v1816
        %3134 = vmatpush1.bf16.xpose.msra.mxu0 %v1815
        %3135 = vmatprep.subr.bf16.mxu0 %v1832
        %3136 = vmatpush1.bf16.xpose.msra.mxu0 %v1831
        %3137 = vmatprep.subr.bf16.mxu0 %v1848
        %3138 = vmatpush1.bf16.xpose.msra.mxu0 %v1847
        %3139 = vmatprep.subr.bf16.mxu0 %v1864
        %3140 = vmatpush1.bf16.xpose.msra.mxu0 %v1863
        %3141 = vmatprep.subr.bf16.mxu0 %v1880
        %3142 = vmatpush1.bf16.xpose.msra.mxu0 %v1879
        %3143 = vmatprep.subr.bf16.mxu0 %v1896
        %3144 = vmatpush1.bf16.xpose.msra.mxu0 %v1895
        %3145 = vmatprep.subr.bf16.mxu0 %v1912
        %3146 = vmatpush1.bf16.xpose.msra.mxu0 %v1911
        %3147 = vmatprep.subr.bf16.mxu0 %v1928
        %3148 = vmatpush1.bf16.xpose.msra.mxu0 %v1927
        %3149 = vmatprep.subr.bf16.mxu0 %v1944
        %3150 = vmatpush1.bf16.xpose.msra.mxu0 %v1943
        %3151 = vmatprep.subr.bf16.mxu0 %v1960
        %3152 = vmatpush1.bf16.xpose.msra.mxu0 %v1959
        %3153 = vmatprep.subr.bf16.mxu0 %v1976
        %3154 = vmatpush1.bf16.xpose.msra.mxu0 %v1975
        %3155 = vmatprep.subr.bf16.mxu0 %v1992
        %3156 = vmatpush1.bf16.xpose.msra.mxu0 %v1991
        %3157 = vmatprep.subr.bf16.mxu0 %v2008
        %3158 = vmatpush1.bf16.xpose.msra.mxu0 %v2007
        %3159 = vmatprep.subr.bf16.mxu0 %v2024
        %3160 = vmatpush1.bf16.xpose.msra.mxu0 %v2023
        %3161 = vmatprep.subr.bf16.mxu0 %v2040
        %3162 = vmatpush1.bf16.xpose.msra.mxu0 %v2039
        %3163 = vmatprep.subr.bf16.mxu0 %v2056
        %3164 = vmatpush1.bf16.xpose.msra.mxu0 %v2055
        %3165 = vmatprep.mubr.bf16.mxu0 %v520
        %3166 = vmatmul.mubr.bf16.gmra.mrb[0].mxu0 %v519
        %v3167 = vpop.f32.mrb[0].mxu0
        %v3168 = vadd.f32 %v3127, %v3167
        %v3169 = vpop.f32.mrb[0].mxu0
        %v3170 = vadd.f32 %v3129, %v3169
        %v3171 = vpop.f32.mrb[0].mxu0
        %v3172 = vpop.f32.mrb[0].mxu0
        %3173 = vdwg.mxu0
        %3174 = vmatprep.subr.bf16.mxu0 %v1818
        %3175 = vmatpush1.bf16.xpose.msra.mxu0 %v1817
        %3176 = vmatprep.subr.bf16.mxu0 %v1834
        %3177 = vmatpush1.bf16.xpose.msra.mxu0 %v1833
        %3178 = vmatprep.subr.bf16.mxu0 %v1850
        %3179 = vmatpush1.bf16.xpose.msra.mxu0 %v1849
        %3180 = vmatprep.subr.bf16.mxu0 %v1866
        %3181 = vmatpush1.bf16.xpose.msra.mxu0 %v1865
        %3182 = vmatprep.subr.bf16.mxu0 %v1882
        %3183 = vmatpush1.bf16.xpose.msra.mxu0 %v1881
        %3184 = vmatprep.subr.bf16.mxu0 %v1898
        %3185 = vmatpush1.bf16.xpose.msra.mxu0 %v1897
        %3186 = vmatprep.subr.bf16.mxu0 %v1914
        %3187 = vmatpush1.bf16.xpose.msra.mxu0 %v1913
        %3188 = vmatprep.subr.bf16.mxu0 %v1930
        %3189 = vmatpush1.bf16.xpose.msra.mxu0 %v1929
        %3190 = vmatprep.subr.bf16.mxu0 %v1946
        %3191 = vmatpush1.bf16.xpose.msra.mxu0 %v1945
        %3192 = vmatprep.subr.bf16.mxu0 %v1962
        %3193 = vmatpush1.bf16.xpose.msra.mxu0 %v1961
        %3194 = vmatprep.subr.bf16.mxu0 %v1978
        %3195 = vmatpush1.bf16.xpose.msra.mxu0 %v1977
        %3196 = vmatprep.subr.bf16.mxu0 %v1994
        %3197 = vmatpush1.bf16.xpose.msra.mxu0 %v1993
        %3198 = vmatprep.subr.bf16.mxu0 %v2010
        %3199 = vmatpush1.bf16.xpose.msra.mxu0 %v2009
        %3200 = vmatprep.subr.bf16.mxu0 %v2026
        %3201 = vmatpush1.bf16.xpose.msra.mxu0 %v2025
        %3202 = vmatprep.subr.bf16.mxu0 %v2042
        %3203 = vmatpush1.bf16.xpose.msra.mxu0 %v2041
        %3204 = vmatprep.subr.bf16.mxu0 %v2058
        %3205 = vmatpush1.bf16.xpose.msra.mxu0 %v2057
        %3206 = vmatprep.mubr.bf16.mxu0 %v522
        %3207 = vmatmul.mubr.bf16.gmra.mrb[0].mxu0 %v521
        %v3208 = vpop.f32.mrb[0].mxu0
        %v3209 = vadd.f32 %v3168, %v3208
        %v3210 = vpop.f32.mrb[0].mxu0
        %v3211 = vadd.f32 %v3170, %v3210
        %v3212 = vpop.f32.mrb[0].mxu0
        %v3213 = vpop.f32.mrb[0].mxu0
        %3214 = vdwg.mxu0
        %3215 = vmatprep.subr.bf16.mxu0 %v1820
        %3216 = vmatpush1.bf16.xpose.msra.mxu0 %v1819
        %3217 = vmatprep.subr.bf16.mxu0 %v1836
        %3218 = vmatpush1.bf16.xpose.msra.mxu0 %v1835
        %3219 = vmatprep.subr.bf16.mxu0 %v1852
        %3220 = vmatpush1.bf16.xpose.msra.mxu0 %v1851
        %3221 = vmatprep.subr.bf16.mxu0 %v1868
        %3222 = vmatpush1.bf16.xpose.msra.mxu0 %v1867
        %3223 = vmatprep.subr.bf16.mxu0 %v1884
        %3224 = vmatpush1.bf16.xpose.msra.mxu0 %v1883
        %3225 = vmatprep.subr.bf16.mxu0 %v1900
        %3226 = vmatpush1.bf16.xpose.msra.mxu0 %v1899
        %3227 = vmatprep.subr.bf16.mxu0 %v1916
        %3228 = vmatpush1.bf16.xpose.msra.mxu0 %v1915
        %3229 = vmatprep.subr.bf16.mxu0 %v1932
        %3230 = vmatpush1.bf16.xpose.msra.mxu0 %v1931
        %3231 = vmatprep.subr.bf16.mxu0 %v1948
        %3232 = vmatpush1.bf16.xpose.msra.mxu0 %v1947
        %3233 = vmatprep.subr.bf16.mxu0 %v1964
        %3234 = vmatpush1.bf16.xpose.msra.mxu0 %v1963
        %3235 = vmatprep.subr.bf16.mxu0 %v1980
        %3236 = vmatpush1.bf16.xpose.msra.mxu0 %v1979
        %3237 = vmatprep.subr.bf16.mxu0 %v1996
        %3238 = vmatpush1.bf16.xpose.msra.mxu0 %v1995
        %3239 = vmatprep.subr.bf16.mxu0 %v2012
        %3240 = vmatpush1.bf16.xpose.msra.mxu0 %v2011
        %3241 = vmatprep.subr.bf16.mxu0 %v2028
        %3242 = vmatpush1.bf16.xpose.msra.mxu0 %v2027
        %3243 = vmatprep.subr.bf16.mxu0 %v2044
        %3244 = vmatpush1.bf16.xpose.msra.mxu0 %v2043
        %3245 = vmatprep.subr.bf16.mxu0 %v2060
        %3246 = vmatpush1.bf16.xpose.msra.mxu0 %v2059
        %3247 = vmatprep.mubr.bf16.mxu0 %v524
        %3248 = vmatmul.mubr.bf16.gmra.mrb[0].mxu0 %v523
        %v3249 = vpop.f32.mrb[0].mxu0
        %v3250 = vadd.f32 %v3209, %v3249
        %v3251 = vpop.f32.mrb[0].mxu0
        %v3252 = vadd.f32 %v3211, %v3251
        %v3253 = vpop.f32.mrb[0].mxu0
        %v3254 = vpop.f32.mrb[0].mxu0
        %3255 = vdwg.mxu0
        %3256 = vmatprep.subr.bf16.mxu0 %v1822
        %3257 = vmatpush1.bf16.xpose.msra.mxu0 %v1821
        %3258 = vmatprep.subr.bf16.mxu0 %v1838
        %3259 = vmatpush1.bf16.xpose.msra.mxu0 %v1837
        %3260 = vmatprep.subr.bf16.mxu0 %v1854
        %3261 = vmatpush1.bf16.xpose.msra.mxu0 %v1853
        %3262 = vmatprep.subr.bf16.mxu0 %v1870
        %3263 = vmatpush1.bf16.xpose.msra.mxu0 %v1869
        %3264 = vmatprep.subr.bf16.mxu0 %v1886
        %3265 = vmatpush1.bf16.xpose.msra.mxu0 %v1885
        %3266 = vmatprep.subr.bf16.mxu0 %v1902
        %3267 = vmatpush1.bf16.xpose.msra.mxu0 %v1901
        %3268 = vmatprep.subr.bf16.mxu0 %v1918
        %3269 = vmatpush1.bf16.xpose.msra.mxu0 %v1917
        %3270 = vmatprep.subr.bf16.mxu0 %v1934
        %3271 = vmatpush1.bf16.xpose.msra.mxu0 %v1933
        %3272 = vmatprep.subr.bf16.mxu0 %v1950
        %3273 = vmatpush1.bf16.xpose.msra.mxu0 %v1949
        %3274 = vmatprep.subr.bf16.mxu0 %v1966
        %3275 = vmatpush1.bf16.xpose.msra.mxu0 %v1965
        %3276 = vmatprep.subr.bf16.mxu0 %v1982
        %3277 = vmatpush1.bf16.xpose.msra.mxu0 %v1981
        %3278 = vmatprep.subr.bf16.mxu0 %v1998
        %3279 = vmatpush1.bf16.xpose.msra.mxu0 %v1997
        %3280 = vmatprep.subr.bf16.mxu0 %v2014
        %3281 = vmatpush1.bf16.xpose.msra.mxu0 %v2013
        %3282 = vmatprep.subr.bf16.mxu0 %v2030
        %3283 = vmatpush1.bf16.xpose.msra.mxu0 %v2029
        %3284 = vmatprep.subr.bf16.mxu0 %v2046
        %3285 = vmatpush1.bf16.xpose.msra.mxu0 %v2045
        %3286 = vmatprep.subr.bf16.mxu0 %v2062
        %3287 = vmatpush1.bf16.xpose.msra.mxu0 %v2061
        %3288 = vmatprep.mubr.bf16.mxu0 %v526
        %3289 = vmatmul.mubr.bf16.gmra.mrb[0].mxu0 %v525
        %v3290 = vpop.f32.mrb[0].mxu0
        %v3291 = vadd.f32 %v3250, %v3290
        %v3292 = vpop.f32.mrb[0].mxu0
        %v3293 = vadd.f32 %v3252, %v3292
        %v3294 = vpop.f32.mrb[0].mxu0
        %v3295 = vpop.f32.mrb[0].mxu0
        %3296 = vdwg.mxu0
        %3297 = vmatprep.subr.bf16.mxu0 %v1824
        %3298 = vmatpush1.bf16.xpose.msra.mxu0 %v1823
        %3299 = vmatprep.subr.bf16.mxu0 %v1840
        %3300 = vmatpush1.bf16.xpose.msra.mxu0 %v1839
        %3301 = vmatprep.subr.bf16.mxu0 %v1856
        %3302 = vmatpush1.bf16.xpose.msra.mxu0 %v1855
        %3303 = vmatprep.subr.bf16.mxu0 %v1872
        %3304 = vmatpush1.bf16.xpose.msra.mxu0 %v1871
        %3305 = vmatprep.subr.bf16.mxu0 %v1888
        %3306 = vmatpush1.bf16.xpose.msra.mxu0 %v1887
        %3307 = vmatprep.subr.bf16.mxu0 %v1904
        %3308 = vmatpush1.bf16.xpose.msra.mxu0 %v1903
        %3309 = vmatprep.subr.bf16.mxu0 %v1920
        %3310 = vmatpush1.bf16.xpose.msra.mxu0 %v1919
        %3311 = vmatprep.subr.bf16.mxu0 %v1936
        %3312 = vmatpush1.bf16.xpose.msra.mxu0 %v1935
        %3313 = vmatprep.subr.bf16.mxu0 %v1952
        %3314 = vmatpush1.bf16.xpose.msra.mxu0 %v1951
        %3315 = vmatprep.subr.bf16.mxu0 %v1968
        %3316 = vmatpush1.bf16.xpose.msra.mxu0 %v1967
        %3317 = vmatprep.subr.bf16.mxu0 %v1984
        %3318 = vmatpush1.bf16.xpose.msra.mxu0 %v1983
        %3319 = vmatprep.subr.bf16.mxu0 %v2000
        %3320 = vmatpush1.bf16.xpose.msra.mxu0 %v1999
        %3321 = vmatprep.subr.bf16.mxu0 %v2016
        %3322 = vmatpush1.bf16.xpose.msra.mxu0 %v2015
        %3323 = vmatprep.subr.bf16.mxu0 %v2032
        %3324 = vmatpush1.bf16.xpose.msra.mxu0 %v2031
        %3325 = vmatprep.subr.bf16.mxu0 %v2048
        %3326 = vmatpush1.bf16.xpose.msra.mxu0 %v2047
        %3327 = vmatprep.subr.bf16.mxu0 %v2064
        %3328 = vmatpush1.bf16.xpose.msra.mxu0 %v2063
        %3329 = vmatprep.mubr.bf16.mxu0 %v528
        %3330 = vmatmul.mubr.bf16.gmra.mrb[0].mxu0 %v527
        %v3331 = vpop.f32.mrb[0].mxu0
        %v3332 = vadd.f32 %v3291, %v3331
        %v3333 = vpop.f32.mrb[0].mxu0
        %v3334 = vadd.f32 %v3293, %v3333
        %v3335 = vpop.f32.mrb[0].mxu0
        %v3336 = vpop.f32.mrb[0].mxu0
        %3337 = vdwg.mxu0
        %3338 = vmatprep.subr.bf16.mxu0 %v1826
        %3339 = vmatpush1.bf16.xpose.msra.mxu0 %v1825
        %3340 = vmatprep.subr.bf16.mxu0 %v1842
        %3341 = vmatpush1.bf16.xpose.msra.mxu0 %v1841
        %3342 = vmatprep.subr.bf16.mxu0 %v1858
        %3343 = vmatpush1.bf16.xpose.msra.mxu0 %v1857
        %3344 = vmatprep.subr.bf16.mxu0 %v1874
        %3345 = vmatpush1.bf16.xpose.msra.mxu0 %v1873
        %3346 = vmatprep.subr.bf16.mxu0 %v1890
        %3347 = vmatpush1.bf16.xpose.msra.mxu0 %v1889
        %3348 = vmatprep.subr.bf16.mxu0 %v1906
        %3349 = vmatpush1.bf16.xpose.msra.mxu0 %v1905
        %3350 = vmatprep.subr.bf16.mxu0 %v1922
        %3351 = vmatpush1.bf16.xpose.msra.mxu0 %v1921
        %3352 = vmatprep.subr.bf16.mxu0 %v1938
        %3353 = vmatpush1.bf16.xpose.msra.mxu0 %v1937
        %3354 = vmatprep.subr.bf16.mxu0 %v1954
        %3355 = vmatpush1.bf16.xpose.msra.mxu0 %v1953
        %3356 = vmatprep.subr.bf16.mxu0 %v1970
        %3357 = vmatpush1.bf16.xpose.msra.mxu0 %v1969
        %3358 = vmatprep.subr.bf16.mxu0 %v1986
        %3359 = vmatpush1.bf16.xpose.msra.mxu0 %v1985
        %3360 = vmatprep.subr.bf16.mxu0 %v2002
        %3361 = vmatpush1.bf16.xpose.msra.mxu0 %v2001
        %3362 = vmatprep.subr.bf16.mxu0 %v2018
        %3363 = vmatpush1.bf16.xpose.msra.mxu0 %v2017
        %3364 = vmatprep.subr.bf16.mxu0 %v2034
        %3365 = vmatpush1.bf16.xpose.msra.mxu0 %v2033
        %3366 = vmatprep.subr.bf16.mxu0 %v2050
        %3367 = vmatpush1.bf16.xpose.msra.mxu0 %v2049
        %3368 = vmatprep.subr.bf16.mxu0 %v2066
        %3369 = vmatpush1.bf16.xpose.msra.mxu0 %v2065
        %3370 = vmatprep.mubr.bf16.mxu0 %v530
        %3371 = vmatmul.mubr.bf16.gmra.mrb[0].mxu0 %v529
        %v3372 = vpop.f32.mrb[0].mxu0
        %v3373 = vadd.f32 %v3332, %v3372
        %v3374 = vpop.f32.mrb[0].mxu0
        %v3375 = vadd.f32 %v3334, %v3374
        %v3376 = vpop.f32.mrb[0].mxu0
        %v3377 = vpop.f32.mrb[0].mxu0
        %3378 = vdwg.mxu0
        %v3379 = vld [vmem:[%s341] sm:$0xff]
        %v3381 = vlaneseq
        %v3382 = vshrl.u32 %v3381, 7
        %v3383 = vsub.s32 0, %v3382
        %v3384 = vrot.slane %v3379, %v3383
        %v3385 = vlaneseq
        %v3386 = vshrl.u32 %v3385, 7
        %v3387 = vsub.s32 1, %v3386
        %v3388 = vrot.slane %v3379, %v3387
        %v3389 = vlaneseq
        %v3390 = vshrl.u32 %v3389, 7
        %v3391 = vsub.s32 2, %v3390
        %v3392 = vrot.slane %v3379, %v3391
        %v3393 = vlaneseq
        %v3394 = vshrl.u32 %v3393, 7
        %v3395 = vsub.s32 3, %v3394
        %v3396 = vrot.slane %v3379, %v3395
        %v3397 = vlaneseq
        %v3398 = vshrl.u32 %v3397, 7
        %v3399 = vsub.s32 4, %v3398
        %v3400 = vrot.slane %v3379, %v3399
        %v3401 = vlaneseq
        %v3402 = vshrl.u32 %v3401, 7
        %v3403 = vsub.s32 5, %v3402
        %v3404 = vrot.slane %v3379, %v3403
        %v3405 = vlaneseq
        %v3406 = vshrl.u32 %v3405, 7
        %v3407 = vsub.s32 6, %v3406
        %v3408 = vrot.slane %v3379, %v3407
        %v3409 = vlaneseq
        %v3410 = vshrl.u32 %v3409, 7
        %v3411 = vsub.s32 7, %v3410
        %v3412 = vrot.slane %v3379, %v3411
        %v3421 = vmul.f32 %v2389, %v3384
        %v3422 = vmul.f32 %v2391, %v3388
        %v3423 = vmul.f32 %v2717, %v3392
        %v3424 = vmul.f32 %v2719, %v3396
        %v3425 = vmul.f32 %v3045, %v3400
        %v3426 = vmul.f32 %v3047, %v3404
        %v3427 = vmul.f32 %v3373, %v3408
        %v3428 = vmul.f32 %v3375, %v3412
        %v3429 = vld [vmem:[%s350] sm:$0xff]
        %v3431 = vlaneseq
        %v3432 = vshrl.u32 %v3431, 7
        %v3433 = vsub.s32 0, %v3432
        %v3434 = vrot.slane %v3429, %v3433
        %v3435 = vlaneseq
        %v3436 = vshrl.u32 %v3435, 7
        %v3437 = vsub.s32 1, %v3436
        %v3438 = vrot.slane %v3429, %v3437
        %v3439 = vlaneseq
        %v3440 = vshrl.u32 %v3439, 7
        %v3441 = vsub.s32 2, %v3440
        %v3442 = vrot.slane %v3429, %v3441
        %v3443 = vlaneseq
        %v3444 = vshrl.u32 %v3443, 7
        %v3445 = vsub.s32 3, %v3444
        %v3446 = vrot.slane %v3429, %v3445
        %v3447 = vlaneseq
        %v3448 = vshrl.u32 %v3447, 7
        %v3449 = vsub.s32 4, %v3448
        %v3450 = vrot.slane %v3429, %v3449
        %v3451 = vlaneseq
        %v3452 = vshrl.u32 %v3451, 7
        %v3453 = vsub.s32 5, %v3452
        %v3454 = vrot.slane %v3429, %v3453
        %v3455 = vlaneseq
        %v3456 = vshrl.u32 %v3455, 7
        %v3457 = vsub.s32 6, %v3456
        %v3458 = vrot.slane %v3429, %v3457
        %v3459 = vlaneseq
        %v3460 = vshrl.u32 %v3459, 7
        %v3461 = vsub.s32 7, %v3460
        %v3462 = vrot.slane %v3429, %v3461
        %v3471 = vadd.f32 %v3421, %v3434
        %v3472 = vadd.f32 %v3422, %v3438
        %v3473 = vadd.f32 %v3423, %v3442
        %v3474 = vadd.f32 %v3424, %v3446
        %v3475 = vadd.f32 %v3425, %v3450
        %v3476 = vadd.f32 %v3426, %v3454
        %v3477 = vadd.f32 %v3427, %v3458
        %v3478 = vadd.f32 %v3428, %v3462
        %vm3479 = vcmask 1041408
        %v3480 = vsel %vm3479, %v3471, 0.0
        %v3481 = vrot.slane %v3480, 4
        %v3482 = vadd.f32 %v3480, %v3481
        %v3483 = vrot.slane %v3482, 2
        %v3484 = vadd.f32 %v3482, %v3483
        %v3485 = vrot.slane %v3484, 1
        %v3486 = vadd.f32 %v3484, %v3485
        %v3487 = vsel %vm3479, %v3472, 0.0
        %v3488 = vrot.slane %v3487, 4
        %v3489 = vadd.f32 %v3487, %v3488
        %v3490 = vrot.slane %v3489, 2
        %v3491 = vadd.f32 %v3489, %v3490
        %v3492 = vrot.slane %v3491, 1
        %v3493 = vadd.f32 %v3491, %v3492
        %v3494 = vsel %vm3479, %v3473, 0.0
        %v3495 = vrot.slane %v3494, 4
        %v3496 = vadd.f32 %v3494, %v3495
        %v3497 = vrot.slane %v3496, 2
        %v3498 = vadd.f32 %v3496, %v3497
        %v3499 = vrot.slane %v3498, 1
        %v3500 = vadd.f32 %v3498, %v3499
        %v3501 = vsel %vm3479, %v3474, 0.0
        %v3502 = vrot.slane %v3501, 4
        %v3503 = vadd.f32 %v3501, %v3502
        %v3504 = vrot.slane %v3503, 2
        %v3505 = vadd.f32 %v3503, %v3504
        %v3506 = vrot.slane %v3505, 1
        %v3507 = vadd.f32 %v3505, %v3506
        %v3508 = vsel %vm3479, %v3475, 0.0
        %v3509 = vrot.slane %v3508, 4
        %v3510 = vadd.f32 %v3508, %v3509
        %v3511 = vrot.slane %v3510, 2
        %v3512 = vadd.f32 %v3510, %v3511
        %v3513 = vrot.slane %v3512, 1
        %v3514 = vadd.f32 %v3512, %v3513
        %v3515 = vsel %vm3479, %v3476, 0.0
        %v3516 = vrot.slane %v3515, 4
        %v3517 = vadd.f32 %v3515, %v3516
        %v3518 = vrot.slane %v3517, 2
        %v3519 = vadd.f32 %v3517, %v3518
        %v3520 = vrot.slane %v3519, 1
        %v3521 = vadd.f32 %v3519, %v3520
        %v3522 = vsel %vm3479, %v3477, 0.0
        %v3523 = vrot.slane %v3522, 4
        %v3524 = vadd.f32 %v3522, %v3523
        %v3525 = vrot.slane %v3524, 2
        %v3526 = vadd.f32 %v3524, %v3525
        %v3527 = vrot.slane %v3526, 1
        %v3528 = vadd.f32 %v3526, %v3527
        %v3529 = vsel %vm3479, %v3478, 0.0
        %v3530 = vrot.slane %v3529, 4
        %v3531 = vadd.f32 %v3529, %v3530
        %v3532 = vrot.slane %v3531, 2
        %v3533 = vadd.f32 %v3531, %v3532
        %v3534 = vrot.slane %v3533, 1
        %v3535 = vadd.f32 %v3533, %v3534
        %v3536 = vrcp.pop 2.0
        %v3537 = vmul.f32 %v3486, %v3536
        %v3538 = vmul.f32 %v3493, %v3536
        %v3539 = vmul.f32 %v3500, %v3536
        %v3540 = vmul.f32 %v3507, %v3536
        %v3541 = vmul.f32 %v3514, %v3536
        %v3542 = vmul.f32 %v3521, %v3536
        %v3543 = vmul.f32 %v3528, %v3536
        %v3544 = vmul.f32 %v3535, %v3536
        %v3545 = vsub.f32 %v3471, %v3537
        %v3546 = vsub.f32 %v3472, %v3538
        %v3547 = vsub.f32 %v3473, %v3539
        %v3548 = vsub.f32 %v3474, %v3540
        %v3549 = vsub.f32 %v3475, %v3541
        %v3550 = vsub.f32 %v3476, %v3542
        %v3551 = vsub.f32 %v3477, %v3543
        %v3552 = vsub.f32 %v3478, %v3544
        %v3553 = vmul.f32 %v3545, %v3545
        %v3554 = vmul.f32 %v3546, %v3546
        %v3555 = vmul.f32 %v3547, %v3547
        %v3556 = vmul.f32 %v3548, %v3548
        %v3557 = vmul.f32 %v3549, %v3549
        %v3558 = vmul.f32 %v3550, %v3550
        %v3559 = vmul.f32 %v3551, %v3551
        %v3560 = vmul.f32 %v3552, %v3552
        %v3561 = vsel %vm3479, %v3553, 0.0
        %v3562 = vrot.slane %v3561, 4
        %v3563 = vadd.f32 %v3561, %v3562
        %v3564 = vrot.slane %v3563, 2
        %v3565 = vadd.f32 %v3563, %v3564
        %v3566 = vrot.slane %v3565, 1
        %v3567 = vadd.f32 %v3565, %v3566
        %v3568 = vsel %vm3479, %v3554, 0.0
        %v3569 = vrot.slane %v3568, 4
        %v3570 = vadd.f32 %v3568, %v3569
        %v3571 = vrot.slane %v3570, 2
        %v3572 = vadd.f32 %v3570, %v3571
        %v3573 = vrot.slane %v3572, 1
        %v3574 = vadd.f32 %v3572, %v3573
        %v3575 = vsel %vm3479, %v3555, 0.0
        %v3576 = vrot.slane %v3575, 4
        %v3577 = vadd.f32 %v3575, %v3576
        %v3578 = vrot.slane %v3577, 2
        %v3579 = vadd.f32 %v3577, %v3578
        %v3580 = vrot.slane %v3579, 1
        %v3581 = vadd.f32 %v3579, %v3580
        %v3582 = vsel %vm3479, %v3556, 0.0
        %v3583 = vrot.slane %v3582, 4
        %v3584 = vadd.f32 %v3582, %v3583
        %v3585 = vrot.slane %v3584, 2
        %v3586 = vadd.f32 %v3584, %v3585
        %v3587 = vrot.slane %v3586, 1
        %v3588 = vadd.f32 %v3586, %v3587
        %v3589 = vsel %vm3479, %v3557, 0.0
        %v3590 = vrot.slane %v3589, 4
        %v3591 = vadd.f32 %v3589, %v3590
        %v3592 = vrot.slane %v3591, 2
        %v3593 = vadd.f32 %v3591, %v3592
        %v3594 = vrot.slane %v3593, 1
        %v3595 = vadd.f32 %v3593, %v3594
        %v3596 = vsel %vm3479, %v3558, 0.0
        %v3597 = vrot.slane %v3596, 4
        %v3598 = vadd.f32 %v3596, %v3597
        %v3599 = vrot.slane %v3598, 2
        %v3600 = vadd.f32 %v3598, %v3599
        %v3601 = vrot.slane %v3600, 1
        %v3602 = vadd.f32 %v3600, %v3601
        %v3603 = vsel %vm3479, %v3559, 0.0
        %v3604 = vrot.slane %v3603, 4
        %v3605 = vadd.f32 %v3603, %v3604
        %v3606 = vrot.slane %v3605, 2
        %v3607 = vadd.f32 %v3605, %v3606
        %v3608 = vrot.slane %v3607, 1
        %v3609 = vadd.f32 %v3607, %v3608
        %v3610 = vsel %vm3479, %v3560, 0.0
        %v3611 = vrot.slane %v3610, 4
        %v3612 = vadd.f32 %v3610, %v3611
        %v3613 = vrot.slane %v3612, 2
        %v3614 = vadd.f32 %v3612, %v3613
        %v3615 = vrot.slane %v3614, 1
        %v3616 = vadd.f32 %v3614, %v3615
        %v3617 = vmul.f32 %v3567, %v3536
        %v3618 = vmul.f32 %v3574, %v3536
        %v3619 = vmul.f32 %v3581, %v3536
        %v3620 = vmul.f32 %v3588, %v3536
        %v3621 = vmul.f32 %v3595, %v3536
        %v3622 = vmul.f32 %v3602, %v3536
        %v3623 = vmul.f32 %v3609, %v3536
        %v3624 = vmul.f32 %v3616, %v3536
        %v3625 = vld [vmem:[%s359] sm:$0xff]
        %v3627 = vlaneseq
        %v3628 = vshrl.u32 %v3627, 7
        %v3629 = vsub.s32 0, %v3628
        %v3630 = vrot.slane %v3625, %v3629
        %v3631 = vlaneseq
        %v3632 = vshrl.u32 %v3631, 7
        %v3633 = vsub.s32 1, %v3632
        %v3634 = vrot.slane %v3625, %v3633
        %v3635 = vlaneseq
        %v3636 = vshrl.u32 %v3635, 7
        %v3637 = vsub.s32 2, %v3636
        %v3638 = vrot.slane %v3625, %v3637
        %v3639 = vlaneseq
        %v3640 = vshrl.u32 %v3639, 7
        %v3641 = vsub.s32 3, %v3640
        %v3642 = vrot.slane %v3625, %v3641
        %v3643 = vlaneseq
        %v3644 = vshrl.u32 %v3643, 7
        %v3645 = vsub.s32 4, %v3644
        %v3646 = vrot.slane %v3625, %v3645
        %v3647 = vlaneseq
        %v3648 = vshrl.u32 %v3647, 7
        %v3649 = vsub.s32 5, %v3648
        %v3650 = vrot.slane %v3625, %v3649
        %v3651 = vlaneseq
        %v3652 = vshrl.u32 %v3651, 7
        %v3653 = vsub.s32 6, %v3652
        %v3654 = vrot.slane %v3625, %v3653
        %v3655 = vlaneseq
        %v3656 = vshrl.u32 %v3655, 7
        %v3657 = vsub.s32 7, %v3656
        %v3658 = vrot.slane %v3625, %v3657
        %v3667 = vmul.f32 %v3630, %v3545
        %v3668 = vmul.f32 %v3634, %v3546
        %v3669 = vmul.f32 %v3638, %v3547
        %v3670 = vmul.f32 %v3642, %v3548
        %v3671 = vmul.f32 %v3646, %v3549
        %v3672 = vmul.f32 %v3650, %v3550
        %v3673 = vmul.f32 %v3654, %v3551
        %v3674 = vmul.f32 %v3658, %v3552
        %v3675 = vadd.f32 %v3617, 1e-05
        %v3676 = vadd.f32 %v3618, 1e-05
        %v3677 = vadd.f32 %v3619, 1e-05
        %v3678 = vadd.f32 %v3620, 1e-05
        %v3679 = vadd.f32 %v3621, 1e-05
        %v3680 = vadd.f32 %v3622, 1e-05
        %v3681 = vadd.f32 %v3623, 1e-05
        %v3682 = vadd.f32 %v3624, 1e-05
        %v3683 = vrsqrt.pop %v3675
        %v3684 = vrsqrt.pop %v3676
        %v3685 = vrsqrt.pop %v3677
        %v3686 = vrsqrt.pop %v3678
        %v3687 = vrsqrt.pop %v3679
        %v3688 = vrsqrt.pop %v3680
        %v3689 = vrsqrt.pop %v3681
        %v3690 = vrsqrt.pop %v3682
        %v3691 = vmul.f32 %v3667, %v3683
        %v3692 = vmul.f32 %v3668, %v3684
        %v3693 = vmul.f32 %v3669, %v3685
        %v3694 = vmul.f32 %v3670, %v3686
        %v3695 = vmul.f32 %v3671, %v3687
        %v3696 = vmul.f32 %v3672, %v3688
        %v3697 = vmul.f32 %v3673, %v3689
        %v3698 = vmul.f32 %v3674, %v3690
        %v3699 = vld [vmem:[%s368] sm:$0xff]
        %v3701 = vlaneseq
        %v3702 = vshrl.u32 %v3701, 7
        %v3703 = vsub.s32 0, %v3702
        %v3704 = vrot.slane %v3699, %v3703
        %v3705 = vlaneseq
        %v3706 = vshrl.u32 %v3705, 7
        %v3707 = vsub.s32 1, %v3706
        %v3708 = vrot.slane %v3699, %v3707
        %v3709 = vlaneseq
        %v3710 = vshrl.u32 %v3709, 7
        %v3711 = vsub.s32 2, %v3710
        %v3712 = vrot.slane %v3699, %v3711
        %v3713 = vlaneseq
        %v3714 = vshrl.u32 %v3713, 7
        %v3715 = vsub.s32 3, %v3714
        %v3716 = vrot.slane %v3699, %v3715
        %v3717 = vlaneseq
        %v3718 = vshrl.u32 %v3717, 7
        %v3719 = vsub.s32 4, %v3718
        %v3720 = vrot.slane %v3699, %v3719
        %v3721 = vlaneseq
        %v3722 = vshrl.u32 %v3721, 7
        %v3723 = vsub.s32 5, %v3722
        %v3724 = vrot.slane %v3699, %v3723
        %v3725 = vlaneseq
        %v3726 = vshrl.u32 %v3725, 7
        %v3727 = vsub.s32 6, %v3726
        %v3728 = vrot.slane %v3699, %v3727
        %v3729 = vlaneseq
        %v3730 = vshrl.u32 %v3729, 7
        %v3731 = vsub.s32 7, %v3730
        %v3732 = vrot.slane %v3699, %v3731
        %v3741 = vadd.f32 %v3691, %v3704
        %v3742 = vadd.f32 %v3692, %v3708
        %v3743 = vadd.f32 %v3693, %v3712
        %v3744 = vadd.f32 %v3694, %v3716
        %v3745 = vadd.f32 %v3695, %v3720
        %v3746 = vadd.f32 %v3696, %v3724
        %v3747 = vadd.f32 %v3697, %v3728
        %v3748 = vadd.f32 %v3698, %v3732
        %v3749 = vmax.f32 %v3741, 0.0
        %v3750 = vmax.f32 %v3742, 0.0
        %v3751 = vmax.f32 %v3743, 0.0
        %v3752 = vmax.f32 %v3744, 0.0
        %v3753 = vmax.f32 %v3745, 0.0
        %v3754 = vmax.f32 %v3746, 0.0
        %v3755 = vmax.f32 %v3747, 0.0
        %v3756 = vmax.f32 %v3748, 0.0
        %v3765 = vcombine.low %v3749, %v3750
        %v3766 = vcombine.low %v3751, %v3752
        %v3768 = vunpack.c.l.s4 1983009808
        %v3769 = vunpack.c.0.s8 %v3768
        %v3770 = vlaneseq
        %v3771 = vshrl.u32 %v3770, 7
        %v3772 = vsub.s32 %v3769, %v3771
        %v3773 = vrot.slane %v3765, %v3772
        %v3775 = vunpack.c.l.s4 1983009808
        %v3776 = vunpack.c.0.s8 %v3775
        %v3777 = vlaneseq
        %v3778 = vshrl.u32 %v3777, 7
        %v3779 = vsub.s32 %v3776, %v3778
        %v3780 = vrot.slane %v3766, %v3779
        %v3781 = vcombine.low %v3773, %v3780
        %v3782 = vcombine.low %v3753, %v3754
        %v3783 = vcombine.low %v3755, %v3756
        %v3785 = vunpack.c.l.s4 1983009808
        %v3786 = vunpack.c.0.s8 %v3785
        %v3787 = vlaneseq
        %v3788 = vshrl.u32 %v3787, 7
        %v3789 = vsub.s32 %v3786, %v3788
        %v3790 = vrot.slane %v3782, %v3789
        %v3792 = vunpack.c.l.s4 1983009808
        %v3793 = vunpack.c.0.s8 %v3792
        %v3794 = vlaneseq
        %v3795 = vshrl.u32 %v3794, 7
        %v3796 = vsub.s32 %v3793, %v3795
        %v3797 = vrot.slane %v3783, %v3796
        %v3798 = vcombine.low %v3790, %v3797
        %3801 = vst [vmem:[%s416] sm:$0xff] %v3781
        %3802 = vst [vmem:[%s416 + $0x8] sm:$0xff] %v3798
        %s3803 = sand.u32 %s188, 1
        %s3804 = scalar_lea.sflag [#allocation4], %s3803
        %s3805 = sand.u32 %s188, 1
        %s3806 = smul.addr %s3805, 16
        %s3807 = scalar_lea.vmem [#allocation11], %s3806
        // Predicated region
        $region65: #{spatial_max_forward.3} parent=43 // pred_check
          %p3808 = pneg %p198
        $region66: #{spatial_max_forward.3} parent=43 // pred_check_branch
          %3810 = sbr.rel (%p3808) target = $region68
        $region67: #{spatial_max_forward.3} parent=43 // pred_region
          %s3811 = smul.u32 8, %s29
          %s3813 = ssub.s32 256, 256
          %3814 = vsyncadd %s3804, %s3813
          %s3815 = smul.addr %s3811, 32
          %s3816 = scalar_lea.hbm %s6, %s3815
          %s3818 = sshll.u32 %s3807, 4
          %s3819 = int_to_ptr.vmem [resolvable:$true] %s3818
          %3821 = dma.vmem_to_hbm [thread:$0]  %s3819, 256, %s3816, %s3804
        $region68: #{spatial_max_forward.3} parent=43 // pred_fallthru
          _
      $region44: #{spatial_max_forward.3} parent=5 // pred_fallthru
        _
      %p3822 = scmp.le.s32.totalorder 2, %s24
      // Predicated region
      $region69: #{spatial_max_forward.3} parent=5 // pred_check
        %p3823 = pneg %p3822
      $region70: #{spatial_max_forward.3} parent=5 // pred_check_branch
        %3825 = sbr.rel (%p3823) target = $region72
      $region71: #{spatial_max_forward.3} parent=5 // pred_region
        %s3826 = ssub.s32 %s24, 2
        // Predicated region
        $region73: #{spatial_max_forward.3} parent=71 // pred_check
          %p3827 = pneg %p204
        $region74: #{spatial_max_forward.3} parent=71 // pred_check_branch
          %3829 = sbr.rel (%p3827) target = $region76
        $region75: #{spatial_max_forward.3} parent=71 // pred_region
          %s3830 = sand.u32 %s189, 1
          %s3831 = scalar_lea.sflag [#allocation4], %s3830
          %s3832 = sand.u32 %s189, 1
          %s3833 = smul.addr %s3832, 16
          %s3834 = scalar_lea.vmem [#allocation11], %s3833
          %3835 = dma.done %s3831, 256
        $region76: #{spatial_max_forward.3} parent=71 // pred_fallthru
          _
      $region72: #{spatial_max_forward.3} parent=5 // pred_fallthru
        _
    $region6: #{spatial_max_forward.3} parent=1 // loop_footer
      %s28 = sadd.s32 1, %s24
    $region7: #{spatial_max_forward.3} parent=1 // loop_footer_branch
      %23 = sbr.rel target = $region3
    $region8: #{spatial_max_forward.3} parent=1 // loop_exit
      _
    %3836 = vsyncpa [#allocation3], 1
    %s3837 = scalar_lea.sflag [#allocation3], 1
    %3838 = vsyncpa %s3837, 1
    %3839 = vsyncpa [#allocation6], 1
    %s3840 = scalar_lea.sflag [#allocation6], 1
    %3841 = vsyncpa %s3840, 1
    %3842 = vsyncpa [#allocation9], 1
    %s3843 = scalar_lea.sflag [#allocation9], 1
    %3844 = vsyncpa %s3843, 1
    %3845 = vsyncpa [#allocation4], 1
    %s3846 = scalar_lea.sflag [#allocation4], 1
    %3847 = vsyncpa %s3846, 1

// kernel: spatial_max_forward.2
$region0: #{spatial_max_forward.2}
  #allocation0 [shape = 'u32[]', space=smem, size = 0x4, offset = 0x4, fixed_abs, tag = 'smem constant byte address 0x4 - core index']
  #allocation1 [shape = 'u32[144,128]{1,0:T(1,128)}', space=vmem, size = 0x12000, scoped, tag = 'internal scratch']
  #allocation2 [shape = 'f32[2,14,14]{2,1,0:T(8,128)}', space=vmem, size = 0x4000, scoped, tag = 'scratch operand']
  %s0 = inlined_call_operand.vmem [shape: bf16[2,8,8,2048], index: 0, kind: input, shape index: {}]
  %s1 = inlined_call_operand.vmem [shape: f32[2,49], index: 1, kind: input, shape index: {}]
  %s2 = inlined_call_operand.vmem [shape: f32[2,1,2048], index: 2, kind: output, shape index: {}]
  %s3 = sld [smem:[#allocation0]]
  $region49: #{spatial_max_forward.2} parent=0
    _
  %s5 = ssub.s32 1, %s3
  %s6 = scalar_select 0, %s5, %s3
  $region1: #{spatial_max_forward.2} parent=0
    #allocation3 [shape = 'u8[1024]{0}', space=smem, size = 0x400, scoped, tag = 'input window, operand 1, single buffered']
    #allocation4 [shape = 's32[2]{0}', space=sflag, size = 0x8, scoped, tag = 'scoped memory for spatial_max_forward.2']
    %7 = vsyncpa [#allocation4], 0
    loop: start=0, step=1, limit=4
    $region2: #{spatial_max_forward.2} parent=1 // loop_pre_header
      _
    $region3: #{spatial_max_forward.2} parent=1 // loop_header
      %s9 = sphi 0, %s13
      %p10 = scmp.ge.s32.totalorder %s9, 4
      %s19 = sphi 0, %s21
      %s22 = sphi 0, %s19
      %s23 = sphi 0, %s22
      %s39 = sphi 0, %s23
      %s43 = sphi 0, %s43
      %s45 = sphi 0, %s43
      %s46 = sphi 0, %s45
      %s60 = sphi 0, %s46
      %s66 = sphi 0, %s68
      %s69 = sphi 0, %s66
      %s70 = sphi 0, %s69
      %s86 = sphi 0, %s70
    $region4: #{spatial_max_forward.2} parent=1 // loop_header_branch
      %12 = sbr.rel (%p10) target = $region8
    $region5: #{spatial_max_forward.2} parent=1 // loop_body
      %s14 = ssub.s32 %s9, 1
      %s15 = ssub.s32 %s9, 2
      %s16 = sadd.s32 %s9, 1
      %s17 = ssub.s32 %s9, %s16
      %p18 = scmp.eq.s32.totalorder %s17, 0
      %s20 = sadd.s32 %s19, 1
      %s21 = scalar_select %p18, %s19, %s20
      %p24 = pneg %p18
      %p25 = scmp.eq.s32.totalorder %s9, 1
      %p26 = por %p24, %p25
      %p27 = scmp.ne.s32.totalorder %s19, %s22
      %p28 = scmp.eq.s32.totalorder %s9, 0
      %p29 = por %p27, %p28
      %p30 = scmp.ne.s32.totalorder %s19, %s22
      %p31 = scmp.eq.s32.totalorder %s14, 1
      %p32 = por %p30, %p31
      %p33 = scmp.ne.s32.totalorder %s22, %s23
      %p34 = scmp.eq.s32.totalorder %s14, 0
      %p35 = por %p33, %p34
      %p36 = scmp.ne.s32.totalorder %s22, %s23
      %p37 = scmp.eq.s32.totalorder %s15, 1
      %p38 = por %p36, %p37
      %p40 = scmp.ne.s32.totalorder %s23, %s39
      %p41 = scmp.eq.s32.totalorder %s15, 0
      %p42 = por %p40, %p41
      %s44 = sadd.s32 %s43, 1
      %p47 = scmp.eq.s32.totalorder %s9, 1
      %p48 = scmp.ne.s32.totalorder %s43, %s45
      %p49 = scmp.eq.s32.totalorder %s9, 0
      %p50 = por %p48, %p49
      %p51 = scmp.ne.s32.totalorder %s43, %s45
      %p52 = scmp.eq.s32.totalorder %s14, 1
      %p53 = por %p51, %p52
      %p54 = scmp.ne.s32.totalorder %s45, %s46
      %p55 = scmp.eq.s32.totalorder %s14, 0
      %p56 = por %p54, %p55
      %p57 = scmp.ne.s32.totalorder %s45, %s46
      %p58 = scmp.eq.s32.totalorder %s15, 1
      %p59 = por %p57, %p58
      %p61 = scmp.ne.s32.totalorder %s46, %s60
      %p62 = scmp.eq.s32.totalorder %s15, 0
      %p63 = por %p61, %p62
      %s64 = ssub.s32 %s9, %s16
      %p65 = scmp.eq.s32.totalorder %s64, 0
      %s67 = sadd.s32 %s66, 1
      %s68 = scalar_select %p65, %s66, %s67
      %p71 = pneg %p65
      %p72 = scmp.eq.s32.totalorder %s9, 1
      %p73 = por %p71, %p72
      %p74 = scmp.ne.s32.totalorder %s66, %s69
      %p75 = scmp.eq.s32.totalorder %s9, 0
      %p76 = por %p74, %p75
      %p77 = scmp.ne.s32.totalorder %s66, %s69
      %p78 = scmp.eq.s32.totalorder %s14, 1
      %p79 = por %p77, %p78
      %p80 = scmp.ne.s32.totalorder %s69, %s70
      %p81 = scmp.eq.s32.totalorder %s14, 0
      %p82 = por %p80, %p81
      %p83 = scmp.ne.s32.totalorder %s69, %s70
      %p84 = scmp.eq.s32.totalorder %s15, 1
      %p85 = por %p83, %p84
      %p87 = scmp.ne.s32.totalorder %s70, %s86
      %p88 = scmp.eq.s32.totalorder %s15, 0
      %p89 = por %p87, %p88
      %p90 = scmp.le.s32.totalorder 1, %s9
      %p91 = scmp.lt.s32.totalorder %s9, 3
      %p92 = pnand %p90, %p91
      %p93 = pneg %p92
      // Predicated region
      $region9: #{spatial_max_forward.2} parent=5 // pred_check
        _
      $region10: #{spatial_max_forward.2} parent=5 // pred_check_branch
        %95 = sbr.rel (%p92) target = $region12
      $region11: #{spatial_max_forward.2} parent=5 // pred_region
        %s96 = ssub.s32 %s9, 1
        // Predicated region
        $region13: #{spatial_max_forward.2} parent=11 // pred_check
          %p97 = pneg %p56
        $region14: #{spatial_max_forward.2} parent=11 // pred_check_branch
          %99 = sbr.rel (%p97) target = $region16
        $region15: #{spatial_max_forward.2} parent=11 // pred_region
          %s101 = ssub.s32 32, 32
          %102 = vsyncadd [#allocation4], %s101
          %s104 = sshll.u32 %s1, 4
          %s105 = int_to_ptr.vmem [resolvable:$true] %s104
          %107 = dma.vmem_to_smem %s105, 32, [#allocation3], [#allocation4]
        $region16: #{spatial_max_forward.2} parent=11 // pred_fallthru
          _
      $region12: #{spatial_max_forward.2} parent=5 // pred_fallthru
        _
      %p108 = scmp.lt.s32.totalorder %s9, 2
      // Predicated region
      $region17: #{spatial_max_forward.2} parent=5 // pred_check
        %p109 = pneg %p108
      $region18: #{spatial_max_forward.2} parent=5 // pred_check_branch
        %111 = sbr.rel (%p109) target = $region20
      $region19: #{spatial_max_forward.2} parent=5 // pred_region
        // Predicated region
        $region21: #{spatial_max_forward.2} parent=19 // pred_check
          %p112 = pneg %p29
        $region22: #{spatial_max_forward.2} parent=19 // pred_check_branch
          %114 = sbr.rel (%p112) target = $region24
        $region23: #{spatial_max_forward.2} parent=19 // pred_region
          %p115 = scmp.lt.s32.totalorder %s9, 1
          %s116 = scalar_select %p115, %s9, 1
          %s117 = smul.addr %s116, 128
          %s118 = smul.addr %s117, 4
          %s119 = scalar_lea.vmem %s0, %s118
        $region24: #{spatial_max_forward.2} parent=19 // pred_fallthru
          _
      $region20: #{spatial_max_forward.2} parent=5 // pred_fallthru
        _
      %p120 = scmp.le.s32.totalorder 1, %s9
      %p121 = scmp.lt.s32.totalorder %s9, 3
      %p122 = pnand %p120, %p121
      %p123 = pneg %p122
      // Predicated region
      $region25: #{spatial_max_forward.2} parent=5 // pred_check
        _
      $region26: #{spatial_max_forward.2} parent=5 // pred_check_branch
        %125 = sbr.rel (%p122) target = $region28
      $region27: #{spatial_max_forward.2} parent=5 // pred_region
        %s126 = ssub.s32 %s9, 1
        // Predicated region
        $region29: #{spatial_max_forward.2} parent=27 // pred_check
          %p127 = pneg %p56
        $region30: #{spatial_max_forward.2} parent=27 // pred_check_branch
          %129 = sbr.rel (%p127) target = $region32
        $region31: #{spatial_max_forward.2} parent=27 // pred_region
          %130 = dma.done [#allocation4], 32
        $region32: #{spatial_max_forward.2} parent=27 // pred_fallthru
          _
        %131 = sfence
        %p132 = scmp.lt.s32.totalorder %s14, 1
        %s133 = scalar_select %p132, %s14, 1
        %s134 = smul.addr %s133, 128
        %s135 = smul.addr %s134, 4
        %s136 = scalar_lea.vmem %s0, %s135
        %p137 = pneg %p35
        %p138 = pneg %p32
        %p139 = pneg %p56
        %p140 = pneg %p53
        %p141 = pneg %p82
        %p142 = pneg %p79
        %p143 = scmp.lt.s32.totalorder %s14, 1
        %s144 = scalar_select %p143, %s14, 1
        %s145 = smul.addr %s144, 16
        %s146 = scalar_lea.vmem %s2, %s145
        %p147 = scmp.lt.s32.totalorder %s14, 1
        %s148 = scalar_select %p147, %s14, 1
        %s149 = smul.addr %s148, 128
        %s150 = smul.addr %s149, 4
        %s151 = scalar_lea.vmem %s0, %s150
        %p152 = scmp.lt.s32.totalorder %s14, 1
        %s153 = scalar_select %p152, %s14, 1
        %s154 = smul.addr %s153, 16
        %s155 = scalar_lea.vmem %s2, %s154
        %v156 = vld [vmem:[%s151] sm:$0xff]
        %v157 = vld [vmem:[%s151 + $0x8] sm:$0xff]
        %v158 = vld [vmem:[%s151 + $0x10] sm:$0xff]
        %v159 = vld [vmem:[%s151 + $0x18] sm:$0xff]
        %v160 = vld [vmem:[%s151 + $0x20] sm:$0xff]
        %v161 = vld [vmem:[%s151 + $0x28] sm:$0xff]
        %v162 = vld [vmem:[%s151 + $0x30] sm:$0xff]
        %v163 = vld [vmem:[%s151 + $0x38] sm:$0xff]
        %v164 = vld [vmem:[%s151 + $0x40] sm:$0xff]
        %v165 = vld [vmem:[%s151 + $0x48] sm:$0xff]
        %v166 = vld [vmem:[%s151 + $0x50] sm:$0xff]
        %v167 = vld [vmem:[%s151 + $0x58] sm:$0xff]
        %v168 = vld [vmem:[%s151 + $0x60] sm:$0xff]
        %v169 = vld [vmem:[%s151 + $0x68] sm:$0xff]
        %v170 = vld [vmem:[%s151 + $0x70] sm:$0xff]
        %v171 = vld [vmem:[%s151 + $0x78] sm:$0xff]
        %v172 = vld [vmem:[%s151 + $0x80] sm:$0xff]
        %v173 = vld [vmem:[%s151 + $0x88] sm:$0xff]
        %v174 = vld [vmem:[%s151 + $0x90] sm:$0xff]
        %v175 = vld [vmem:[%s151 + $0x98] sm:$0xff]
        %v176 = vld [vmem:[%s151 + $0xa0] sm:$0xff]
        %v177 = vld [vmem:[%s151 + $0xa8] sm:$0xff]
        %v178 = vld [vmem:[%s151 + $0xb0] sm:$0xff]
        %v179 = vld [vmem:[%s151 + $0xb8] sm:$0xff]
        %v180 = vld [vmem:[%s151 + $0xc0] sm:$0xff]
        %v181 = vld [vmem:[%s151 + $0xc8] sm:$0xff]
        %v182 = vld [vmem:[%s151 + $0xd0] sm:$0xff]
        %v183 = vld [vmem:[%s151 + $0xd8] sm:$0xff]
        %v184 = vld [vmem:[%s151 + $0xe0] sm:$0xff]
        %v185 = vld [vmem:[%s151 + $0xe8] sm:$0xff]
        %v186 = vld [vmem:[%s151 + $0xf0] sm:$0xff]
        %v187 = vld [vmem:[%s151 + $0xf8] sm:$0xff]
        %v188 = vld [vmem:[%s151 + $0x100] sm:$0xff]
        %v189 = vld [vmem:[%s151 + $0x108] sm:$0xff]
        %v190 = vld [vmem:[%s151 + $0x110] sm:$0xff]
        %v191 = vld [vmem:[%s151 + $0x118] sm:$0xff]
        %v192 = vld [vmem:[%s151 + $0x120] sm:$0xff]
        %v193 = vld [vmem:[%s151 + $0x128] sm:$0xff]
        %v194 = vld [vmem:[%s151 + $0x130] sm:$0xff]
        %v195 = vld [vmem:[%s151 + $0x138] sm:$0xff]
        %v196 = vld [vmem:[%s151 + $0x140] sm:$0xff]
        %v197 = vld [vmem:[%s151 + $0x148] sm:$0xff]
        %v198 = vld [vmem:[%s151 + $0x150] sm:$0xff]
        %v199 = vld [vmem:[%s151 + $0x158] sm:$0xff]
        %v200 = vld [vmem:[%s151 + $0x160] sm:$0xff]
        %v201 = vld [vmem:[%s151 + $0x168] sm:$0xff]
        %v202 = vld [vmem:[%s151 + $0x170] sm:$0xff]
        %v203 = vld [vmem:[%s151 + $0x178] sm:$0xff]
        %v204 = vld [vmem:[%s151 + $0x180] sm:$0xff]
        %v205 = vld [vmem:[%s151 + $0x188] sm:$0xff]
        %v206 = vld [vmem:[%s151 + $0x190] sm:$0xff]
        %v207 = vld [vmem:[%s151 + $0x198] sm:$0xff]
        %v208 = vld [vmem:[%s151 + $0x1a0] sm:$0xff]
        %v209 = vld [vmem:[%s151 + $0x1a8] sm:$0xff]
        %v210 = vld [vmem:[%s151 + $0x1b0] sm:$0xff]
        %v211 = vld [vmem:[%s151 + $0x1b8] sm:$0xff]
        %v212 = vld [vmem:[%s151 + $0x1c0] sm:$0xff]
        %v213 = vld [vmem:[%s151 + $0x1c8] sm:$0xff]
        %v214 = vld [vmem:[%s151 + $0x1d0] sm:$0xff]
        %v215 = vld [vmem:[%s151 + $0x1d8] sm:$0xff]
        %v216 = vld [vmem:[%s151 + $0x1e0] sm:$0xff]
        %v217 = vld [vmem:[%s151 + $0x1e8] sm:$0xff]
        %v218 = vld [vmem:[%s151 + $0x1f0] sm:$0xff]
        %v219 = vld [vmem:[%s151 + $0x1f8] sm:$0xff]
        %v220 = vunpack.c.l.bf16 %v156
        %v221 = vunpack.c.h.bf16 %v156
        %v222 = vunpack.c.l.bf16 %v157
        %v223 = vunpack.c.h.bf16 %v157
        %v224 = vunpack.c.l.bf16 %v158
        %v225 = vunpack.c.h.bf16 %v158
        %v226 = vunpack.c.l.bf16 %v159
        %v227 = vunpack.c.h.bf16 %v159
        %v228 = vunpack.c.l.bf16 %v160
        %v229 = vunpack.c.h.bf16 %v160
        %v230 = vunpack.c.l.bf16 %v161
        %v231 = vunpack.c.h.bf16 %v161
        %v232 = vunpack.c.l.bf16 %v162
        %v233 = vunpack.c.h.bf16 %v162
        %v234 = vunpack.c.l.bf16 %v163
        %v235 = vunpack.c.h.bf16 %v163
        %v236 = vunpack.c.l.bf16 %v164
        %v237 = vunpack.c.h.bf16 %v164
        %v238 = vunpack.c.l.bf16 %v165
        %v239 = vunpack.c.h.bf16 %v165
        %v240 = vunpack.c.l.bf16 %v166
        %v241 = vunpack.c.h.bf16 %v166
        %v242 = vunpack.c.l.bf16 %v167
        %v243 = vunpack.c.h.bf16 %v167
        %v244 = vunpack.c.l.bf16 %v168
        %v245 = vunpack.c.h.bf16 %v168
        %v246 = vunpack.c.l.bf16 %v169
        %v247 = vunpack.c.h.bf16 %v169
        %v248 = vunpack.c.l.bf16 %v170
        %v249 = vunpack.c.h.bf16 %v170
        %v250 = vunpack.c.l.bf16 %v171
        %v251 = vunpack.c.h.bf16 %v171
        %v252 = vunpack.c.l.bf16 %v172
        %v253 = vunpack.c.h.bf16 %v172
        %v254 = vunpack.c.l.bf16 %v173
        %v255 = vunpack.c.h.bf16 %v173
        %v256 = vunpack.c.l.bf16 %v174
        %v257 = vunpack.c.h.bf16 %v174
        %v258 = vunpack.c.l.bf16 %v175
        %v259 = vunpack.c.h.bf16 %v175
        %v260 = vunpack.c.l.bf16 %v176
        %v261 = vunpack.c.h.bf16 %v176
        %v262 = vunpack.c.l.bf16 %v177
        %v263 = vunpack.c.h.bf16 %v177
        %v264 = vunpack.c.l.bf16 %v178
        %v265 = vunpack.c.h.bf16 %v178
        %v266 = vunpack.c.l.bf16 %v179
        %v267 = vunpack.c.h.bf16 %v179
        %v268 = vunpack.c.l.bf16 %v180
        %v269 = vunpack.c.h.bf16 %v180
        %v270 = vunpack.c.l.bf16 %v181
        %v271 = vunpack.c.h.bf16 %v181
        %v272 = vunpack.c.l.bf16 %v182
        %v273 = vunpack.c.h.bf16 %v182
        %v274 = vunpack.c.l.bf16 %v183
        %v275 = vunpack.c.h.bf16 %v183
        %v276 = vunpack.c.l.bf16 %v184
        %v277 = vunpack.c.h.bf16 %v184
        %v278 = vunpack.c.l.bf16 %v185
        %v279 = vunpack.c.h.bf16 %v185
        %v280 = vunpack.c.l.bf16 %v186
        %v281 = vunpack.c.h.bf16 %v186
        %v282 = vunpack.c.l.bf16 %v187
        %v283 = vunpack.c.h.bf16 %v187
        %v284 = vunpack.c.l.bf16 %v188
        %v285 = vunpack.c.h.bf16 %v188
        %v286 = vunpack.c.l.bf16 %v189
        %v287 = vunpack.c.h.bf16 %v189
        %v288 = vunpack.c.l.bf16 %v190
        %v289 = vunpack.c.h.bf16 %v190
        %v290 = vunpack.c.l.bf16 %v191
        %v291 = vunpack.c.h.bf16 %v191
        %v292 = vunpack.c.l.bf16 %v192
        %v293 = vunpack.c.h.bf16 %v192
        %v294 = vunpack.c.l.bf16 %v193
        %v295 = vunpack.c.h.bf16 %v193
        %v296 = vunpack.c.l.bf16 %v194
        %v297 = vunpack.c.h.bf16 %v194
        %v298 = vunpack.c.l.bf16 %v195
        %v299 = vunpack.c.h.bf16 %v195
        %v300 = vunpack.c.l.bf16 %v196
        %v301 = vunpack.c.h.bf16 %v196
        %v302 = vunpack.c.l.bf16 %v197
        %v303 = vunpack.c.h.bf16 %v197
        %v304 = vunpack.c.l.bf16 %v198
        %v305 = vunpack.c.h.bf16 %v198
        %v306 = vunpack.c.l.bf16 %v199
        %v307 = vunpack.c.h.bf16 %v199
        %v308 = vunpack.c.l.bf16 %v200
        %v309 = vunpack.c.h.bf16 %v200
        %v310 = vunpack.c.l.bf16 %v201
        %v311 = vunpack.c.h.bf16 %v201
        %v312 = vunpack.c.l.bf16 %v202
        %v313 = vunpack.c.h.bf16 %v202
        %v314 = vunpack.c.l.bf16 %v203
        %v315 = vunpack.c.h.bf16 %v203
        %v316 = vunpack.c.l.bf16 %v204
        %v317 = vunpack.c.h.bf16 %v204
        %v318 = vunpack.c.l.bf16 %v205
        %v319 = vunpack.c.h.bf16 %v205
        %v320 = vunpack.c.l.bf16 %v206
        %v321 = vunpack.c.h.bf16 %v206
        %v322 = vunpack.c.l.bf16 %v207
        %v323 = vunpack.c.h.bf16 %v207
        %v324 = vunpack.c.l.bf16 %v208
        %v325 = vunpack.c.h.bf16 %v208
        %v326 = vunpack.c.l.bf16 %v209
        %v327 = vunpack.c.h.bf16 %v209
        %v328 = vunpack.c.l.bf16 %v210
        %v329 = vunpack.c.h.bf16 %v210
        %v330 = vunpack.c.l.bf16 %v211
        %v331 = vunpack.c.h.bf16 %v211
        %v332 = vunpack.c.l.bf16 %v212
        %v333 = vunpack.c.h.bf16 %v212
        %v334 = vunpack.c.l.bf16 %v213
        %v335 = vunpack.c.h.bf16 %v213
        %v336 = vunpack.c.l.bf16 %v214
        %v337 = vunpack.c.h.bf16 %v214
        %v338 = vunpack.c.l.bf16 %v215
        %v339 = vunpack.c.h.bf16 %v215
        %v340 = vunpack.c.l.bf16 %v216
        %v341 = vunpack.c.h.bf16 %v216
        %v342 = vunpack.c.l.bf16 %v217
        %v343 = vunpack.c.h.bf16 %v217
        %v344 = vunpack.c.l.bf16 %v218
        %v345 = vunpack.c.h.bf16 %v218
        %v346 = vunpack.c.l.bf16 %v219
        %v347 = vunpack.c.h.bf16 %v219
        %v348 = vadd.f32 %v220, %v221
        %v349 = vadd.f32 %v348, %v222
        %v350 = vadd.f32 %v349, %v223
        %v351 = vadd.f32 %v350, %v224
        %v352 = vadd.f32 %v351, %v225
        %v353 = vadd.f32 %v352, %v226
        %v354 = vadd.f32 %v353, %v227
        %v355 = vadd.f32 %v354, %v228
        %v356 = vadd.f32 %v355, %v229
        %v357 = vadd.f32 %v356, %v230
        %v358 = vadd.f32 %v357, %v231
        %v359 = vadd.f32 %v358, %v232
        %v360 = vadd.f32 %v359, %v233
        %v361 = vadd.f32 %v360, %v234
        %v362 = vadd.f32 %v361, %v235
        %363 = vadd.xlane.f32.xlu0 %v362
        %v364 = vpop.xlane.xlu0 %363
        %v365 = vadd.f32 %v236, %v237
        %v366 = vadd.f32 %v365, %v238
        %v367 = vadd.f32 %v366, %v239
        %v368 = vadd.f32 %v367, %v240
        %v369 = vadd.f32 %v368, %v241
        %v370 = vadd.f32 %v369, %v242
        %v371 = vadd.f32 %v370, %v243
        %v372 = vadd.f32 %v371, %v244
        %v373 = vadd.f32 %v372, %v245
        %v374 = vadd.f32 %v373, %v246
        %v375 = vadd.f32 %v374, %v247
        %v376 = vadd.f32 %v375, %v248
        %v377 = vadd.f32 %v376, %v249
        %v378 = vadd.f32 %v377, %v250
        %v379 = vadd.f32 %v378, %v251
        %380 = vadd.xlane.f32.xlu0 %v379
        %v381 = vpop.xlane.xlu0 %380
        %v382 = vadd.f32 %v252, %v253
        %v383 = vadd.f32 %v382, %v254
        %v384 = vadd.f32 %v383, %v255
        %v385 = vadd.f32 %v384, %v256
        %v386 = vadd.f32 %v385, %v257
        %v387 = vadd.f32 %v386, %v258
        %v388 = vadd.f32 %v387, %v259
        %v389 = vadd.f32 %v388, %v260
        %v390 = vadd.f32 %v389, %v261
        %v391 = vadd.f32 %v390, %v262
        %v392 = vadd.f32 %v391, %v263
        %v393 = vadd.f32 %v392, %v264
        %v394 = vadd.f32 %v393, %v265
        %v395 = vadd.f32 %v394, %v266
        %v396 = vadd.f32 %v395, %v267
        %397 = vadd.xlane.f32.xlu0 %v396
        %v398 = vpop.xlane.xlu0 %397
        %v399 = vadd.f32 %v268, %v269
        %v400 = vadd.f32 %v399, %v270
        %v401 = vadd.f32 %v400, %v271
        %v402 = vadd.f32 %v401, %v272
        %v403 = vadd.f32 %v402, %v273
        %v404 = vadd.f32 %v403, %v274
        %v405 = vadd.f32 %v404, %v275
        %v406 = vadd.f32 %v405, %v276
        %v407 = vadd.f32 %v406, %v277
        %v408 = vadd.f32 %v407, %v278
        %v409 = vadd.f32 %v408, %v279
        %v410 = vadd.f32 %v409, %v280
        %v411 = vadd.f32 %v410, %v281
        %v412 = vadd.f32 %v411, %v282
        %v413 = vadd.f32 %v412, %v283
        %414 = vadd.xlane.f32.xlu0 %v413
        %v415 = vpop.xlane.xlu0 %414
        %v416 = vadd.f32 %v284, %v285
        %v417 = vadd.f32 %v416, %v286
        %v418 = vadd.f32 %v417, %v287
        %v419 = vadd.f32 %v418, %v288
        %v420 = vadd.f32 %v419, %v289
        %v421 = vadd.f32 %v420, %v290
        %v422 = vadd.f32 %v421, %v291
        %v423 = vadd.f32 %v422, %v292
        %v424 = vadd.f32 %v423, %v293
        %v425 = vadd.f32 %v424, %v294
        %v426 = vadd.f32 %v425, %v295
        %v427 = vadd.f32 %v426, %v296
        %v428 = vadd.f32 %v427, %v297
        %v429 = vadd.f32 %v428, %v298
        %v430 = vadd.f32 %v429, %v299
        %431 = vadd.xlane.f32.xlu0 %v430
        %v432 = vpop.xlane.xlu0 %431
        %v433 = vadd.f32 %v300, %v301
        %v434 = vadd.f32 %v433, %v302
        %v435 = vadd.f32 %v434, %v303
        %v436 = vadd.f32 %v435, %v304
        %v437 = vadd.f32 %v436, %v305
        %v438 = vadd.f32 %v437, %v306
        %v439 = vadd.f32 %v438, %v307
        %v440 = vadd.f32 %v439, %v308
        %v441 = vadd.f32 %v440, %v309
        %v442 = vadd.f32 %v441, %v310
        %v443 = vadd.f32 %v442, %v311
        %v444 = vadd.f32 %v443, %v312
        %v445 = vadd.f32 %v444, %v313
        %v446 = vadd.f32 %v445, %v314
        %v447 = vadd.f32 %v446, %v315
        %448 = vadd.xlane.f32.xlu0 %v447
        %v449 = vpop.xlane.xlu0 %448
        %v450 = vadd.f32 %v316, %v317
        %v451 = vadd.f32 %v450, %v318
        %v452 = vadd.f32 %v451, %v319
        %v453 = vadd.f32 %v452, %v320
        %v454 = vadd.f32 %v453, %v321
        %v455 = vadd.f32 %v454, %v322
        %v456 = vadd.f32 %v455, %v323
        %v457 = vadd.f32 %v456, %v324
        %v458 = vadd.f32 %v457, %v325
        %v459 = vadd.f32 %v458, %v326
        %v460 = vadd.f32 %v459, %v327
        %v461 = vadd.f32 %v460, %v328
        %v462 = vadd.f32 %v461, %v329
        %v463 = vadd.f32 %v462, %v330
        %v464 = vadd.f32 %v463, %v331
        %465 = vadd.xlane.f32.xlu0 %v464
        %v466 = vpop.xlane.xlu0 %465
        %v467 = vadd.f32 %v332, %v333
        %v468 = vadd.f32 %v467, %v334
        %v469 = vadd.f32 %v468, %v335
        %v470 = vadd.f32 %v469, %v336
        %v471 = vadd.f32 %v470, %v337
        %v472 = vadd.f32 %v471, %v338
        %v473 = vadd.f32 %v472, %v339
        %v474 = vadd.f32 %v473, %v340
        %v475 = vadd.f32 %v474, %v341
        %v476 = vadd.f32 %v475, %v342
        %v477 = vadd.f32 %v476, %v343
        %v478 = vadd.f32 %v477, %v344
        %v479 = vadd.f32 %v478, %v345
        %v480 = vadd.f32 %v479, %v346
        %v481 = vadd.f32 %v480, %v347
        %482 = vadd.xlane.f32.xlu0 %v481
        %v483 = vpop.xlane.xlu0 %482
        %v484 = vrcp.pop 2048.0
        %v485 = vmul.f32 %v364, %v484
        %v486 = vmul.f32 %v381, %v484
        %v487 = vmul.f32 %v398, %v484
        %v488 = vmul.f32 %v415, %v484
        %v489 = vmul.f32 %v432, %v484
        %v490 = vmul.f32 %v449, %v484
        %v491 = vmul.f32 %v466, %v484
        %v492 = vmul.f32 %v483, %v484
        %v493 = vmax.f32 %v220, %v221
        %v494 = vmax.f32 %v493, %v222
        %v495 = vmax.f32 %v494, %v223
        %v496 = vmax.f32 %v495, %v224
        %v497 = vmax.f32 %v496, %v225
        %v498 = vmax.f32 %v497, %v226
        %v499 = vmax.f32 %v498, %v227
        %v500 = vmax.f32 %v499, %v228
        %v501 = vmax.f32 %v500, %v229
        %v502 = vmax.f32 %v501, %v230
        %v503 = vmax.f32 %v502, %v231
        %v504 = vmax.f32 %v503, %v232
        %v505 = vmax.f32 %v504, %v233
        %v506 = vmax.f32 %v505, %v234
        %v507 = vmax.f32 %v506, %v235
        %508 = vmax.xlane.f32.xlu0 %v507
        %v509 = vpop.xlane.xlu0 %508
        %v510 = vmax.f32 %v236, %v237
        %v511 = vmax.f32 %v510, %v238
        %v512 = vmax.f32 %v511, %v239
        %v513 = vmax.f32 %v512, %v240
        %v514 = vmax.f32 %v513, %v241
        %v515 = vmax.f32 %v514, %v242
        %v516 = vmax.f32 %v515, %v243
        %v517 = vmax.f32 %v516, %v244
        %v518 = vmax.f32 %v517, %v245
        %v519 = vmax.f32 %v518, %v246
        %v520 = vmax.f32 %v519, %v247
        %v521 = vmax.f32 %v520, %v248
        %v522 = vmax.f32 %v521, %v249
        %v523 = vmax.f32 %v522, %v250
        %v524 = vmax.f32 %v523, %v251
        %525 = vmax.xlane.f32.xlu0 %v524
        %v526 = vpop.xlane.xlu0 %525
        %v527 = vmax.f32 %v252, %v253
        %v528 = vmax.f32 %v527, %v254
        %v529 = vmax.f32 %v528, %v255
        %v530 = vmax.f32 %v529, %v256
        %v531 = vmax.f32 %v530, %v257
        %v532 = vmax.f32 %v531, %v258
        %v533 = vmax.f32 %v532, %v259
        %v534 = vmax.f32 %v533, %v260
        %v535 = vmax.f32 %v534, %v261
        %v536 = vmax.f32 %v535, %v262
        %v537 = vmax.f32 %v536, %v263
        %v538 = vmax.f32 %v537, %v264
        %v539 = vmax.f32 %v538, %v265
        %v540 = vmax.f32 %v539, %v266
        %v541 = vmax.f32 %v540, %v267
        %542 = vmax.xlane.f32.xlu0 %v541
        %v543 = vpop.xlane.xlu0 %542
        %v544 = vmax.f32 %v268, %v269
        %v545 = vmax.f32 %v544, %v270
        %v546 = vmax.f32 %v545, %v271
        %v547 = vmax.f32 %v546, %v272
        %v548 = vmax.f32 %v547, %v273
        %v549 = vmax.f32 %v548, %v274
        %v550 = vmax.f32 %v549, %v275
        %v551 = vmax.f32 %v550, %v276
        %v552 = vmax.f32 %v551, %v277
        %v553 = vmax.f32 %v552, %v278
        %v554 = vmax.f32 %v553, %v279
        %v555 = vmax.f32 %v554, %v280
        %v556 = vmax.f32 %v555, %v281
        %v557 = vmax.f32 %v556, %v282
        %v558 = vmax.f32 %v557, %v283
        %559 = vmax.xlane.f32.xlu0 %v558
        %v560 = vpop.xlane.xlu0 %559
        %v561 = vmax.f32 %v284, %v285
        %v562 = vmax.f32 %v561, %v286
        %v563 = vmax.f32 %v562, %v287
        %v564 = vmax.f32 %v563, %v288
        %v565 = vmax.f32 %v564, %v289
        %v566 = vmax.f32 %v565, %v290
        %v567 = vmax.f32 %v566, %v291
        %v568 = vmax.f32 %v567, %v292
        %v569 = vmax.f32 %v568, %v293
        %v570 = vmax.f32 %v569, %v294
        %v571 = vmax.f32 %v570, %v295
        %v572 = vmax.f32 %v571, %v296
        %v573 = vmax.f32 %v572, %v297
        %v574 = vmax.f32 %v573, %v298
        %v575 = vmax.f32 %v574, %v299
        %576 = vmax.xlane.f32.xlu0 %v575
        %v577 = vpop.xlane.xlu0 %576
        %v578 = vmax.f32 %v300, %v301
        %v579 = vmax.f32 %v578, %v302
        %v580 = vmax.f32 %v579, %v303
        %v581 = vmax.f32 %v580, %v304
        %v582 = vmax.f32 %v581, %v305
        %v583 = vmax.f32 %v582, %v306
        %v584 = vmax.f32 %v583, %v307
        %v585 = vmax.f32 %v584, %v308
        %v586 = vmax.f32 %v585, %v309
        %v587 = vmax.f32 %v586, %v310
        %v588 = vmax.f32 %v587, %v311
        %v589 = vmax.f32 %v588, %v312
        %v590 = vmax.f32 %v589, %v313
        %v591 = vmax.f32 %v590, %v314
        %v592 = vmax.f32 %v591, %v315
        %593 = vmax.xlane.f32.xlu0 %v592
        %v594 = vpop.xlane.xlu0 %593
        %v595 = vmax.f32 %v316, %v317
        %v596 = vmax.f32 %v595, %v318
        %v597 = vmax.f32 %v596, %v319
        %v598 = vmax.f32 %v597, %v320
        %v599 = vmax.f32 %v598, %v321
        %v600 = vmax.f32 %v599, %v322
        %v601 = vmax.f32 %v600, %v323
        %v602 = vmax.f32 %v601, %v324
        %v603 = vmax.f32 %v602, %v325
        %v604 = vmax.f32 %v603, %v326
        %v605 = vmax.f32 %v604, %v327
        %v606 = vmax.f32 %v605, %v328
        %v607 = vmax.f32 %v606, %v329
        %v608 = vmax.f32 %v607, %v330
        %v609 = vmax.f32 %v608, %v331
        %610 = vmax.xlane.f32.xlu0 %v609
        %v611 = vpop.xlane.xlu0 %610
        %v612 = vmax.f32 %v332, %v333
        %v613 = vmax.f32 %v612, %v334
        %v614 = vmax.f32 %v613, %v335
        %v615 = vmax.f32 %v614, %v336
        %v616 = vmax.f32 %v615, %v337
        %v617 = vmax.f32 %v616, %v338
        %v618 = vmax.f32 %v617, %v339
        %v619 = vmax.f32 %v618, %v340
        %v620 = vmax.f32 %v619, %v341
        %v621 = vmax.f32 %v620, %v342
        %v622 = vmax.f32 %v621, %v343
        %v623 = vmax.f32 %v622, %v344
        %v624 = vmax.f32 %v623, %v345
        %v625 = vmax.f32 %v624, %v346
        %v626 = vmax.f32 %v625, %v347
        %627 = vmax.xlane.f32.xlu0 %v626
        %v628 = vpop.xlane.xlu0 %627
        %p629 = scmp.eq.s32.totalorder %s14, 0
        // Predicated region
        $region33: #{spatial_max_forward.2} parent=27 // pred_check
          %p630 = pneg %p629
        $region34: #{spatial_max_forward.2} parent=27 // pred_check_branch
          %632 = sbr.rel (%p630) target = $region36
        $region35: #{spatial_max_forward.2} parent=27 // pred_region
          %vm633 = vcmask 113664
          %634 = vst.msk [vmem:[#allocation2] sm:$0xff] %vm633, 0.0
          %vm635 = vcmask 111616
          %636 = vst.msk [vmem:[#allocation2 + $0x8] sm:$0x3f] %vm635, 0.0
          %637 = vst.msk [vmem:[#allocation2 + $0x10] sm:$0xff] %vm633, 0.0
          %638 = vst.msk [vmem:[#allocation2 + $0x18] sm:$0x3f] %vm635, 0.0
        $region36: #{spatial_max_forward.2} parent=27 // pred_fallthru
          _
        %v647 = vlaneseq
        %v648 = vand.u32 %v647, 127
        %v649 = vadd.s32 %v648, 4294967293
        %v650 = vlaneseq
        %v651 = vshrl.u32 %v650, 7
        %v652 = vsub.s32 %v649, %v651
        %v653 = vrot.slane %v485, %v652
        %v654 = vlaneseq
        %v655 = vshrl.u32 %v654, 7
        %v656 = vsub.s32 %v649, %v655
        %v657 = vrot.slane %v486, %v656
        %v658 = vlaneseq
        %v659 = vshrl.u32 %v658, 7
        %v660 = vsub.s32 %v649, %v659
        %v661 = vrot.slane %v487, %v660
        %v662 = vlaneseq
        %v663 = vshrl.u32 %v662, 7
        %v664 = vsub.s32 %v649, %v663
        %v665 = vrot.slane %v488, %v664
        %v666 = vlaneseq
        %v667 = vshrl.u32 %v666, 7
        %v668 = vsub.s32 %v649, %v667
        %v669 = vrot.slane %v489, %v668
        %v670 = vlaneseq
        %v671 = vshrl.u32 %v670, 7
        %v672 = vsub.s32 %v649, %v671
        %v673 = vrot.slane %v490, %v672
        %v674 = vlaneseq
        %v675 = vshrl.u32 %v674, 7
        %v676 = vsub.s32 %v649, %v675
        %v677 = vrot.slane %v491, %v676
        %v678 = vlaneseq
        %v679 = vshrl.u32 %v678, 7
        %v680 = vsub.s32 %v649, %v679
        %v681 = vrot.slane %v492, %v680
        %vm682 = vcmask 1041409
        %v683 = vsel %vm682, %v657, %v653
        %vm684 = vcmask 1042434
        %v685 = vsel %vm684, %v661, %v683
        %vm686 = vcmask 1043459
        %v687 = vsel %vm686, %v665, %v685
        %vm688 = vcmask 1044484
        %v689 = vsel %vm688, %v669, %v687
        %vm690 = vcmask 1045509
        %v691 = vsel %vm690, %v673, %v689
        %vm692 = vcmask 1046534
        %v693 = vsel %vm692, %v677, %v691
        %vm694 = vcmask 1047559
        %v695 = vsel %vm694, %v681, %v693
        %vm697 = vcmask 89112
        %698 = vst.msk [vmem:[#allocation2 + $0x3] sm:$0xff] %vm697, %v695
        %v707 = vlaneseq
        %v708 = vshrl.u32 %v707, 7
        %v709 = vsub.s32 %v649, %v708
        %v710 = vrot.slane %v509, %v709
        %v711 = vlaneseq
        %v712 = vshrl.u32 %v711, 7
        %v713 = vsub.s32 %v649, %v712
        %v714 = vrot.slane %v526, %v713
        %v715 = vlaneseq
        %v716 = vshrl.u32 %v715, 7
        %v717 = vsub.s32 %v649, %v716
        %v718 = vrot.slane %v543, %v717
        %v719 = vlaneseq
        %v720 = vshrl.u32 %v719, 7
        %v721 = vsub.s32 %v649, %v720
        %v722 = vrot.slane %v560, %v721
        %v723 = vlaneseq
        %v724 = vshrl.u32 %v723, 7
        %v725 = vsub.s32 %v649, %v724
        %v726 = vrot.slane %v577, %v725
        %v727 = vlaneseq
        %v728 = vshrl.u32 %v727, 7
        %v729 = vsub.s32 %v649, %v728
        %v730 = vrot.slane %v594, %v729
        %v731 = vlaneseq
        %v732 = vshrl.u32 %v731, 7
        %v733 = vsub.s32 %v649, %v732
        %v734 = vrot.slane %v611, %v733
        %v735 = vlaneseq
        %v736 = vshrl.u32 %v735, 7
        %v737 = vsub.s32 %v649, %v736
        %v738 = vrot.slane %v628, %v737
        %v739 = vsel %vm682, %v714, %v710
        %v740 = vsel %vm684, %v718, %v739
        %v741 = vsel %vm686, %v722, %v740
        %v742 = vsel %vm688, %v726, %v741
        %v743 = vsel %vm690, %v730, %v742
        %v744 = vsel %vm692, %v734, %v743
        %v745 = vsel %vm694, %v738, %v744
        %s747 = scalar_lea.vmem [#allocation2], 16
        %748 = vst.msk [vmem:[%s747 + $0x3] sm:$0xff] %vm697, %v745
        %v749 = vld [vmem:[#allocation2] sm:$0xff]
        %v750 = vld [vmem:[#allocation2 + $0x8] sm:$0x3f]
        %v751 = vld [vmem:[%s747] sm:$0xff]
        %v752 = vld [vmem:[%s747 + $0x8] sm:$0x3f]
        %s753 = sld [smem:[#allocation3]]
        %s754 = sld [smem:[#allocation3 + $0x80]]
        %v755 = vstv %s753
        %v756 = vmul.f32 %v755, %v749
        %v757 = vadd.f32 %v756, 0.0
        %v758 = vstv %s754
        %v759 = vmul.f32 %v758, %v751
        %v760 = vadd.f32 %v757, %v759
        %s761 = sld [smem:[#allocation3 + $0x1]]
        %s762 = sld [smem:[#allocation3 + $0x81]]
        %v763 = vstv %s761
        %v764 = vmul.f32 %v763, %v749
        %766 = vrot.lane.b32.xlu0 %v764, 127
        %v767 = vpop.permute.xlu0 %766
        %v769 = vadd.f32 %v760, %v767
        %v770 = vstv %s762
        %v771 = vmul.f32 %v770, %v751
        %773 = vrot.lane.b32.xlu0 %v771, 127
        %v774 = vpop.permute.xlu0 %773
        %v776 = vadd.f32 %v769, %v774
        %s777 = sld [smem:[#allocation3 + $0x2]]
        %s778 = sld [smem:[#allocation3 + $0x82]]
        %v779 = vstv %s777
        %v780 = vmul.f32 %v779, %v749
        %782 = vrot.lane.b32.xlu0 %v780, 126
        %v783 = vpop.permute.xlu0 %782
        %v785 = vadd.f32 %v776, %v783
        %v786 = vstv %s778
        %v787 = vmul.f32 %v786, %v751
        %789 = vrot.lane.b32.xlu0 %v787, 126
        %v790 = vpop.permute.xlu0 %789
        %v792 = vadd.f32 %v785, %v790
        %s793 = sld [smem:[#allocation3 + $0x3]]
        %s794 = sld [smem:[#allocation3 + $0x83]]
        %v795 = vstv %s793
        %v796 = vmul.f32 %v795, %v749
        %798 = vrot.lane.b32.xlu0 %v796, 125
        %v799 = vpop.permute.xlu0 %798
        %v801 = vadd.f32 %v792, %v799
        %v802 = vstv %s794
        %v803 = vmul.f32 %v802, %v751
        %805 = vrot.lane.b32.xlu0 %v803, 125
        %v806 = vpop.permute.xlu0 %805
        %v808 = vadd.f32 %v801, %v806
        %s809 = sld [smem:[#allocation3 + $0x4]]
        %s810 = sld [smem:[#allocation3 + $0x84]]
        %v811 = vstv %s809
        %v812 = vmul.f32 %v811, %v749
        %814 = vrot.lane.b32.xlu0 %v812, 124
        %v815 = vpop.permute.xlu0 %814
        %v817 = vadd.f32 %v808, %v815
        %v818 = vstv %s810
        %v819 = vmul.f32 %v818, %v751
        %821 = vrot.lane.b32.xlu0 %v819, 124
        %v822 = vpop.permute.xlu0 %821
        %v824 = vadd.f32 %v817, %v822
        %s825 = sld [smem:[#allocation3 + $0x5]]
        %s826 = sld [smem:[#allocation3 + $0x85]]
        %v827 = vstv %s825
        %v828 = vmul.f32 %v827, %v749
        %830 = vrot.lane.b32.xlu0 %v828, 123
        %v831 = vpop.permute.xlu0 %830
        %v833 = vadd.f32 %v824, %v831
        %v834 = vstv %s826
        %v835 = vmul.f32 %v834, %v751
        %837 = vrot.lane.b32.xlu0 %v835, 123
        %v838 = vpop.permute.xlu0 %837
        %v840 = vadd.f32 %v833, %v838
        %s841 = sld [smem:[#allocation3 + $0x6]]
        %s842 = sld [smem:[#allocation3 + $0x86]]
        %v843 = vstv %s841
        %v844 = vmul.f32 %v843, %v749
        %846 = vrot.lane.b32.xlu0 %v844, 122
        %v847 = vpop.permute.xlu0 %846
        %v849 = vadd.f32 %v840, %v847
        %v850 = vstv %s842
        %v851 = vmul.f32 %v850, %v751
        %853 = vrot.lane.b32.xlu0 %v851, 122
        %v854 = vpop.permute.xlu0 %853
        %v856 = vadd.f32 %v849, %v854
        %s857 = sld [smem:[#allocation3 + $0x7]]
        %s858 = sld [smem:[#allocation3 + $0x87]]
        %v859 = vstv %s857
        %v860 = vmul.f32 %v859, %v749
        %v861 = vmul.f32 %v859, %v750
        %vm864 = vcmask 1046528
        %v865 = vrot.slane %v860, 1
        %v866 = vrot.slane %v861, 1
        %v867 = vsel %vm864, %v865, %v866
        %v869 = vadd.f32 %v856, %v867
        %v870 = vstv %s858
        %v871 = vmul.f32 %v870, %v751
        %v872 = vmul.f32 %v870, %v752
        %v875 = vrot.slane %v871, 1
        %v876 = vrot.slane %v872, 1
        %v877 = vsel %vm864, %v875, %v876
        %v879 = vadd.f32 %v869, %v877
        %s880 = sld [smem:[#allocation3 + $0x8]]
        %s881 = sld [smem:[#allocation3 + $0x88]]
        %v882 = vstv %s880
        %v883 = vmul.f32 %v882, %v749
        %v884 = vmul.f32 %v882, %v750
        %v887 = vrot.slane %v883, 1
        %v888 = vrot.slane %v884, 1
        %v889 = vsel %vm864, %v887, %v888
        %890 = vrot.lane.b32.xlu0 %v889, 127
        %v891 = vpop.permute.xlu0 %890
        %v893 = vadd.f32 %v879, %v891
        %v894 = vstv %s881
        %v895 = vmul.f32 %v894, %v751
        %v896 = vmul.f32 %v894, %v752
        %v899 = vrot.slane %v895, 1
        %v900 = vrot.slane %v896, 1
        %v901 = vsel %vm864, %v899, %v900
        %902 = vrot.lane.b32.xlu0 %v901, 127
        %v903 = vpop.permute.xlu0 %902
        %v905 = vadd.f32 %v893, %v903
        %s906 = sld [smem:[#allocation3 + $0x9]]
        %s907 = sld [smem:[#allocation3 + $0x89]]
        %v908 = vstv %s906
        %v909 = vmul.f32 %v908, %v749
        %v910 = vmul.f32 %v908, %v750
        %v913 = vrot.slane %v909, 1
        %v914 = vrot.slane %v910, 1
        %v915 = vsel %vm864, %v913, %v914
        %916 = vrot.lane.b32.xlu0 %v915, 126
        %v917 = vpop.permute.xlu0 %916
        %v919 = vadd.f32 %v905, %v917
        %v920 = vstv %s907
        %v921 = vmul.f32 %v920, %v751
        %v922 = vmul.f32 %v920, %v752
        %v925 = vrot.slane %v921, 1
        %v926 = vrot.slane %v922, 1
        %v927 = vsel %vm864, %v925, %v926
        %928 = vrot.lane.b32.xlu0 %v927, 126
        %v929 = vpop.permute.xlu0 %928
        %v931 = vadd.f32 %v919, %v929
        %s932 = sld [smem:[#allocation3 + $0xa]]
        %s933 = sld [smem:[#allocation3 + $0x8a]]
        %v934 = vstv %s932
        %v935 = vmul.f32 %v934, %v749
        %v936 = vmul.f32 %v934, %v750
        %v939 = vrot.slane %v935, 1
        %v940 = vrot.slane %v936, 1
        %v941 = vsel %vm864, %v939, %v940
        %942 = vrot.lane.b32.xlu0 %v941, 125
        %v943 = vpop.permute.xlu0 %942
        %v945 = vadd.f32 %v931, %v943
        %v946 = vstv %s933
        %v947 = vmul.f32 %v946, %v751
        %v948 = vmul.f32 %v946, %v752
        %v951 = vrot.slane %v947, 1
        %v952 = vrot.slane %v948, 1
        %v953 = vsel %vm864, %v951, %v952
        %954 = vrot.lane.b32.xlu0 %v953, 125
        %v955 = vpop.permute.xlu0 %954
        %v957 = vadd.f32 %v945, %v955
        %s958 = sld [smem:[#allocation3 + $0xb]]
        %s959 = sld [smem:[#allocation3 + $0x8b]]
        %v960 = vstv %s958
        %v961 = vmul.f32 %v960, %v749
        %v962 = vmul.f32 %v960, %v750
        %v965 = vrot.slane %v961, 1
        %v966 = vrot.slane %v962, 1
        %v967 = vsel %vm864, %v965, %v966
        %968 = vrot.lane.b32.xlu0 %v967, 124
        %v969 = vpop.permute.xlu0 %968
        %v971 = vadd.f32 %v957, %v969
        %v972 = vstv %s959
        %v973 = vmul.f32 %v972, %v751
        %v974 = vmul.f32 %v972, %v752
        %v977 = vrot.slane %v973, 1
        %v978 = vrot.slane %v974, 1
        %v979 = vsel %vm864, %v977, %v978
        %980 = vrot.lane.b32.xlu0 %v979, 124
        %v981 = vpop.permute.xlu0 %980
        %v983 = vadd.f32 %v971, %v981
        %s984 = sld [smem:[#allocation3 + $0xc]]
        %s985 = sld [smem:[#allocation3 + $0x8c]]
        %v986 = vstv %s984
        %v987 = vmul.f32 %v986, %v749
        %v988 = vmul.f32 %v986, %v750
        %v991 = vrot.slane %v987, 1
        %v992 = vrot.slane %v988, 1
        %v993 = vsel %vm864, %v991, %v992
        %994 = vrot.lane.b32.xlu0 %v993, 123
        %v995 = vpop.permute.xlu0 %994
        %v997 = vadd.f32 %v983, %v995
        %v998 = vstv %s985
        %v999 = vmul.f32 %v998, %v751
        %v1000 = vmul.f32 %v998, %v752
        %v1003 = vrot.slane %v999, 1
        %v1004 = vrot.slane %v1000, 1
        %v1005 = vsel %vm864, %v1003, %v1004
        %1006 = vrot.lane.b32.xlu0 %v1005, 123
        %v1007 = vpop.permute.xlu0 %1006
        %v1009 = vadd.f32 %v997, %v1007
        %s1010 = sld [smem:[#allocation3 + $0xd]]
        %s1011 = sld [smem:[#allocation3 + $0x8d]]
        %v1012 = vstv %s1010
        %v1013 = vmul.f32 %v1012, %v749
        %v1014 = vmul.f32 %v1012, %v750
        %v1017 = vrot.slane %v1013, 1
        %v1018 = vrot.slane %v1014, 1
        %v1019 = vsel %vm864, %v1017, %v1018
        %1020 = vrot.lane.b32.xlu0 %v1019, 122
        %v1021 = vpop.permute.xlu0 %1020
        %v1023 = vadd.f32 %v1009, %v1021
        %v1024 = vstv %s1011
        %v1025 = vmul.f32 %v1024, %v751
        %v1026 = vmul.f32 %v1024, %v752
        %v1029 = vrot.slane %v1025, 1
        %v1030 = vrot.slane %v1026, 1
        %v1031 = vsel %vm864, %v1029, %v1030
        %1032 = vrot.lane.b32.xlu0 %v1031, 122
        %v1033 = vpop.permute.xlu0 %1032
        %v1035 = vadd.f32 %v1023, %v1033
        %s1036 = sld [smem:[#allocation3 + $0xe]]
        %s1037 = sld [smem:[#allocation3 + $0x8e]]
        %v1038 = vstv %s1036
        %v1039 = vmul.f32 %v1038, %v749
        %v1040 = vmul.f32 %v1038, %v750
        %vm1043 = vcmask 1045504
        %v1044 = vrot.slane %v1039, 2
        %v1045 = vrot.slane %v1040, 2
        %v1046 = vsel %vm1043, %v1044, %v1045
        %v1048 = vadd.f32 %v1035, %v1046
        %v1049 = vstv %s1037
        %v1050 = vmul.f32 %v1049, %v751
        %v1051 = vmul.f32 %v1049, %v752
        %v1054 = vrot.slane %v1050, 2
        %v1055 = vrot.slane %v1051, 2
        %v1056 = vsel %vm1043, %v1054, %v1055
        %v1058 = vadd.f32 %v1048, %v1056
        %s1059 = sld [smem:[#allocation3 + $0xf]]
        %s1060 = sld [smem:[#allocation3 + $0x8f]]
        %v1061 = vstv %s1059
        %v1062 = vmul.f32 %v1061, %v749
        %v1063 = vmul.f32 %v1061, %v750
        %v1066 = vrot.slane %v1062, 2
        %v1067 = vrot.slane %v1063, 2
        %v1068 = vsel %vm1043, %v1066, %v1067
        %1069 = vrot.lane.b32.xlu0 %v1068, 127
        %v1070 = vpop.permute.xlu0 %1069
        %v1072 = vadd.f32 %v1058, %v1070
        %v1073 = vstv %s1060
        %v1074 = vmul.f32 %v1073, %v751
        %v1075 = vmul.f32 %v1073, %v752
        %v1078 = vrot.slane %v1074, 2
        %v1079 = vrot.slane %v1075, 2
        %v1080 = vsel %vm1043, %v1078, %v1079
        %1081 = vrot.lane.b32.xlu0 %v1080, 127
        %v1082 = vpop.permute.xlu0 %1081
        %v1084 = vadd.f32 %v1072, %v1082
        %s1085 = sld [smem:[#allocation3 + $0x10]]
        %s1086 = sld [smem:[#allocation3 + $0x90]]
        %v1087 = vstv %s1085
        %v1088 = vmul.f32 %v1087, %v749
        %v1089 = vmul.f32 %v1087, %v750
        %v1092 = vrot.slane %v1088, 2
        %v1093 = vrot.slane %v1089, 2
        %v1094 = vsel %vm1043, %v1092, %v1093
        %1095 = vrot.lane.b32.xlu0 %v1094, 126
        %v1096 = vpop.permute.xlu0 %1095
        %v1098 = vadd.f32 %v1084, %v1096
        %v1099 = vstv %s1086
        %v1100 = vmul.f32 %v1099, %v751
        %v1101 = vmul.f32 %v1099, %v752
        %v1104 = vrot.slane %v1100, 2
        %v1105 = vrot.slane %v1101, 2
        %v1106 = vsel %vm1043, %v1104, %v1105
        %1107 = vrot.lane.b32.xlu0 %v1106, 126
        %v1108 = vpop.permute.xlu0 %1107
        %v1110 = vadd.f32 %v1098, %v1108
        %s1111 = sld [smem:[#allocation3 + $0x11]]
        %s1112 = sld [smem:[#allocation3 + $0x91]]
        %v1113 = vstv %s1111
        %v1114 = vmul.f32 %v1113, %v749
        %v1115 = vmul.f32 %v1113, %v750
        %v1118 = vrot.slane %v1114, 2
        %v1119 = vrot.slane %v1115, 2
        %v1120 = vsel %vm1043, %v1118, %v1119
        %1121 = vrot.lane.b32.xlu0 %v1120, 125
        %v1122 = vpop.permute.xlu0 %1121
        %v1124 = vadd.f32 %v1110, %v1122
        %v1125 = vstv %s1112
        %v1126 = vmul.f32 %v1125, %v751
        %v1127 = vmul.f32 %v1125, %v752
        %v1130 = vrot.slane %v1126, 2
        %v1131 = vrot.slane %v1127, 2
        %v1132 = vsel %vm1043, %v1130, %v1131
        %1133 = vrot.lane.b32.xlu0 %v1132, 125
        %v1134 = vpop.permute.xlu0 %1133
        %v1136 = vadd.f32 %v1124, %v1134
        %s1137 = sld [smem:[#allocation3 + $0x12]]
        %s1138 = sld [smem:[#allocation3 + $0x92]]
        %v1139 = vstv %s1137
        %v1140 = vmul.f32 %v1139, %v749
        %v1141 = vmul.f32 %v1139, %v750
        %v1144 = vrot.slane %v1140, 2
        %v1145 = vrot.slane %v1141, 2
        %v1146 = vsel %vm1043, %v1144, %v1145
        %1147 = vrot.lane.b32.xlu0 %v1146, 124
        %v1148 = vpop.permute.xlu0 %1147
        %v1150 = vadd.f32 %v1136, %v1148
        %v1151 = vstv %s1138
        %v1152 = vmul.f32 %v1151, %v751
        %v1153 = vmul.f32 %v1151, %v752
        %v1156 = vrot.slane %v1152, 2
        %v1157 = vrot.slane %v1153, 2
        %v1158 = vsel %vm1043, %v1156, %v1157
        %1159 = vrot.lane.b32.xlu0 %v1158, 124
        %v1160 = vpop.permute.xlu0 %1159
        %v1162 = vadd.f32 %v1150, %v1160
        %s1163 = sld [smem:[#allocation3 + $0x13]]
        %s1164 = sld [smem:[#allocation3 + $0x93]]
        %v1165 = vstv %s1163
        %v1166 = vmul.f32 %v1165, %v749
        %v1167 = vmul.f32 %v1165, %v750
        %v1170 = vrot.slane %v1166, 2
        %v1171 = vrot.slane %v1167, 2
        %v1172 = vsel %vm1043, %v1170, %v1171
        %1173 = vrot.lane.b32.xlu0 %v1172, 123
        %v1174 = vpop.permute.xlu0 %1173
        %v1176 = vadd.f32 %v1162, %v1174
        %v1177 = vstv %s1164
        %v1178 = vmul.f32 %v1177, %v751
        %v1179 = vmul.f32 %v1177, %v752
        %v1182 = vrot.slane %v1178, 2
        %v1183 = vrot.slane %v1179, 2
        %v1184 = vsel %vm1043, %v1182, %v1183
        %1185 = vrot.lane.b32.xlu0 %v1184, 123
        %v1186 = vpop.permute.xlu0 %1185
        %v1188 = vadd.f32 %v1176, %v1186
        %s1189 = sld [smem:[#allocation3 + $0x14]]
        %s1190 = sld [smem:[#allocation3 + $0x94]]
        %v1191 = vstv %s1189
        %v1192 = vmul.f32 %v1191, %v749
        %v1193 = vmul.f32 %v1191, %v750
        %v1196 = vrot.slane %v1192, 2
        %v1197 = vrot.slane %v1193, 2
        %v1198 = vsel %vm1043, %v1196, %v1197
        %1199 = vrot.lane.b32.xlu0 %v1198, 122
        %v1200 = vpop.permute.xlu0 %1199
        %v1202 = vadd.f32 %v1188, %v1200
        %v1203 = vstv %s1190
        %v1204 = vmul.f32 %v1203, %v751
        %v1205 = vmul.f32 %v1203, %v752
        %v1208 = vrot.slane %v1204, 2
        %v1209 = vrot.slane %v1205, 2
        %v1210 = vsel %vm1043, %v1208, %v1209
        %1211 = vrot.lane.b32.xlu0 %v1210, 122
        %v1212 = vpop.permute.xlu0 %1211
        %v1214 = vadd.f32 %v1202, %v1212
        %s1215 = sld [smem:[#allocation3 + $0x15]]
        %s1216 = sld [smem:[#allocation3 + $0x95]]
        %v1217 = vstv %s1215
        %v1218 = vmul.f32 %v1217, %v749
        %v1219 = vmul.f32 %v1217, %v750
        %vm1222 = vcmask 1044480
        %v1223 = vrot.slane %v1218, 3
        %v1224 = vrot.slane %v1219, 3
        %v1225 = vsel %vm1222, %v1223, %v1224
        %v1227 = vadd.f32 %v1214, %v1225
        %v1228 = vstv %s1216
        %v1229 = vmul.f32 %v1228, %v751
        %v1230 = vmul.f32 %v1228, %v752
        %v1233 = vrot.slane %v1229, 3
        %v1234 = vrot.slane %v1230, 3
        %v1235 = vsel %vm1222, %v1233, %v1234
        %v1237 = vadd.f32 %v1227, %v1235
        %s1238 = sld [smem:[#allocation3 + $0x16]]
        %s1239 = sld [smem:[#allocation3 + $0x96]]
        %v1240 = vstv %s1238
        %v1241 = vmul.f32 %v1240, %v749
        %v1242 = vmul.f32 %v1240, %v750
        %v1245 = vrot.slane %v1241, 3
        %v1246 = vrot.slane %v1242, 3
        %v1247 = vsel %vm1222, %v1245, %v1246
        %1248 = vrot.lane.b32.xlu0 %v1247, 127
        %v1249 = vpop.permute.xlu0 %1248
        %v1251 = vadd.f32 %v1237, %v1249
        %v1252 = vstv %s1239
        %v1253 = vmul.f32 %v1252, %v751
        %v1254 = vmul.f32 %v1252, %v752
        %v1257 = vrot.slane %v1253, 3
        %v1258 = vrot.slane %v1254, 3
        %v1259 = vsel %vm1222, %v1257, %v1258
        %1260 = vrot.lane.b32.xlu0 %v1259, 127
        %v1261 = vpop.permute.xlu0 %1260
        %v1263 = vadd.f32 %v1251, %v1261
        %s1264 = sld [smem:[#allocation3 + $0x17]]
        %s1265 = sld [smem:[#allocation3 + $0x97]]
        %v1266 = vstv %s1264
        %v1267 = vmul.f32 %v1266, %v749
        %v1268 = vmul.f32 %v1266, %v750
        %v1271 = vrot.slane %v1267, 3
        %v1272 = vrot.slane %v1268, 3
        %v1273 = vsel %vm1222, %v1271, %v1272
        %1274 = vrot.lane.b32.xlu0 %v1273, 126
        %v1275 = vpop.permute.xlu0 %1274
        %v1277 = vadd.f32 %v1263, %v1275
        %v1278 = vstv %s1265
        %v1279 = vmul.f32 %v1278, %v751
        %v1280 = vmul.f32 %v1278, %v752
        %v1283 = vrot.slane %v1279, 3
        %v1284 = vrot.slane %v1280, 3
        %v1285 = vsel %vm1222, %v1283, %v1284
        %1286 = vrot.lane.b32.xlu0 %v1285, 126
        %v1287 = vpop.permute.xlu0 %1286
        %v1289 = vadd.f32 %v1277, %v1287
        %s1290 = sld [smem:[#allocation3 + $0x18]]
        %s1291 = sld [smem:[#allocation3 + $0x98]]
        %v1292 = vstv %s1290
        %v1293 = vmul.f32 %v1292, %v749
        %v1294 = vmul.f32 %v1292, %v750
        %v1297 = vrot.slane %v1293, 3
        %v1298 = vrot.slane %v1294, 3
        %v1299 = vsel %vm1222, %v1297, %v1298
        %1300 = vrot.lane.b32.xlu0 %v1299, 125
        %v1301 = vpop.permute.xlu0 %1300
        %v1303 = vadd.f32 %v1289, %v1301
        %v1304 = vstv %s1291
        %v1305 = vmul.f32 %v1304, %v751
        %v1306 = vmul.f32 %v1304, %v752
        %v1309 = vrot.slane %v1305, 3
        %v1310 = vrot.slane %v1306, 3
        %v1311 = vsel %vm1222, %v1309, %v1310
        %1312 = vrot.lane.b32.xlu0 %v1311, 125
        %v1313 = vpop.permute.xlu0 %1312
        %v1315 = vadd.f32 %v1303, %v1313
        %s1316 = sld [smem:[#allocation3 + $0x19]]
        %s1317 = sld [smem:[#allocation3 + $0x99]]
        %v1318 = vstv %s1316
        %v1319 = vmul.f32 %v1318, %v749
        %v1320 = vmul.f32 %v1318, %v750
        %v1323 = vrot.slane %v1319, 3
        %v1324 = vrot.slane %v1320, 3
        %v1325 = vsel %vm1222, %v1323, %v1324
        %1326 = vrot.lane.b32.xlu0 %v1325, 124
        %v1327 = vpop.permute.xlu0 %1326
        %v1329 = vadd.f32 %v1315, %v1327
        %v1330 = vstv %s1317
        %v1331 = vmul.f32 %v1330, %v751
        %v1332 = vmul.f32 %v1330, %v752
        %v1335 = vrot.slane %v1331, 3
        %v1336 = vrot.slane %v1332, 3
        %v1337 = vsel %vm1222, %v1335, %v1336
        %1338 = vrot.lane.b32.xlu0 %v1337, 124
        %v1339 = vpop.permute.xlu0 %1338
        %v1341 = vadd.f32 %v1329, %v1339
        %s1342 = sld [smem:[#allocation3 + $0x1a]]
        %s1343 = sld [smem:[#allocation3 + $0x9a]]
        %v1344 = vstv %s1342
        %v1345 = vmul.f32 %v1344, %v749
        %v1346 = vmul.f32 %v1344, %v750
        %v1349 = vrot.slane %v1345, 3
        %v1350 = vrot.slane %v1346, 3
        %v1351 = vsel %vm1222, %v1349, %v1350
        %1352 = vrot.lane.b32.xlu0 %v1351, 123
        %v1353 = vpop.permute.xlu0 %1352
        %v1355 = vadd.f32 %v1341, %v1353
        %v1356 = vstv %s1343
        %v1357 = vmul.f32 %v1356, %v751
        %v1358 = vmul.f32 %v1356, %v752
        %v1361 = vrot.slane %v1357, 3
        %v1362 = vrot.slane %v1358, 3
        %v1363 = vsel %vm1222, %v1361, %v1362
        %1364 = vrot.lane.b32.xlu0 %v1363, 123
        %v1365 = vpop.permute.xlu0 %1364
        %v1367 = vadd.f32 %v1355, %v1365
        %s1368 = sld [smem:[#allocation3 + $0x1b]]
        %s1369 = sld [smem:[#allocation3 + $0x9b]]
        %v1370 = vstv %s1368
        %v1371 = vmul.f32 %v1370, %v749
        %v1372 = vmul.f32 %v1370, %v750
        %v1375 = vrot.slane %v1371, 3
        %v1376 = vrot.slane %v1372, 3
        %v1377 = vsel %vm1222, %v1375, %v1376
        %1378 = vrot.lane.b32.xlu0 %v1377, 122
        %v1379 = vpop.permute.xlu0 %1378
        %v1381 = vadd.f32 %v1367, %v1379
        %v1382 = vstv %s1369
        %v1383 = vmul.f32 %v1382, %v751
        %v1384 = vmul.f32 %v1382, %v752
        %v1387 = vrot.slane %v1383, 3
        %v1388 = vrot.slane %v1384, 3
        %v1389 = vsel %vm1222, %v1387, %v1388
        %1390 = vrot.lane.b32.xlu0 %v1389, 122
        %v1391 = vpop.permute.xlu0 %1390
        %v1393 = vadd.f32 %v1381, %v1391
        %s1394 = sld [smem:[#allocation3 + $0x1c]]
        %s1395 = sld [smem:[#allocation3 + $0x9c]]
        %v1396 = vstv %s1394
        %v1397 = vmul.f32 %v1396, %v749
        %v1398 = vmul.f32 %v1396, %v750
        %vm1401 = vcmask 1043456
        %v1402 = vrot.slane %v1397, 4
        %v1403 = vrot.slane %v1398, 4
        %v1404 = vsel %vm1401, %v1402, %v1403
        %v1406 = vadd.f32 %v1393, %v1404
        %v1407 = vstv %s1395
        %v1408 = vmul.f32 %v1407, %v751
        %v1409 = vmul.f32 %v1407, %v752
        %v1412 = vrot.slane %v1408, 4
        %v1413 = vrot.slane %v1409, 4
        %v1414 = vsel %vm1401, %v1412, %v1413
        %v1416 = vadd.f32 %v1406, %v1414
        %s1417 = sld [smem:[#allocation3 + $0x1d]]
        %s1418 = sld [smem:[#allocation3 + $0x9d]]
        %v1419 = vstv %s1417
        %v1420 = vmul.f32 %v1419, %v749
        %v1421 = vmul.f32 %v1419, %v750
        %v1424 = vrot.slane %v1420, 4
        %v1425 = vrot.slane %v1421, 4
        %v1426 = vsel %vm1401, %v1424, %v1425
        %1427 = vrot.lane.b32.xlu0 %v1426, 127
        %v1428 = vpop.permute.xlu0 %1427
        %v1430 = vadd.f32 %v1416, %v1428
        %v1431 = vstv %s1418
        %v1432 = vmul.f32 %v1431, %v751
        %v1433 = vmul.f32 %v1431, %v752
        %v1436 = vrot.slane %v1432, 4
        %v1437 = vrot.slane %v1433, 4
        %v1438 = vsel %vm1401, %v1436, %v1437
        %1439 = vrot.lane.b32.xlu0 %v1438, 127
        %v1440 = vpop.permute.xlu0 %1439
        %v1442 = vadd.f32 %v1430, %v1440
        %s1443 = sld [smem:[#allocation3 + $0x1e]]
        %s1444 = sld [smem:[#allocation3 + $0x9e]]
        %v1445 = vstv %s1443
        %v1446 = vmul.f32 %v1445, %v749
        %v1447 = vmul.f32 %v1445, %v750
        %v1450 = vrot.slane %v1446, 4
        %v1451 = vrot.slane %v1447, 4
        %v1452 = vsel %vm1401, %v1450, %v1451
        %1453 = vrot.lane.b32.xlu0 %v1452, 126
        %v1454 = vpop.permute.xlu0 %1453
        %v1456 = vadd.f32 %v1442, %v1454
        %v1457 = vstv %s1444
        %v1458 = vmul.f32 %v1457, %v751
        %v1459 = vmul.f32 %v1457, %v752
        %v1462 = vrot.slane %v1458, 4
        %v1463 = vrot.slane %v1459, 4
        %v1464 = vsel %vm1401, %v1462, %v1463
        %1465 = vrot.lane.b32.xlu0 %v1464, 126
        %v1466 = vpop.permute.xlu0 %1465
        %v1468 = vadd.f32 %v1456, %v1466
        %s1469 = sld [smem:[#allocation3 + $0x1f]]
        %s1470 = sld [smem:[#allocation3 + $0x9f]]
        %v1471 = vstv %s1469
        %v1472 = vmul.f32 %v1471, %v749
        %v1473 = vmul.f32 %v1471, %v750
        %v1476 = vrot.slane %v1472, 4
        %v1477 = vrot.slane %v1473, 4
        %v1478 = vsel %vm1401, %v1476, %v1477
        %1479 = vrot.lane.b32.xlu0 %v1478, 125
        %v1480 = vpop.permute.xlu0 %1479
        %v1482 = vadd.f32 %v1468, %v1480
        %v1483 = vstv %s1470
        %v1484 = vmul.f32 %v1483, %v751
        %v1485 = vmul.f32 %v1483, %v752
        %v1488 = vrot.slane %v1484, 4
        %v1489 = vrot.slane %v1485, 4
        %v1490 = vsel %vm1401, %v1488, %v1489
        %1491 = vrot.lane.b32.xlu0 %v1490, 125
        %v1492 = vpop.permute.xlu0 %1491
        %v1494 = vadd.f32 %v1482, %v1492
        %s1495 = sld [smem:[#allocation3 + $0x20]]
        %s1496 = sld [smem:[#allocation3 + $0xa0]]
        %v1497 = vstv %s1495
        %v1498 = vmul.f32 %v1497, %v749
        %v1499 = vmul.f32 %v1497, %v750
        %v1502 = vrot.slane %v1498, 4
        %v1503 = vrot.slane %v1499, 4
        %v1504 = vsel %vm1401, %v1502, %v1503
        %1505 = vrot.lane.b32.xlu0 %v1504, 124
        %v1506 = vpop.permute.xlu0 %1505
        %v1508 = vadd.f32 %v1494, %v1506
        %v1509 = vstv %s1496
        %v1510 = vmul.f32 %v1509, %v751
        %v1511 = vmul.f32 %v1509, %v752
        %v1514 = vrot.slane %v1510, 4
        %v1515 = vrot.slane %v1511, 4
        %v1516 = vsel %vm1401, %v1514, %v1515
        %1517 = vrot.lane.b32.xlu0 %v1516, 124
        %v1518 = vpop.permute.xlu0 %1517
        %v1520 = vadd.f32 %v1508, %v1518
        %s1521 = sld [smem:[#allocation3 + $0x21]]
        %s1522 = sld [smem:[#allocation3 + $0xa1]]
        %v1523 = vstv %s1521
        %v1524 = vmul.f32 %v1523, %v749
        %v1525 = vmul.f32 %v1523, %v750
        %v1528 = vrot.slane %v1524, 4
        %v1529 = vrot.slane %v1525, 4
        %v1530 = vsel %vm1401, %v1528, %v1529
        %1531 = vrot.lane.b32.xlu0 %v1530, 123
        %v1532 = vpop.permute.xlu0 %1531
        %v1534 = vadd.f32 %v1520, %v1532
        %v1535 = vstv %s1522
        %v1536 = vmul.f32 %v1535, %v751
        %v1537 = vmul.f32 %v1535, %v752
        %v1540 = vrot.slane %v1536, 4
        %v1541 = vrot.slane %v1537, 4
        %v1542 = vsel %vm1401, %v1540, %v1541
        %1543 = vrot.lane.b32.xlu0 %v1542, 123
        %v1544 = vpop.permute.xlu0 %1543
        %v1546 = vadd.f32 %v1534, %v1544
        %s1547 = sld [smem:[#allocation3 + $0x22]]
        %s1548 = sld [smem:[#allocation3 + $0xa2]]
        %v1549 = vstv %s1547
        %v1550 = vmul.f32 %v1549, %v749
        %v1551 = vmul.f32 %v1549, %v750
        %v1554 = vrot.slane %v1550, 4
        %v1555 = vrot.slane %v1551, 4
        %v1556 = vsel %vm1401, %v1554, %v1555
        %1557 = vrot.lane.b32.xlu0 %v1556, 122
        %v1558 = vpop.permute.xlu0 %1557
        %v1560 = vadd.f32 %v1546, %v1558
        %v1561 = vstv %s1548
        %v1562 = vmul.f32 %v1561, %v751
        %v1563 = vmul.f32 %v1561, %v752
        %v1566 = vrot.slane %v1562, 4
        %v1567 = vrot.slane %v1563, 4
        %v1568 = vsel %vm1401, %v1566, %v1567
        %1569 = vrot.lane.b32.xlu0 %v1568, 122
        %v1570 = vpop.permute.xlu0 %1569
        %v1572 = vadd.f32 %v1560, %v1570
        %s1573 = sld [smem:[#allocation3 + $0x23]]
        %s1574 = sld [smem:[#allocation3 + $0xa3]]
        %v1575 = vstv %s1573
        %v1576 = vmul.f32 %v1575, %v749
        %v1577 = vmul.f32 %v1575, %v750
        %vm1580 = vcmask 1042432
        %v1581 = vrot.slane %v1576, 5
        %v1582 = vrot.slane %v1577, 5
        %v1583 = vsel %vm1580, %v1581, %v1582
        %v1585 = vadd.f32 %v1572, %v1583
        %v1586 = vstv %s1574
        %v1587 = vmul.f32 %v1586, %v751
        %v1588 = vmul.f32 %v1586, %v752
        %v1591 = vrot.slane %v1587, 5
        %v1592 = vrot.slane %v1588, 5
        %v1593 = vsel %vm1580, %v1591, %v1592
        %v1595 = vadd.f32 %v1585, %v1593
        %s1596 = sld [smem:[#allocation3 + $0x24]]
        %s1597 = sld [smem:[#allocation3 + $0xa4]]
        %v1598 = vstv %s1596
        %v1599 = vmul.f32 %v1598, %v749
        %v1600 = vmul.f32 %v1598, %v750
        %v1603 = vrot.slane %v1599, 5
        %v1604 = vrot.slane %v1600, 5
        %v1605 = vsel %vm1580, %v1603, %v1604
        %1606 = vrot.lane.b32.xlu0 %v1605, 127
        %v1607 = vpop.permute.xlu0 %1606
        %v1609 = vadd.f32 %v1595, %v1607
        %v1610 = vstv %s1597
        %v1611 = vmul.f32 %v1610, %v751
        %v1612 = vmul.f32 %v1610, %v752
        %v1615 = vrot.slane %v1611, 5
        %v1616 = vrot.slane %v1612, 5
        %v1617 = vsel %vm1580, %v1615, %v1616
        %1618 = vrot.lane.b32.xlu0 %v1617, 127
        %v1619 = vpop.permute.xlu0 %1618
        %v1621 = vadd.f32 %v1609, %v1619
        %s1622 = sld [smem:[#allocation3 + $0x25]]
        %s1623 = sld [smem:[#allocation3 + $0xa5]]
        %v1624 = vstv %s1622
        %v1625 = vmul.f32 %v1624, %v749
        %v1626 = vmul.f32 %v1624, %v750
        %v1629 = vrot.slane %v1625, 5
        %v1630 = vrot.slane %v1626, 5
        %v1631 = vsel %vm1580, %v1629, %v1630
        %1632 = vrot.lane.b32.xlu0 %v1631, 126
        %v1633 = vpop.permute.xlu0 %1632
        %v1635 = vadd.f32 %v1621, %v1633
        %v1636 = vstv %s1623
        %v1637 = vmul.f32 %v1636, %v751
        %v1638 = vmul.f32 %v1636, %v752
        %v1641 = vrot.slane %v1637, 5
        %v1642 = vrot.slane %v1638, 5
        %v1643 = vsel %vm1580, %v1641, %v1642
        %1644 = vrot.lane.b32.xlu0 %v1643, 126
        %v1645 = vpop.permute.xlu0 %1644
        %v1647 = vadd.f32 %v1635, %v1645
        %s1648 = sld [smem:[#allocation3 + $0x26]]
        %s1649 = sld [smem:[#allocation3 + $0xa6]]
        %v1650 = vstv %s1648
        %v1651 = vmul.f32 %v1650, %v749
        %v1652 = vmul.f32 %v1650, %v750
        %v1655 = vrot.slane %v1651, 5
        %v1656 = vrot.slane %v1652, 5
        %v1657 = vsel %vm1580, %v1655, %v1656
        %1658 = vrot.lane.b32.xlu0 %v1657, 125
        %v1659 = vpop.permute.xlu0 %1658
        %v1661 = vadd.f32 %v1647, %v1659
        %v1662 = vstv %s1649
        %v1663 = vmul.f32 %v1662, %v751
        %v1664 = vmul.f32 %v1662, %v752
        %v1667 = vrot.slane %v1663, 5
        %v1668 = vrot.slane %v1664, 5
        %v1669 = vsel %vm1580, %v1667, %v1668
        %1670 = vrot.lane.b32.xlu0 %v1669, 125
        %v1671 = vpop.permute.xlu0 %1670
        %v1673 = vadd.f32 %v1661, %v1671
        %s1674 = sld [smem:[#allocation3 + $0x27]]
        %s1675 = sld [smem:[#allocation3 + $0xa7]]
        %v1676 = vstv %s1674
        %v1677 = vmul.f32 %v1676, %v749
        %v1678 = vmul.f32 %v1676, %v750
        %v1681 = vrot.slane %v1677, 5
        %v1682 = vrot.slane %v1678, 5
        %v1683 = vsel %vm1580, %v1681, %v1682
        %1684 = vrot.lane.b32.xlu0 %v1683, 124
        %v1685 = vpop.permute.xlu0 %1684
        %v1687 = vadd.f32 %v1673, %v1685
        %v1688 = vstv %s1675
        %v1689 = vmul.f32 %v1688, %v751
        %v1690 = vmul.f32 %v1688, %v752
        %v1693 = vrot.slane %v1689, 5
        %v1694 = vrot.slane %v1690, 5
        %v1695 = vsel %vm1580, %v1693, %v1694
        %1696 = vrot.lane.b32.xlu0 %v1695, 124
        %v1697 = vpop.permute.xlu0 %1696
        %v1699 = vadd.f32 %v1687, %v1697
        %s1700 = sld [smem:[#allocation3 + $0x28]]
        %s1701 = sld [smem:[#allocation3 + $0xa8]]
        %v1702 = vstv %s1700
        %v1703 = vmul.f32 %v1702, %v749
        %v1704 = vmul.f32 %v1702, %v750
        %v1707 = vrot.slane %v1703, 5
        %v1708 = vrot.slane %v1704, 5
        %v1709 = vsel %vm1580, %v1707, %v1708
        %1710 = vrot.lane.b32.xlu0 %v1709, 123
        %v1711 = vpop.permute.xlu0 %1710
        %v1713 = vadd.f32 %v1699, %v1711
        %v1714 = vstv %s1701
        %v1715 = vmul.f32 %v1714, %v751
        %v1716 = vmul.f32 %v1714, %v752
        %v1719 = vrot.slane %v1715, 5
        %v1720 = vrot.slane %v1716, 5
        %v1721 = vsel %vm1580, %v1719, %v1720
        %1722 = vrot.lane.b32.xlu0 %v1721, 123
        %v1723 = vpop.permute.xlu0 %1722
        %v1725 = vadd.f32 %v1713, %v1723
        %s1726 = sld [smem:[#allocation3 + $0x29]]
        %s1727 = sld [smem:[#allocation3 + $0xa9]]
        %v1728 = vstv %s1726
        %v1729 = vmul.f32 %v1728, %v749
        %v1730 = vmul.f32 %v1728, %v750
        %v1733 = vrot.slane %v1729, 5
        %v1734 = vrot.slane %v1730, 5
        %v1735 = vsel %vm1580, %v1733, %v1734
        %1736 = vrot.lane.b32.xlu0 %v1735, 122
        %v1737 = vpop.permute.xlu0 %1736
        %v1739 = vadd.f32 %v1725, %v1737
        %v1740 = vstv %s1727
        %v1741 = vmul.f32 %v1740, %v751
        %v1742 = vmul.f32 %v1740, %v752
        %v1745 = vrot.slane %v1741, 5
        %v1746 = vrot.slane %v1742, 5
        %v1747 = vsel %vm1580, %v1745, %v1746
        %1748 = vrot.lane.b32.xlu0 %v1747, 122
        %v1749 = vpop.permute.xlu0 %1748
        %v1751 = vadd.f32 %v1739, %v1749
        %s1752 = sld [smem:[#allocation3 + $0x2a]]
        %s1753 = sld [smem:[#allocation3 + $0xaa]]
        %v1754 = vstv %s1752
        %v1755 = vmul.f32 %v1754, %v749
        %v1756 = vmul.f32 %v1754, %v750
        %vm1759 = vcmask 1041408
        %v1760 = vrot.slane %v1755, 6
        %v1761 = vrot.slane %v1756, 6
        %v1762 = vsel %vm1759, %v1760, %v1761
        %v1764 = vadd.f32 %v1751, %v1762
        %v1765 = vstv %s1753
        %v1766 = vmul.f32 %v1765, %v751
        %v1767 = vmul.f32 %v1765, %v752
        %v1770 = vrot.slane %v1766, 6
        %v1771 = vrot.slane %v1767, 6
        %v1772 = vsel %vm1759, %v1770, %v1771
        %v1774 = vadd.f32 %v1764, %v1772
        %s1775 = sld [smem:[#allocation3 + $0x2b]]
        %s1776 = sld [smem:[#allocation3 + $0xab]]
        %v1777 = vstv %s1775
        %v1778 = vmul.f32 %v1777, %v749
        %v1779 = vmul.f32 %v1777, %v750
        %v1782 = vrot.slane %v1778, 6
        %v1783 = vrot.slane %v1779, 6
        %v1784 = vsel %vm1759, %v1782, %v1783
        %1785 = vrot.lane.b32.xlu0 %v1784, 127
        %v1786 = vpop.permute.xlu0 %1785
        %v1788 = vadd.f32 %v1774, %v1786
        %v1789 = vstv %s1776
        %v1790 = vmul.f32 %v1789, %v751
        %v1791 = vmul.f32 %v1789, %v752
        %v1794 = vrot.slane %v1790, 6
        %v1795 = vrot.slane %v1791, 6
        %v1796 = vsel %vm1759, %v1794, %v1795
        %1797 = vrot.lane.b32.xlu0 %v1796, 127
        %v1798 = vpop.permute.xlu0 %1797
        %v1800 = vadd.f32 %v1788, %v1798
        %s1801 = sld [smem:[#allocation3 + $0x2c]]
        %s1802 = sld [smem:[#allocation3 + $0xac]]
        %v1803 = vstv %s1801
        %v1804 = vmul.f32 %v1803, %v749
        %v1805 = vmul.f32 %v1803, %v750
        %v1808 = vrot.slane %v1804, 6
        %v1809 = vrot.slane %v1805, 6
        %v1810 = vsel %vm1759, %v1808, %v1809
        %1811 = vrot.lane.b32.xlu0 %v1810, 126
        %v1812 = vpop.permute.xlu0 %1811
        %v1814 = vadd.f32 %v1800, %v1812
        %v1815 = vstv %s1802
        %v1816 = vmul.f32 %v1815, %v751
        %v1817 = vmul.f32 %v1815, %v752
        %v1820 = vrot.slane %v1816, 6
        %v1821 = vrot.slane %v1817, 6
        %v1822 = vsel %vm1759, %v1820, %v1821
        %1823 = vrot.lane.b32.xlu0 %v1822, 126
        %v1824 = vpop.permute.xlu0 %1823
        %v1826 = vadd.f32 %v1814, %v1824
        %s1827 = sld [smem:[#allocation3 + $0x2d]]
        %s1828 = sld [smem:[#allocation3 + $0xad]]
        %v1829 = vstv %s1827
        %v1830 = vmul.f32 %v1829, %v749
        %v1831 = vmul.f32 %v1829, %v750
        %v1834 = vrot.slane %v1830, 6
        %v1835 = vrot.slane %v1831, 6
        %v1836 = vsel %vm1759, %v1834, %v1835
        %1837 = vrot.lane.b32.xlu0 %v1836, 125
        %v1838 = vpop.permute.xlu0 %1837
        %v1840 = vadd.f32 %v1826, %v1838
        %v1841 = vstv %s1828
        %v1842 = vmul.f32 %v1841, %v751
        %v1843 = vmul.f32 %v1841, %v752
        %v1846 = vrot.slane %v1842, 6
        %v1847 = vrot.slane %v1843, 6
        %v1848 = vsel %vm1759, %v1846, %v1847
        %1849 = vrot.lane.b32.xlu0 %v1848, 125
        %v1850 = vpop.permute.xlu0 %1849
        %v1852 = vadd.f32 %v1840, %v1850
        %s1853 = sld [smem:[#allocation3 + $0x2e]]
        %s1854 = sld [smem:[#allocation3 + $0xae]]
        %v1855 = vstv %s1853
        %v1856 = vmul.f32 %v1855, %v749
        %v1857 = vmul.f32 %v1855, %v750
        %v1860 = vrot.slane %v1856, 6
        %v1861 = vrot.slane %v1857, 6
        %v1862 = vsel %vm1759, %v1860, %v1861
        %1863 = vrot.lane.b32.xlu0 %v1862, 124
        %v1864 = vpop.permute.xlu0 %1863
        %v1866 = vadd.f32 %v1852, %v1864
        %v1867 = vstv %s1854
        %v1868 = vmul.f32 %v1867, %v751
        %v1869 = vmul.f32 %v1867, %v752
        %v1872 = vrot.slane %v1868, 6
        %v1873 = vrot.slane %v1869, 6
        %v1874 = vsel %vm1759, %v1872, %v1873
        %1875 = vrot.lane.b32.xlu0 %v1874, 124
        %v1876 = vpop.permute.xlu0 %1875
        %v1878 = vadd.f32 %v1866, %v1876
        %s1879 = sld [smem:[#allocation3 + $0x2f]]
        %s1880 = sld [smem:[#allocation3 + $0xaf]]
        %v1881 = vstv %s1879
        %v1882 = vmul.f32 %v1881, %v749
        %v1883 = vmul.f32 %v1881, %v750
        %v1886 = vrot.slane %v1882, 6
        %v1887 = vrot.slane %v1883, 6
        %v1888 = vsel %vm1759, %v1886, %v1887
        %1889 = vrot.lane.b32.xlu0 %v1888, 123
        %v1890 = vpop.permute.xlu0 %1889
        %v1892 = vadd.f32 %v1878, %v1890
        %v1893 = vstv %s1880
        %v1894 = vmul.f32 %v1893, %v751
        %v1895 = vmul.f32 %v1893, %v752
        %v1898 = vrot.slane %v1894, 6
        %v1899 = vrot.slane %v1895, 6
        %v1900 = vsel %vm1759, %v1898, %v1899
        %1901 = vrot.lane.b32.xlu0 %v1900, 123
        %v1902 = vpop.permute.xlu0 %1901
        %v1904 = vadd.f32 %v1892, %v1902
        %s1905 = sld [smem:[#allocation3 + $0x30]]
        %s1906 = sld [smem:[#allocation3 + $0xb0]]
        %v1907 = vstv %s1905
        %v1908 = vmul.f32 %v1907, %v749
        %v1909 = vmul.f32 %v1907, %v750
        %v1912 = vrot.slane %v1908, 6
        %v1913 = vrot.slane %v1909, 6
        %v1914 = vsel %vm1759, %v1912, %v1913
        %1915 = vrot.lane.b32.xlu0 %v1914, 122
        %v1916 = vpop.permute.xlu0 %1915
        %v1918 = vadd.f32 %v1904, %v1916
        %v1919 = vstv %s1906
        %v1920 = vmul.f32 %v1919, %v751
        %v1921 = vmul.f32 %v1919, %v752
        %v1924 = vrot.slane %v1920, 6
        %v1925 = vrot.slane %v1921, 6
        %v1926 = vsel %vm1759, %v1924, %v1925
        %1927 = vrot.lane.b32.xlu0 %v1926, 122
        %v1928 = vpop.permute.xlu0 %1927
        %v1930 = vadd.f32 %v1918, %v1928
        %v1931 = vxor.u32 %v1930, 2147483648
        %v1932 = vmul.f32 %v1931, 1.442695
        %v1933 = vpow.pop %v1932
        %v1934 = vadd.f32 %v1933, 1.0
        %v1935 = vrcp.pop %v1934
        %v1936 = vmul.f32 1.0, %v1935
        %v1937 = vlaneseq
        %v1938 = vshrl.u32 %v1937, 7
        %v1939 = vsub.s32 0, %v1938
        %v1940 = vrot.slane %v1936, %v1939
        %1942 = vbcast.lane.b32.xlu0 %v1940, 256
        %v1943 = vpop.permute.xlu0 %1942
        %v1944 = vlaneseq
        %v1945 = vshrl.u32 %v1944, 7
        %v1946 = vsub.s32 1, %v1945
        %v1947 = vrot.slane %v1936, %v1946
        %1949 = vbcast.lane.b32.xlu0 %v1947, 256
        %v1950 = vpop.permute.xlu0 %1949
        %v1951 = vlaneseq
        %v1952 = vshrl.u32 %v1951, 7
        %v1953 = vsub.s32 2, %v1952
        %v1954 = vrot.slane %v1936, %v1953
        %1956 = vbcast.lane.b32.xlu0 %v1954, 256
        %v1957 = vpop.permute.xlu0 %1956
        %v1958 = vlaneseq
        %v1959 = vshrl.u32 %v1958, 7
        %v1960 = vsub.s32 3, %v1959
        %v1961 = vrot.slane %v1936, %v1960
        %1963 = vbcast.lane.b32.xlu0 %v1961, 256
        %v1964 = vpop.permute.xlu0 %1963
        %v1965 = vlaneseq
        %v1966 = vshrl.u32 %v1965, 7
        %v1967 = vsub.s32 4, %v1966
        %v1968 = vrot.slane %v1936, %v1967
        %1970 = vbcast.lane.b32.xlu0 %v1968, 256
        %v1971 = vpop.permute.xlu0 %1970
        %v1972 = vlaneseq
        %v1973 = vshrl.u32 %v1972, 7
        %v1974 = vsub.s32 5, %v1973
        %v1975 = vrot.slane %v1936, %v1974
        %1977 = vbcast.lane.b32.xlu0 %v1975, 256
        %v1978 = vpop.permute.xlu0 %1977
        %v1979 = vlaneseq
        %v1980 = vshrl.u32 %v1979, 7
        %v1981 = vsub.s32 6, %v1980
        %v1982 = vrot.slane %v1936, %v1981
        %1984 = vbcast.lane.b32.xlu0 %v1982, 256
        %v1985 = vpop.permute.xlu0 %1984
        %v1986 = vlaneseq
        %v1987 = vshrl.u32 %v1986, 7
        %v1988 = vsub.s32 7, %v1987
        %v1989 = vrot.slane %v1936, %v1988
        %1991 = vbcast.lane.b32.xlu0 %v1989, 256
        %v1992 = vpop.permute.xlu0 %1991
        %v1993 = vmul.f32 %v1943, %v220
        %v1994 = vmul.f32 %v1943, %v221
        %v1995 = vmul.f32 %v1943, %v222
        %v1996 = vmul.f32 %v1943, %v223
        %v1997 = vmul.f32 %v1943, %v224
        %v1998 = vmul.f32 %v1943, %v225
        %v1999 = vmul.f32 %v1943, %v226
        %v2000 = vmul.f32 %v1943, %v227
        %v2001 = vmul.f32 %v1943, %v228
        %v2002 = vmul.f32 %v1943, %v229
        %v2003 = vmul.f32 %v1943, %v230
        %v2004 = vmul.f32 %v1943, %v231
        %v2005 = vmul.f32 %v1943, %v232
        %v2006 = vmul.f32 %v1943, %v233
        %v2007 = vmul.f32 %v1943, %v234
        %v2008 = vmul.f32 %v1943, %v235
        %v2009 = vmul.f32 %v1950, %v236
        %v2010 = vmul.f32 %v1950, %v237
        %v2011 = vmul.f32 %v1950, %v238
        %v2012 = vmul.f32 %v1950, %v239
        %v2013 = vmul.f32 %v1950, %v240
        %v2014 = vmul.f32 %v1950, %v241
        %v2015 = vmul.f32 %v1950, %v242
        %v2016 = vmul.f32 %v1950, %v243
        %v2017 = vmul.f32 %v1950, %v244
        %v2018 = vmul.f32 %v1950, %v245
        %v2019 = vmul.f32 %v1950, %v246
        %v2020 = vmul.f32 %v1950, %v247
        %v2021 = vmul.f32 %v1950, %v248
        %v2022 = vmul.f32 %v1950, %v249
        %v2023 = vmul.f32 %v1950, %v250
        %v2024 = vmul.f32 %v1950, %v251
        %v2025 = vmul.f32 %v1957, %v252
        %v2026 = vmul.f32 %v1957, %v253
        %v2027 = vmul.f32 %v1957, %v254
        %v2028 = vmul.f32 %v1957, %v255
        %v2029 = vmul.f32 %v1957, %v256
        %v2030 = vmul.f32 %v1957, %v257
        %v2031 = vmul.f32 %v1957, %v258
        %v2032 = vmul.f32 %v1957, %v259
        %v2033 = vmul.f32 %v1957, %v260
        %v2034 = vmul.f32 %v1957, %v261
        %v2035 = vmul.f32 %v1957, %v262
        %v2036 = vmul.f32 %v1957, %v263
        %v2037 = vmul.f32 %v1957, %v264
        %v2038 = vmul.f32 %v1957, %v265
        %v2039 = vmul.f32 %v1957, %v266
        %v2040 = vmul.f32 %v1957, %v267
        %v2041 = vmul.f32 %v1964, %v268
        %v2042 = vmul.f32 %v1964, %v269
        %v2043 = vmul.f32 %v1964, %v270
        %v2044 = vmul.f32 %v1964, %v271
        %v2045 = vmul.f32 %v1964, %v272
        %v2046 = vmul.f32 %v1964, %v273
        %v2047 = vmul.f32 %v1964, %v274
        %v2048 = vmul.f32 %v1964, %v275
        %v2049 = vmul.f32 %v1964, %v276
        %v2050 = vmul.f32 %v1964, %v277
        %v2051 = vmul.f32 %v1964, %v278
        %v2052 = vmul.f32 %v1964, %v279
        %v2053 = vmul.f32 %v1964, %v280
        %v2054 = vmul.f32 %v1964, %v281
        %v2055 = vmul.f32 %v1964, %v282
        %v2056 = vmul.f32 %v1964, %v283
        %v2057 = vmul.f32 %v1971, %v284
        %v2058 = vmul.f32 %v1971, %v285
        %v2059 = vmul.f32 %v1971, %v286
        %v2060 = vmul.f32 %v1971, %v287
        %v2061 = vmul.f32 %v1971, %v288
        %v2062 = vmul.f32 %v1971, %v289
        %v2063 = vmul.f32 %v1971, %v290
        %v2064 = vmul.f32 %v1971, %v291
        %v2065 = vmul.f32 %v1971, %v292
        %v2066 = vmul.f32 %v1971, %v293
        %v2067 = vmul.f32 %v1971, %v294
        %v2068 = vmul.f32 %v1971, %v295
        %v2069 = vmul.f32 %v1971, %v296
        %v2070 = vmul.f32 %v1971, %v297
        %v2071 = vmul.f32 %v1971, %v298
        %v2072 = vmul.f32 %v1971, %v299
        %v2073 = vmul.f32 %v1978, %v300
        %v2074 = vmul.f32 %v1978, %v301
        %v2075 = vmul.f32 %v1978, %v302
        %v2076 = vmul.f32 %v1978, %v303
        %v2077 = vmul.f32 %v1978, %v304
        %v2078 = vmul.f32 %v1978, %v305
        %v2079 = vmul.f32 %v1978, %v306
        %v2080 = vmul.f32 %v1978, %v307
        %v2081 = vmul.f32 %v1978, %v308
        %v2082 = vmul.f32 %v1978, %v309
        %v2083 = vmul.f32 %v1978, %v310
        %v2084 = vmul.f32 %v1978, %v311
        %v2085 = vmul.f32 %v1978, %v312
        %v2086 = vmul.f32 %v1978, %v313
        %v2087 = vmul.f32 %v1978, %v314
        %v2088 = vmul.f32 %v1978, %v315
        %v2089 = vmul.f32 %v1985, %v316
        %v2090 = vmul.f32 %v1985, %v317
        %v2091 = vmul.f32 %v1985, %v318
        %v2092 = vmul.f32 %v1985, %v319
        %v2093 = vmul.f32 %v1985, %v320
        %v2094 = vmul.f32 %v1985, %v321
        %v2095 = vmul.f32 %v1985, %v322
        %v2096 = vmul.f32 %v1985, %v323
        %v2097 = vmul.f32 %v1985, %v324
        %v2098 = vmul.f32 %v1985, %v325
        %v2099 = vmul.f32 %v1985, %v326
        %v2100 = vmul.f32 %v1985, %v327
        %v2101 = vmul.f32 %v1985, %v328
        %v2102 = vmul.f32 %v1985, %v329
        %v2103 = vmul.f32 %v1985, %v330
        %v2104 = vmul.f32 %v1985, %v331
        %v2105 = vmul.f32 %v1992, %v332
        %v2106 = vmul.f32 %v1992, %v333
        %v2107 = vmul.f32 %v1992, %v334
        %v2108 = vmul.f32 %v1992, %v335
        %v2109 = vmul.f32 %v1992, %v336
        %v2110 = vmul.f32 %v1992, %v337
        %v2111 = vmul.f32 %v1992, %v338
        %v2112 = vmul.f32 %v1992, %v339
        %v2113 = vmul.f32 %v1992, %v340
        %v2114 = vmul.f32 %v1992, %v341
        %v2115 = vmul.f32 %v1992, %v342
        %v2116 = vmul.f32 %v1992, %v343
        %v2117 = vmul.f32 %v1992, %v344
        %v2118 = vmul.f32 %v1992, %v345
        %v2119 = vmul.f32 %v1992, %v346
        %v2120 = vmul.f32 %v1992, %v347
        %v2121 = vrot.slane %v1993, 4
        %v2122 = vmax.f32 %v1993, %v2121
        %v2123 = vrot.slane %v2122, 2
        %v2124 = vmax.f32 %v2122, %v2123
        %v2125 = vrot.slane %v2124, 1
        %v2126 = vmax.f32 %v2124, %v2125
        %v2127 = vrot.slane %v1994, 4
        %v2128 = vmax.f32 %v1994, %v2127
        %v2129 = vrot.slane %v2128, 2
        %v2130 = vmax.f32 %v2128, %v2129
        %v2131 = vrot.slane %v2130, 1
        %v2132 = vmax.f32 %v2130, %v2131
        %v2133 = vrot.slane %v1995, 4
        %v2134 = vmax.f32 %v1995, %v2133
        %v2135 = vrot.slane %v2134, 2
        %v2136 = vmax.f32 %v2134, %v2135
        %v2137 = vrot.slane %v2136, 1
        %v2138 = vmax.f32 %v2136, %v2137
        %v2139 = vrot.slane %v1996, 4
        %v2140 = vmax.f32 %v1996, %v2139
        %v2141 = vrot.slane %v2140, 2
        %v2142 = vmax.f32 %v2140, %v2141
        %v2143 = vrot.slane %v2142, 1
        %v2144 = vmax.f32 %v2142, %v2143
        %v2145 = vrot.slane %v1997, 4
        %v2146 = vmax.f32 %v1997, %v2145
        %v2147 = vrot.slane %v2146, 2
        %v2148 = vmax.f32 %v2146, %v2147
        %v2149 = vrot.slane %v2148, 1
        %v2150 = vmax.f32 %v2148, %v2149
        %v2151 = vrot.slane %v1998, 4
        %v2152 = vmax.f32 %v1998, %v2151
        %v2153 = vrot.slane %v2152, 2
        %v2154 = vmax.f32 %v2152, %v2153
        %v2155 = vrot.slane %v2154, 1
        %v2156 = vmax.f32 %v2154, %v2155
        %v2157 = vrot.slane %v1999, 4
        %v2158 = vmax.f32 %v1999, %v2157
        %v2159 = vrot.slane %v2158, 2
        %v2160 = vmax.f32 %v2158, %v2159
        %v2161 = vrot.slane %v2160, 1
        %v2162 = vmax.f32 %v2160, %v2161
        %v2163 = vrot.slane %v2000, 4
        %v2164 = vmax.f32 %v2000, %v2163
        %v2165 = vrot.slane %v2164, 2
        %v2166 = vmax.f32 %v2164, %v2165
        %v2167 = vrot.slane %v2166, 1
        %v2168 = vmax.f32 %v2166, %v2167
        %v2169 = vrot.slane %v2001, 4
        %v2170 = vmax.f32 %v2001, %v2169
        %v2171 = vrot.slane %v2170, 2
        %v2172 = vmax.f32 %v2170, %v2171
        %v2173 = vrot.slane %v2172, 1
        %v2174 = vmax.f32 %v2172, %v2173
        %v2175 = vrot.slane %v2002, 4
        %v2176 = vmax.f32 %v2002, %v2175
        %v2177 = vrot.slane %v2176, 2
        %v2178 = vmax.f32 %v2176, %v2177
        %v2179 = vrot.slane %v2178, 1
        %v2180 = vmax.f32 %v2178, %v2179
        %v2181 = vrot.slane %v2003, 4
        %v2182 = vmax.f32 %v2003, %v2181
        %v2183 = vrot.slane %v2182, 2
        %v2184 = vmax.f32 %v2182, %v2183
        %v2185 = vrot.slane %v2184, 1
        %v2186 = vmax.f32 %v2184, %v2185
        %v2187 = vrot.slane %v2004, 4
        %v2188 = vmax.f32 %v2004, %v2187
        %v2189 = vrot.slane %v2188, 2
        %v2190 = vmax.f32 %v2188, %v2189
        %v2191 = vrot.slane %v2190, 1
        %v2192 = vmax.f32 %v2190, %v2191
        %v2193 = vrot.slane %v2005, 4
        %v2194 = vmax.f32 %v2005, %v2193
        %v2195 = vrot.slane %v2194, 2
        %v2196 = vmax.f32 %v2194, %v2195
        %v2197 = vrot.slane %v2196, 1
        %v2198 = vmax.f32 %v2196, %v2197
        %v2199 = vrot.slane %v2006, 4
        %v2200 = vmax.f32 %v2006, %v2199
        %v2201 = vrot.slane %v2200, 2
        %v2202 = vmax.f32 %v2200, %v2201
        %v2203 = vrot.slane %v2202, 1
        %v2204 = vmax.f32 %v2202, %v2203
        %v2205 = vrot.slane %v2007, 4
        %v2206 = vmax.f32 %v2007, %v2205
        %v2207 = vrot.slane %v2206, 2
        %v2208 = vmax.f32 %v2206, %v2207
        %v2209 = vrot.slane %v2208, 1
        %v2210 = vmax.f32 %v2208, %v2209
        %v2211 = vrot.slane %v2008, 4
        %v2212 = vmax.f32 %v2008, %v2211
        %v2213 = vrot.slane %v2212, 2
        %v2214 = vmax.f32 %v2212, %v2213
        %v2215 = vrot.slane %v2214, 1
        %v2216 = vmax.f32 %v2214, %v2215
        %v2217 = vrot.slane %v2009, 4
        %v2218 = vmax.f32 %v2009, %v2217
        %v2219 = vrot.slane %v2218, 2
        %v2220 = vmax.f32 %v2218, %v2219
        %v2221 = vrot.slane %v2220, 1
        %v2222 = vmax.f32 %v2220, %v2221
        %v2223 = vrot.slane %v2010, 4
        %v2224 = vmax.f32 %v2010, %v2223
        %v2225 = vrot.slane %v2224, 2
        %v2226 = vmax.f32 %v2224, %v2225
        %v2227 = vrot.slane %v2226, 1
        %v2228 = vmax.f32 %v2226, %v2227
        %v2229 = vrot.slane %v2011, 4
        %v2230 = vmax.f32 %v2011, %v2229
        %v2231 = vrot.slane %v2230, 2
        %v2232 = vmax.f32 %v2230, %v2231
        %v2233 = vrot.slane %v2232, 1
        %v2234 = vmax.f32 %v2232, %v2233
        %v2235 = vrot.slane %v2012, 4
        %v2236 = vmax.f32 %v2012, %v2235
        %v2237 = vrot.slane %v2236, 2
        %v2238 = vmax.f32 %v2236, %v2237
        %v2239 = vrot.slane %v2238, 1
        %v2240 = vmax.f32 %v2238, %v2239
        %v2241 = vrot.slane %v2013, 4
        %v2242 = vmax.f32 %v2013, %v2241
        %v2243 = vrot.slane %v2242, 2
        %v2244 = vmax.f32 %v2242, %v2243
        %v2245 = vrot.slane %v2244, 1
        %v2246 = vmax.f32 %v2244, %v2245
        %v2247 = vrot.slane %v2014, 4
        %v2248 = vmax.f32 %v2014, %v2247
        %v2249 = vrot.slane %v2248, 2
        %v2250 = vmax.f32 %v2248, %v2249
        %v2251 = vrot.slane %v2250, 1
        %v2252 = vmax.f32 %v2250, %v2251
        %v2253 = vrot.slane %v2015, 4
        %v2254 = vmax.f32 %v2015, %v2253
        %v2255 = vrot.slane %v2254, 2
        %v2256 = vmax.f32 %v2254, %v2255
        %v2257 = vrot.slane %v2256, 1
        %v2258 = vmax.f32 %v2256, %v2257
        %v2259 = vrot.slane %v2016, 4
        %v2260 = vmax.f32 %v2016, %v2259
        %v2261 = vrot.slane %v2260, 2
        %v2262 = vmax.f32 %v2260, %v2261
        %v2263 = vrot.slane %v2262, 1
        %v2264 = vmax.f32 %v2262, %v2263
        %v2265 = vrot.slane %v2017, 4
        %v2266 = vmax.f32 %v2017, %v2265
        %v2267 = vrot.slane %v2266, 2
        %v2268 = vmax.f32 %v2266, %v2267
        %v2269 = vrot.slane %v2268, 1
        %v2270 = vmax.f32 %v2268, %v2269
        %v2271 = vrot.slane %v2018, 4
        %v2272 = vmax.f32 %v2018, %v2271
        %v2273 = vrot.slane %v2272, 2
        %v2274 = vmax.f32 %v2272, %v2273
        %v2275 = vrot.slane %v2274, 1
        %v2276 = vmax.f32 %v2274, %v2275
        %v2277 = vrot.slane %v2019, 4
        %v2278 = vmax.f32 %v2019, %v2277
        %v2279 = vrot.slane %v2278, 2
        %v2280 = vmax.f32 %v2278, %v2279
        %v2281 = vrot.slane %v2280, 1
        %v2282 = vmax.f32 %v2280, %v2281
        %v2283 = vrot.slane %v2020, 4
        %v2284 = vmax.f32 %v2020, %v2283
        %v2285 = vrot.slane %v2284, 2
        %v2286 = vmax.f32 %v2284, %v2285
        %v2287 = vrot.slane %v2286, 1
        %v2288 = vmax.f32 %v2286, %v2287
        %v2289 = vrot.slane %v2021, 4
        %v2290 = vmax.f32 %v2021, %v2289
        %v2291 = vrot.slane %v2290, 2
        %v2292 = vmax.f32 %v2290, %v2291
        %v2293 = vrot.slane %v2292, 1
        %v2294 = vmax.f32 %v2292, %v2293
        %v2295 = vrot.slane %v2022, 4
        %v2296 = vmax.f32 %v2022, %v2295
        %v2297 = vrot.slane %v2296, 2
        %v2298 = vmax.f32 %v2296, %v2297
        %v2299 = vrot.slane %v2298, 1
        %v2300 = vmax.f32 %v2298, %v2299
        %v2301 = vrot.slane %v2023, 4
        %v2302 = vmax.f32 %v2023, %v2301
        %v2303 = vrot.slane %v2302, 2
        %v2304 = vmax.f32 %v2302, %v2303
        %v2305 = vrot.slane %v2304, 1
        %v2306 = vmax.f32 %v2304, %v2305
        %v2307 = vrot.slane %v2024, 4
        %v2308 = vmax.f32 %v2024, %v2307
        %v2309 = vrot.slane %v2308, 2
        %v2310 = vmax.f32 %v2308, %v2309
        %v2311 = vrot.slane %v2310, 1
        %v2312 = vmax.f32 %v2310, %v2311
        %v2313 = vrot.slane %v2025, 4
        %v2314 = vmax.f32 %v2025, %v2313
        %v2315 = vrot.slane %v2314, 2
        %v2316 = vmax.f32 %v2314, %v2315
        %v2317 = vrot.slane %v2316, 1
        %v2318 = vmax.f32 %v2316, %v2317
        %v2319 = vrot.slane %v2026, 4
        %v2320 = vmax.f32 %v2026, %v2319
        %v2321 = vrot.slane %v2320, 2
        %v2322 = vmax.f32 %v2320, %v2321
        %v2323 = vrot.slane %v2322, 1
        %v2324 = vmax.f32 %v2322, %v2323
        %v2325 = vrot.slane %v2027, 4
        %v2326 = vmax.f32 %v2027, %v2325
        %v2327 = vrot.slane %v2326, 2
        %v2328 = vmax.f32 %v2326, %v2327
        %v2329 = vrot.slane %v2328, 1
        %v2330 = vmax.f32 %v2328, %v2329
        %v2331 = vrot.slane %v2028, 4
        %v2332 = vmax.f32 %v2028, %v2331
        %v2333 = vrot.slane %v2332, 2
        %v2334 = vmax.f32 %v2332, %v2333
        %v2335 = vrot.slane %v2334, 1
        %v2336 = vmax.f32 %v2334, %v2335
        %v2337 = vrot.slane %v2029, 4
        %v2338 = vmax.f32 %v2029, %v2337
        %v2339 = vrot.slane %v2338, 2
        %v2340 = vmax.f32 %v2338, %v2339
        %v2341 = vrot.slane %v2340, 1
        %v2342 = vmax.f32 %v2340, %v2341
        %v2343 = vrot.slane %v2030, 4
        %v2344 = vmax.f32 %v2030, %v2343
        %v2345 = vrot.slane %v2344, 2
        %v2346 = vmax.f32 %v2344, %v2345
        %v2347 = vrot.slane %v2346, 1
        %v2348 = vmax.f32 %v2346, %v2347
        %v2349 = vrot.slane %v2031, 4
        %v2350 = vmax.f32 %v2031, %v2349
        %v2351 = vrot.slane %v2350, 2
        %v2352 = vmax.f32 %v2350, %v2351
        %v2353 = vrot.slane %v2352, 1
        %v2354 = vmax.f32 %v2352, %v2353
        %v2355 = vrot.slane %v2032, 4
        %v2356 = vmax.f32 %v2032, %v2355
        %v2357 = vrot.slane %v2356, 2
        %v2358 = vmax.f32 %v2356, %v2357
        %v2359 = vrot.slane %v2358, 1
        %v2360 = vmax.f32 %v2358, %v2359
        %v2361 = vrot.slane %v2033, 4
        %v2362 = vmax.f32 %v2033, %v2361
        %v2363 = vrot.slane %v2362, 2
        %v2364 = vmax.f32 %v2362, %v2363
        %v2365 = vrot.slane %v2364, 1
        %v2366 = vmax.f32 %v2364, %v2365
        %v2367 = vrot.slane %v2034, 4
        %v2368 = vmax.f32 %v2034, %v2367
        %v2369 = vrot.slane %v2368, 2
        %v2370 = vmax.f32 %v2368, %v2369
        %v2371 = vrot.slane %v2370, 1
        %v2372 = vmax.f32 %v2370, %v2371
        %v2373 = vrot.slane %v2035, 4
        %v2374 = vmax.f32 %v2035, %v2373
        %v2375 = vrot.slane %v2374, 2
        %v2376 = vmax.f32 %v2374, %v2375
        %v2377 = vrot.slane %v2376, 1
        %v2378 = vmax.f32 %v2376, %v2377
        %v2379 = vrot.slane %v2036, 4
        %v2380 = vmax.f32 %v2036, %v2379
        %v2381 = vrot.slane %v2380, 2
        %v2382 = vmax.f32 %v2380, %v2381
        %v2383 = vrot.slane %v2382, 1
        %v2384 = vmax.f32 %v2382, %v2383
        %v2385 = vrot.slane %v2037, 4
        %v2386 = vmax.f32 %v2037, %v2385
        %v2387 = vrot.slane %v2386, 2
        %v2388 = vmax.f32 %v2386, %v2387
        %v2389 = vrot.slane %v2388, 1
        %v2390 = vmax.f32 %v2388, %v2389
        %v2391 = vrot.slane %v2038, 4
        %v2392 = vmax.f32 %v2038, %v2391
        %v2393 = vrot.slane %v2392, 2
        %v2394 = vmax.f32 %v2392, %v2393
        %v2395 = vrot.slane %v2394, 1
        %v2396 = vmax.f32 %v2394, %v2395
        %v2397 = vrot.slane %v2039, 4
        %v2398 = vmax.f32 %v2039, %v2397
        %v2399 = vrot.slane %v2398, 2
        %v2400 = vmax.f32 %v2398, %v2399
        %v2401 = vrot.slane %v2400, 1
        %v2402 = vmax.f32 %v2400, %v2401
        %v2403 = vrot.slane %v2040, 4
        %v2404 = vmax.f32 %v2040, %v2403
        %v2405 = vrot.slane %v2404, 2
        %v2406 = vmax.f32 %v2404, %v2405
        %v2407 = vrot.slane %v2406, 1
        %v2408 = vmax.f32 %v2406, %v2407
        %v2409 = vrot.slane %v2041, 4
        %v2410 = vmax.f32 %v2041, %v2409
        %v2411 = vrot.slane %v2410, 2
        %v2412 = vmax.f32 %v2410, %v2411
        %v2413 = vrot.slane %v2412, 1
        %v2414 = vmax.f32 %v2412, %v2413
        %v2415 = vrot.slane %v2042, 4
        %v2416 = vmax.f32 %v2042, %v2415
        %v2417 = vrot.slane %v2416, 2
        %v2418 = vmax.f32 %v2416, %v2417
        %v2419 = vrot.slane %v2418, 1
        %v2420 = vmax.f32 %v2418, %v2419
        %v2421 = vrot.slane %v2043, 4
        %v2422 = vmax.f32 %v2043, %v2421
        %v2423 = vrot.slane %v2422, 2
        %v2424 = vmax.f32 %v2422, %v2423
        %v2425 = vrot.slane %v2424, 1
        %v2426 = vmax.f32 %v2424, %v2425
        %v2427 = vrot.slane %v2044, 4
        %v2428 = vmax.f32 %v2044, %v2427
        %v2429 = vrot.slane %v2428, 2
        %v2430 = vmax.f32 %v2428, %v2429
        %v2431 = vrot.slane %v2430, 1
        %v2432 = vmax.f32 %v2430, %v2431
        %v2433 = vrot.slane %v2045, 4
        %v2434 = vmax.f32 %v2045, %v2433
        %v2435 = vrot.slane %v2434, 2
        %v2436 = vmax.f32 %v2434, %v2435
        %v2437 = vrot.slane %v2436, 1
        %v2438 = vmax.f32 %v2436, %v2437
        %v2439 = vrot.slane %v2046, 4
        %v2440 = vmax.f32 %v2046, %v2439
        %v2441 = vrot.slane %v2440, 2
        %v2442 = vmax.f32 %v2440, %v2441
        %v2443 = vrot.slane %v2442, 1
        %v2444 = vmax.f32 %v2442, %v2443
        %v2445 = vrot.slane %v2047, 4
        %v2446 = vmax.f32 %v2047, %v2445
        %v2447 = vrot.slane %v2446, 2
        %v2448 = vmax.f32 %v2446, %v2447
        %v2449 = vrot.slane %v2448, 1
        %v2450 = vmax.f32 %v2448, %v2449
        %v2451 = vrot.slane %v2048, 4
        %v2452 = vmax.f32 %v2048, %v2451
        %v2453 = vrot.slane %v2452, 2
        %v2454 = vmax.f32 %v2452, %v2453
        %v2455 = vrot.slane %v2454, 1
        %v2456 = vmax.f32 %v2454, %v2455
        %v2457 = vrot.slane %v2049, 4
        %v2458 = vmax.f32 %v2049, %v2457
        %v2459 = vrot.slane %v2458, 2
        %v2460 = vmax.f32 %v2458, %v2459
        %v2461 = vrot.slane %v2460, 1
        %v2462 = vmax.f32 %v2460, %v2461
        %v2463 = vrot.slane %v2050, 4
        %v2464 = vmax.f32 %v2050, %v2463
        %v2465 = vrot.slane %v2464, 2
        %v2466 = vmax.f32 %v2464, %v2465
        %v2467 = vrot.slane %v2466, 1
        %v2468 = vmax.f32 %v2466, %v2467
        %v2469 = vrot.slane %v2051, 4
        %v2470 = vmax.f32 %v2051, %v2469
        %v2471 = vrot.slane %v2470, 2
        %v2472 = vmax.f32 %v2470, %v2471
        %v2473 = vrot.slane %v2472, 1
        %v2474 = vmax.f32 %v2472, %v2473
        %v2475 = vrot.slane %v2052, 4
        %v2476 = vmax.f32 %v2052, %v2475
        %v2477 = vrot.slane %v2476, 2
        %v2478 = vmax.f32 %v2476, %v2477
        %v2479 = vrot.slane %v2478, 1
        %v2480 = vmax.f32 %v2478, %v2479
        %v2481 = vrot.slane %v2053, 4
        %v2482 = vmax.f32 %v2053, %v2481
        %v2483 = vrot.slane %v2482, 2
        %v2484 = vmax.f32 %v2482, %v2483
        %v2485 = vrot.slane %v2484, 1
        %v2486 = vmax.f32 %v2484, %v2485
        %v2487 = vrot.slane %v2054, 4
        %v2488 = vmax.f32 %v2054, %v2487
        %v2489 = vrot.slane %v2488, 2
        %v2490 = vmax.f32 %v2488, %v2489
        %v2491 = vrot.slane %v2490, 1
        %v2492 = vmax.f32 %v2490, %v2491
        %v2493 = vrot.slane %v2055, 4
        %v2494 = vmax.f32 %v2055, %v2493
        %v2495 = vrot.slane %v2494, 2
        %v2496 = vmax.f32 %v2494, %v2495
        %v2497 = vrot.slane %v2496, 1
        %v2498 = vmax.f32 %v2496, %v2497
        %v2499 = vrot.slane %v2056, 4
        %v2500 = vmax.f32 %v2056, %v2499
        %v2501 = vrot.slane %v2500, 2
        %v2502 = vmax.f32 %v2500, %v2501
        %v2503 = vrot.slane %v2502, 1
        %v2504 = vmax.f32 %v2502, %v2503
        %v2505 = vrot.slane %v2057, 4
        %v2506 = vmax.f32 %v2057, %v2505
        %v2507 = vrot.slane %v2506, 2
        %v2508 = vmax.f32 %v2506, %v2507
        %v2509 = vrot.slane %v2508, 1
        %v2510 = vmax.f32 %v2508, %v2509
        %v2511 = vrot.slane %v2058, 4
        %v2512 = vmax.f32 %v2058, %v2511
        %v2513 = vrot.slane %v2512, 2
        %v2514 = vmax.f32 %v2512, %v2513
        %v2515 = vrot.slane %v2514, 1
        %v2516 = vmax.f32 %v2514, %v2515
        %v2517 = vrot.slane %v2059, 4
        %v2518 = vmax.f32 %v2059, %v2517
        %v2519 = vrot.slane %v2518, 2
        %v2520 = vmax.f32 %v2518, %v2519
        %v2521 = vrot.slane %v2520, 1
        %v2522 = vmax.f32 %v2520, %v2521
        %v2523 = vrot.slane %v2060, 4
        %v2524 = vmax.f32 %v2060, %v2523
        %v2525 = vrot.slane %v2524, 2
        %v2526 = vmax.f32 %v2524, %v2525
        %v2527 = vrot.slane %v2526, 1
        %v2528 = vmax.f32 %v2526, %v2527
        %v2529 = vrot.slane %v2061, 4
        %v2530 = vmax.f32 %v2061, %v2529
        %v2531 = vrot.slane %v2530, 2
        %v2532 = vmax.f32 %v2530, %v2531
        %v2533 = vrot.slane %v2532, 1
        %v2534 = vmax.f32 %v2532, %v2533
        %v2535 = vrot.slane %v2062, 4
        %v2536 = vmax.f32 %v2062, %v2535
        %v2537 = vrot.slane %v2536, 2
        %v2538 = vmax.f32 %v2536, %v2537
        %v2539 = vrot.slane %v2538, 1
        %v2540 = vmax.f32 %v2538, %v2539
        %v2541 = vrot.slane %v2063, 4
        %v2542 = vmax.f32 %v2063, %v2541
        %v2543 = vrot.slane %v2542, 2
        %v2544 = vmax.f32 %v2542, %v2543
        %v2545 = vrot.slane %v2544, 1
        %v2546 = vmax.f32 %v2544, %v2545
        %v2547 = vrot.slane %v2064, 4
        %v2548 = vmax.f32 %v2064, %v2547
        %v2549 = vrot.slane %v2548, 2
        %v2550 = vmax.f32 %v2548, %v2549
        %v2551 = vrot.slane %v2550, 1
        %v2552 = vmax.f32 %v2550, %v2551
        %v2553 = vrot.slane %v2065, 4
        %v2554 = vmax.f32 %v2065, %v2553
        %v2555 = vrot.slane %v2554, 2
        %v2556 = vmax.f32 %v2554, %v2555
        %v2557 = vrot.slane %v2556, 1
        %v2558 = vmax.f32 %v2556, %v2557
        %v2559 = vrot.slane %v2066, 4
        %v2560 = vmax.f32 %v2066, %v2559
        %v2561 = vrot.slane %v2560, 2
        %v2562 = vmax.f32 %v2560, %v2561
        %v2563 = vrot.slane %v2562, 1
        %v2564 = vmax.f32 %v2562, %v2563
        %v2565 = vrot.slane %v2067, 4
        %v2566 = vmax.f32 %v2067, %v2565
        %v2567 = vrot.slane %v2566, 2
        %v2568 = vmax.f32 %v2566, %v2567
        %v2569 = vrot.slane %v2568, 1
        %v2570 = vmax.f32 %v2568, %v2569
        %v2571 = vrot.slane %v2068, 4
        %v2572 = vmax.f32 %v2068, %v2571
        %v2573 = vrot.slane %v2572, 2
        %v2574 = vmax.f32 %v2572, %v2573
        %v2575 = vrot.slane %v2574, 1
        %v2576 = vmax.f32 %v2574, %v2575
        %v2577 = vrot.slane %v2069, 4
        %v2578 = vmax.f32 %v2069, %v2577
        %v2579 = vrot.slane %v2578, 2
        %v2580 = vmax.f32 %v2578, %v2579
        %v2581 = vrot.slane %v2580, 1
        %v2582 = vmax.f32 %v2580, %v2581
        %v2583 = vrot.slane %v2070, 4
        %v2584 = vmax.f32 %v2070, %v2583
        %v2585 = vrot.slane %v2584, 2
        %v2586 = vmax.f32 %v2584, %v2585
        %v2587 = vrot.slane %v2586, 1
        %v2588 = vmax.f32 %v2586, %v2587
        %v2589 = vrot.slane %v2071, 4
        %v2590 = vmax.f32 %v2071, %v2589
        %v2591 = vrot.slane %v2590, 2
        %v2592 = vmax.f32 %v2590, %v2591
        %v2593 = vrot.slane %v2592, 1
        %v2594 = vmax.f32 %v2592, %v2593
        %v2595 = vrot.slane %v2072, 4
        %v2596 = vmax.f32 %v2072, %v2595
        %v2597 = vrot.slane %v2596, 2
        %v2598 = vmax.f32 %v2596, %v2597
        %v2599 = vrot.slane %v2598, 1
        %v2600 = vmax.f32 %v2598, %v2599
        %v2601 = vrot.slane %v2073, 4
        %v2602 = vmax.f32 %v2073, %v2601
        %v2603 = vrot.slane %v2602, 2
        %v2604 = vmax.f32 %v2602, %v2603
        %v2605 = vrot.slane %v2604, 1
        %v2606 = vmax.f32 %v2604, %v2605
        %v2607 = vrot.slane %v2074, 4
        %v2608 = vmax.f32 %v2074, %v2607
        %v2609 = vrot.slane %v2608, 2
        %v2610 = vmax.f32 %v2608, %v2609
        %v2611 = vrot.slane %v2610, 1
        %v2612 = vmax.f32 %v2610, %v2611
        %v2613 = vrot.slane %v2075, 4
        %v2614 = vmax.f32 %v2075, %v2613
        %v2615 = vrot.slane %v2614, 2
        %v2616 = vmax.f32 %v2614, %v2615
        %v2617 = vrot.slane %v2616, 1
        %v2618 = vmax.f32 %v2616, %v2617
        %v2619 = vrot.slane %v2076, 4
        %v2620 = vmax.f32 %v2076, %v2619
        %v2621 = vrot.slane %v2620, 2
        %v2622 = vmax.f32 %v2620, %v2621
        %v2623 = vrot.slane %v2622, 1
        %v2624 = vmax.f32 %v2622, %v2623
        %v2625 = vrot.slane %v2077, 4
        %v2626 = vmax.f32 %v2077, %v2625
        %v2627 = vrot.slane %v2626, 2
        %v2628 = vmax.f32 %v2626, %v2627
        %v2629 = vrot.slane %v2628, 1
        %v2630 = vmax.f32 %v2628, %v2629
        %v2631 = vrot.slane %v2078, 4
        %v2632 = vmax.f32 %v2078, %v2631
        %v2633 = vrot.slane %v2632, 2
        %v2634 = vmax.f32 %v2632, %v2633
        %v2635 = vrot.slane %v2634, 1
        %v2636 = vmax.f32 %v2634, %v2635
        %v2637 = vrot.slane %v2079, 4
        %v2638 = vmax.f32 %v2079, %v2637
        %v2639 = vrot.slane %v2638, 2
        %v2640 = vmax.f32 %v2638, %v2639
        %v2641 = vrot.slane %v2640, 1
        %v2642 = vmax.f32 %v2640, %v2641
        %v2643 = vrot.slane %v2080, 4
        %v2644 = vmax.f32 %v2080, %v2643
        %v2645 = vrot.slane %v2644, 2
        %v2646 = vmax.f32 %v2644, %v2645
        %v2647 = vrot.slane %v2646, 1
        %v2648 = vmax.f32 %v2646, %v2647
        %v2649 = vrot.slane %v2081, 4
        %v2650 = vmax.f32 %v2081, %v2649
        %v2651 = vrot.slane %v2650, 2
        %v2652 = vmax.f32 %v2650, %v2651
        %v2653 = vrot.slane %v2652, 1
        %v2654 = vmax.f32 %v2652, %v2653
        %v2655 = vrot.slane %v2082, 4
        %v2656 = vmax.f32 %v2082, %v2655
        %v2657 = vrot.slane %v2656, 2
        %v2658 = vmax.f32 %v2656, %v2657
        %v2659 = vrot.slane %v2658, 1
        %v2660 = vmax.f32 %v2658, %v2659
        %v2661 = vrot.slane %v2083, 4
        %v2662 = vmax.f32 %v2083, %v2661
        %v2663 = vrot.slane %v2662, 2
        %v2664 = vmax.f32 %v2662, %v2663
        %v2665 = vrot.slane %v2664, 1
        %v2666 = vmax.f32 %v2664, %v2665
        %v2667 = vrot.slane %v2084, 4
        %v2668 = vmax.f32 %v2084, %v2667
        %v2669 = vrot.slane %v2668, 2
        %v2670 = vmax.f32 %v2668, %v2669
        %v2671 = vrot.slane %v2670, 1
        %v2672 = vmax.f32 %v2670, %v2671
        %v2673 = vrot.slane %v2085, 4
        %v2674 = vmax.f32 %v2085, %v2673
        %v2675 = vrot.slane %v2674, 2
        %v2676 = vmax.f32 %v2674, %v2675
        %v2677 = vrot.slane %v2676, 1
        %v2678 = vmax.f32 %v2676, %v2677
        %v2679 = vrot.slane %v2086, 4
        %v2680 = vmax.f32 %v2086, %v2679
        %v2681 = vrot.slane %v2680, 2
        %v2682 = vmax.f32 %v2680, %v2681
        %v2683 = vrot.slane %v2682, 1
        %v2684 = vmax.f32 %v2682, %v2683
        %v2685 = vrot.slane %v2087, 4
        %v2686 = vmax.f32 %v2087, %v2685
        %v2687 = vrot.slane %v2686, 2
        %v2688 = vmax.f32 %v2686, %v2687
        %v2689 = vrot.slane %v2688, 1
        %v2690 = vmax.f32 %v2688, %v2689
        %v2691 = vrot.slane %v2088, 4
        %v2692 = vmax.f32 %v2088, %v2691
        %v2693 = vrot.slane %v2692, 2
        %v2694 = vmax.f32 %v2692, %v2693
        %v2695 = vrot.slane %v2694, 1
        %v2696 = vmax.f32 %v2694, %v2695
        %v2697 = vrot.slane %v2089, 4
        %v2698 = vmax.f32 %v2089, %v2697
        %v2699 = vrot.slane %v2698, 2
        %v2700 = vmax.f32 %v2698, %v2699
        %v2701 = vrot.slane %v2700, 1
        %v2702 = vmax.f32 %v2700, %v2701
        %v2703 = vrot.slane %v2090, 4
        %v2704 = vmax.f32 %v2090, %v2703
        %v2705 = vrot.slane %v2704, 2
        %v2706 = vmax.f32 %v2704, %v2705
        %v2707 = vrot.slane %v2706, 1
        %v2708 = vmax.f32 %v2706, %v2707
        %v2709 = vrot.slane %v2091, 4
        %v2710 = vmax.f32 %v2091, %v2709
        %v2711 = vrot.slane %v2710, 2
        %v2712 = vmax.f32 %v2710, %v2711
        %v2713 = vrot.slane %v2712, 1
        %v2714 = vmax.f32 %v2712, %v2713
        %v2715 = vrot.slane %v2092, 4
        %v2716 = vmax.f32 %v2092, %v2715
        %v2717 = vrot.slane %v2716, 2
        %v2718 = vmax.f32 %v2716, %v2717
        %v2719 = vrot.slane %v2718, 1
        %v2720 = vmax.f32 %v2718, %v2719
        %v2721 = vrot.slane %v2093, 4
        %v2722 = vmax.f32 %v2093, %v2721
        %v2723 = vrot.slane %v2722, 2
        %v2724 = vmax.f32 %v2722, %v2723
        %v2725 = vrot.slane %v2724, 1
        %v2726 = vmax.f32 %v2724, %v2725
        %v2727 = vrot.slane %v2094, 4
        %v2728 = vmax.f32 %v2094, %v2727
        %v2729 = vrot.slane %v2728, 2
        %v2730 = vmax.f32 %v2728, %v2729
        %v2731 = vrot.slane %v2730, 1
        %v2732 = vmax.f32 %v2730, %v2731
        %v2733 = vrot.slane %v2095, 4
        %v2734 = vmax.f32 %v2095, %v2733
        %v2735 = vrot.slane %v2734, 2
        %v2736 = vmax.f32 %v2734, %v2735
        %v2737 = vrot.slane %v2736, 1
        %v2738 = vmax.f32 %v2736, %v2737
        %v2739 = vrot.slane %v2096, 4
        %v2740 = vmax.f32 %v2096, %v2739
        %v2741 = vrot.slane %v2740, 2
        %v2742 = vmax.f32 %v2740, %v2741
        %v2743 = vrot.slane %v2742, 1
        %v2744 = vmax.f32 %v2742, %v2743
        %v2745 = vrot.slane %v2097, 4
        %v2746 = vmax.f32 %v2097, %v2745
        %v2747 = vrot.slane %v2746, 2
        %v2748 = vmax.f32 %v2746, %v2747
        %v2749 = vrot.slane %v2748, 1
        %v2750 = vmax.f32 %v2748, %v2749
        %v2751 = vrot.slane %v2098, 4
        %v2752 = vmax.f32 %v2098, %v2751
        %v2753 = vrot.slane %v2752, 2
        %v2754 = vmax.f32 %v2752, %v2753
        %v2755 = vrot.slane %v2754, 1
        %v2756 = vmax.f32 %v2754, %v2755
        %v2757 = vrot.slane %v2099, 4
        %v2758 = vmax.f32 %v2099, %v2757
        %v2759 = vrot.slane %v2758, 2
        %v2760 = vmax.f32 %v2758, %v2759
        %v2761 = vrot.slane %v2760, 1
        %v2762 = vmax.f32 %v2760, %v2761
        %v2763 = vrot.slane %v2100, 4
        %v2764 = vmax.f32 %v2100, %v2763
        %v2765 = vrot.slane %v2764, 2
        %v2766 = vmax.f32 %v2764, %v2765
        %v2767 = vrot.slane %v2766, 1
        %v2768 = vmax.f32 %v2766, %v2767
        %v2769 = vrot.slane %v2101, 4
        %v2770 = vmax.f32 %v2101, %v2769
        %v2771 = vrot.slane %v2770, 2
        %v2772 = vmax.f32 %v2770, %v2771
        %v2773 = vrot.slane %v2772, 1
        %v2774 = vmax.f32 %v2772, %v2773
        %v2775 = vrot.slane %v2102, 4
        %v2776 = vmax.f32 %v2102, %v2775
        %v2777 = vrot.slane %v2776, 2
        %v2778 = vmax.f32 %v2776, %v2777
        %v2779 = vrot.slane %v2778, 1
        %v2780 = vmax.f32 %v2778, %v2779
        %v2781 = vrot.slane %v2103, 4
        %v2782 = vmax.f32 %v2103, %v2781
        %v2783 = vrot.slane %v2782, 2
        %v2784 = vmax.f32 %v2782, %v2783
        %v2785 = vrot.slane %v2784, 1
        %v2786 = vmax.f32 %v2784, %v2785
        %v2787 = vrot.slane %v2104, 4
        %v2788 = vmax.f32 %v2104, %v2787
        %v2789 = vrot.slane %v2788, 2
        %v2790 = vmax.f32 %v2788, %v2789
        %v2791 = vrot.slane %v2790, 1
        %v2792 = vmax.f32 %v2790, %v2791
        %v2793 = vrot.slane %v2105, 4
        %v2794 = vmax.f32 %v2105, %v2793
        %v2795 = vrot.slane %v2794, 2
        %v2796 = vmax.f32 %v2794, %v2795
        %v2797 = vrot.slane %v2796, 1
        %v2798 = vmax.f32 %v2796, %v2797
        %v2799 = vrot.slane %v2106, 4
        %v2800 = vmax.f32 %v2106, %v2799
        %v2801 = vrot.slane %v2800, 2
        %v2802 = vmax.f32 %v2800, %v2801
        %v2803 = vrot.slane %v2802, 1
        %v2804 = vmax.f32 %v2802, %v2803
        %v2805 = vrot.slane %v2107, 4
        %v2806 = vmax.f32 %v2107, %v2805
        %v2807 = vrot.slane %v2806, 2
        %v2808 = vmax.f32 %v2806, %v2807
        %v2809 = vrot.slane %v2808, 1
        %v2810 = vmax.f32 %v2808, %v2809
        %v2811 = vrot.slane %v2108, 4
        %v2812 = vmax.f32 %v2108, %v2811
        %v2813 = vrot.slane %v2812, 2
        %v2814 = vmax.f32 %v2812, %v2813
        %v2815 = vrot.slane %v2814, 1
        %v2816 = vmax.f32 %v2814, %v2815
        %v2817 = vrot.slane %v2109, 4
        %v2818 = vmax.f32 %v2109, %v2817
        %v2819 = vrot.slane %v2818, 2
        %v2820 = vmax.f32 %v2818, %v2819
        %v2821 = vrot.slane %v2820, 1
        %v2822 = vmax.f32 %v2820, %v2821
        %v2823 = vrot.slane %v2110, 4
        %v2824 = vmax.f32 %v2110, %v2823
        %v2825 = vrot.slane %v2824, 2
        %v2826 = vmax.f32 %v2824, %v2825
        %v2827 = vrot.slane %v2826, 1
        %v2828 = vmax.f32 %v2826, %v2827
        %v2829 = vrot.slane %v2111, 4
        %v2830 = vmax.f32 %v2111, %v2829
        %v2831 = vrot.slane %v2830, 2
        %v2832 = vmax.f32 %v2830, %v2831
        %v2833 = vrot.slane %v2832, 1
        %v2834 = vmax.f32 %v2832, %v2833
        %v2835 = vrot.slane %v2112, 4
        %v2836 = vmax.f32 %v2112, %v2835
        %v2837 = vrot.slane %v2836, 2
        %v2838 = vmax.f32 %v2836, %v2837
        %v2839 = vrot.slane %v2838, 1
        %v2840 = vmax.f32 %v2838, %v2839
        %v2841 = vrot.slane %v2113, 4
        %v2842 = vmax.f32 %v2113, %v2841
        %v2843 = vrot.slane %v2842, 2
        %v2844 = vmax.f32 %v2842, %v2843
        %v2845 = vrot.slane %v2844, 1
        %v2846 = vmax.f32 %v2844, %v2845
        %v2847 = vrot.slane %v2114, 4
        %v2848 = vmax.f32 %v2114, %v2847
        %v2849 = vrot.slane %v2848, 2
        %v2850 = vmax.f32 %v2848, %v2849
        %v2851 = vrot.slane %v2850, 1
        %v2852 = vmax.f32 %v2850, %v2851
        %v2853 = vrot.slane %v2115, 4
        %v2854 = vmax.f32 %v2115, %v2853
        %v2855 = vrot.slane %v2854, 2
        %v2856 = vmax.f32 %v2854, %v2855
        %v2857 = vrot.slane %v2856, 1
        %v2858 = vmax.f32 %v2856, %v2857
        %v2859 = vrot.slane %v2116, 4
        %v2860 = vmax.f32 %v2116, %v2859
        %v2861 = vrot.slane %v2860, 2
        %v2862 = vmax.f32 %v2860, %v2861
        %v2863 = vrot.slane %v2862, 1
        %v2864 = vmax.f32 %v2862, %v2863
        %v2865 = vrot.slane %v2117, 4
        %v2866 = vmax.f32 %v2117, %v2865
        %v2867 = vrot.slane %v2866, 2
        %v2868 = vmax.f32 %v2866, %v2867
        %v2869 = vrot.slane %v2868, 1
        %v2870 = vmax.f32 %v2868, %v2869
        %v2871 = vrot.slane %v2118, 4
        %v2872 = vmax.f32 %v2118, %v2871
        %v2873 = vrot.slane %v2872, 2
        %v2874 = vmax.f32 %v2872, %v2873
        %v2875 = vrot.slane %v2874, 1
        %v2876 = vmax.f32 %v2874, %v2875
        %v2877 = vrot.slane %v2119, 4
        %v2878 = vmax.f32 %v2119, %v2877
        %v2879 = vrot.slane %v2878, 2
        %v2880 = vmax.f32 %v2878, %v2879
        %v2881 = vrot.slane %v2880, 1
        %v2882 = vmax.f32 %v2880, %v2881
        %v2883 = vrot.slane %v2120, 4
        %v2884 = vmax.f32 %v2120, %v2883
        %v2885 = vrot.slane %v2884, 2
        %v2886 = vmax.f32 %v2884, %v2885
        %v2887 = vrot.slane %v2886, 1
        %v2888 = vmax.f32 %v2886, %v2887
        %v2889 = vmax.f32 %v2126, %v2222
        %v2890 = vmax.f32 %v2889, %v2318
        %v2891 = vmax.f32 %v2890, %v2414
        %v2892 = vmax.f32 %v2891, %v2510
        %v2893 = vmax.f32 %v2892, %v2606
        %v2894 = vmax.f32 %v2893, %v2702
        %v2895 = vmax.f32 %v2894, %v2798
        %v2896 = vmax.f32 %v2132, %v2228
        %v2897 = vmax.f32 %v2896, %v2324
        %v2898 = vmax.f32 %v2897, %v2420
        %v2899 = vmax.f32 %v2898, %v2516
        %v2900 = vmax.f32 %v2899, %v2612
        %v2901 = vmax.f32 %v2900, %v2708
        %v2902 = vmax.f32 %v2901, %v2804
        %v2903 = vmax.f32 %v2138, %v2234
        %v2904 = vmax.f32 %v2903, %v2330
        %v2905 = vmax.f32 %v2904, %v2426
        %v2906 = vmax.f32 %v2905, %v2522
        %v2907 = vmax.f32 %v2906, %v2618
        %v2908 = vmax.f32 %v2907, %v2714
        %v2909 = vmax.f32 %v2908, %v2810
        %v2910 = vmax.f32 %v2144, %v2240
        %v2911 = vmax.f32 %v2910, %v2336
        %v2912 = vmax.f32 %v2911, %v2432
        %v2913 = vmax.f32 %v2912, %v2528
        %v2914 = vmax.f32 %v2913, %v2624
        %v2915 = vmax.f32 %v2914, %v2720
        %v2916 = vmax.f32 %v2915, %v2816
        %v2917 = vmax.f32 %v2150, %v2246
        %v2918 = vmax.f32 %v2917, %v2342
        %v2919 = vmax.f32 %v2918, %v2438
        %v2920 = vmax.f32 %v2919, %v2534
        %v2921 = vmax.f32 %v2920, %v2630
        %v2922 = vmax.f32 %v2921, %v2726
        %v2923 = vmax.f32 %v2922, %v2822
        %v2924 = vmax.f32 %v2156, %v2252
        %v2925 = vmax.f32 %v2924, %v2348
        %v2926 = vmax.f32 %v2925, %v2444
        %v2927 = vmax.f32 %v2926, %v2540
        %v2928 = vmax.f32 %v2927, %v2636
        %v2929 = vmax.f32 %v2928, %v2732
        %v2930 = vmax.f32 %v2929, %v2828
        %v2931 = vmax.f32 %v2162, %v2258
        %v2932 = vmax.f32 %v2931, %v2354
        %v2933 = vmax.f32 %v2932, %v2450
        %v2934 = vmax.f32 %v2933, %v2546
        %v2935 = vmax.f32 %v2934, %v2642
        %v2936 = vmax.f32 %v2935, %v2738
        %v2937 = vmax.f32 %v2936, %v2834
        %v2938 = vmax.f32 %v2168, %v2264
        %v2939 = vmax.f32 %v2938, %v2360
        %v2940 = vmax.f32 %v2939, %v2456
        %v2941 = vmax.f32 %v2940, %v2552
        %v2942 = vmax.f32 %v2941, %v2648
        %v2943 = vmax.f32 %v2942, %v2744
        %v2944 = vmax.f32 %v2943, %v2840
        %v2945 = vmax.f32 %v2174, %v2270
        %v2946 = vmax.f32 %v2945, %v2366
        %v2947 = vmax.f32 %v2946, %v2462
        %v2948 = vmax.f32 %v2947, %v2558
        %v2949 = vmax.f32 %v2948, %v2654
        %v2950 = vmax.f32 %v2949, %v2750
        %v2951 = vmax.f32 %v2950, %v2846
        %v2952 = vmax.f32 %v2180, %v2276
        %v2953 = vmax.f32 %v2952, %v2372
        %v2954 = vmax.f32 %v2953, %v2468
        %v2955 = vmax.f32 %v2954, %v2564
        %v2956 = vmax.f32 %v2955, %v2660
        %v2957 = vmax.f32 %v2956, %v2756
        %v2958 = vmax.f32 %v2957, %v2852
        %v2959 = vmax.f32 %v2186, %v2282
        %v2960 = vmax.f32 %v2959, %v2378
        %v2961 = vmax.f32 %v2960, %v2474
        %v2962 = vmax.f32 %v2961, %v2570
        %v2963 = vmax.f32 %v2962, %v2666
        %v2964 = vmax.f32 %v2963, %v2762
        %v2965 = vmax.f32 %v2964, %v2858
        %v2966 = vmax.f32 %v2192, %v2288
        %v2967 = vmax.f32 %v2966, %v2384
        %v2968 = vmax.f32 %v2967, %v2480
        %v2969 = vmax.f32 %v2968, %v2576
        %v2970 = vmax.f32 %v2969, %v2672
        %v2971 = vmax.f32 %v2970, %v2768
        %v2972 = vmax.f32 %v2971, %v2864
        %v2973 = vmax.f32 %v2198, %v2294
        %v2974 = vmax.f32 %v2973, %v2390
        %v2975 = vmax.f32 %v2974, %v2486
        %v2976 = vmax.f32 %v2975, %v2582
        %v2977 = vmax.f32 %v2976, %v2678
        %v2978 = vmax.f32 %v2977, %v2774
        %v2979 = vmax.f32 %v2978, %v2870
        %v2980 = vmax.f32 %v2204, %v2300
        %v2981 = vmax.f32 %v2980, %v2396
        %v2982 = vmax.f32 %v2981, %v2492
        %v2983 = vmax.f32 %v2982, %v2588
        %v2984 = vmax.f32 %v2983, %v2684
        %v2985 = vmax.f32 %v2984, %v2780
        %v2986 = vmax.f32 %v2985, %v2876
        %v2987 = vmax.f32 %v2210, %v2306
        %v2988 = vmax.f32 %v2987, %v2402
        %v2989 = vmax.f32 %v2988, %v2498
        %v2990 = vmax.f32 %v2989, %v2594
        %v2991 = vmax.f32 %v2990, %v2690
        %v2992 = vmax.f32 %v2991, %v2786
        %v2993 = vmax.f32 %v2992, %v2882
        %v2994 = vmax.f32 %v2216, %v2312
        %v2995 = vmax.f32 %v2994, %v2408
        %v2996 = vmax.f32 %v2995, %v2504
        %v2997 = vmax.f32 %v2996, %v2600
        %v2998 = vmax.f32 %v2997, %v2696
        %v2999 = vmax.f32 %v2998, %v2792
        %v3000 = vmax.f32 %v2999, %v2888
        %v3017 = vcombine.low %v2895, %v2902
        %v3018 = vcombine.low %v2909, %v2916
        %v3019 = vcombine.low %v2923, %v2930
        %v3020 = vcombine.low %v2937, %v2944
        %v3022 = vunpack.c.l.s4 1966171168
        %v3023 = vunpack.c.0.s8 %v3022
        %v3024 = vlaneseq
        %v3025 = vshrl.u32 %v3024, 7
        %v3026 = vsub.s32 %v3023, %v3025
        %v3027 = vrot.slane %v3017, %v3026
        %v3029 = vunpack.c.l.s4 1966171168
        %v3030 = vunpack.c.0.s8 %v3029
        %v3031 = vlaneseq
        %v3032 = vshrl.u32 %v3031, 7
        %v3033 = vsub.s32 %v3030, %v3032
        %v3034 = vrot.slane %v3018, %v3033
        %v3036 = vunpack.c.l.s4 1966171168
        %v3037 = vunpack.c.0.s8 %v3036
        %v3038 = vlaneseq
        %v3039 = vshrl.u32 %v3038, 7
        %v3040 = vsub.s32 %v3037, %v3039
        %v3041 = vrot.slane %v3019, %v3040
        %v3043 = vunpack.c.l.s4 1966171168
        %v3044 = vunpack.c.0.s8 %v3043
        %v3045 = vlaneseq
        %v3046 = vshrl.u32 %v3045, 7
        %v3047 = vsub.s32 %v3044, %v3046
        %v3048 = vrot.slane %v3020, %v3047
        %v3049 = vcombine.low %v3027, %v3034
        %v3050 = vcombine.low %v3041, %v3048
        %v3052 = vunpack.c.l.s4 1966171168
        %v3053 = vunpack.c.0.s8 %v3052
        %v3054 = vlaneseq
        %v3055 = vshrl.u32 %v3054, 7
        %v3056 = vsub.s32 %v3053, %v3055
        %v3057 = vrot.slane %v3049, %v3056
        %v3059 = vunpack.c.l.s4 1966171168
        %v3060 = vunpack.c.0.s8 %v3059
        %v3061 = vlaneseq
        %v3062 = vshrl.u32 %v3061, 7
        %v3063 = vsub.s32 %v3060, %v3062
        %v3064 = vrot.slane %v3050, %v3063
        %v3065 = vcombine.low %v3057, %v3064
        %v3066 = vcombine.low %v2951, %v2958
        %v3067 = vcombine.low %v2965, %v2972
        %v3068 = vcombine.low %v2979, %v2986
        %v3069 = vcombine.low %v2993, %v3000
        %v3071 = vunpack.c.l.s4 1966171168
        %v3072 = vunpack.c.0.s8 %v3071
        %v3073 = vlaneseq
        %v3074 = vshrl.u32 %v3073, 7
        %v3075 = vsub.s32 %v3072, %v3074
        %v3076 = vrot.slane %v3066, %v3075
        %v3078 = vunpack.c.l.s4 1966171168
        %v3079 = vunpack.c.0.s8 %v3078
        %v3080 = vlaneseq
        %v3081 = vshrl.u32 %v3080, 7
        %v3082 = vsub.s32 %v3079, %v3081
        %v3083 = vrot.slane %v3067, %v3082
        %v3085 = vunpack.c.l.s4 1966171168
        %v3086 = vunpack.c.0.s8 %v3085
        %v3087 = vlaneseq
        %v3088 = vshrl.u32 %v3087, 7
        %v3089 = vsub.s32 %v3086, %v3088
        %v3090 = vrot.slane %v3068, %v3089
        %v3092 = vunpack.c.l.s4 1966171168
        %v3093 = vunpack.c.0.s8 %v3092
        %v3094 = vlaneseq
        %v3095 = vshrl.u32 %v3094, 7
        %v3096 = vsub.s32 %v3093, %v3095
        %v3097 = vrot.slane %v3069, %v3096
        %v3098 = vcombine.low %v3076, %v3083
        %v3099 = vcombine.low %v3090, %v3097
        %v3101 = vunpack.c.l.s4 1966171168
        %v3102 = vunpack.c.0.s8 %v3101
        %v3103 = vlaneseq
        %v3104 = vshrl.u32 %v3103, 7
        %v3105 = vsub.s32 %v3102, %v3104
        %v3106 = vrot.slane %v3098, %v3105
        %v3108 = vunpack.c.l.s4 1966171168
        %v3109 = vunpack.c.0.s8 %v3108
        %v3110 = vlaneseq
        %v3111 = vshrl.u32 %v3110, 7
        %v3112 = vsub.s32 %v3109, %v3111
        %v3113 = vrot.slane %v3099, %v3112
        %v3114 = vcombine.low %v3106, %v3113
        %3117 = vst [vmem:[%s155] sm:$0xff] %v3065
        %3118 = vst [vmem:[%s155 + $0x8] sm:$0xff] %v3114
        %p3119 = scmp.lt.s32.totalorder %s14, 1
        %s3120 = scalar_select %p3119, %s14, 1
        %s3121 = smul.addr %s3120, 16
        %s3122 = scalar_lea.vmem %s2, %s3121
        // Predicated region
        $region37: #{spatial_max_forward.2} parent=27 // pred_check
          %p3123 = pneg %p79
        $region38: #{spatial_max_forward.2} parent=27 // pred_check_branch
          %3125 = sbr.rel (%p3123) target = $region40
        $region39: #{spatial_max_forward.2} parent=27 // pred_region
          _
        $region40: #{spatial_max_forward.2} parent=27 // pred_fallthru
          _
      $region28: #{spatial_max_forward.2} parent=5 // pred_fallthru
        _
      %p3126 = scmp.le.s32.totalorder 2, %s9
      // Predicated region
      $region41: #{spatial_max_forward.2} parent=5 // pred_check
        %p3127 = pneg %p3126
      $region42: #{spatial_max_forward.2} parent=5 // pred_check_branch
        %3129 = sbr.rel (%p3127) target = $region44
      $region43: #{spatial_max_forward.2} parent=5 // pred_region
        %s3130 = ssub.s32 %s9, 2
        // Predicated region
        $region45: #{spatial_max_forward.2} parent=43 // pred_check
          %p3131 = pneg %p85
        $region46: #{spatial_max_forward.2} parent=43 // pred_check_branch
          %3133 = sbr.rel (%p3131) target = $region48
        $region47: #{spatial_max_forward.2} parent=43 // pred_region
          %p3134 = scmp.lt.s32.totalorder %s15, 1
          %s3135 = scalar_select %p3134, %s15, 1
          %s3136 = smul.addr %s3135, 16
          %s3137 = scalar_lea.vmem %s2, %s3136
        $region48: #{spatial_max_forward.2} parent=43 // pred_fallthru
          _
      $region44: #{spatial_max_forward.2} parent=5 // pred_fallthru
        _
    $region6: #{spatial_max_forward.2} parent=1 // loop_footer
      %s13 = sadd.s32 1, %s9
    $region7: #{spatial_max_forward.2} parent=1 // loop_footer_branch
      %8 = sbr.rel target = $region3
    $region8: #{spatial_max_forward.2} parent=1 // loop_exit
      _
    %3138 = vsyncpa [#allocation4], 1
    %s3139 = scalar_lea.sflag [#allocation4], 1
    %3140 = vsyncpa %s3139, 1

</llo_original>
